<compile_context>
chip_gen: v7x
topology: tpu7x:2x2x1
jax: 0.10.0
libtpu: 0.0.40
codegen_flags: <defaults>
</compile_context>

<pallas_src>
import functools

import jax
import jax.numpy as jnp
from jax import lax
from jax.experimental import pallas as pl
from jax.experimental.pallas import tpu as pltpu


# ---------------------------------------------------------------------------
# Fused kernel.
# refs layout (all VMEM):
#   x_ref                       : (T*B, Din)        time-major flattened input
#   per layer l (n_layers of):  wih_f (Din_l,4H), whh_f (H,4H), b_f (1,4H),
#                               wih_b (Din_l,4H), whh_b (H,4H), b_b (1,4H)
#   w_fc_ref                    : (2H, O)  (BatchNorm folded in)
#   b_fc_ref                    : (1, O)
#   out_ref                     : (B, O)
#   act0, act1 (scratch)        : (T*B, 2H)  ping-pong inter-layer activations
# Gate order matches PyTorch: [i, f, g, o].
# ---------------------------------------------------------------------------
def fused_classifier_kernel(*refs, T, B, H, O, n_layers):
    x_ref = refs[0]
    idx = 1
    layer_refs = []
    for _ in range(n_layers):
        layer_refs.append(refs[idx:idx + 6])
        idx += 6
    w_fc_ref = refs[idx]
    b_fc_ref = refs[idx + 1]
    out_ref = refs[idx + 2]
    act0 = refs[idx + 3]
    act1 = refs[idx + 4]

    # Lane mask selecting the "g" gate lanes [2H, 3H): one full-vreg sigmoid +
    # one full-vreg tanh + a VPU select instead of four sub-vreg EUP ops.
    lane = lax.broadcasted_iota(jnp.int32, (B, 4 * H), 1)
    g_mask = (lane >= 2 * H) & (lane < 3 * H)

    def gate_update(gates, c_prev):
        sg = jax.nn.sigmoid(gates)
        th = jnp.tanh(gates)
        act = jnp.where(g_mask, th, sg)              # tanh on g lanes, sigmoid elsewhere
        i = act[:, 0 * H:1 * H]
        f = act[:, 1 * H:2 * H]
        g = act[:, 2 * H:3 * H]
        o = act[:, 3 * H:4 * H]
        c = f * c_prev + i * g
        h = o * jnp.tanh(c)
        return h, c

    bufs = (act0, act1)
    src = x_ref
    zero = jnp.zeros((B, H), jnp.float32)
    h_last_f = zero
    h_last_b = zero

    for l in range(n_layers):
        wih_f_ref, whh_f_ref, b_f_ref, wih_b_ref, whh_b_ref, b_b_ref = layer_refs[l]
        last = (l == n_layers - 1)
        dst = bufs[l % 2]

        x_all = src[...]                                               # (T*B, Din_l)
        # Hoisted input projection + bias for the whole sequence, both directions.
        gx_f = jnp.dot(x_all, wih_f_ref[...],
                       preferred_element_type=jnp.float32) + b_f_ref[...]   # (T*B, 4H)
        gx_b = jnp.dot(x_all, wih_b_ref[...],
                       preferred_element_type=jnp.float32) + b_b_ref[...]   # (T*B, 4H)
        whh_f = whh_f_ref[...]
        whh_b = whh_b_ref[...]

        h_f, c_f = zero, zero
        h_b, c_b = zero, zero

        if last:
            # Only z[:, -1] is needed: bwd hidden at time T-1 is the FIRST backward
            # step (zero initial state -> h @ Whh term vanishes).
            h_last_b, _ = gate_update(gx_b[(T - 1) * B:T * B, :], zero)
            for s in range(T):                                         # fully unrolled
                gates_f = gx_f[s * B:(s + 1) * B, :] + jnp.dot(
                    h_f, whh_f, preferred_element_type=jnp.float32)
                h_f, c_f = gate_update(gates_f, c_f)
            h_last_f = h_f
        else:
            for s in range(T):                                         # fully unrolled
                tb = T - 1 - s
                # Two independent chains back-to-back so the scheduler can overlap them.
                gates_f = gx_f[s * B:(s + 1) * B, :] + jnp.dot(
                    h_f, whh_f, preferred_element_type=jnp.float32)
                gates_b = gx_b[tb * B:(tb + 1) * B, :] + jnp.dot(
                    h_b, whh_b, preferred_element_type=jnp.float32)
                h_f, c_f = gate_update(gates_f, c_f)
                h_b, c_b = gate_update(gates_b, c_b)
                dst[s * B:(s + 1) * B, 0:H] = h_f                      # fwd lanes [:H]
                dst[tb * B:(tb + 1) * B, H:2 * H] = h_b                # bwd lanes [H:]
            src = dst
            # (inter-layer dropout is identity in eval mode)

    # ---- Head: ReLU -> (BatchNorm folded into) Linear -> Softmax ----
    zf = jnp.maximum(h_last_f, 0.0)
    zb = jnp.maximum(h_last_b, 0.0)
    w = w_fc_ref[...]                                                  # (2H, O)
    logits = (jnp.dot(zf, w[0:H, :], preferred_element_type=jnp.float32)
              + jnp.dot(zb, w[H:2 * H, :], preferred_element_type=jnp.float32)
              + b_fc_ref[...])
    m = jnp.max(logits, axis=-1, keepdims=True)                        # stable softmax
    e = jnp.exp(logits - m)
    out_ref[...] = e * pl.reciprocal(jnp.sum(e, axis=-1, keepdims=True))


# ---------------------------------------------------------------------------
# Parameter construction (deterministic, mirrors nn.LSTM / nn.Linear shapes).
# ---------------------------------------------------------------------------
def init_params(key, input_size, hidden_size, output_size, n_layers):
    H = hidden_size
    k = 1.0 / jnp.sqrt(jnp.float32(H))
    params = {"lstm": []}
    for layer in range(n_layers):
        din = input_size if layer == 0 else 2 * H
        layer_p = {}
        for direction in ("fwd", "bwd"):
            key, k1, k2, k3, k4 = jax.random.split(key, 5)
            layer_p[direction] = dict(
                w_ih=jax.random.uniform(k1, (4 * H, din), jnp.float32, -k, k),
                w_hh=jax.random.uniform(k2, (4 * H, H), jnp.float32, -k, k),
                b_ih=jax.random.uniform(k3, (4 * H,), jnp.float32, -k, k),
                b_hh=jax.random.uniform(k4, (4 * H,), jnp.float32, -k, k),
            )
        params["lstm"].append(layer_p)

    # BatchNorm1d(2H): PyTorch default init (weight=1, bias=0, rm=0, rv=1).
    params["bn"] = dict(
        gamma=jnp.ones((2 * H,), jnp.float32),
        beta=jnp.zeros((2 * H,), jnp.float32),
        running_mean=jnp.zeros((2 * H,), jnp.float32),
        running_var=jnp.ones((2 * H,), jnp.float32),
    )
    # Linear(2H -> output_size)
    kf = 1.0 / jnp.sqrt(jnp.float32(2 * H))
    key, k1, k2 = jax.random.split(key, 3)
    params["fc"] = dict(
        w=jax.random.uniform(k1, (output_size, 2 * H), jnp.float32, -kf, kf),
        b=jax.random.uniform(k2, (output_size,), jnp.float32, -kf, kf),
    )
    return params


# ---------------------------------------------------------------------------
# Full forward pass: SequenceClassifier.forward (single fused pallas_call).
# ---------------------------------------------------------------------------
@jax.jit
def sequence_classifier_forward(x, params):
    # x: (B, T, input_size) batch-first, like PyTorch nn.LSTM(batch_first=True).
    B, T, Din = x.shape
    n_layers = len(params["lstm"])
    H = params["lstm"][0]["fwd"]["w_hh"].shape[1]
    O = params["fc"]["w"].shape[0]

    # Time-major, flattened to a lane/sublane-friendly 2-D slab (row = t*B + b).
    x_flat = jnp.transpose(x, (1, 0, 2)).astype(jnp.float32).reshape(T * B, Din)

    inputs = [x_flat]
    for layer_p in params["lstm"]:
        for direction in ("fwd", "bwd"):
            p = layer_p[direction]
            inputs.append(jnp.transpose(p["w_ih"]))             # (Din_l, 4H)
            inputs.append(jnp.transpose(p["w_hh"]))             # (H, 4H)
            inputs.append((p["b_ih"] + p["b_hh"])[None, :])     # (1, 4H)

    # Fold eval-mode BatchNorm (running stats) into the FC layer.
    bn, fc = params["bn"], params["fc"]
    eps = 1e-5
    scale = bn["gamma"] * lax.rsqrt(bn["running_var"] + eps)          # (2H,)
    w_t = jnp.transpose(fc["w"])                                      # (2H, O)
    w_eff = scale[:, None] * w_t                                      # (2H, O)
    b_eff = ((bn["beta"] - bn["running_mean"] * scale) @ w_t + fc["b"])[None, :]
    inputs += [w_eff, b_eff]

    vmem = pl.BlockSpec(memory_space=pltpu.MemorySpace.VMEM)
    kernel = functools.partial(fused_classifier_kernel,
                               T=T, B=B, H=H, O=O, n_layers=n_layers)
    return pl.pallas_call(
        kernel,
        out_shape=jax.ShapeDtypeStruct((B, O), jnp.float32),
        in_specs=[vmem] * len(inputs),
        out_specs=vmem,
        scratch_shapes=[
            pltpu.VMEM((T * B, 2 * H), jnp.float32),   # ping
            pltpu.VMEM((T * B, 2 * H), jnp.float32),   # pong
        ],
    )(*inputs)


if __name__ == "__main__":
    # Small shapes consistent with the module: row-of-pixels style sequence input.
    B, T = 2, 8
    input_size, hidden_size, output_size, n_layers = 16, 32, 10, 4

    key = jax.random.PRNGKey(0)
    key, kx, kp = jax.random.split(key, 3)
    x = jax.random.normal(kx, (B, T, input_size), dtype=jnp.float32)
    params = init_params(kp, input_size, hidden_size, output_size, n_layers)

    y = sequence_classifier_forward(x, params)
    y = jax.block_until_ready(y)

    assert y.shape == (B, output_size)
    assert bool(jnp.all(jnp.isfinite(y)))
    # softmax rows sum to 1
    assert bool(jnp.allclose(jnp.sum(y, axis=-1), 1.0, atol=1e-5))
    print("KERNEL_OK")
</pallas_src>

<mosaic_0001>
module attributes {stable_mosaic.version = 11 : i64} {
  func.func @fused_classifier_kernel(%arg0: memref<16x16xf32, #tpu.memory_space<vmem>>, %arg1: memref<16x128xf32, #tpu.memory_space<vmem>>, %arg2: memref<32x128xf32, #tpu.memory_space<vmem>>, %arg3: memref<1x128xf32, #tpu.memory_space<vmem>>, %arg4: memref<16x128xf32, #tpu.memory_space<vmem>>, %arg5: memref<32x128xf32, #tpu.memory_space<vmem>>, %arg6: memref<1x128xf32, #tpu.memory_space<vmem>>, %arg7: memref<64x128xf32, #tpu.memory_space<vmem>>, %arg8: memref<32x128xf32, #tpu.memory_space<vmem>>, %arg9: memref<1x128xf32, #tpu.memory_space<vmem>>, %arg10: memref<64x128xf32, #tpu.memory_space<vmem>>, %arg11: memref<32x128xf32, #tpu.memory_space<vmem>>, %arg12: memref<1x128xf32, #tpu.memory_space<vmem>>, %arg13: memref<64x128xf32, #tpu.memory_space<vmem>>, %arg14: memref<32x128xf32, #tpu.memory_space<vmem>>, %arg15: memref<1x128xf32, #tpu.memory_space<vmem>>, %arg16: memref<64x128xf32, #tpu.memory_space<vmem>>, %arg17: memref<32x128xf32, #tpu.memory_space<vmem>>, %arg18: memref<1x128xf32, #tpu.memory_space<vmem>>, %arg19: memref<64x128xf32, #tpu.memory_space<vmem>>, %arg20: memref<32x128xf32, #tpu.memory_space<vmem>>, %arg21: memref<1x128xf32, #tpu.memory_space<vmem>>, %arg22: memref<64x128xf32, #tpu.memory_space<vmem>>, %arg23: memref<32x128xf32, #tpu.memory_space<vmem>>, %arg24: memref<1x128xf32, #tpu.memory_space<vmem>>, %arg25: memref<64x10xf32, #tpu.memory_space<vmem>>, %arg26: memref<1x10xf32, #tpu.memory_space<vmem>>, %arg27: memref<2x10xf32, #tpu.memory_space<vmem>>, %arg28: memref<16x64xf32, #tpu.memory_space<vmem>>, %arg29: memref<16x64xf32, #tpu.memory_space<vmem>>) attributes {dimension_semantics = [], scalar_prefetch = 0 : i64, scratch_operands = 2 : i64, tpu.core_type = #tpu.core_type<tc>} {
    %0 = tpu.iota {dimensions = array<i32: 1>} : vector<2x128xi32>
    %c64_i32 = arith.constant 64 : i32
    %1 = vector.broadcast %c64_i32 : i32 to vector<2x128xi32>
    %2 = arith.cmpi sge, %0, %1 : vector<2x128xi32>
    %c96_i32 = arith.constant 96 : i32
    %3 = vector.broadcast %c96_i32 : i32 to vector<2x128xi32>
    %4 = arith.cmpi slt, %0, %3 : vector<2x128xi32>
    %5 = arith.andi %2, %4 : vector<2x128xi1>
    %cst = arith.constant 0.000000e+00 : f32
    %6 = vector.broadcast %cst : f32 to vector<2x32xf32>
    %c0 = arith.constant 0 : index
    %c0_0 = arith.constant 0 : index
    %7 = vector.load %arg0[%c0, %c0_0] : memref<16x16xf32, #tpu.memory_space<vmem>>, vector<16x16xf32>
    %c0_1 = arith.constant 0 : index
    %c0_2 = arith.constant 0 : index
    %8 = vector.load %arg1[%c0_1, %c0_2] : memref<16x128xf32, #tpu.memory_space<vmem>>, vector<16x128xf32>
    %cst_3 = arith.constant dense<0.000000e+00> : vector<16x128xf32>
    %9 = tpu.matmul %7, %8, %cst_3 {dimension_numbers = #tpu.dot_dimension_numbers<[1], [0], [0], [1], [0, 0, 1, 1], [], []>} : vector<16x16xf32>, vector<16x128xf32>, vector<16x128xf32> -> vector<16x128xf32>
    %c0_4 = arith.constant 0 : index
    %c0_5 = arith.constant 0 : index
    %10 = vector.load %arg3[%c0_4, %c0_5] : memref<1x128xf32, #tpu.memory_space<vmem>>, vector<1x128xf32>
    %11 = vector.broadcast %10 : vector<1x128xf32> to vector<16x128xf32>
    %12 = arith.addf %9, %11 : vector<16x128xf32>
    %c0_6 = arith.constant 0 : index
    %c0_7 = arith.constant 0 : index
    %13 = vector.load %arg4[%c0_6, %c0_7] : memref<16x128xf32, #tpu.memory_space<vmem>>, vector<16x128xf32>
    %cst_8 = arith.constant dense<0.000000e+00> : vector<16x128xf32>
    %14 = tpu.matmul %7, %13, %cst_8 {dimension_numbers = #tpu.dot_dimension_numbers<[1], [0], [0], [1], [0, 0, 1, 1], [], []>} : vector<16x16xf32>, vector<16x128xf32>, vector<16x128xf32> -> vector<16x128xf32>
    %c0_9 = arith.constant 0 : index
    %c0_10 = arith.constant 0 : index
    %15 = vector.load %arg6[%c0_9, %c0_10] : memref<1x128xf32, #tpu.memory_space<vmem>>, vector<1x128xf32>
    %16 = vector.broadcast %15 : vector<1x128xf32> to vector<16x128xf32>
    %17 = arith.addf %14, %16 : vector<16x128xf32>
    %c0_11 = arith.constant 0 : index
    %c0_12 = arith.constant 0 : index
    %18 = vector.load %arg2[%c0_11, %c0_12] : memref<32x128xf32, #tpu.memory_space<vmem>>, vector<32x128xf32>
    %c0_13 = arith.constant 0 : index
    %c0_14 = arith.constant 0 : index
    %19 = vector.load %arg5[%c0_13, %c0_14] : memref<32x128xf32, #tpu.memory_space<vmem>>, vector<32x128xf32>
    %20 = vector.extract_strided_slice %12 {offsets = [0, 0], sizes = [2, 128], strides = [1, 1]} : vector<16x128xf32> to vector<2x128xf32>
    %cst_15 = arith.constant dense<0.000000e+00> : vector<2x128xf32>
    %21 = tpu.matmul %6, %18, %cst_15 {dimension_numbers = #tpu.dot_dimension_numbers<[1], [0], [0], [1], [0, 0, 1, 1], [], []>} : vector<2x32xf32>, vector<32x128xf32>, vector<2x128xf32> -> vector<2x128xf32>
    %22 = arith.addf %20, %21 : vector<2x128xf32>
    %23 = vector.extract_strided_slice %17 {offsets = [14, 0], sizes = [2, 128], strides = [1, 1]} : vector<16x128xf32> to vector<2x128xf32>
    %cst_16 = arith.constant dense<0.000000e+00> : vector<2x128xf32>
    %24 = tpu.matmul %6, %19, %cst_16 {dimension_numbers = #tpu.dot_dimension_numbers<[1], [0], [0], [1], [0, 0, 1, 1], [], []>} : vector<2x32xf32>, vector<32x128xf32>, vector<2x128xf32> -> vector<2x128xf32>
    %25 = arith.addf %23, %24 : vector<2x128xf32>
    %26 = arith.negf %22 : vector<2x128xf32>
    %27 = math.exp %26 : vector<2x128xf32>
    %cst_17 = arith.constant 1.000000e+00 : f32
    %28 = vector.broadcast %cst_17 : f32 to vector<2x128xf32>
    %29 = arith.addf %28, %27 : vector<2x128xf32>
    %30 = arith.divf %28, %29 : vector<2x128xf32>
    %31 = math.tanh %22 : vector<2x128xf32>
    %32 = arith.select %5, %31, %30 : vector<2x128xi1>, vector<2x128xf32>
    %33 = vector.extract_strided_slice %32 {offsets = [0, 0], sizes = [2, 32], strides = [1, 1]} : vector<2x128xf32> to vector<2x32xf32>
    %34 = vector.extract_strided_slice %32 {offsets = [0, 32], sizes = [2, 32], strides = [1, 1]} : vector<2x128xf32> to vector<2x32xf32>
    %35 = vector.extract_strided_slice %32 {offsets = [0, 64], sizes = [2, 32], strides = [1, 1]} : vector<2x128xf32> to vector<2x32xf32>
    %36 = vector.extract_strided_slice %32 {offsets = [0, 96], sizes = [2, 32], strides = [1, 1]} : vector<2x128xf32> to vector<2x32xf32>
    %37 = arith.mulf %34, %6 : vector<2x32xf32>
    %38 = arith.mulf %33, %35 : vector<2x32xf32>
    %39 = arith.addf %37, %38 : vector<2x32xf32>
    %40 = math.tanh %39 : vector<2x32xf32>
    %41 = arith.mulf %36, %40 : vector<2x32xf32>
    %42 = arith.negf %25 : vector<2x128xf32>
    %43 = math.exp %42 : vector<2x128xf32>
    %cst_18 = arith.constant 1.000000e+00 : f32
    %44 = vector.broadcast %cst_18 : f32 to vector<2x128xf32>
    %45 = arith.addf %44, %43 : vector<2x128xf32>
    %46 = arith.divf %44, %45 : vector<2x128xf32>
    %47 = math.tanh %25 : vector<2x128xf32>
    %48 = arith.select %5, %47, %46 : vector<2x128xi1>, vector<2x128xf32>
    %49 = vector.extract_strided_slice %48 {offsets = [0, 0], sizes = [2, 32], strides = [1, 1]} : vector<2x128xf32> to vector<2x32xf32>
    %50 = vector.extract_strided_slice %48 {offsets = [0, 32], sizes = [2, 32], strides = [1, 1]} : vector<2x128xf32> to vector<2x32xf32>
    %51 = vector.extract_strided_slice %48 {offsets = [0, 64], sizes = [2, 32], strides = [1, 1]} : vector<2x128xf32> to vector<2x32xf32>
    %52 = vector.extract_strided_slice %48 {offsets = [0, 96], sizes = [2, 32], strides = [1, 1]} : vector<2x128xf32> to vector<2x32xf32>
    %53 = arith.mulf %50, %6 : vector<2x32xf32>
    %54 = arith.mulf %49, %51 : vector<2x32xf32>
    %55 = arith.addf %53, %54 : vector<2x32xf32>
    %56 = math.tanh %55 : vector<2x32xf32>
    %57 = arith.mulf %52, %56 : vector<2x32xf32>
    %c0_19 = arith.constant 0 : index
    %c0_20 = arith.constant 0 : index
    %58 = vector.load %arg28[%c0_19, %c0_20] : memref<16x64xf32, #tpu.memory_space<vmem>>, vector<2x32xf32>
    tpu.vector_store %arg28[%c0_19, %c0_20], %41 {strides = array<i32>} : memref<16x64xf32, #tpu.memory_space<vmem>>, vector<2x32xf32>,
    %c14 = arith.constant 14 : index
    %c32 = arith.constant 32 : index
    %59 = vector.load %arg28[%c14, %c32] : memref<16x64xf32, #tpu.memory_space<vmem>>, vector<2x32xf32>
    tpu.vector_store %arg28[%c14, %c32], %57 {strides = array<i32>} : memref<16x64xf32, #tpu.memory_space<vmem>>, vector<2x32xf32>,
    %60 = vector.extract_strided_slice %12 {offsets = [2, 0], sizes = [2, 128], strides = [1, 1]} : vector<16x128xf32> to vector<2x128xf32>
    %cst_21 = arith.constant dense<0.000000e+00> : vector<2x128xf32>
    %61 = tpu.matmul %41, %18, %cst_21 {dimension_numbers = #tpu.dot_dimension_numbers<[1], [0], [0], [1], [0, 0, 1, 1], [], []>} : vector<2x32xf32>, vector<32x128xf32>, vector<2x128xf32> -> vector<2x128xf32>
    %62 = arith.addf %60, %61 : vector<2x128xf32>
    %63 = vector.extract_strided_slice %17 {offsets = [12, 0], sizes = [2, 128], strides = [1, 1]} : vector<16x128xf32> to vector<2x128xf32>
    %cst_22 = arith.constant dense<0.000000e+00> : vector<2x128xf32>
    %64 = tpu.matmul %57, %19, %cst_22 {dimension_numbers = #tpu.dot_dimension_numbers<[1], [0], [0], [1], [0, 0, 1, 1], [], []>} : vector<2x32xf32>, vector<32x128xf32>, vector<2x128xf32> -> vector<2x128xf32>
    %65 = arith.addf %63, %64 : vector<2x128xf32>
    %66 = arith.negf %62 : vector<2x128xf32>
    %67 = math.exp %66 : vector<2x128xf32>
    %cst_23 = arith.constant 1.000000e+00 : f32
    %68 = vector.broadcast %cst_23 : f32 to vector<2x128xf32>
    %69 = arith.addf %68, %67 : vector<2x128xf32>
    %70 = arith.divf %68, %69 : vector<2x128xf32>
    %71 = math.tanh %62 : vector<2x128xf32>
    %72 = arith.select %5, %71, %70 : vector<2x128xi1>, vector<2x128xf32>
    %73 = vector.extract_strided_slice %72 {offsets = [0, 0], sizes = [2, 32], strides = [1, 1]} : vector<2x128xf32> to vector<2x32xf32>
    %74 = vector.extract_strided_slice %72 {offsets = [0, 32], sizes = [2, 32], strides = [1, 1]} : vector<2x128xf32> to vector<2x32xf32>
    %75 = vector.extract_strided_slice %72 {offsets = [0, 64], sizes = [2, 32], strides = [1, 1]} : vector<2x128xf32> to vector<2x32xf32>
    %76 = vector.extract_strided_slice %72 {offsets = [0, 96], sizes = [2, 32], strides = [1, 1]} : vector<2x128xf32> to vector<2x32xf32>
    %77 = arith.mulf %74, %39 : vector<2x32xf32>
    %78 = arith.mulf %73, %75 : vector<2x32xf32>
    %79 = arith.addf %77, %78 : vector<2x32xf32>
    %80 = math.tanh %79 : vector<2x32xf32>
    %81 = arith.mulf %76, %80 : vector<2x32xf32>
    %82 = arith.negf %65 : vector<2x128xf32>
    %83 = math.exp %82 : vector<2x128xf32>
    %cst_24 = arith.constant 1.000000e+00 : f32
    %84 = vector.broadcast %cst_24 : f32 to vector<2x128xf32>
    %85 = arith.addf %84, %83 : vector<2x128xf32>
    %86 = arith.divf %84, %85 : vector<2x128xf32>
    %87 = math.tanh %65 : vector<2x128xf32>
    %88 = arith.select %5, %87, %86 : vector<2x128xi1>, vector<2x128xf32>
    %89 = vector.extract_strided_slice %88 {offsets = [0, 0], sizes = [2, 32], strides = [1, 1]} : vector<2x128xf32> to vector<2x32xf32>
    %90 = vector.extract_strided_slice %88 {offsets = [0, 32], sizes = [2, 32], strides = [1, 1]} : vector<2x128xf32> to vector<2x32xf32>
    %91 = vector.extract_strided_slice %88 {offsets = [0, 64], sizes = [2, 32], strides = [1, 1]} : vector<2x128xf32> to vector<2x32xf32>
    %92 = vector.extract_strided_slice %88 {offsets = [0, 96], sizes = [2, 32], strides = [1, 1]} : vector<2x128xf32> to vector<2x32xf32>
    %93 = arith.mulf %90, %55 : vector<2x32xf32>
    %94 = arith.mulf %89, %91 : vector<2x32xf32>
    %95 = arith.addf %93, %94 : vector<2x32xf32>
    %96 = math.tanh %95 : vector<2x32xf32>
    %97 = arith.mulf %92, %96 : vector<2x32xf32>
    %c2 = arith.constant 2 : index
    %c0_25 = arith.constant 0 : index
    %98 = vector.load %arg28[%c2, %c0_25] : memref<16x64xf32, #tpu.memory_space<vmem>>, vector<2x32xf32>
    tpu.vector_store %arg28[%c2, %c0_25], %81 {strides = array<i32>} : memref<16x64xf32, #tpu.memory_space<vmem>>, vector<2x32xf32>,
    %c12 = arith.constant 12 : index
    %c32_26 = arith.constant 32 : index
    %99 = vector.load %arg28[%c12, %c32_26] : memref<16x64xf32, #tpu.memory_space<vmem>>, vector<2x32xf32>
    tpu.vector_store %arg28[%c12, %c32_26], %97 {strides = array<i32>} : memref<16x64xf32, #tpu.memory_space<vmem>>, vector<2x32xf32>,
    %100 = vector.extract_strided_slice %12 {offsets = [4, 0], sizes = [2, 128], strides = [1, 1]} : vector<16x128xf32> to vector<2x128xf32>
    %cst_27 = arith.constant dense<0.000000e+00> : vector<2x128xf32>
    %101 = tpu.matmul %81, %18, %cst_27 {dimension_numbers = #tpu.dot_dimension_numbers<[1], [0], [0], [1], [0, 0, 1, 1], [], []>} : vector<2x32xf32>, vector<32x128xf32>, vector<2x128xf32> -> vector<2x128xf32>
    %102 = arith.addf %100, %101 : vector<2x128xf32>
    %103 = vector.extract_strided_slice %17 {offsets = [10, 0], sizes = [2, 128], strides = [1, 1]} : vector<16x128xf32> to vector<2x128xf32>
    %cst_28 = arith.constant dense<0.000000e+00> : vector<2x128xf32>
    %104 = tpu.matmul %97, %19, %cst_28 {dimension_numbers = #tpu.dot_dimension_numbers<[1], [0], [0], [1], [0, 0, 1, 1], [], []>} : vector<2x32xf32>, vector<32x128xf32>, vector<2x128xf32> -> vector<2x128xf32>
    %105 = arith.addf %103, %104 : vector<2x128xf32>
    %106 = arith.negf %102 : vector<2x128xf32>
    %107 = math.exp %106 : vector<2x128xf32>
    %cst_29 = arith.constant 1.000000e+00 : f32
    %108 = vector.broadcast %cst_29 : f32 to vector<2x128xf32>
    %109 = arith.addf %108, %107 : vector<2x128xf32>
    %110 = arith.divf %108, %109 : vector<2x128xf32>
    %111 = math.tanh %102 : vector<2x128xf32>
    %112 = arith.select %5, %111, %110 : vector<2x128xi1>, vector<2x128xf32>
    %113 = vector.extract_strided_slice %112 {offsets = [0, 0], sizes = [2, 32], strides = [1, 1]} : vector<2x128xf32> to vector<2x32xf32>
    %114 = vector.extract_strided_slice %112 {offsets = [0, 32], sizes = [2, 32], strides = [1, 1]} : vector<2x128xf32> to vector<2x32xf32>
    %115 = vector.extract_strided_slice %112 {offsets = [0, 64], sizes = [2, 32], strides = [1, 1]} : vector<2x128xf32> to vector<2x32xf32>
    %116 = vector.extract_strided_slice %112 {offsets = [0, 96], sizes = [2, 32], strides = [1, 1]} : vector<2x128xf32> to vector<2x32xf32>
    %117 = arith.mulf %114, %79 : vector<2x32xf32>
    %118 = arith.mulf %113, %115 : vector<2x32xf32>
    %119 = arith.addf %117, %118 : vector<2x32xf32>
    %120 = math.tanh %119 : vector<2x32xf32>
    %121 = arith.mulf %116, %120 : vector<2x32xf32>
    %122 = arith.negf %105 : vector<2x128xf32>
    %123 = math.exp %122 : vector<2x128xf32>
    %cst_30 = arith.constant 1.000000e+00 : f32
    %124 = vector.broadcast %cst_30 : f32 to vector<2x128xf32>
    %125 = arith.addf %124, %123 : vector<2x128xf32>
    %126 = arith.divf %124, %125 : vector<2x128xf32>
    %127 = math.tanh %105 : vector<2x128xf32>
    %128 = arith.select %5, %127, %126 : vector<2x128xi1>, vector<2x128xf32>
    %129 = vector.extract_strided_slice %128 {offsets = [0, 0], sizes = [2, 32], strides = [1, 1]} : vector<2x128xf32> to vector<2x32xf32>
    %130 = vector.extract_strided_slice %128 {offsets = [0, 32], sizes = [2, 32], strides = [1, 1]} : vector<2x128xf32> to vector<2x32xf32>
    %131 = vector.extract_strided_slice %128 {offsets = [0, 64], sizes = [2, 32], strides = [1, 1]} : vector<2x128xf32> to vector<2x32xf32>
    %132 = vector.extract_strided_slice %128 {offsets = [0, 96], sizes = [2, 32], strides = [1, 1]} : vector<2x128xf32> to vector<2x32xf32>
    %133 = arith.mulf %130, %95 : vector<2x32xf32>
    %134 = arith.mulf %129, %131 : vector<2x32xf32>
    %135 = arith.addf %133, %134 : vector<2x32xf32>
    %136 = math.tanh %135 : vector<2x32xf32>
    %137 = arith.mulf %132, %136 : vector<2x32xf32>
    %c4 = arith.constant 4 : index
    %c0_31 = arith.constant 0 : index
    %138 = vector.load %arg28[%c4, %c0_31] : memref<16x64xf32, #tpu.memory_space<vmem>>, vector<2x32xf32>
    tpu.vector_store %arg28[%c4, %c0_31], %121 {strides = array<i32>} : memref<16x64xf32, #tpu.memory_space<vmem>>, vector<2x32xf32>,
    %c10 = arith.constant 10 : index
    %c32_32 = arith.constant 32 : index
    %139 = vector.load %arg28[%c10, %c32_32] : memref<16x64xf32, #tpu.memory_space<vmem>>, vector<2x32xf32>
    tpu.vector_store %arg28[%c10, %c32_32], %137 {strides = array<i32>} : memref<16x64xf32, #tpu.memory_space<vmem>>, vector<2x32xf32>,
    %140 = vector.extract_strided_slice %12 {offsets = [6, 0], sizes = [2, 128], strides = [1, 1]} : vector<16x128xf32> to vector<2x128xf32>
    %cst_33 = arith.constant dense<0.000000e+00> : vector<2x128xf32>
    %141 = tpu.matmul %121, %18, %cst_33 {dimension_numbers = #tpu.dot_dimension_numbers<[1], [0], [0], [1], [0, 0, 1, 1], [], []>} : vector<2x32xf32>, vector<32x128xf32>, vector<2x128xf32> -> vector<2x128xf32>
    %142 = arith.addf %140, %141 : vector<2x128xf32>
    %143 = vector.extract_strided_slice %17 {offsets = [8, 0], sizes = [2, 128], strides = [1, 1]} : vector<16x128xf32> to vector<2x128xf32>
    %cst_34 = arith.constant dense<0.000000e+00> : vector<2x128xf32>
    %144 = tpu.matmul %137, %19, %cst_34 {dimension_numbers = #tpu.dot_dimension_numbers<[1], [0], [0], [1], [0, 0, 1, 1], [], []>} : vector<2x32xf32>, vector<32x128xf32>, vector<2x128xf32> -> vector<2x128xf32>
    %145 = arith.addf %143, %144 : vector<2x128xf32>
    %146 = arith.negf %142 : vector<2x128xf32>
    %147 = math.exp %146 : vector<2x128xf32>
    %cst_35 = arith.constant 1.000000e+00 : f32
    %148 = vector.broadcast %cst_35 : f32 to vector<2x128xf32>
    %149 = arith.addf %148, %147 : vector<2x128xf32>
    %150 = arith.divf %148, %149 : vector<2x128xf32>
    %151 = math.tanh %142 : vector<2x128xf32>
    %152 = arith.select %5, %151, %150 : vector<2x128xi1>, vector<2x128xf32>
    %153 = vector.extract_strided_slice %152 {offsets = [0, 0], sizes = [2, 32], strides = [1, 1]} : vector<2x128xf32> to vector<2x32xf32>
    %154 = vector.extract_strided_slice %152 {offsets = [0, 32], sizes = [2, 32], strides = [1, 1]} : vector<2x128xf32> to vector<2x32xf32>
    %155 = vector.extract_strided_slice %152 {offsets = [0, 64], sizes = [2, 32], strides = [1, 1]} : vector<2x128xf32> to vector<2x32xf32>
    %156 = vector.extract_strided_slice %152 {offsets = [0, 96], sizes = [2, 32], strides = [1, 1]} : vector<2x128xf32> to vector<2x32xf32>
    %157 = arith.mulf %154, %119 : vector<2x32xf32>
    %158 = arith.mulf %153, %155 : vector<2x32xf32>
    %159 = arith.addf %157, %158 : vector<2x32xf32>
    %160 = math.tanh %159 : vector<2x32xf32>
    %161 = arith.mulf %156, %160 : vector<2x32xf32>
    %162 = arith.negf %145 : vector<2x128xf32>
    %163 = math.exp %162 : vector<2x128xf32>
    %cst_36 = arith.constant 1.000000e+00 : f32
    %164 = vector.broadcast %cst_36 : f32 to vector<2x128xf32>
    %165 = arith.addf %164, %163 : vector<2x128xf32>
    %166 = arith.divf %164, %165 : vector<2x128xf32>
    %167 = math.tanh %145 : vector<2x128xf32>
    %168 = arith.select %5, %167, %166 : vector<2x128xi1>, vector<2x128xf32>
    %169 = vector.extract_strided_slice %168 {offsets = [0, 0], sizes = [2, 32], strides = [1, 1]} : vector<2x128xf32> to vector<2x32xf32>
    %170 = vector.extract_strided_slice %168 {offsets = [0, 32], sizes = [2, 32], strides = [1, 1]} : vector<2x128xf32> to vector<2x32xf32>
    %171 = vector.extract_strided_slice %168 {offsets = [0, 64], sizes = [2, 32], strides = [1, 1]} : vector<2x128xf32> to vector<2x32xf32>
    %172 = vector.extract_strided_slice %168 {offsets = [0, 96], sizes = [2, 32], strides = [1, 1]} : vector<2x128xf32> to vector<2x32xf32>
    %173 = arith.mulf %170, %135 : vector<2x32xf32>
    %174 = arith.mulf %169, %171 : vector<2x32xf32>
    %175 = arith.addf %173, %174 : vector<2x32xf32>
    %176 = math.tanh %175 : vector<2x32xf32>
    %177 = arith.mulf %172, %176 : vector<2x32xf32>
    %c6 = arith.constant 6 : index
    %c0_37 = arith.constant 0 : index
    %178 = vector.load %arg28[%c6, %c0_37] : memref<16x64xf32, #tpu.memory_space<vmem>>, vector<2x32xf32>
    tpu.vector_store %arg28[%c6, %c0_37], %161 {strides = array<i32>} : memref<16x64xf32, #tpu.memory_space<vmem>>, vector<2x32xf32>,
    %c8 = arith.constant 8 : index
    %c32_38 = arith.constant 32 : index
    %179 = vector.load %arg28[%c8, %c32_38] : memref<16x64xf32, #tpu.memory_space<vmem>>, vector<2x32xf32>
    tpu.vector_store %arg28[%c8, %c32_38], %177 {strides = array<i32>} : memref<16x64xf32, #tpu.memory_space<vmem>>, vector<2x32xf32>,
    %180 = vector.extract_strided_slice %12 {offsets = [8, 0], sizes = [2, 128], strides = [1, 1]} : vector<16x128xf32> to vector<2x128xf32>
    %cst_39 = arith.constant dense<0.000000e+00> : vector<2x128xf32>
    %181 = tpu.matmul %161, %18, %cst_39 {dimension_numbers = #tpu.dot_dimension_numbers<[1], [0], [0], [1], [0, 0, 1, 1], [], []>} : vector<2x32xf32>, vector<32x128xf32>, vector<2x128xf32> -> vector<2x128xf32>
    %182 = arith.addf %180, %181 : vector<2x128xf32>
    %183 = vector.extract_strided_slice %17 {offsets = [6, 0], sizes = [2, 128], strides = [1, 1]} : vector<16x128xf32> to vector<2x128xf32>
    %cst_40 = arith.constant dense<0.000000e+00> : vector<2x128xf32>
    %184 = tpu.matmul %177, %19, %cst_40 {dimension_numbers = #tpu.dot_dimension_numbers<[1], [0], [0], [1], [0, 0, 1, 1], [], []>} : vector<2x32xf32>, vector<32x128xf32>, vector<2x128xf32> -> vector<2x128xf32>
    %185 = arith.addf %183, %184 : vector<2x128xf32>
    %186 = arith.negf %182 : vector<2x128xf32>
    %187 = math.exp %186 : vector<2x128xf32>
    %cst_41 = arith.constant 1.000000e+00 : f32
    %188 = vector.broadcast %cst_41 : f32 to vector<2x128xf32>
    %189 = arith.addf %188, %187 : vector<2x128xf32>
    %190 = arith.divf %188, %189 : vector<2x128xf32>
    %191 = math.tanh %182 : vector<2x128xf32>
    %192 = arith.select %5, %191, %190 : vector<2x128xi1>, vector<2x128xf32>
    %193 = vector.extract_strided_slice %192 {offsets = [0, 0], sizes = [2, 32], strides = [1, 1]} : vector<2x128xf32> to vector<2x32xf32>
    %194 = vector.extract_strided_slice %192 {offsets = [0, 32], sizes = [2, 32], strides = [1, 1]} : vector<2x128xf32> to vector<2x32xf32>
    %195 = vector.extract_strided_slice %192 {offsets = [0, 64], sizes = [2, 32], strides = [1, 1]} : vector<2x128xf32> to vector<2x32xf32>
    %196 = vector.extract_strided_slice %192 {offsets = [0, 96], sizes = [2, 32], strides = [1, 1]} : vector<2x128xf32> to vector<2x32xf32>
    %197 = arith.mulf %194, %159 : vector<2x32xf32>
    %198 = arith.mulf %193, %195 : vector<2x32xf32>
    %199 = arith.addf %197, %198 : vector<2x32xf32>
    %200 = math.tanh %199 : vector<2x32xf32>
    %201 = arith.mulf %196, %200 : vector<2x32xf32>
    %202 = arith.negf %185 : vector<2x128xf32>
    %203 = math.exp %202 : vector<2x128xf32>
    %cst_42 = arith.constant 1.000000e+00 : f32
    %204 = vector.broadcast %cst_42 : f32 to vector<2x128xf32>
    %205 = arith.addf %204, %203 : vector<2x128xf32>
    %206 = arith.divf %204, %205 : vector<2x128xf32>
    %207 = math.tanh %185 : vector<2x128xf32>
    %208 = arith.select %5, %207, %206 : vector<2x128xi1>, vector<2x128xf32>
    %209 = vector.extract_strided_slice %208 {offsets = [0, 0], sizes = [2, 32], strides = [1, 1]} : vector<2x128xf32> to vector<2x32xf32>
    %210 = vector.extract_strided_slice %208 {offsets = [0, 32], sizes = [2, 32], strides = [1, 1]} : vector<2x128xf32> to vector<2x32xf32>
    %211 = vector.extract_strided_slice %208 {offsets = [0, 64], sizes = [2, 32], strides = [1, 1]} : vector<2x128xf32> to vector<2x32xf32>
    %212 = vector.extract_strided_slice %208 {offsets = [0, 96], sizes = [2, 32], strides = [1, 1]} : vector<2x128xf32> to vector<2x32xf32>
    %213 = arith.mulf %210, %175 : vector<2x32xf32>
    %214 = arith.mulf %209, %211 : vector<2x32xf32>
    %215 = arith.addf %213, %214 : vector<2x32xf32>
    %216 = math.tanh %215 : vector<2x32xf32>
    %217 = arith.mulf %212, %216 : vector<2x32xf32>
    %c8_43 = arith.constant 8 : index
    %c0_44 = arith.constant 0 : index
    %218 = vector.load %arg28[%c8_43, %c0_44] : memref<16x64xf32, #tpu.memory_space<vmem>>, vector<2x32xf32>
    tpu.vector_store %arg28[%c8_43, %c0_44], %201 {strides = array<i32>} : memref<16x64xf32, #tpu.memory_space<vmem>>, vector<2x32xf32>,
    %c6_45 = arith.constant 6 : index
    %c32_46 = arith.constant 32 : index
    %219 = vector.load %arg28[%c6_45, %c32_46] : memref<16x64xf32, #tpu.memory_space<vmem>>, vector<2x32xf32>
    tpu.vector_store %arg28[%c6_45, %c32_46], %217 {strides = array<i32>} : memref<16x64xf32, #tpu.memory_space<vmem>>, vector<2x32xf32>,
    %220 = vector.extract_strided_slice %12 {offsets = [10, 0], sizes = [2, 128], strides = [1, 1]} : vector<16x128xf32> to vector<2x128xf32>
    %cst_47 = arith.constant dense<0.000000e+00> : vector<2x128xf32>
    %221 = tpu.matmul %201, %18, %cst_47 {dimension_numbers = #tpu.dot_dimension_numbers<[1], [0], [0], [1], [0, 0, 1, 1], [], []>} : vector<2x32xf32>, vector<32x128xf32>, vector<2x128xf32> -> vector<2x128xf32>
    %222 = arith.addf %220, %221 : vector<2x128xf32>
    %223 = vector.extract_strided_slice %17 {offsets = [4, 0], sizes = [2, 128], strides = [1, 1]} : vector<16x128xf32> to vector<2x128xf32>
    %cst_48 = arith.constant dense<0.000000e+00> : vector<2x128xf32>
    %224 = tpu.matmul %217, %19, %cst_48 {dimension_numbers = #tpu.dot_dimension_numbers<[1], [0], [0], [1], [0, 0, 1, 1], [], []>} : vector<2x32xf32>, vector<32x128xf32>, vector<2x128xf32> -> vector<2x128xf32>
    %225 = arith.addf %223, %224 : vector<2x128xf32>
    %226 = arith.negf %222 : vector<2x128xf32>
    %227 = math.exp %226 : vector<2x128xf32>
    %cst_49 = arith.constant 1.000000e+00 : f32
    %228 = vector.broadcast %cst_49 : f32 to vector<2x128xf32>
    %229 = arith.addf %228, %227 : vector<2x128xf32>
    %230 = arith.divf %228, %229 : vector<2x128xf32>
    %231 = math.tanh %222 : vector<2x128xf32>
    %232 = arith.select %5, %231, %230 : vector<2x128xi1>, vector<2x128xf32>
    %233 = vector.extract_strided_slice %232 {offsets = [0, 0], sizes = [2, 32], strides = [1, 1]} : vector<2x128xf32> to vector<2x32xf32>
    %234 = vector.extract_strided_slice %232 {offsets = [0, 32], sizes = [2, 32], strides = [1, 1]} : vector<2x128xf32> to vector<2x32xf32>
    %235 = vector.extract_strided_slice %232 {offsets = [0, 64], sizes = [2, 32], strides = [1, 1]} : vector<2x128xf32> to vector<2x32xf32>
    %236 = vector.extract_strided_slice %232 {offsets = [0, 96], sizes = [2, 32], strides = [1, 1]} : vector<2x128xf32> to vector<2x32xf32>
    %237 = arith.mulf %234, %199 : vector<2x32xf32>
    %238 = arith.mulf %233, %235 : vector<2x32xf32>
    %239 = arith.addf %237, %238 : vector<2x32xf32>
    %240 = math.tanh %239 : vector<2x32xf32>
    %241 = arith.mulf %236, %240 : vector<2x32xf32>
    %242 = arith.negf %225 : vector<2x128xf32>
    %243 = math.exp %242 : vector<2x128xf32>
    %cst_50 = arith.constant 1.000000e+00 : f32
    %244 = vector.broadcast %cst_50 : f32 to vector<2x128xf32>
    %245 = arith.addf %244, %243 : vector<2x128xf32>
    %246 = arith.divf %244, %245 : vector<2x128xf32>
    %247 = math.tanh %225 : vector<2x128xf32>
    %248 = arith.select %5, %247, %246 : vector<2x128xi1>, vector<2x128xf32>
    %249 = vector.extract_strided_slice %248 {offsets = [0, 0], sizes = [2, 32], strides = [1, 1]} : vector<2x128xf32> to vector<2x32xf32>
    %250 = vector.extract_strided_slice %248 {offsets = [0, 32], sizes = [2, 32], strides = [1, 1]} : vector<2x128xf32> to vector<2x32xf32>
    %251 = vector.extract_strided_slice %248 {offsets = [0, 64], sizes = [2, 32], strides = [1, 1]} : vector<2x128xf32> to vector<2x32xf32>
    %252 = vector.extract_strided_slice %248 {offsets = [0, 96], sizes = [2, 32], strides = [1, 1]} : vector<2x128xf32> to vector<2x32xf32>
    %253 = arith.mulf %250, %215 : vector<2x32xf32>
    %254 = arith.mulf %249, %251 : vector<2x32xf32>
    %255 = arith.addf %253, %254 : vector<2x32xf32>
    %256 = math.tanh %255 : vector<2x32xf32>
    %257 = arith.mulf %252, %256 : vector<2x32xf32>
    %c10_51 = arith.constant 10 : index
    %c0_52 = arith.constant 0 : index
    %258 = vector.load %arg28[%c10_51, %c0_52] : memref<16x64xf32, #tpu.memory_space<vmem>>, vector<2x32xf32>
    tpu.vector_store %arg28[%c10_51, %c0_52], %241 {strides = array<i32>} : memref<16x64xf32, #tpu.memory_space<vmem>>, vector<2x32xf32>,
    %c4_53 = arith.constant 4 : index
    %c32_54 = arith.constant 32 : index
    %259 = vector.load %arg28[%c4_53, %c32_54] : memref<16x64xf32, #tpu.memory_space<vmem>>, vector<2x32xf32>
    tpu.vector_store %arg28[%c4_53, %c32_54], %257 {strides = array<i32>} : memref<16x64xf32, #tpu.memory_space<vmem>>, vector<2x32xf32>,
    %260 = vector.extract_strided_slice %12 {offsets = [12, 0], sizes = [2, 128], strides = [1, 1]} : vector<16x128xf32> to vector<2x128xf32>
    %cst_55 = arith.constant dense<0.000000e+00> : vector<2x128xf32>
    %261 = tpu.matmul %241, %18, %cst_55 {dimension_numbers = #tpu.dot_dimension_numbers<[1], [0], [0], [1], [0, 0, 1, 1], [], []>} : vector<2x32xf32>, vector<32x128xf32>, vector<2x128xf32> -> vector<2x128xf32>
    %262 = arith.addf %260, %261 : vector<2x128xf32>
    %263 = vector.extract_strided_slice %17 {offsets = [2, 0], sizes = [2, 128], strides = [1, 1]} : vector<16x128xf32> to vector<2x128xf32>
    %cst_56 = arith.constant dense<0.000000e+00> : vector<2x128xf32>
    %264 = tpu.matmul %257, %19, %cst_56 {dimension_numbers = #tpu.dot_dimension_numbers<[1], [0], [0], [1], [0, 0, 1, 1], [], []>} : vector<2x32xf32>, vector<32x128xf32>, vector<2x128xf32> -> vector<2x128xf32>
    %265 = arith.addf %263, %264 : vector<2x128xf32>
    %266 = arith.negf %262 : vector<2x128xf32>
    %267 = math.exp %266 : vector<2x128xf32>
    %cst_57 = arith.constant 1.000000e+00 : f32
    %268 = vector.broadcast %cst_57 : f32 to vector<2x128xf32>
    %269 = arith.addf %268, %267 : vector<2x128xf32>
    %270 = arith.divf %268, %269 : vector<2x128xf32>
    %271 = math.tanh %262 : vector<2x128xf32>
    %272 = arith.select %5, %271, %270 : vector<2x128xi1>, vector<2x128xf32>
    %273 = vector.extract_strided_slice %272 {offsets = [0, 0], sizes = [2, 32], strides = [1, 1]} : vector<2x128xf32> to vector<2x32xf32>
    %274 = vector.extract_strided_slice %272 {offsets = [0, 32], sizes = [2, 32], strides = [1, 1]} : vector<2x128xf32> to vector<2x32xf32>
    %275 = vector.extract_strided_slice %272 {offsets = [0, 64], sizes = [2, 32], strides = [1, 1]} : vector<2x128xf32> to vector<2x32xf32>
    %276 = vector.extract_strided_slice %272 {offsets = [0, 96], sizes = [2, 32], strides = [1, 1]} : vector<2x128xf32> to vector<2x32xf32>
    %277 = arith.mulf %274, %239 : vector<2x32xf32>
    %278 = arith.mulf %273, %275 : vector<2x32xf32>
    %279 = arith.addf %277, %278 : vector<2x32xf32>
    %280 = math.tanh %279 : vector<2x32xf32>
    %281 = arith.mulf %276, %280 : vector<2x32xf32>
    %282 = arith.negf %265 : vector<2x128xf32>
    %283 = math.exp %282 : vector<2x128xf32>
    %cst_58 = arith.constant 1.000000e+00 : f32
    %284 = vector.broadcast %cst_58 : f32 to vector<2x128xf32>
    %285 = arith.addf %284, %283 : vector<2x128xf32>
    %286 = arith.divf %284, %285 : vector<2x128xf32>
    %287 = math.tanh %265 : vector<2x128xf32>
    %288 = arith.select %5, %287, %286 : vector<2x128xi1>, vector<2x128xf32>
    %289 = vector.extract_strided_slice %288 {offsets = [0, 0], sizes = [2, 32], strides = [1, 1]} : vector<2x128xf32> to vector<2x32xf32>
    %290 = vector.extract_strided_slice %288 {offsets = [0, 32], sizes = [2, 32], strides = [1, 1]} : vector<2x128xf32> to vector<2x32xf32>
    %291 = vector.extract_strided_slice %288 {offsets = [0, 64], sizes = [2, 32], strides = [1, 1]} : vector<2x128xf32> to vector<2x32xf32>
    %292 = vector.extract_strided_slice %288 {offsets = [0, 96], sizes = [2, 32], strides = [1, 1]} : vector<2x128xf32> to vector<2x32xf32>
    %293 = arith.mulf %290, %255 : vector<2x32xf32>
    %294 = arith.mulf %289, %291 : vector<2x32xf32>
    %295 = arith.addf %293, %294 : vector<2x32xf32>
    %296 = math.tanh %295 : vector<2x32xf32>
    %297 = arith.mulf %292, %296 : vector<2x32xf32>
    %c12_59 = arith.constant 12 : index
    %c0_60 = arith.constant 0 : index
    %298 = vector.load %arg28[%c12_59, %c0_60] : memref<16x64xf32, #tpu.memory_space<vmem>>, vector<2x32xf32>
    tpu.vector_store %arg28[%c12_59, %c0_60], %281 {strides = array<i32>} : memref<16x64xf32, #tpu.memory_space<vmem>>, vector<2x32xf32>,
    %c2_61 = arith.constant 2 : index
    %c32_62 = arith.constant 32 : index
    %299 = vector.load %arg28[%c2_61, %c32_62] : memref<16x64xf32, #tpu.memory_space<vmem>>, vector<2x32xf32>
    tpu.vector_store %arg28[%c2_61, %c32_62], %297 {strides = array<i32>} : memref<16x64xf32, #tpu.memory_space<vmem>>, vector<2x32xf32>,
    %300 = vector.extract_strided_slice %12 {offsets = [14, 0], sizes = [2, 128], strides = [1, 1]} : vector<16x128xf32> to vector<2x128xf32>
    %cst_63 = arith.constant dense<0.000000e+00> : vector<2x128xf32>
    %301 = tpu.matmul %281, %18, %cst_63 {dimension_numbers = #tpu.dot_dimension_numbers<[1], [0], [0], [1], [0, 0, 1, 1], [], []>} : vector<2x32xf32>, vector<32x128xf32>, vector<2x128xf32> -> vector<2x128xf32>
    %302 = arith.addf %300, %301 : vector<2x128xf32>
    %303 = vector.extract_strided_slice %17 {offsets = [0, 0], sizes = [2, 128], strides = [1, 1]} : vector<16x128xf32> to vector<2x128xf32>
    %cst_64 = arith.constant dense<0.000000e+00> : vector<2x128xf32>
    %304 = tpu.matmul %297, %19, %cst_64 {dimension_numbers = #tpu.dot_dimension_numbers<[1], [0], [0], [1], [0, 0, 1, 1], [], []>} : vector<2x32xf32>, vector<32x128xf32>, vector<2x128xf32> -> vector<2x128xf32>
    %305 = arith.addf %303, %304 : vector<2x128xf32>
    %306 = arith.negf %302 : vector<2x128xf32>
    %307 = math.exp %306 : vector<2x128xf32>
    %cst_65 = arith.constant 1.000000e+00 : f32
    %308 = vector.broadcast %cst_65 : f32 to vector<2x128xf32>
    %309 = arith.addf %308, %307 : vector<2x128xf32>
    %310 = arith.divf %308, %309 : vector<2x128xf32>
    %311 = math.tanh %302 : vector<2x128xf32>
    %312 = arith.select %5, %311, %310 : vector<2x128xi1>, vector<2x128xf32>
    %313 = vector.extract_strided_slice %312 {offsets = [0, 0], sizes = [2, 32], strides = [1, 1]} : vector<2x128xf32> to vector<2x32xf32>
    %314 = vector.extract_strided_slice %312 {offsets = [0, 32], sizes = [2, 32], strides = [1, 1]} : vector<2x128xf32> to vector<2x32xf32>
    %315 = vector.extract_strided_slice %312 {offsets = [0, 64], sizes = [2, 32], strides = [1, 1]} : vector<2x128xf32> to vector<2x32xf32>
    %316 = vector.extract_strided_slice %312 {offsets = [0, 96], sizes = [2, 32], strides = [1, 1]} : vector<2x128xf32> to vector<2x32xf32>
    %317 = arith.mulf %314, %279 : vector<2x32xf32>
    %318 = arith.mulf %313, %315 : vector<2x32xf32>
    %319 = arith.addf %317, %318 : vector<2x32xf32>
    %320 = math.tanh %319 : vector<2x32xf32>
    %321 = arith.mulf %316, %320 : vector<2x32xf32>
    %322 = arith.negf %305 : vector<2x128xf32>
    %323 = math.exp %322 : vector<2x128xf32>
    %cst_66 = arith.constant 1.000000e+00 : f32
    %324 = vector.broadcast %cst_66 : f32 to vector<2x128xf32>
    %325 = arith.addf %324, %323 : vector<2x128xf32>
    %326 = arith.divf %324, %325 : vector<2x128xf32>
    %327 = math.tanh %305 : vector<2x128xf32>
    %328 = arith.select %5, %327, %326 : vector<2x128xi1>, vector<2x128xf32>
    %329 = vector.extract_strided_slice %328 {offsets = [0, 0], sizes = [2, 32], strides = [1, 1]} : vector<2x128xf32> to vector<2x32xf32>
    %330 = vector.extract_strided_slice %328 {offsets = [0, 32], sizes = [2, 32], strides = [1, 1]} : vector<2x128xf32> to vector<2x32xf32>
    %331 = vector.extract_strided_slice %328 {offsets = [0, 64], sizes = [2, 32], strides = [1, 1]} : vector<2x128xf32> to vector<2x32xf32>
    %332 = vector.extract_strided_slice %328 {offsets = [0, 96], sizes = [2, 32], strides = [1, 1]} : vector<2x128xf32> to vector<2x32xf32>
    %333 = arith.mulf %330, %295 : vector<2x32xf32>
    %334 = arith.mulf %329, %331 : vector<2x32xf32>
    %335 = arith.addf %333, %334 : vector<2x32xf32>
    %336 = math.tanh %335 : vector<2x32xf32>
    %337 = arith.mulf %332, %336 : vector<2x32xf32>
    %c14_67 = arith.constant 14 : index
    %c0_68 = arith.constant 0 : index
    %338 = vector.load %arg28[%c14_67, %c0_68] : memref<16x64xf32, #tpu.memory_space<vmem>>, vector<2x32xf32>
    tpu.vector_store %arg28[%c14_67, %c0_68], %321 {strides = array<i32>} : memref<16x64xf32, #tpu.memory_space<vmem>>, vector<2x32xf32>,
    %c0_69 = arith.constant 0 : index
    %c32_70 = arith.constant 32 : index
    %339 = vector.load %arg28[%c0_69, %c32_70] : memref<16x64xf32, #tpu.memory_space<vmem>>, vector<2x32xf32>
    tpu.vector_store %arg28[%c0_69, %c32_70], %337 {strides = array<i32>} : memref<16x64xf32, #tpu.memory_space<vmem>>, vector<2x32xf32>,
    %c0_71 = arith.constant 0 : index
    %c0_72 = arith.constant 0 : index
    %340 = vector.load %arg28[%c0_71, %c0_72] : memref<16x64xf32, #tpu.memory_space<vmem>>, vector<16x64xf32>
    %c0_73 = arith.constant 0 : index
    %c0_74 = arith.constant 0 : index
    %341 = vector.load %arg7[%c0_73, %c0_74] : memref<64x128xf32, #tpu.memory_space<vmem>>, vector<64x128xf32>
    %cst_75 = arith.constant dense<0.000000e+00> : vector<16x128xf32>
    %342 = tpu.matmul %340, %341, %cst_75 {dimension_numbers = #tpu.dot_dimension_numbers<[1], [0], [0], [1], [0, 0, 1, 1], [], []>} : vector<16x64xf32>, vector<64x128xf32>, vector<16x128xf32> -> vector<16x128xf32>
    %c0_76 = arith.constant 0 : index
    %c0_77 = arith.constant 0 : index
    %343 = vector.load %arg9[%c0_76, %c0_77] : memref<1x128xf32, #tpu.memory_space<vmem>>, vector<1x128xf32>
    %344 = vector.broadcast %343 : vector<1x128xf32> to vector<16x128xf32>
    %345 = arith.addf %342, %344 : vector<16x128xf32>
    %c0_78 = arith.constant 0 : index
    %c0_79 = arith.constant 0 : index
    %346 = vector.load %arg10[%c0_78, %c0_79] : memref<64x128xf32, #tpu.memory_space<vmem>>, vector<64x128xf32>
    %cst_80 = arith.constant dense<0.000000e+00> : vector<16x128xf32>
    %347 = tpu.matmul %340, %346, %cst_80 {dimension_numbers = #tpu.dot_dimension_numbers<[1], [0], [0], [1], [0, 0, 1, 1], [], []>} : vector<16x64xf32>, vector<64x128xf32>, vector<16x128xf32> -> vector<16x128xf32>
    %c0_81 = arith.constant 0 : index
    %c0_82 = arith.constant 0 : index
    %348 = vector.load %arg12[%c0_81, %c0_82] : memref<1x128xf32, #tpu.memory_space<vmem>>, vector<1x128xf32>
    %349 = vector.broadcast %348 : vector<1x128xf32> to vector<16x128xf32>
    %350 = arith.addf %347, %349 : vector<16x128xf32>
    %c0_83 = arith.constant 0 : index
    %c0_84 = arith.constant 0 : index
    %351 = vector.load %arg8[%c0_83, %c0_84] : memref<32x128xf32, #tpu.memory_space<vmem>>, vector<32x128xf32>
    %c0_85 = arith.constant 0 : index
    %c0_86 = arith.constant 0 : index
    %352 = vector.load %arg11[%c0_85, %c0_86] : memref<32x128xf32, #tpu.memory_space<vmem>>, vector<32x128xf32>
    %353 = vector.extract_strided_slice %345 {offsets = [0, 0], sizes = [2, 128], strides = [1, 1]} : vector<16x128xf32> to vector<2x128xf32>
    %cst_87 = arith.constant dense<0.000000e+00> : vector<2x128xf32>
    %354 = tpu.matmul %6, %351, %cst_87 {dimension_numbers = #tpu.dot_dimension_numbers<[1], [0], [0], [1], [0, 0, 1, 1], [], []>} : vector<2x32xf32>, vector<32x128xf32>, vector<2x128xf32> -> vector<2x128xf32>
    %355 = arith.addf %353, %354 : vector<2x128xf32>
    %356 = vector.extract_strided_slice %350 {offsets = [14, 0], sizes = [2, 128], strides = [1, 1]} : vector<16x128xf32> to vector<2x128xf32>
    %cst_88 = arith.constant dense<0.000000e+00> : vector<2x128xf32>
    %357 = tpu.matmul %6, %352, %cst_88 {dimension_numbers = #tpu.dot_dimension_numbers<[1], [0], [0], [1], [0, 0, 1, 1], [], []>} : vector<2x32xf32>, vector<32x128xf32>, vector<2x128xf32> -> vector<2x128xf32>
    %358 = arith.addf %356, %357 : vector<2x128xf32>
    %359 = arith.negf %355 : vector<2x128xf32>
    %360 = math.exp %359 : vector<2x128xf32>
    %cst_89 = arith.constant 1.000000e+00 : f32
    %361 = vector.broadcast %cst_89 : f32 to vector<2x128xf32>
    %362 = arith.addf %361, %360 : vector<2x128xf32>
    %363 = arith.divf %361, %362 : vector<2x128xf32>
    %364 = math.tanh %355 : vector<2x128xf32>
    %365 = arith.select %5, %364, %363 : vector<2x128xi1>, vector<2x128xf32>
    %366 = vector.extract_strided_slice %365 {offsets = [0, 0], sizes = [2, 32], strides = [1, 1]} : vector<2x128xf32> to vector<2x32xf32>
    %367 = vector.extract_strided_slice %365 {offsets = [0, 32], sizes = [2, 32], strides = [1, 1]} : vector<2x128xf32> to vector<2x32xf32>
    %368 = vector.extract_strided_slice %365 {offsets = [0, 64], sizes = [2, 32], strides = [1, 1]} : vector<2x128xf32> to vector<2x32xf32>
    %369 = vector.extract_strided_slice %365 {offsets = [0, 96], sizes = [2, 32], strides = [1, 1]} : vector<2x128xf32> to vector<2x32xf32>
    %370 = arith.mulf %367, %6 : vector<2x32xf32>
    %371 = arith.mulf %366, %368 : vector<2x32xf32>
    %372 = arith.addf %370, %371 : vector<2x32xf32>
    %373 = math.tanh %372 : vector<2x32xf32>
    %374 = arith.mulf %369, %373 : vector<2x32xf32>
    %375 = arith.negf %358 : vector<2x128xf32>
    %376 = math.exp %375 : vector<2x128xf32>
    %cst_90 = arith.constant 1.000000e+00 : f32
    %377 = vector.broadcast %cst_90 : f32 to vector<2x128xf32>
    %378 = arith.addf %377, %376 : vector<2x128xf32>
    %379 = arith.divf %377, %378 : vector<2x128xf32>
    %380 = math.tanh %358 : vector<2x128xf32>
    %381 = arith.select %5, %380, %379 : vector<2x128xi1>, vector<2x128xf32>
    %382 = vector.extract_strided_slice %381 {offsets = [0, 0], sizes = [2, 32], strides = [1, 1]} : vector<2x128xf32> to vector<2x32xf32>
    %383 = vector.extract_strided_slice %381 {offsets = [0, 32], sizes = [2, 32], strides = [1, 1]} : vector<2x128xf32> to vector<2x32xf32>
    %384 = vector.extract_strided_slice %381 {offsets = [0, 64], sizes = [2, 32], strides = [1, 1]} : vector<2x128xf32> to vector<2x32xf32>
    %385 = vector.extract_strided_slice %381 {offsets = [0, 96], sizes = [2, 32], strides = [1, 1]} : vector<2x128xf32> to vector<2x32xf32>
    %386 = arith.mulf %383, %6 : vector<2x32xf32>
    %387 = arith.mulf %382, %384 : vector<2x32xf32>
    %388 = arith.addf %386, %387 : vector<2x32xf32>
    %389 = math.tanh %388 : vector<2x32xf32>
    %390 = arith.mulf %385, %389 : vector<2x32xf32>
    %c0_91 = arith.constant 0 : index
    %c0_92 = arith.constant 0 : index
    %391 = vector.load %arg29[%c0_91, %c0_92] : memref<16x64xf32, #tpu.memory_space<vmem>>, vector<2x32xf32>
    tpu.vector_store %arg29[%c0_91, %c0_92], %374 {strides = array<i32>} : memref<16x64xf32, #tpu.memory_space<vmem>>, vector<2x32xf32>,
    %c14_93 = arith.constant 14 : index
    %c32_94 = arith.constant 32 : index
    %392 = vector.load %arg29[%c14_93, %c32_94] : memref<16x64xf32, #tpu.memory_space<vmem>>, vector<2x32xf32>
    tpu.vector_store %arg29[%c14_93, %c32_94], %390 {strides = array<i32>} : memref<16x64xf32, #tpu.memory_space<vmem>>, vector<2x32xf32>,
    %393 = vector.extract_strided_slice %345 {offsets = [2, 0], sizes = [2, 128], strides = [1, 1]} : vector<16x128xf32> to vector<2x128xf32>
    %cst_95 = arith.constant dense<0.000000e+00> : vector<2x128xf32>
    %394 = tpu.matmul %374, %351, %cst_95 {dimension_numbers = #tpu.dot_dimension_numbers<[1], [0], [0], [1], [0, 0, 1, 1], [], []>} : vector<2x32xf32>, vector<32x128xf32>, vector<2x128xf32> -> vector<2x128xf32>
    %395 = arith.addf %393, %394 : vector<2x128xf32>
    %396 = vector.extract_strided_slice %350 {offsets = [12, 0], sizes = [2, 128], strides = [1, 1]} : vector<16x128xf32> to vector<2x128xf32>
    %cst_96 = arith.constant dense<0.000000e+00> : vector<2x128xf32>
    %397 = tpu.matmul %390, %352, %cst_96 {dimension_numbers = #tpu.dot_dimension_numbers<[1], [0], [0], [1], [0, 0, 1, 1], [], []>} : vector<2x32xf32>, vector<32x128xf32>, vector<2x128xf32> -> vector<2x128xf32>
    %398 = arith.addf %396, %397 : vector<2x128xf32>
    %399 = arith.negf %395 : vector<2x128xf32>
    %400 = math.exp %399 : vector<2x128xf32>
    %cst_97 = arith.constant 1.000000e+00 : f32
    %401 = vector.broadcast %cst_97 : f32 to vector<2x128xf32>
    %402 = arith.addf %401, %400 : vector<2x128xf32>
    %403 = arith.divf %401, %402 : vector<2x128xf32>
    %404 = math.tanh %395 : vector<2x128xf32>
    %405 = arith.select %5, %404, %403 : vector<2x128xi1>, vector<2x128xf32>
    %406 = vector.extract_strided_slice %405 {offsets = [0, 0], sizes = [2, 32], strides = [1, 1]} : vector<2x128xf32> to vector<2x32xf32>
    %407 = vector.extract_strided_slice %405 {offsets = [0, 32], sizes = [2, 32], strides = [1, 1]} : vector<2x128xf32> to vector<2x32xf32>
    %408 = vector.extract_strided_slice %405 {offsets = [0, 64], sizes = [2, 32], strides = [1, 1]} : vector<2x128xf32> to vector<2x32xf32>
    %409 = vector.extract_strided_slice %405 {offsets = [0, 96], sizes = [2, 32], strides = [1, 1]} : vector<2x128xf32> to vector<2x32xf32>
    %410 = arith.mulf %407, %372 : vector<2x32xf32>
    %411 = arith.mulf %406, %408 : vector<2x32xf32>
    %412 = arith.addf %410, %411 : vector<2x32xf32>
    %413 = math.tanh %412 : vector<2x32xf32>
    %414 = arith.mulf %409, %413 : vector<2x32xf32>
    %415 = arith.negf %398 : vector<2x128xf32>
    %416 = math.exp %415 : vector<2x128xf32>
    %cst_98 = arith.constant 1.000000e+00 : f32
    %417 = vector.broadcast %cst_98 : f32 to vector<2x128xf32>
    %418 = arith.addf %417, %416 : vector<2x128xf32>
    %419 = arith.divf %417, %418 : vector<2x128xf32>
    %420 = math.tanh %398 : vector<2x128xf32>
    %421 = arith.select %5, %420, %419 : vector<2x128xi1>, vector<2x128xf32>
    %422 = vector.extract_strided_slice %421 {offsets = [0, 0], sizes = [2, 32], strides = [1, 1]} : vector<2x128xf32> to vector<2x32xf32>
    %423 = vector.extract_strided_slice %421 {offsets = [0, 32], sizes = [2, 32], strides = [1, 1]} : vector<2x128xf32> to vector<2x32xf32>
    %424 = vector.extract_strided_slice %421 {offsets = [0, 64], sizes = [2, 32], strides = [1, 1]} : vector<2x128xf32> to vector<2x32xf32>
    %425 = vector.extract_strided_slice %421 {offsets = [0, 96], sizes = [2, 32], strides = [1, 1]} : vector<2x128xf32> to vector<2x32xf32>
    %426 = arith.mulf %423, %388 : vector<2x32xf32>
    %427 = arith.mulf %422, %424 : vector<2x32xf32>
    %428 = arith.addf %426, %427 : vector<2x32xf32>
    %429 = math.tanh %428 : vector<2x32xf32>
    %430 = arith.mulf %425, %429 : vector<2x32xf32>
    %c2_99 = arith.constant 2 : index
    %c0_100 = arith.constant 0 : index
    %431 = vector.load %arg29[%c2_99, %c0_100] : memref<16x64xf32, #tpu.memory_space<vmem>>, vector<2x32xf32>
    tpu.vector_store %arg29[%c2_99, %c0_100], %414 {strides = array<i32>} : memref<16x64xf32, #tpu.memory_space<vmem>>, vector<2x32xf32>,
    %c12_101 = arith.constant 12 : index
    %c32_102 = arith.constant 32 : index
    %432 = vector.load %arg29[%c12_101, %c32_102] : memref<16x64xf32, #tpu.memory_space<vmem>>, vector<2x32xf32>
    tpu.vector_store %arg29[%c12_101, %c32_102], %430 {strides = array<i32>} : memref<16x64xf32, #tpu.memory_space<vmem>>, vector<2x32xf32>,
    %433 = vector.extract_strided_slice %345 {offsets = [4, 0], sizes = [2, 128], strides = [1, 1]} : vector<16x128xf32> to vector<2x128xf32>
    %cst_103 = arith.constant dense<0.000000e+00> : vector<2x128xf32>
    %434 = tpu.matmul %414, %351, %cst_103 {dimension_numbers = #tpu.dot_dimension_numbers<[1], [0], [0], [1], [0, 0, 1, 1], [], []>} : vector<2x32xf32>, vector<32x128xf32>, vector<2x128xf32> -> vector<2x128xf32>
    %435 = arith.addf %433, %434 : vector<2x128xf32>
    %436 = vector.extract_strided_slice %350 {offsets = [10, 0], sizes = [2, 128], strides = [1, 1]} : vector<16x128xf32> to vector<2x128xf32>
    %cst_104 = arith.constant dense<0.000000e+00> : vector<2x128xf32>
    %437 = tpu.matmul %430, %352, %cst_104 {dimension_numbers = #tpu.dot_dimension_numbers<[1], [0], [0], [1], [0, 0, 1, 1], [], []>} : vector<2x32xf32>, vector<32x128xf32>, vector<2x128xf32> -> vector<2x128xf32>
    %438 = arith.addf %436, %437 : vector<2x128xf32>
    %439 = arith.negf %435 : vector<2x128xf32>
    %440 = math.exp %439 : vector<2x128xf32>
    %cst_105 = arith.constant 1.000000e+00 : f32
    %441 = vector.broadcast %cst_105 : f32 to vector<2x128xf32>
    %442 = arith.addf %441, %440 : vector<2x128xf32>
    %443 = arith.divf %441, %442 : vector<2x128xf32>
    %444 = math.tanh %435 : vector<2x128xf32>
    %445 = arith.select %5, %444, %443 : vector<2x128xi1>, vector<2x128xf32>
    %446 = vector.extract_strided_slice %445 {offsets = [0, 0], sizes = [2, 32], strides = [1, 1]} : vector<2x128xf32> to vector<2x32xf32>
    %447 = vector.extract_strided_slice %445 {offsets = [0, 32], sizes = [2, 32], strides = [1, 1]} : vector<2x128xf32> to vector<2x32xf32>
    %448 = vector.extract_strided_slice %445 {offsets = [0, 64], sizes = [2, 32], strides = [1, 1]} : vector<2x128xf32> to vector<2x32xf32>
    %449 = vector.extract_strided_slice %445 {offsets = [0, 96], sizes = [2, 32], strides = [1, 1]} : vector<2x128xf32> to vector<2x32xf32>
    %450 = arith.mulf %447, %412 : vector<2x32xf32>
    %451 = arith.mulf %446, %448 : vector<2x32xf32>
    %452 = arith.addf %450, %451 : vector<2x32xf32>
    %453 = math.tanh %452 : vector<2x32xf32>
    %454 = arith.mulf %449, %453 : vector<2x32xf32>
    %455 = arith.negf %438 : vector<2x128xf32>
    %456 = math.exp %455 : vector<2x128xf32>
    %cst_106 = arith.constant 1.000000e+00 : f32
    %457 = vector.broadcast %cst_106 : f32 to vector<2x128xf32>
    %458 = arith.addf %457, %456 : vector<2x128xf32>
    %459 = arith.divf %457, %458 : vector<2x128xf32>
    %460 = math.tanh %438 : vector<2x128xf32>
    %461 = arith.select %5, %460, %459 : vector<2x128xi1>, vector<2x128xf32>
    %462 = vector.extract_strided_slice %461 {offsets = [0, 0], sizes = [2, 32], strides = [1, 1]} : vector<2x128xf32> to vector<2x32xf32>
    %463 = vector.extract_strided_slice %461 {offsets = [0, 32], sizes = [2, 32], strides = [1, 1]} : vector<2x128xf32> to vector<2x32xf32>
    %464 = vector.extract_strided_slice %461 {offsets = [0, 64], sizes = [2, 32], strides = [1, 1]} : vector<2x128xf32> to vector<2x32xf32>
    %465 = vector.extract_strided_slice %461 {offsets = [0, 96], sizes = [2, 32], strides = [1, 1]} : vector<2x128xf32> to vector<2x32xf32>
    %466 = arith.mulf %463, %428 : vector<2x32xf32>
    %467 = arith.mulf %462, %464 : vector<2x32xf32>
    %468 = arith.addf %466, %467 : vector<2x32xf32>
    %469 = math.tanh %468 : vector<2x32xf32>
    %470 = arith.mulf %465, %469 : vector<2x32xf32>
    %c4_107 = arith.constant 4 : index
    %c0_108 = arith.constant 0 : index
    %471 = vector.load %arg29[%c4_107, %c0_108] : memref<16x64xf32, #tpu.memory_space<vmem>>, vector<2x32xf32>
    tpu.vector_store %arg29[%c4_107, %c0_108], %454 {strides = array<i32>} : memref<16x64xf32, #tpu.memory_space<vmem>>, vector<2x32xf32>,
    %c10_109 = arith.constant 10 : index
    %c32_110 = arith.constant 32 : index
    %472 = vector.load %arg29[%c10_109, %c32_110] : memref<16x64xf32, #tpu.memory_space<vmem>>, vector<2x32xf32>
    tpu.vector_store %arg29[%c10_109, %c32_110], %470 {strides = array<i32>} : memref<16x64xf32, #tpu.memory_space<vmem>>, vector<2x32xf32>,
    %473 = vector.extract_strided_slice %345 {offsets = [6, 0], sizes = [2, 128], strides = [1, 1]} : vector<16x128xf32> to vector<2x128xf32>
    %cst_111 = arith.constant dense<0.000000e+00> : vector<2x128xf32>
    %474 = tpu.matmul %454, %351, %cst_111 {dimension_numbers = #tpu.dot_dimension_numbers<[1], [0], [0], [1], [0, 0, 1, 1], [], []>} : vector<2x32xf32>, vector<32x128xf32>, vector<2x128xf32> -> vector<2x128xf32>
    %475 = arith.addf %473, %474 : vector<2x128xf32>
    %476 = vector.extract_strided_slice %350 {offsets = [8, 0], sizes = [2, 128], strides = [1, 1]} : vector<16x128xf32> to vector<2x128xf32>
    %cst_112 = arith.constant dense<0.000000e+00> : vector<2x128xf32>
    %477 = tpu.matmul %470, %352, %cst_112 {dimension_numbers = #tpu.dot_dimension_numbers<[1], [0], [0], [1], [0, 0, 1, 1], [], []>} : vector<2x32xf32>, vector<32x128xf32>, vector<2x128xf32> -> vector<2x128xf32>
    %478 = arith.addf %476, %477 : vector<2x128xf32>
    %479 = arith.negf %475 : vector<2x128xf32>
    %480 = math.exp %479 : vector<2x128xf32>
    %cst_113 = arith.constant 1.000000e+00 : f32
    %481 = vector.broadcast %cst_113 : f32 to vector<2x128xf32>
    %482 = arith.addf %481, %480 : vector<2x128xf32>
    %483 = arith.divf %481, %482 : vector<2x128xf32>
    %484 = math.tanh %475 : vector<2x128xf32>
    %485 = arith.select %5, %484, %483 : vector<2x128xi1>, vector<2x128xf32>
    %486 = vector.extract_strided_slice %485 {offsets = [0, 0], sizes = [2, 32], strides = [1, 1]} : vector<2x128xf32> to vector<2x32xf32>
    %487 = vector.extract_strided_slice %485 {offsets = [0, 32], sizes = [2, 32], strides = [1, 1]} : vector<2x128xf32> to vector<2x32xf32>
    %488 = vector.extract_strided_slice %485 {offsets = [0, 64], sizes = [2, 32], strides = [1, 1]} : vector<2x128xf32> to vector<2x32xf32>
    %489 = vector.extract_strided_slice %485 {offsets = [0, 96], sizes = [2, 32], strides = [1, 1]} : vector<2x128xf32> to vector<2x32xf32>
    %490 = arith.mulf %487, %452 : vector<2x32xf32>
    %491 = arith.mulf %486, %488 : vector<2x32xf32>
    %492 = arith.addf %490, %491 : vector<2x32xf32>
    %493 = math.tanh %492 : vector<2x32xf32>
    %494 = arith.mulf %489, %493 : vector<2x32xf32>
    %495 = arith.negf %478 : vector<2x128xf32>
    %496 = math.exp %495 : vector<2x128xf32>
    %cst_114 = arith.constant 1.000000e+00 : f32
    %497 = vector.broadcast %cst_114 : f32 to vector<2x128xf32>
    %498 = arith.addf %497, %496 : vector<2x128xf32>
    %499 = arith.divf %497, %498 : vector<2x128xf32>
    %500 = math.tanh %478 : vector<2x128xf32>
    %501 = arith.select %5, %500, %499 : vector<2x128xi1>, vector<2x128xf32>
    %502 = vector.extract_strided_slice %501 {offsets = [0, 0], sizes = [2, 32], strides = [1, 1]} : vector<2x128xf32> to vector<2x32xf32>
    %503 = vector.extract_strided_slice %501 {offsets = [0, 32], sizes = [2, 32], strides = [1, 1]} : vector<2x128xf32> to vector<2x32xf32>
    %504 = vector.extract_strided_slice %501 {offsets = [0, 64], sizes = [2, 32], strides = [1, 1]} : vector<2x128xf32> to vector<2x32xf32>
    %505 = vector.extract_strided_slice %501 {offsets = [0, 96], sizes = [2, 32], strides = [1, 1]} : vector<2x128xf32> to vector<2x32xf32>
    %506 = arith.mulf %503, %468 : vector<2x32xf32>
    %507 = arith.mulf %502, %504 : vector<2x32xf32>
    %508 = arith.addf %506, %507 : vector<2x32xf32>
    %509 = math.tanh %508 : vector<2x32xf32>
    %510 = arith.mulf %505, %509 : vector<2x32xf32>
    %c6_115 = arith.constant 6 : index
    %c0_116 = arith.constant 0 : index
    %511 = vector.load %arg29[%c6_115, %c0_116] : memref<16x64xf32, #tpu.memory_space<vmem>>, vector<2x32xf32>
    tpu.vector_store %arg29[%c6_115, %c0_116], %494 {strides = array<i32>} : memref<16x64xf32, #tpu.memory_space<vmem>>, vector<2x32xf32>,
    %c8_117 = arith.constant 8 : index
    %c32_118 = arith.constant 32 : index
    %512 = vector.load %arg29[%c8_117, %c32_118] : memref<16x64xf32, #tpu.memory_space<vmem>>, vector<2x32xf32>
    tpu.vector_store %arg29[%c8_117, %c32_118], %510 {strides = array<i32>} : memref<16x64xf32, #tpu.memory_space<vmem>>, vector<2x32xf32>,
    %513 = vector.extract_strided_slice %345 {offsets = [8, 0], sizes = [2, 128], strides = [1, 1]} : vector<16x128xf32> to vector<2x128xf32>
    %cst_119 = arith.constant dense<0.000000e+00> : vector<2x128xf32>
    %514 = tpu.matmul %494, %351, %cst_119 {dimension_numbers = #tpu.dot_dimension_numbers<[1], [0], [0], [1], [0, 0, 1, 1], [], []>} : vector<2x32xf32>, vector<32x128xf32>, vector<2x128xf32> -> vector<2x128xf32>
    %515 = arith.addf %513, %514 : vector<2x128xf32>
    %516 = vector.extract_strided_slice %350 {offsets = [6, 0], sizes = [2, 128], strides = [1, 1]} : vector<16x128xf32> to vector<2x128xf32>
    %cst_120 = arith.constant dense<0.000000e+00> : vector<2x128xf32>
    %517 = tpu.matmul %510, %352, %cst_120 {dimension_numbers = #tpu.dot_dimension_numbers<[1], [0], [0], [1], [0, 0, 1, 1], [], []>} : vector<2x32xf32>, vector<32x128xf32>, vector<2x128xf32> -> vector<2x128xf32>
    %518 = arith.addf %516, %517 : vector<2x128xf32>
    %519 = arith.negf %515 : vector<2x128xf32>
    %520 = math.exp %519 : vector<2x128xf32>
    %cst_121 = arith.constant 1.000000e+00 : f32
    %521 = vector.broadcast %cst_121 : f32 to vector<2x128xf32>
    %522 = arith.addf %521, %520 : vector<2x128xf32>
    %523 = arith.divf %521, %522 : vector<2x128xf32>
    %524 = math.tanh %515 : vector<2x128xf32>
    %525 = arith.select %5, %524, %523 : vector<2x128xi1>, vector<2x128xf32>
    %526 = vector.extract_strided_slice %525 {offsets = [0, 0], sizes = [2, 32], strides = [1, 1]} : vector<2x128xf32> to vector<2x32xf32>
    %527 = vector.extract_strided_slice %525 {offsets = [0, 32], sizes = [2, 32], strides = [1, 1]} : vector<2x128xf32> to vector<2x32xf32>
    %528 = vector.extract_strided_slice %525 {offsets = [0, 64], sizes = [2, 32], strides = [1, 1]} : vector<2x128xf32> to vector<2x32xf32>
    %529 = vector.extract_strided_slice %525 {offsets = [0, 96], sizes = [2, 32], strides = [1, 1]} : vector<2x128xf32> to vector<2x32xf32>
    %530 = arith.mulf %527, %492 : vector<2x32xf32>
    %531 = arith.mulf %526, %528 : vector<2x32xf32>
    %532 = arith.addf %530, %531 : vector<2x32xf32>
    %533 = math.tanh %532 : vector<2x32xf32>
    %534 = arith.mulf %529, %533 : vector<2x32xf32>
    %535 = arith.negf %518 : vector<2x128xf32>
    %536 = math.exp %535 : vector<2x128xf32>
    %cst_122 = arith.constant 1.000000e+00 : f32
    %537 = vector.broadcast %cst_122 : f32 to vector<2x128xf32>
    %538 = arith.addf %537, %536 : vector<2x128xf32>
    %539 = arith.divf %537, %538 : vector<2x128xf32>
    %540 = math.tanh %518 : vector<2x128xf32>
    %541 = arith.select %5, %540, %539 : vector<2x128xi1>, vector<2x128xf32>
    %542 = vector.extract_strided_slice %541 {offsets = [0, 0], sizes = [2, 32], strides = [1, 1]} : vector<2x128xf32> to vector<2x32xf32>
    %543 = vector.extract_strided_slice %541 {offsets = [0, 32], sizes = [2, 32], strides = [1, 1]} : vector<2x128xf32> to vector<2x32xf32>
    %544 = vector.extract_strided_slice %541 {offsets = [0, 64], sizes = [2, 32], strides = [1, 1]} : vector<2x128xf32> to vector<2x32xf32>
    %545 = vector.extract_strided_slice %541 {offsets = [0, 96], sizes = [2, 32], strides = [1, 1]} : vector<2x128xf32> to vector<2x32xf32>
    %546 = arith.mulf %543, %508 : vector<2x32xf32>
    %547 = arith.mulf %542, %544 : vector<2x32xf32>
    %548 = arith.addf %546, %547 : vector<2x32xf32>
    %549 = math.tanh %548 : vector<2x32xf32>
    %550 = arith.mulf %545, %549 : vector<2x32xf32>
    %c8_123 = arith.constant 8 : index
    %c0_124 = arith.constant 0 : index
    %551 = vector.load %arg29[%c8_123, %c0_124] : memref<16x64xf32, #tpu.memory_space<vmem>>, vector<2x32xf32>
    tpu.vector_store %arg29[%c8_123, %c0_124], %534 {strides = array<i32>} : memref<16x64xf32, #tpu.memory_space<vmem>>, vector<2x32xf32>,
    %c6_125 = arith.constant 6 : index
    %c32_126 = arith.constant 32 : index
    %552 = vector.load %arg29[%c6_125, %c32_126] : memref<16x64xf32, #tpu.memory_space<vmem>>, vector<2x32xf32>
    tpu.vector_store %arg29[%c6_125, %c32_126], %550 {strides = array<i32>} : memref<16x64xf32, #tpu.memory_space<vmem>>, vector<2x32xf32>,
    %553 = vector.extract_strided_slice %345 {offsets = [10, 0], sizes = [2, 128], strides = [1, 1]} : vector<16x128xf32> to vector<2x128xf32>
    %cst_127 = arith.constant dense<0.000000e+00> : vector<2x128xf32>
    %554 = tpu.matmul %534, %351, %cst_127 {dimension_numbers = #tpu.dot_dimension_numbers<[1], [0], [0], [1], [0, 0, 1, 1], [], []>} : vector<2x32xf32>, vector<32x128xf32>, vector<2x128xf32> -> vector<2x128xf32>
    %555 = arith.addf %553, %554 : vector<2x128xf32>
    %556 = vector.extract_strided_slice %350 {offsets = [4, 0], sizes = [2, 128], strides = [1, 1]} : vector<16x128xf32> to vector<2x128xf32>
    %cst_128 = arith.constant dense<0.000000e+00> : vector<2x128xf32>
    %557 = tpu.matmul %550, %352, %cst_128 {dimension_numbers = #tpu.dot_dimension_numbers<[1], [0], [0], [1], [0, 0, 1, 1], [], []>} : vector<2x32xf32>, vector<32x128xf32>, vector<2x128xf32> -> vector<2x128xf32>
    %558 = arith.addf %556, %557 : vector<2x128xf32>
    %559 = arith.negf %555 : vector<2x128xf32>
    %560 = math.exp %559 : vector<2x128xf32>
    %cst_129 = arith.constant 1.000000e+00 : f32
    %561 = vector.broadcast %cst_129 : f32 to vector<2x128xf32>
    %562 = arith.addf %561, %560 : vector<2x128xf32>
    %563 = arith.divf %561, %562 : vector<2x128xf32>
    %564 = math.tanh %555 : vector<2x128xf32>
    %565 = arith.select %5, %564, %563 : vector<2x128xi1>, vector<2x128xf32>
    %566 = vector.extract_strided_slice %565 {offsets = [0, 0], sizes = [2, 32], strides = [1, 1]} : vector<2x128xf32> to vector<2x32xf32>
    %567 = vector.extract_strided_slice %565 {offsets = [0, 32], sizes = [2, 32], strides = [1, 1]} : vector<2x128xf32> to vector<2x32xf32>
    %568 = vector.extract_strided_slice %565 {offsets = [0, 64], sizes = [2, 32], strides = [1, 1]} : vector<2x128xf32> to vector<2x32xf32>
    %569 = vector.extract_strided_slice %565 {offsets = [0, 96], sizes = [2, 32], strides = [1, 1]} : vector<2x128xf32> to vector<2x32xf32>
    %570 = arith.mulf %567, %532 : vector<2x32xf32>
    %571 = arith.mulf %566, %568 : vector<2x32xf32>
    %572 = arith.addf %570, %571 : vector<2x32xf32>
    %573 = math.tanh %572 : vector<2x32xf32>
    %574 = arith.mulf %569, %573 : vector<2x32xf32>
    %575 = arith.negf %558 : vector<2x128xf32>
    %576 = math.exp %575 : vector<2x128xf32>
    %cst_130 = arith.constant 1.000000e+00 : f32
    %577 = vector.broadcast %cst_130 : f32 to vector<2x128xf32>
    %578 = arith.addf %577, %576 : vector<2x128xf32>
    %579 = arith.divf %577, %578 : vector<2x128xf32>
    %580 = math.tanh %558 : vector<2x128xf32>
    %581 = arith.select %5, %580, %579 : vector<2x128xi1>, vector<2x128xf32>
    %582 = vector.extract_strided_slice %581 {offsets = [0, 0], sizes = [2, 32], strides = [1, 1]} : vector<2x128xf32> to vector<2x32xf32>
    %583 = vector.extract_strided_slice %581 {offsets = [0, 32], sizes = [2, 32], strides = [1, 1]} : vector<2x128xf32> to vector<2x32xf32>
    %584 = vector.extract_strided_slice %581 {offsets = [0, 64], sizes = [2, 32], strides = [1, 1]} : vector<2x128xf32> to vector<2x32xf32>
    %585 = vector.extract_strided_slice %581 {offsets = [0, 96], sizes = [2, 32], strides = [1, 1]} : vector<2x128xf32> to vector<2x32xf32>
    %586 = arith.mulf %583, %548 : vector<2x32xf32>
    %587 = arith.mulf %582, %584 : vector<2x32xf32>
    %588 = arith.addf %586, %587 : vector<2x32xf32>
    %589 = math.tanh %588 : vector<2x32xf32>
    %590 = arith.mulf %585, %589 : vector<2x32xf32>
    %c10_131 = arith.constant 10 : index
    %c0_132 = arith.constant 0 : index
    %591 = vector.load %arg29[%c10_131, %c0_132] : memref<16x64xf32, #tpu.memory_space<vmem>>, vector<2x32xf32>
    tpu.vector_store %arg29[%c10_131, %c0_132], %574 {strides = array<i32>} : memref<16x64xf32, #tpu.memory_space<vmem>>, vector<2x32xf32>,
    %c4_133 = arith.constant 4 : index
    %c32_134 = arith.constant 32 : index
    %592 = vector.load %arg29[%c4_133, %c32_134] : memref<16x64xf32, #tpu.memory_space<vmem>>, vector<2x32xf32>
    tpu.vector_store %arg29[%c4_133, %c32_134], %590 {strides = array<i32>} : memref<16x64xf32, #tpu.memory_space<vmem>>, vector<2x32xf32>,
    %593 = vector.extract_strided_slice %345 {offsets = [12, 0], sizes = [2, 128], strides = [1, 1]} : vector<16x128xf32> to vector<2x128xf32>
    %cst_135 = arith.constant dense<0.000000e+00> : vector<2x128xf32>
    %594 = tpu.matmul %574, %351, %cst_135 {dimension_numbers = #tpu.dot_dimension_numbers<[1], [0], [0], [1], [0, 0, 1, 1], [], []>} : vector<2x32xf32>, vector<32x128xf32>, vector<2x128xf32> -> vector<2x128xf32>
    %595 = arith.addf %593, %594 : vector<2x128xf32>
    %596 = vector.extract_strided_slice %350 {offsets = [2, 0], sizes = [2, 128], strides = [1, 1]} : vector<16x128xf32> to vector<2x128xf32>
    %cst_136 = arith.constant dense<0.000000e+00> : vector<2x128xf32>
    %597 = tpu.matmul %590, %352, %cst_136 {dimension_numbers = #tpu.dot_dimension_numbers<[1], [0], [0], [1], [0, 0, 1, 1], [], []>} : vector<2x32xf32>, vector<32x128xf32>, vector<2x128xf32> -> vector<2x128xf32>
    %598 = arith.addf %596, %597 : vector<2x128xf32>
    %599 = arith.negf %595 : vector<2x128xf32>
    %600 = math.exp %599 : vector<2x128xf32>
    %cst_137 = arith.constant 1.000000e+00 : f32
    %601 = vector.broadcast %cst_137 : f32 to vector<2x128xf32>
    %602 = arith.addf %601, %600 : vector<2x128xf32>
    %603 = arith.divf %601, %602 : vector<2x128xf32>
    %604 = math.tanh %595 : vector<2x128xf32>
    %605 = arith.select %5, %604, %603 : vector<2x128xi1>, vector<2x128xf32>
    %606 = vector.extract_strided_slice %605 {offsets = [0, 0], sizes = [2, 32], strides = [1, 1]} : vector<2x128xf32> to vector<2x32xf32>
    %607 = vector.extract_strided_slice %605 {offsets = [0, 32], sizes = [2, 32], strides = [1, 1]} : vector<2x128xf32> to vector<2x32xf32>
    %608 = vector.extract_strided_slice %605 {offsets = [0, 64], sizes = [2, 32], strides = [1, 1]} : vector<2x128xf32> to vector<2x32xf32>
    %609 = vector.extract_strided_slice %605 {offsets = [0, 96], sizes = [2, 32], strides = [1, 1]} : vector<2x128xf32> to vector<2x32xf32>
    %610 = arith.mulf %607, %572 : vector<2x32xf32>
    %611 = arith.mulf %606, %608 : vector<2x32xf32>
    %612 = arith.addf %610, %611 : vector<2x32xf32>
    %613 = math.tanh %612 : vector<2x32xf32>
    %614 = arith.mulf %609, %613 : vector<2x32xf32>
    %615 = arith.negf %598 : vector<2x128xf32>
    %616 = math.exp %615 : vector<2x128xf32>
    %cst_138 = arith.constant 1.000000e+00 : f32
    %617 = vector.broadcast %cst_138 : f32 to vector<2x128xf32>
    %618 = arith.addf %617, %616 : vector<2x128xf32>
    %619 = arith.divf %617, %618 : vector<2x128xf32>
    %620 = math.tanh %598 : vector<2x128xf32>
    %621 = arith.select %5, %620, %619 : vector<2x128xi1>, vector<2x128xf32>
    %622 = vector.extract_strided_slice %621 {offsets = [0, 0], sizes = [2, 32], strides = [1, 1]} : vector<2x128xf32> to vector<2x32xf32>
    %623 = vector.extract_strided_slice %621 {offsets = [0, 32], sizes = [2, 32], strides = [1, 1]} : vector<2x128xf32> to vector<2x32xf32>
    %624 = vector.extract_strided_slice %621 {offsets = [0, 64], sizes = [2, 32], strides = [1, 1]} : vector<2x128xf32> to vector<2x32xf32>
    %625 = vector.extract_strided_slice %621 {offsets = [0, 96], sizes = [2, 32], strides = [1, 1]} : vector<2x128xf32> to vector<2x32xf32>
    %626 = arith.mulf %623, %588 : vector<2x32xf32>
    %627 = arith.mulf %622, %624 : vector<2x32xf32>
    %628 = arith.addf %626, %627 : vector<2x32xf32>
    %629 = math.tanh %628 : vector<2x32xf32>
    %630 = arith.mulf %625, %629 : vector<2x32xf32>
    %c12_139 = arith.constant 12 : index
    %c0_140 = arith.constant 0 : index
    %631 = vector.load %arg29[%c12_139, %c0_140] : memref<16x64xf32, #tpu.memory_space<vmem>>, vector<2x32xf32>
    tpu.vector_store %arg29[%c12_139, %c0_140], %614 {strides = array<i32>} : memref<16x64xf32, #tpu.memory_space<vmem>>, vector<2x32xf32>,
    %c2_141 = arith.constant 2 : index
    %c32_142 = arith.constant 32 : index
    %632 = vector.load %arg29[%c2_141, %c32_142] : memref<16x64xf32, #tpu.memory_space<vmem>>, vector<2x32xf32>
    tpu.vector_store %arg29[%c2_141, %c32_142], %630 {strides = array<i32>} : memref<16x64xf32, #tpu.memory_space<vmem>>, vector<2x32xf32>,
    %633 = vector.extract_strided_slice %345 {offsets = [14, 0], sizes = [2, 128], strides = [1, 1]} : vector<16x128xf32> to vector<2x128xf32>
    %cst_143 = arith.constant dense<0.000000e+00> : vector<2x128xf32>
    %634 = tpu.matmul %614, %351, %cst_143 {dimension_numbers = #tpu.dot_dimension_numbers<[1], [0], [0], [1], [0, 0, 1, 1], [], []>} : vector<2x32xf32>, vector<32x128xf32>, vector<2x128xf32> -> vector<2x128xf32>
    %635 = arith.addf %633, %634 : vector<2x128xf32>
    %636 = vector.extract_strided_slice %350 {offsets = [0, 0], sizes = [2, 128], strides = [1, 1]} : vector<16x128xf32> to vector<2x128xf32>
    %cst_144 = arith.constant dense<0.000000e+00> : vector<2x128xf32>
    %637 = tpu.matmul %630, %352, %cst_144 {dimension_numbers = #tpu.dot_dimension_numbers<[1], [0], [0], [1], [0, 0, 1, 1], [], []>} : vector<2x32xf32>, vector<32x128xf32>, vector<2x128xf32> -> vector<2x128xf32>
    %638 = arith.addf %636, %637 : vector<2x128xf32>
    %639 = arith.negf %635 : vector<2x128xf32>
    %640 = math.exp %639 : vector<2x128xf32>
    %cst_145 = arith.constant 1.000000e+00 : f32
    %641 = vector.broadcast %cst_145 : f32 to vector<2x128xf32>
    %642 = arith.addf %641, %640 : vector<2x128xf32>
    %643 = arith.divf %641, %642 : vector<2x128xf32>
    %644 = math.tanh %635 : vector<2x128xf32>
    %645 = arith.select %5, %644, %643 : vector<2x128xi1>, vector<2x128xf32>
    %646 = vector.extract_strided_slice %645 {offsets = [0, 0], sizes = [2, 32], strides = [1, 1]} : vector<2x128xf32> to vector<2x32xf32>
    %647 = vector.extract_strided_slice %645 {offsets = [0, 32], sizes = [2, 32], strides = [1, 1]} : vector<2x128xf32> to vector<2x32xf32>
    %648 = vector.extract_strided_slice %645 {offsets = [0, 64], sizes = [2, 32], strides = [1, 1]} : vector<2x128xf32> to vector<2x32xf32>
    %649 = vector.extract_strided_slice %645 {offsets = [0, 96], sizes = [2, 32], strides = [1, 1]} : vector<2x128xf32> to vector<2x32xf32>
    %650 = arith.mulf %647, %612 : vector<2x32xf32>
    %651 = arith.mulf %646, %648 : vector<2x32xf32>
    %652 = arith.addf %650, %651 : vector<2x32xf32>
    %653 = math.tanh %652 : vector<2x32xf32>
    %654 = arith.mulf %649, %653 : vector<2x32xf32>
    %655 = arith.negf %638 : vector<2x128xf32>
    %656 = math.exp %655 : vector<2x128xf32>
    %cst_146 = arith.constant 1.000000e+00 : f32
    %657 = vector.broadcast %cst_146 : f32 to vector<2x128xf32>
    %658 = arith.addf %657, %656 : vector<2x128xf32>
    %659 = arith.divf %657, %658 : vector<2x128xf32>
    %660 = math.tanh %638 : vector<2x128xf32>
    %661 = arith.select %5, %660, %659 : vector<2x128xi1>, vector<2x128xf32>
    %662 = vector.extract_strided_slice %661 {offsets = [0, 0], sizes = [2, 32], strides = [1, 1]} : vector<2x128xf32> to vector<2x32xf32>
    %663 = vector.extract_strided_slice %661 {offsets = [0, 32], sizes = [2, 32], strides = [1, 1]} : vector<2x128xf32> to vector<2x32xf32>
    %664 = vector.extract_strided_slice %661 {offsets = [0, 64], sizes = [2, 32], strides = [1, 1]} : vector<2x128xf32> to vector<2x32xf32>
    %665 = vector.extract_strided_slice %661 {offsets = [0, 96], sizes = [2, 32], strides = [1, 1]} : vector<2x128xf32> to vector<2x32xf32>
    %666 = arith.mulf %663, %628 : vector<2x32xf32>
    %667 = arith.mulf %662, %664 : vector<2x32xf32>
    %668 = arith.addf %666, %667 : vector<2x32xf32>
    %669 = math.tanh %668 : vector<2x32xf32>
    %670 = arith.mulf %665, %669 : vector<2x32xf32>
    %c14_147 = arith.constant 14 : index
    %c0_148 = arith.constant 0 : index
    %671 = vector.load %arg29[%c14_147, %c0_148] : memref<16x64xf32, #tpu.memory_space<vmem>>, vector<2x32xf32>
    tpu.vector_store %arg29[%c14_147, %c0_148], %654 {strides = array<i32>} : memref<16x64xf32, #tpu.memory_space<vmem>>, vector<2x32xf32>,
    %c0_149 = arith.constant 0 : index
    %c32_150 = arith.constant 32 : index
    %672 = vector.load %arg29[%c0_149, %c32_150] : memref<16x64xf32, #tpu.memory_space<vmem>>, vector<2x32xf32>
    tpu.vector_store %arg29[%c0_149, %c32_150], %670 {strides = array<i32>} : memref<16x64xf32, #tpu.memory_space<vmem>>, vector<2x32xf32>,
    %c0_151 = arith.constant 0 : index
    %c0_152 = arith.constant 0 : index
    %673 = vector.load %arg29[%c0_151, %c0_152] : memref<16x64xf32, #tpu.memory_space<vmem>>, vector<16x64xf32>
    %c0_153 = arith.constant 0 : index
    %c0_154 = arith.constant 0 : index
    %674 = vector.load %arg13[%c0_153, %c0_154] : memref<64x128xf32, #tpu.memory_space<vmem>>, vector<64x128xf32>
    %cst_155 = arith.constant dense<0.000000e+00> : vector<16x128xf32>
    %675 = tpu.matmul %673, %674, %cst_155 {dimension_numbers = #tpu.dot_dimension_numbers<[1], [0], [0], [1], [0, 0, 1, 1], [], []>} : vector<16x64xf32>, vector<64x128xf32>, vector<16x128xf32> -> vector<16x128xf32>
    %c0_156 = arith.constant 0 : index
    %c0_157 = arith.constant 0 : index
    %676 = vector.load %arg15[%c0_156, %c0_157] : memref<1x128xf32, #tpu.memory_space<vmem>>, vector<1x128xf32>
    %677 = vector.broadcast %676 : vector<1x128xf32> to vector<16x128xf32>
    %678 = arith.addf %675, %677 : vector<16x128xf32>
    %c0_158 = arith.constant 0 : index
    %c0_159 = arith.constant 0 : index
    %679 = vector.load %arg16[%c0_158, %c0_159] : memref<64x128xf32, #tpu.memory_space<vmem>>, vector<64x128xf32>
    %cst_160 = arith.constant dense<0.000000e+00> : vector<16x128xf32>
    %680 = tpu.matmul %673, %679, %cst_160 {dimension_numbers = #tpu.dot_dimension_numbers<[1], [0], [0], [1], [0, 0, 1, 1], [], []>} : vector<16x64xf32>, vector<64x128xf32>, vector<16x128xf32> -> vector<16x128xf32>
    %c0_161 = arith.constant 0 : index
    %c0_162 = arith.constant 0 : index
    %681 = vector.load %arg18[%c0_161, %c0_162] : memref<1x128xf32, #tpu.memory_space<vmem>>, vector<1x128xf32>
    %682 = vector.broadcast %681 : vector<1x128xf32> to vector<16x128xf32>
    %683 = arith.addf %680, %682 : vector<16x128xf32>
    %c0_163 = arith.constant 0 : index
    %c0_164 = arith.constant 0 : index
    %684 = vector.load %arg14[%c0_163, %c0_164] : memref<32x128xf32, #tpu.memory_space<vmem>>, vector<32x128xf32>
    %c0_165 = arith.constant 0 : index
    %c0_166 = arith.constant 0 : index
    %685 = vector.load %arg17[%c0_165, %c0_166] : memref<32x128xf32, #tpu.memory_space<vmem>>, vector<32x128xf32>
    %686 = vector.extract_strided_slice %678 {offsets = [0, 0], sizes = [2, 128], strides = [1, 1]} : vector<16x128xf32> to vector<2x128xf32>
    %cst_167 = arith.constant dense<0.000000e+00> : vector<2x128xf32>
    %687 = tpu.matmul %6, %684, %cst_167 {dimension_numbers = #tpu.dot_dimension_numbers<[1], [0], [0], [1], [0, 0, 1, 1], [], []>} : vector<2x32xf32>, vector<32x128xf32>, vector<2x128xf32> -> vector<2x128xf32>
    %688 = arith.addf %686, %687 : vector<2x128xf32>
    %689 = vector.extract_strided_slice %683 {offsets = [14, 0], sizes = [2, 128], strides = [1, 1]} : vector<16x128xf32> to vector<2x128xf32>
    %cst_168 = arith.constant dense<0.000000e+00> : vector<2x128xf32>
    %690 = tpu.matmul %6, %685, %cst_168 {dimension_numbers = #tpu.dot_dimension_numbers<[1], [0], [0], [1], [0, 0, 1, 1], [], []>} : vector<2x32xf32>, vector<32x128xf32>, vector<2x128xf32> -> vector<2x128xf32>
    %691 = arith.addf %689, %690 : vector<2x128xf32>
    %692 = arith.negf %688 : vector<2x128xf32>
    %693 = math.exp %692 : vector<2x128xf32>
    %cst_169 = arith.constant 1.000000e+00 : f32
    %694 = vector.broadcast %cst_169 : f32 to vector<2x128xf32>
    %695 = arith.addf %694, %693 : vector<2x128xf32>
    %696 = arith.divf %694, %695 : vector<2x128xf32>
    %697 = math.tanh %688 : vector<2x128xf32>
    %698 = arith.select %5, %697, %696 : vector<2x128xi1>, vector<2x128xf32>
    %699 = vector.extract_strided_slice %698 {offsets = [0, 0], sizes = [2, 32], strides = [1, 1]} : vector<2x128xf32> to vector<2x32xf32>
    %700 = vector.extract_strided_slice %698 {offsets = [0, 32], sizes = [2, 32], strides = [1, 1]} : vector<2x128xf32> to vector<2x32xf32>
    %701 = vector.extract_strided_slice %698 {offsets = [0, 64], sizes = [2, 32], strides = [1, 1]} : vector<2x128xf32> to vector<2x32xf32>
    %702 = vector.extract_strided_slice %698 {offsets = [0, 96], sizes = [2, 32], strides = [1, 1]} : vector<2x128xf32> to vector<2x32xf32>
    %703 = arith.mulf %700, %6 : vector<2x32xf32>
    %704 = arith.mulf %699, %701 : vector<2x32xf32>
    %705 = arith.addf %703, %704 : vector<2x32xf32>
    %706 = math.tanh %705 : vector<2x32xf32>
    %707 = arith.mulf %702, %706 : vector<2x32xf32>
    %708 = arith.negf %691 : vector<2x128xf32>
    %709 = math.exp %708 : vector<2x128xf32>
    %cst_170 = arith.constant 1.000000e+00 : f32
    %710 = vector.broadcast %cst_170 : f32 to vector<2x128xf32>
    %711 = arith.addf %710, %709 : vector<2x128xf32>
    %712 = arith.divf %710, %711 : vector<2x128xf32>
    %713 = math.tanh %691 : vector<2x128xf32>
    %714 = arith.select %5, %713, %712 : vector<2x128xi1>, vector<2x128xf32>
    %715 = vector.extract_strided_slice %714 {offsets = [0, 0], sizes = [2, 32], strides = [1, 1]} : vector<2x128xf32> to vector<2x32xf32>
    %716 = vector.extract_strided_slice %714 {offsets = [0, 32], sizes = [2, 32], strides = [1, 1]} : vector<2x128xf32> to vector<2x32xf32>
    %717 = vector.extract_strided_slice %714 {offsets = [0, 64], sizes = [2, 32], strides = [1, 1]} : vector<2x128xf32> to vector<2x32xf32>
    %718 = vector.extract_strided_slice %714 {offsets = [0, 96], sizes = [2, 32], strides = [1, 1]} : vector<2x128xf32> to vector<2x32xf32>
    %719 = arith.mulf %716, %6 : vector<2x32xf32>
    %720 = arith.mulf %715, %717 : vector<2x32xf32>
    %721 = arith.addf %719, %720 : vector<2x32xf32>
    %722 = math.tanh %721 : vector<2x32xf32>
    %723 = arith.mulf %718, %722 : vector<2x32xf32>
    %c0_171 = arith.constant 0 : index
    %c0_172 = arith.constant 0 : index
    %724 = vector.load %arg28[%c0_171, %c0_172] : memref<16x64xf32, #tpu.memory_space<vmem>>, vector<2x32xf32>
    tpu.vector_store %arg28[%c0_171, %c0_172], %707 {strides = array<i32>} : memref<16x64xf32, #tpu.memory_space<vmem>>, vector<2x32xf32>,
    %c14_173 = arith.constant 14 : index
    %c32_174 = arith.constant 32 : index
    %725 = vector.load %arg28[%c14_173, %c32_174] : memref<16x64xf32, #tpu.memory_space<vmem>>, vector<2x32xf32>
    tpu.vector_store %arg28[%c14_173, %c32_174], %723 {strides = array<i32>} : memref<16x64xf32, #tpu.memory_space<vmem>>, vector<2x32xf32>,
    %726 = vector.extract_strided_slice %678 {offsets = [2, 0], sizes = [2, 128], strides = [1, 1]} : vector<16x128xf32> to vector<2x128xf32>
    %cst_175 = arith.constant dense<0.000000e+00> : vector<2x128xf32>
    %727 = tpu.matmul %707, %684, %cst_175 {dimension_numbers = #tpu.dot_dimension_numbers<[1], [0], [0], [1], [0, 0, 1, 1], [], []>} : vector<2x32xf32>, vector<32x128xf32>, vector<2x128xf32> -> vector<2x128xf32>
    %728 = arith.addf %726, %727 : vector<2x128xf32>
    %729 = vector.extract_strided_slice %683 {offsets = [12, 0], sizes = [2, 128], strides = [1, 1]} : vector<16x128xf32> to vector<2x128xf32>
    %cst_176 = arith.constant dense<0.000000e+00> : vector<2x128xf32>
    %730 = tpu.matmul %723, %685, %cst_176 {dimension_numbers = #tpu.dot_dimension_numbers<[1], [0], [0], [1], [0, 0, 1, 1], [], []>} : vector<2x32xf32>, vector<32x128xf32>, vector<2x128xf32> -> vector<2x128xf32>
    %731 = arith.addf %729, %730 : vector<2x128xf32>
    %732 = arith.negf %728 : vector<2x128xf32>
    %733 = math.exp %732 : vector<2x128xf32>
    %cst_177 = arith.constant 1.000000e+00 : f32
    %734 = vector.broadcast %cst_177 : f32 to vector<2x128xf32>
    %735 = arith.addf %734, %733 : vector<2x128xf32>
    %736 = arith.divf %734, %735 : vector<2x128xf32>
    %737 = math.tanh %728 : vector<2x128xf32>
    %738 = arith.select %5, %737, %736 : vector<2x128xi1>, vector<2x128xf32>
    %739 = vector.extract_strided_slice %738 {offsets = [0, 0], sizes = [2, 32], strides = [1, 1]} : vector<2x128xf32> to vector<2x32xf32>
    %740 = vector.extract_strided_slice %738 {offsets = [0, 32], sizes = [2, 32], strides = [1, 1]} : vector<2x128xf32> to vector<2x32xf32>
    %741 = vector.extract_strided_slice %738 {offsets = [0, 64], sizes = [2, 32], strides = [1, 1]} : vector<2x128xf32> to vector<2x32xf32>
    %742 = vector.extract_strided_slice %738 {offsets = [0, 96], sizes = [2, 32], strides = [1, 1]} : vector<2x128xf32> to vector<2x32xf32>
    %743 = arith.mulf %740, %705 : vector<2x32xf32>
    %744 = arith.mulf %739, %741 : vector<2x32xf32>
    %745 = arith.addf %743, %744 : vector<2x32xf32>
    %746 = math.tanh %745 : vector<2x32xf32>
    %747 = arith.mulf %742, %746 : vector<2x32xf32>
    %748 = arith.negf %731 : vector<2x128xf32>
    %749 = math.exp %748 : vector<2x128xf32>
    %cst_178 = arith.constant 1.000000e+00 : f32
    %750 = vector.broadcast %cst_178 : f32 to vector<2x128xf32>
    %751 = arith.addf %750, %749 : vector<2x128xf32>
    %752 = arith.divf %750, %751 : vector<2x128xf32>
    %753 = math.tanh %731 : vector<2x128xf32>
    %754 = arith.select %5, %753, %752 : vector<2x128xi1>, vector<2x128xf32>
    %755 = vector.extract_strided_slice %754 {offsets = [0, 0], sizes = [2, 32], strides = [1, 1]} : vector<2x128xf32> to vector<2x32xf32>
    %756 = vector.extract_strided_slice %754 {offsets = [0, 32], sizes = [2, 32], strides = [1, 1]} : vector<2x128xf32> to vector<2x32xf32>
    %757 = vector.extract_strided_slice %754 {offsets = [0, 64], sizes = [2, 32], strides = [1, 1]} : vector<2x128xf32> to vector<2x32xf32>
    %758 = vector.extract_strided_slice %754 {offsets = [0, 96], sizes = [2, 32], strides = [1, 1]} : vector<2x128xf32> to vector<2x32xf32>
    %759 = arith.mulf %756, %721 : vector<2x32xf32>
    %760 = arith.mulf %755, %757 : vector<2x32xf32>
    %761 = arith.addf %759, %760 : vector<2x32xf32>
    %762 = math.tanh %761 : vector<2x32xf32>
    %763 = arith.mulf %758, %762 : vector<2x32xf32>
    %c2_179 = arith.constant 2 : index
    %c0_180 = arith.constant 0 : index
    %764 = vector.load %arg28[%c2_179, %c0_180] : memref<16x64xf32, #tpu.memory_space<vmem>>, vector<2x32xf32>
    tpu.vector_store %arg28[%c2_179, %c0_180], %747 {strides = array<i32>} : memref<16x64xf32, #tpu.memory_space<vmem>>, vector<2x32xf32>,
    %c12_181 = arith.constant 12 : index
    %c32_182 = arith.constant 32 : index
    %765 = vector.load %arg28[%c12_181, %c32_182] : memref<16x64xf32, #tpu.memory_space<vmem>>, vector<2x32xf32>
    tpu.vector_store %arg28[%c12_181, %c32_182], %763 {strides = array<i32>} : memref<16x64xf32, #tpu.memory_space<vmem>>, vector<2x32xf32>,
    %766 = vector.extract_strided_slice %678 {offsets = [4, 0], sizes = [2, 128], strides = [1, 1]} : vector<16x128xf32> to vector<2x128xf32>
    %cst_183 = arith.constant dense<0.000000e+00> : vector<2x128xf32>
    %767 = tpu.matmul %747, %684, %cst_183 {dimension_numbers = #tpu.dot_dimension_numbers<[1], [0], [0], [1], [0, 0, 1, 1], [], []>} : vector<2x32xf32>, vector<32x128xf32>, vector<2x128xf32> -> vector<2x128xf32>
    %768 = arith.addf %766, %767 : vector<2x128xf32>
    %769 = vector.extract_strided_slice %683 {offsets = [10, 0], sizes = [2, 128], strides = [1, 1]} : vector<16x128xf32> to vector<2x128xf32>
    %cst_184 = arith.constant dense<0.000000e+00> : vector<2x128xf32>
    %770 = tpu.matmul %763, %685, %cst_184 {dimension_numbers = #tpu.dot_dimension_numbers<[1], [0], [0], [1], [0, 0, 1, 1], [], []>} : vector<2x32xf32>, vector<32x128xf32>, vector<2x128xf32> -> vector<2x128xf32>
    %771 = arith.addf %769, %770 : vector<2x128xf32>
    %772 = arith.negf %768 : vector<2x128xf32>
    %773 = math.exp %772 : vector<2x128xf32>
    %cst_185 = arith.constant 1.000000e+00 : f32
    %774 = vector.broadcast %cst_185 : f32 to vector<2x128xf32>
    %775 = arith.addf %774, %773 : vector<2x128xf32>
    %776 = arith.divf %774, %775 : vector<2x128xf32>
    %777 = math.tanh %768 : vector<2x128xf32>
    %778 = arith.select %5, %777, %776 : vector<2x128xi1>, vector<2x128xf32>
    %779 = vector.extract_strided_slice %778 {offsets = [0, 0], sizes = [2, 32], strides = [1, 1]} : vector<2x128xf32> to vector<2x32xf32>
    %780 = vector.extract_strided_slice %778 {offsets = [0, 32], sizes = [2, 32], strides = [1, 1]} : vector<2x128xf32> to vector<2x32xf32>
    %781 = vector.extract_strided_slice %778 {offsets = [0, 64], sizes = [2, 32], strides = [1, 1]} : vector<2x128xf32> to vector<2x32xf32>
    %782 = vector.extract_strided_slice %778 {offsets = [0, 96], sizes = [2, 32], strides = [1, 1]} : vector<2x128xf32> to vector<2x32xf32>
    %783 = arith.mulf %780, %745 : vector<2x32xf32>
    %784 = arith.mulf %779, %781 : vector<2x32xf32>
    %785 = arith.addf %783, %784 : vector<2x32xf32>
    %786 = math.tanh %785 : vector<2x32xf32>
    %787 = arith.mulf %782, %786 : vector<2x32xf32>
    %788 = arith.negf %771 : vector<2x128xf32>
    %789 = math.exp %788 : vector<2x128xf32>
    %cst_186 = arith.constant 1.000000e+00 : f32
    %790 = vector.broadcast %cst_186 : f32 to vector<2x128xf32>
    %791 = arith.addf %790, %789 : vector<2x128xf32>
    %792 = arith.divf %790, %791 : vector<2x128xf32>
    %793 = math.tanh %771 : vector<2x128xf32>
    %794 = arith.select %5, %793, %792 : vector<2x128xi1>, vector<2x128xf32>
    %795 = vector.extract_strided_slice %794 {offsets = [0, 0], sizes = [2, 32], strides = [1, 1]} : vector<2x128xf32> to vector<2x32xf32>
    %796 = vector.extract_strided_slice %794 {offsets = [0, 32], sizes = [2, 32], strides = [1, 1]} : vector<2x128xf32> to vector<2x32xf32>
    %797 = vector.extract_strided_slice %794 {offsets = [0, 64], sizes = [2, 32], strides = [1, 1]} : vector<2x128xf32> to vector<2x32xf32>
    %798 = vector.extract_strided_slice %794 {offsets = [0, 96], sizes = [2, 32], strides = [1, 1]} : vector<2x128xf32> to vector<2x32xf32>
    %799 = arith.mulf %796, %761 : vector<2x32xf32>
    %800 = arith.mulf %795, %797 : vector<2x32xf32>
    %801 = arith.addf %799, %800 : vector<2x32xf32>
    %802 = math.tanh %801 : vector<2x32xf32>
    %803 = arith.mulf %798, %802 : vector<2x32xf32>
    %c4_187 = arith.constant 4 : index
    %c0_188 = arith.constant 0 : index
    %804 = vector.load %arg28[%c4_187, %c0_188] : memref<16x64xf32, #tpu.memory_space<vmem>>, vector<2x32xf32>
    tpu.vector_store %arg28[%c4_187, %c0_188], %787 {strides = array<i32>} : memref<16x64xf32, #tpu.memory_space<vmem>>, vector<2x32xf32>,
    %c10_189 = arith.constant 10 : index
    %c32_190 = arith.constant 32 : index
    %805 = vector.load %arg28[%c10_189, %c32_190] : memref<16x64xf32, #tpu.memory_space<vmem>>, vector<2x32xf32>
    tpu.vector_store %arg28[%c10_189, %c32_190], %803 {strides = array<i32>} : memref<16x64xf32, #tpu.memory_space<vmem>>, vector<2x32xf32>,
    %806 = vector.extract_strided_slice %678 {offsets = [6, 0], sizes = [2, 128], strides = [1, 1]} : vector<16x128xf32> to vector<2x128xf32>
    %cst_191 = arith.constant dense<0.000000e+00> : vector<2x128xf32>
    %807 = tpu.matmul %787, %684, %cst_191 {dimension_numbers = #tpu.dot_dimension_numbers<[1], [0], [0], [1], [0, 0, 1, 1], [], []>} : vector<2x32xf32>, vector<32x128xf32>, vector<2x128xf32> -> vector<2x128xf32>
    %808 = arith.addf %806, %807 : vector<2x128xf32>
    %809 = vector.extract_strided_slice %683 {offsets = [8, 0], sizes = [2, 128], strides = [1, 1]} : vector<16x128xf32> to vector<2x128xf32>
    %cst_192 = arith.constant dense<0.000000e+00> : vector<2x128xf32>
    %810 = tpu.matmul %803, %685, %cst_192 {dimension_numbers = #tpu.dot_dimension_numbers<[1], [0], [0], [1], [0, 0, 1, 1], [], []>} : vector<2x32xf32>, vector<32x128xf32>, vector<2x128xf32> -> vector<2x128xf32>
    %811 = arith.addf %809, %810 : vector<2x128xf32>
    %812 = arith.negf %808 : vector<2x128xf32>
    %813 = math.exp %812 : vector<2x128xf32>
    %cst_193 = arith.constant 1.000000e+00 : f32
    %814 = vector.broadcast %cst_193 : f32 to vector<2x128xf32>
    %815 = arith.addf %814, %813 : vector<2x128xf32>
    %816 = arith.divf %814, %815 : vector<2x128xf32>
    %817 = math.tanh %808 : vector<2x128xf32>
    %818 = arith.select %5, %817, %816 : vector<2x128xi1>, vector<2x128xf32>
    %819 = vector.extract_strided_slice %818 {offsets = [0, 0], sizes = [2, 32], strides = [1, 1]} : vector<2x128xf32> to vector<2x32xf32>
    %820 = vector.extract_strided_slice %818 {offsets = [0, 32], sizes = [2, 32], strides = [1, 1]} : vector<2x128xf32> to vector<2x32xf32>
    %821 = vector.extract_strided_slice %818 {offsets = [0, 64], sizes = [2, 32], strides = [1, 1]} : vector<2x128xf32> to vector<2x32xf32>
    %822 = vector.extract_strided_slice %818 {offsets = [0, 96], sizes = [2, 32], strides = [1, 1]} : vector<2x128xf32> to vector<2x32xf32>
    %823 = arith.mulf %820, %785 : vector<2x32xf32>
    %824 = arith.mulf %819, %821 : vector<2x32xf32>
    %825 = arith.addf %823, %824 : vector<2x32xf32>
    %826 = math.tanh %825 : vector<2x32xf32>
    %827 = arith.mulf %822, %826 : vector<2x32xf32>
    %828 = arith.negf %811 : vector<2x128xf32>
    %829 = math.exp %828 : vector<2x128xf32>
    %cst_194 = arith.constant 1.000000e+00 : f32
    %830 = vector.broadcast %cst_194 : f32 to vector<2x128xf32>
    %831 = arith.addf %830, %829 : vector<2x128xf32>
    %832 = arith.divf %830, %831 : vector<2x128xf32>
    %833 = math.tanh %811 : vector<2x128xf32>
    %834 = arith.select %5, %833, %832 : vector<2x128xi1>, vector<2x128xf32>
    %835 = vector.extract_strided_slice %834 {offsets = [0, 0], sizes = [2, 32], strides = [1, 1]} : vector<2x128xf32> to vector<2x32xf32>
    %836 = vector.extract_strided_slice %834 {offsets = [0, 32], sizes = [2, 32], strides = [1, 1]} : vector<2x128xf32> to vector<2x32xf32>
    %837 = vector.extract_strided_slice %834 {offsets = [0, 64], sizes = [2, 32], strides = [1, 1]} : vector<2x128xf32> to vector<2x32xf32>
    %838 = vector.extract_strided_slice %834 {offsets = [0, 96], sizes = [2, 32], strides = [1, 1]} : vector<2x128xf32> to vector<2x32xf32>
    %839 = arith.mulf %836, %801 : vector<2x32xf32>
    %840 = arith.mulf %835, %837 : vector<2x32xf32>
    %841 = arith.addf %839, %840 : vector<2x32xf32>
    %842 = math.tanh %841 : vector<2x32xf32>
    %843 = arith.mulf %838, %842 : vector<2x32xf32>
    %c6_195 = arith.constant 6 : index
    %c0_196 = arith.constant 0 : index
    %844 = vector.load %arg28[%c6_195, %c0_196] : memref<16x64xf32, #tpu.memory_space<vmem>>, vector<2x32xf32>
    tpu.vector_store %arg28[%c6_195, %c0_196], %827 {strides = array<i32>} : memref<16x64xf32, #tpu.memory_space<vmem>>, vector<2x32xf32>,
    %c8_197 = arith.constant 8 : index
    %c32_198 = arith.constant 32 : index
    %845 = vector.load %arg28[%c8_197, %c32_198] : memref<16x64xf32, #tpu.memory_space<vmem>>, vector<2x32xf32>
    tpu.vector_store %arg28[%c8_197, %c32_198], %843 {strides = array<i32>} : memref<16x64xf32, #tpu.memory_space<vmem>>, vector<2x32xf32>,
    %846 = vector.extract_strided_slice %678 {offsets = [8, 0], sizes = [2, 128], strides = [1, 1]} : vector<16x128xf32> to vector<2x128xf32>
    %cst_199 = arith.constant dense<0.000000e+00> : vector<2x128xf32>
    %847 = tpu.matmul %827, %684, %cst_199 {dimension_numbers = #tpu.dot_dimension_numbers<[1], [0], [0], [1], [0, 0, 1, 1], [], []>} : vector<2x32xf32>, vector<32x128xf32>, vector<2x128xf32> -> vector<2x128xf32>
    %848 = arith.addf %846, %847 : vector<2x128xf32>
    %849 = vector.extract_strided_slice %683 {offsets = [6, 0], sizes = [2, 128], strides = [1, 1]} : vector<16x128xf32> to vector<2x128xf32>
    %cst_200 = arith.constant dense<0.000000e+00> : vector<2x128xf32>
    %850 = tpu.matmul %843, %685, %cst_200 {dimension_numbers = #tpu.dot_dimension_numbers<[1], [0], [0], [1], [0, 0, 1, 1], [], []>} : vector<2x32xf32>, vector<32x128xf32>, vector<2x128xf32> -> vector<2x128xf32>
    %851 = arith.addf %849, %850 : vector<2x128xf32>
    %852 = arith.negf %848 : vector<2x128xf32>
    %853 = math.exp %852 : vector<2x128xf32>
    %cst_201 = arith.constant 1.000000e+00 : f32
    %854 = vector.broadcast %cst_201 : f32 to vector<2x128xf32>
    %855 = arith.addf %854, %853 : vector<2x128xf32>
    %856 = arith.divf %854, %855 : vector<2x128xf32>
    %857 = math.tanh %848 : vector<2x128xf32>
    %858 = arith.select %5, %857, %856 : vector<2x128xi1>, vector<2x128xf32>
    %859 = vector.extract_strided_slice %858 {offsets = [0, 0], sizes = [2, 32], strides = [1, 1]} : vector<2x128xf32> to vector<2x32xf32>
    %860 = vector.extract_strided_slice %858 {offsets = [0, 32], sizes = [2, 32], strides = [1, 1]} : vector<2x128xf32> to vector<2x32xf32>
    %861 = vector.extract_strided_slice %858 {offsets = [0, 64], sizes = [2, 32], strides = [1, 1]} : vector<2x128xf32> to vector<2x32xf32>
    %862 = vector.extract_strided_slice %858 {offsets = [0, 96], sizes = [2, 32], strides = [1, 1]} : vector<2x128xf32> to vector<2x32xf32>
    %863 = arith.mulf %860, %825 : vector<2x32xf32>
    %864 = arith.mulf %859, %861 : vector<2x32xf32>
    %865 = arith.addf %863, %864 : vector<2x32xf32>
    %866 = math.tanh %865 : vector<2x32xf32>
    %867 = arith.mulf %862, %866 : vector<2x32xf32>
    %868 = arith.negf %851 : vector<2x128xf32>
    %869 = math.exp %868 : vector<2x128xf32>
    %cst_202 = arith.constant 1.000000e+00 : f32
    %870 = vector.broadcast %cst_202 : f32 to vector<2x128xf32>
    %871 = arith.addf %870, %869 : vector<2x128xf32>
    %872 = arith.divf %870, %871 : vector<2x128xf32>
    %873 = math.tanh %851 : vector<2x128xf32>
    %874 = arith.select %5, %873, %872 : vector<2x128xi1>, vector<2x128xf32>
    %875 = vector.extract_strided_slice %874 {offsets = [0, 0], sizes = [2, 32], strides = [1, 1]} : vector<2x128xf32> to vector<2x32xf32>
    %876 = vector.extract_strided_slice %874 {offsets = [0, 32], sizes = [2, 32], strides = [1, 1]} : vector<2x128xf32> to vector<2x32xf32>
    %877 = vector.extract_strided_slice %874 {offsets = [0, 64], sizes = [2, 32], strides = [1, 1]} : vector<2x128xf32> to vector<2x32xf32>
    %878 = vector.extract_strided_slice %874 {offsets = [0, 96], sizes = [2, 32], strides = [1, 1]} : vector<2x128xf32> to vector<2x32xf32>
    %879 = arith.mulf %876, %841 : vector<2x32xf32>
    %880 = arith.mulf %875, %877 : vector<2x32xf32>
    %881 = arith.addf %879, %880 : vector<2x32xf32>
    %882 = math.tanh %881 : vector<2x32xf32>
    %883 = arith.mulf %878, %882 : vector<2x32xf32>
    %c8_203 = arith.constant 8 : index
    %c0_204 = arith.constant 0 : index
    %884 = vector.load %arg28[%c8_203, %c0_204] : memref<16x64xf32, #tpu.memory_space<vmem>>, vector<2x32xf32>
    tpu.vector_store %arg28[%c8_203, %c0_204], %867 {strides = array<i32>} : memref<16x64xf32, #tpu.memory_space<vmem>>, vector<2x32xf32>,
    %c6_205 = arith.constant 6 : index
    %c32_206 = arith.constant 32 : index
    %885 = vector.load %arg28[%c6_205, %c32_206] : memref<16x64xf32, #tpu.memory_space<vmem>>, vector<2x32xf32>
    tpu.vector_store %arg28[%c6_205, %c32_206], %883 {strides = array<i32>} : memref<16x64xf32, #tpu.memory_space<vmem>>, vector<2x32xf32>,
    %886 = vector.extract_strided_slice %678 {offsets = [10, 0], sizes = [2, 128], strides = [1, 1]} : vector<16x128xf32> to vector<2x128xf32>
    %cst_207 = arith.constant dense<0.000000e+00> : vector<2x128xf32>
    %887 = tpu.matmul %867, %684, %cst_207 {dimension_numbers = #tpu.dot_dimension_numbers<[1], [0], [0], [1], [0, 0, 1, 1], [], []>} : vector<2x32xf32>, vector<32x128xf32>, vector<2x128xf32> -> vector<2x128xf32>
    %888 = arith.addf %886, %887 : vector<2x128xf32>
    %889 = vector.extract_strided_slice %683 {offsets = [4, 0], sizes = [2, 128], strides = [1, 1]} : vector<16x128xf32> to vector<2x128xf32>
    %cst_208 = arith.constant dense<0.000000e+00> : vector<2x128xf32>
    %890 = tpu.matmul %883, %685, %cst_208 {dimension_numbers = #tpu.dot_dimension_numbers<[1], [0], [0], [1], [0, 0, 1, 1], [], []>} : vector<2x32xf32>, vector<32x128xf32>, vector<2x128xf32> -> vector<2x128xf32>
    %891 = arith.addf %889, %890 : vector<2x128xf32>
    %892 = arith.negf %888 : vector<2x128xf32>
    %893 = math.exp %892 : vector<2x128xf32>
    %cst_209 = arith.constant 1.000000e+00 : f32
    %894 = vector.broadcast %cst_209 : f32 to vector<2x128xf32>
    %895 = arith.addf %894, %893 : vector<2x128xf32>
    %896 = arith.divf %894, %895 : vector<2x128xf32>
    %897 = math.tanh %888 : vector<2x128xf32>
    %898 = arith.select %5, %897, %896 : vector<2x128xi1>, vector<2x128xf32>
    %899 = vector.extract_strided_slice %898 {offsets = [0, 0], sizes = [2, 32], strides = [1, 1]} : vector<2x128xf32> to vector<2x32xf32>
    %900 = vector.extract_strided_slice %898 {offsets = [0, 32], sizes = [2, 32], strides = [1, 1]} : vector<2x128xf32> to vector<2x32xf32>
    %901 = vector.extract_strided_slice %898 {offsets = [0, 64], sizes = [2, 32], strides = [1, 1]} : vector<2x128xf32> to vector<2x32xf32>
    %902 = vector.extract_strided_slice %898 {offsets = [0, 96], sizes = [2, 32], strides = [1, 1]} : vector<2x128xf32> to vector<2x32xf32>
    %903 = arith.mulf %900, %865 : vector<2x32xf32>
    %904 = arith.mulf %899, %901 : vector<2x32xf32>
    %905 = arith.addf %903, %904 : vector<2x32xf32>
    %906 = math.tanh %905 : vector<2x32xf32>
    %907 = arith.mulf %902, %906 : vector<2x32xf32>
    %908 = arith.negf %891 : vector<2x128xf32>
    %909 = math.exp %908 : vector<2x128xf32>
    %cst_210 = arith.constant 1.000000e+00 : f32
    %910 = vector.broadcast %cst_210 : f32 to vector<2x128xf32>
    %911 = arith.addf %910, %909 : vector<2x128xf32>
    %912 = arith.divf %910, %911 : vector<2x128xf32>
    %913 = math.tanh %891 : vector<2x128xf32>
    %914 = arith.select %5, %913, %912 : vector<2x128xi1>, vector<2x128xf32>
    %915 = vector.extract_strided_slice %914 {offsets = [0, 0], sizes = [2, 32], strides = [1, 1]} : vector<2x128xf32> to vector<2x32xf32>
    %916 = vector.extract_strided_slice %914 {offsets = [0, 32], sizes = [2, 32], strides = [1, 1]} : vector<2x128xf32> to vector<2x32xf32>
    %917 = vector.extract_strided_slice %914 {offsets = [0, 64], sizes = [2, 32], strides = [1, 1]} : vector<2x128xf32> to vector<2x32xf32>
    %918 = vector.extract_strided_slice %914 {offsets = [0, 96], sizes = [2, 32], strides = [1, 1]} : vector<2x128xf32> to vector<2x32xf32>
    %919 = arith.mulf %916, %881 : vector<2x32xf32>
    %920 = arith.mulf %915, %917 : vector<2x32xf32>
    %921 = arith.addf %919, %920 : vector<2x32xf32>
    %922 = math.tanh %921 : vector<2x32xf32>
    %923 = arith.mulf %918, %922 : vector<2x32xf32>
    %c10_211 = arith.constant 10 : index
    %c0_212 = arith.constant 0 : index
    %924 = vector.load %arg28[%c10_211, %c0_212] : memref<16x64xf32, #tpu.memory_space<vmem>>, vector<2x32xf32>
    tpu.vector_store %arg28[%c10_211, %c0_212], %907 {strides = array<i32>} : memref<16x64xf32, #tpu.memory_space<vmem>>, vector<2x32xf32>,
    %c4_213 = arith.constant 4 : index
    %c32_214 = arith.constant 32 : index
    %925 = vector.load %arg28[%c4_213, %c32_214] : memref<16x64xf32, #tpu.memory_space<vmem>>, vector<2x32xf32>
    tpu.vector_store %arg28[%c4_213, %c32_214], %923 {strides = array<i32>} : memref<16x64xf32, #tpu.memory_space<vmem>>, vector<2x32xf32>,
    %926 = vector.extract_strided_slice %678 {offsets = [12, 0], sizes = [2, 128], strides = [1, 1]} : vector<16x128xf32> to vector<2x128xf32>
    %cst_215 = arith.constant dense<0.000000e+00> : vector<2x128xf32>
    %927 = tpu.matmul %907, %684, %cst_215 {dimension_numbers = #tpu.dot_dimension_numbers<[1], [0], [0], [1], [0, 0, 1, 1], [], []>} : vector<2x32xf32>, vector<32x128xf32>, vector<2x128xf32> -> vector<2x128xf32>
    %928 = arith.addf %926, %927 : vector<2x128xf32>
    %929 = vector.extract_strided_slice %683 {offsets = [2, 0], sizes = [2, 128], strides = [1, 1]} : vector<16x128xf32> to vector<2x128xf32>
    %cst_216 = arith.constant dense<0.000000e+00> : vector<2x128xf32>
    %930 = tpu.matmul %923, %685, %cst_216 {dimension_numbers = #tpu.dot_dimension_numbers<[1], [0], [0], [1], [0, 0, 1, 1], [], []>} : vector<2x32xf32>, vector<32x128xf32>, vector<2x128xf32> -> vector<2x128xf32>
    %931 = arith.addf %929, %930 : vector<2x128xf32>
    %932 = arith.negf %928 : vector<2x128xf32>
    %933 = math.exp %932 : vector<2x128xf32>
    %cst_217 = arith.constant 1.000000e+00 : f32
    %934 = vector.broadcast %cst_217 : f32 to vector<2x128xf32>
    %935 = arith.addf %934, %933 : vector<2x128xf32>
    %936 = arith.divf %934, %935 : vector<2x128xf32>
    %937 = math.tanh %928 : vector<2x128xf32>
    %938 = arith.select %5, %937, %936 : vector<2x128xi1>, vector<2x128xf32>
    %939 = vector.extract_strided_slice %938 {offsets = [0, 0], sizes = [2, 32], strides = [1, 1]} : vector<2x128xf32> to vector<2x32xf32>
    %940 = vector.extract_strided_slice %938 {offsets = [0, 32], sizes = [2, 32], strides = [1, 1]} : vector<2x128xf32> to vector<2x32xf32>
    %941 = vector.extract_strided_slice %938 {offsets = [0, 64], sizes = [2, 32], strides = [1, 1]} : vector<2x128xf32> to vector<2x32xf32>
    %942 = vector.extract_strided_slice %938 {offsets = [0, 96], sizes = [2, 32], strides = [1, 1]} : vector<2x128xf32> to vector<2x32xf32>
    %943 = arith.mulf %940, %905 : vector<2x32xf32>
    %944 = arith.mulf %939, %941 : vector<2x32xf32>
    %945 = arith.addf %943, %944 : vector<2x32xf32>
    %946 = math.tanh %945 : vector<2x32xf32>
    %947 = arith.mulf %942, %946 : vector<2x32xf32>
    %948 = arith.negf %931 : vector<2x128xf32>
    %949 = math.exp %948 : vector<2x128xf32>
    %cst_218 = arith.constant 1.000000e+00 : f32
    %950 = vector.broadcast %cst_218 : f32 to vector<2x128xf32>
    %951 = arith.addf %950, %949 : vector<2x128xf32>
    %952 = arith.divf %950, %951 : vector<2x128xf32>
    %953 = math.tanh %931 : vector<2x128xf32>
    %954 = arith.select %5, %953, %952 : vector<2x128xi1>, vector<2x128xf32>
    %955 = vector.extract_strided_slice %954 {offsets = [0, 0], sizes = [2, 32], strides = [1, 1]} : vector<2x128xf32> to vector<2x32xf32>
    %956 = vector.extract_strided_slice %954 {offsets = [0, 32], sizes = [2, 32], strides = [1, 1]} : vector<2x128xf32> to vector<2x32xf32>
    %957 = vector.extract_strided_slice %954 {offsets = [0, 64], sizes = [2, 32], strides = [1, 1]} : vector<2x128xf32> to vector<2x32xf32>
    %958 = vector.extract_strided_slice %954 {offsets = [0, 96], sizes = [2, 32], strides = [1, 1]} : vector<2x128xf32> to vector<2x32xf32>
    %959 = arith.mulf %956, %921 : vector<2x32xf32>
    %960 = arith.mulf %955, %957 : vector<2x32xf32>
    %961 = arith.addf %959, %960 : vector<2x32xf32>
    %962 = math.tanh %961 : vector<2x32xf32>
    %963 = arith.mulf %958, %962 : vector<2x32xf32>
    %c12_219 = arith.constant 12 : index
    %c0_220 = arith.constant 0 : index
    %964 = vector.load %arg28[%c12_219, %c0_220] : memref<16x64xf32, #tpu.memory_space<vmem>>, vector<2x32xf32>
    tpu.vector_store %arg28[%c12_219, %c0_220], %947 {strides = array<i32>} : memref<16x64xf32, #tpu.memory_space<vmem>>, vector<2x32xf32>,
    %c2_221 = arith.constant 2 : index
    %c32_222 = arith.constant 32 : index
    %965 = vector.load %arg28[%c2_221, %c32_222] : memref<16x64xf32, #tpu.memory_space<vmem>>, vector<2x32xf32>
    tpu.vector_store %arg28[%c2_221, %c32_222], %963 {strides = array<i32>} : memref<16x64xf32, #tpu.memory_space<vmem>>, vector<2x32xf32>,
    %966 = vector.extract_strided_slice %678 {offsets = [14, 0], sizes = [2, 128], strides = [1, 1]} : vector<16x128xf32> to vector<2x128xf32>
    %cst_223 = arith.constant dense<0.000000e+00> : vector<2x128xf32>
    %967 = tpu.matmul %947, %684, %cst_223 {dimension_numbers = #tpu.dot_dimension_numbers<[1], [0], [0], [1], [0, 0, 1, 1], [], []>} : vector<2x32xf32>, vector<32x128xf32>, vector<2x128xf32> -> vector<2x128xf32>
    %968 = arith.addf %966, %967 : vector<2x128xf32>
    %969 = vector.extract_strided_slice %683 {offsets = [0, 0], sizes = [2, 128], strides = [1, 1]} : vector<16x128xf32> to vector<2x128xf32>
    %cst_224 = arith.constant dense<0.000000e+00> : vector<2x128xf32>
    %970 = tpu.matmul %963, %685, %cst_224 {dimension_numbers = #tpu.dot_dimension_numbers<[1], [0], [0], [1], [0, 0, 1, 1], [], []>} : vector<2x32xf32>, vector<32x128xf32>, vector<2x128xf32> -> vector<2x128xf32>
    %971 = arith.addf %969, %970 : vector<2x128xf32>
    %972 = arith.negf %968 : vector<2x128xf32>
    %973 = math.exp %972 : vector<2x128xf32>
    %cst_225 = arith.constant 1.000000e+00 : f32
    %974 = vector.broadcast %cst_225 : f32 to vector<2x128xf32>
    %975 = arith.addf %974, %973 : vector<2x128xf32>
    %976 = arith.divf %974, %975 : vector<2x128xf32>
    %977 = math.tanh %968 : vector<2x128xf32>
    %978 = arith.select %5, %977, %976 : vector<2x128xi1>, vector<2x128xf32>
    %979 = vector.extract_strided_slice %978 {offsets = [0, 0], sizes = [2, 32], strides = [1, 1]} : vector<2x128xf32> to vector<2x32xf32>
    %980 = vector.extract_strided_slice %978 {offsets = [0, 32], sizes = [2, 32], strides = [1, 1]} : vector<2x128xf32> to vector<2x32xf32>
    %981 = vector.extract_strided_slice %978 {offsets = [0, 64], sizes = [2, 32], strides = [1, 1]} : vector<2x128xf32> to vector<2x32xf32>
    %982 = vector.extract_strided_slice %978 {offsets = [0, 96], sizes = [2, 32], strides = [1, 1]} : vector<2x128xf32> to vector<2x32xf32>
    %983 = arith.mulf %980, %945 : vector<2x32xf32>
    %984 = arith.mulf %979, %981 : vector<2x32xf32>
    %985 = arith.addf %983, %984 : vector<2x32xf32>
    %986 = math.tanh %985 : vector<2x32xf32>
    %987 = arith.mulf %982, %986 : vector<2x32xf32>
    %988 = arith.negf %971 : vector<2x128xf32>
    %989 = math.exp %988 : vector<2x128xf32>
    %cst_226 = arith.constant 1.000000e+00 : f32
    %990 = vector.broadcast %cst_226 : f32 to vector<2x128xf32>
    %991 = arith.addf %990, %989 : vector<2x128xf32>
    %992 = arith.divf %990, %991 : vector<2x128xf32>
    %993 = math.tanh %971 : vector<2x128xf32>
    %994 = arith.select %5, %993, %992 : vector<2x128xi1>, vector<2x128xf32>
    %995 = vector.extract_strided_slice %994 {offsets = [0, 0], sizes = [2, 32], strides = [1, 1]} : vector<2x128xf32> to vector<2x32xf32>
    %996 = vector.extract_strided_slice %994 {offsets = [0, 32], sizes = [2, 32], strides = [1, 1]} : vector<2x128xf32> to vector<2x32xf32>
    %997 = vector.extract_strided_slice %994 {offsets = [0, 64], sizes = [2, 32], strides = [1, 1]} : vector<2x128xf32> to vector<2x32xf32>
    %998 = vector.extract_strided_slice %994 {offsets = [0, 96], sizes = [2, 32], strides = [1, 1]} : vector<2x128xf32> to vector<2x32xf32>
    %999 = arith.mulf %996, %961 : vector<2x32xf32>
    %1000 = arith.mulf %995, %997 : vector<2x32xf32>
    %1001 = arith.addf %999, %1000 : vector<2x32xf32>
    %1002 = math.tanh %1001 : vector<2x32xf32>
    %1003 = arith.mulf %998, %1002 : vector<2x32xf32>
    %c14_227 = arith.constant 14 : index
    %c0_228 = arith.constant 0 : index
    %1004 = vector.load %arg28[%c14_227, %c0_228] : memref<16x64xf32, #tpu.memory_space<vmem>>, vector<2x32xf32>
    tpu.vector_store %arg28[%c14_227, %c0_228], %987 {strides = array<i32>} : memref<16x64xf32, #tpu.memory_space<vmem>>, vector<2x32xf32>,
    %c0_229 = arith.constant 0 : index
    %c32_230 = arith.constant 32 : index
    %1005 = vector.load %arg28[%c0_229, %c32_230] : memref<16x64xf32, #tpu.memory_space<vmem>>, vector<2x32xf32>
    tpu.vector_store %arg28[%c0_229, %c32_230], %1003 {strides = array<i32>} : memref<16x64xf32, #tpu.memory_space<vmem>>, vector<2x32xf32>,
    %c0_231 = arith.constant 0 : index
    %c0_232 = arith.constant 0 : index
    %1006 = vector.load %arg28[%c0_231, %c0_232] : memref<16x64xf32, #tpu.memory_space<vmem>>, vector<16x64xf32>
    %c0_233 = arith.constant 0 : index
    %c0_234 = arith.constant 0 : index
    %1007 = vector.load %arg19[%c0_233, %c0_234] : memref<64x128xf32, #tpu.memory_space<vmem>>, vector<64x128xf32>
    %cst_235 = arith.constant dense<0.000000e+00> : vector<16x128xf32>
    %1008 = tpu.matmul %1006, %1007, %cst_235 {dimension_numbers = #tpu.dot_dimension_numbers<[1], [0], [0], [1], [0, 0, 1, 1], [], []>} : vector<16x64xf32>, vector<64x128xf32>, vector<16x128xf32> -> vector<16x128xf32>
    %c0_236 = arith.constant 0 : index
    %c0_237 = arith.constant 0 : index
    %1009 = vector.load %arg21[%c0_236, %c0_237] : memref<1x128xf32, #tpu.memory_space<vmem>>, vector<1x128xf32>
    %1010 = vector.broadcast %1009 : vector<1x128xf32> to vector<16x128xf32>
    %1011 = arith.addf %1008, %1010 : vector<16x128xf32>
    %c0_238 = arith.constant 0 : index
    %c0_239 = arith.constant 0 : index
    %1012 = vector.load %arg22[%c0_238, %c0_239] : memref<64x128xf32, #tpu.memory_space<vmem>>, vector<64x128xf32>
    %cst_240 = arith.constant dense<0.000000e+00> : vector<16x128xf32>
    %1013 = tpu.matmul %1006, %1012, %cst_240 {dimension_numbers = #tpu.dot_dimension_numbers<[1], [0], [0], [1], [0, 0, 1, 1], [], []>} : vector<16x64xf32>, vector<64x128xf32>, vector<16x128xf32> -> vector<16x128xf32>
    %c0_241 = arith.constant 0 : index
    %c0_242 = arith.constant 0 : index
    %1014 = vector.load %arg24[%c0_241, %c0_242] : memref<1x128xf32, #tpu.memory_space<vmem>>, vector<1x128xf32>
    %1015 = vector.broadcast %1014 : vector<1x128xf32> to vector<16x128xf32>
    %1016 = arith.addf %1013, %1015 : vector<16x128xf32>
    %c0_243 = arith.constant 0 : index
    %c0_244 = arith.constant 0 : index
    %1017 = vector.load %arg20[%c0_243, %c0_244] : memref<32x128xf32, #tpu.memory_space<vmem>>, vector<32x128xf32>
    %1018 = vector.extract_strided_slice %1016 {offsets = [14, 0], sizes = [2, 128], strides = [1, 1]} : vector<16x128xf32> to vector<2x128xf32>
    %1019 = arith.negf %1018 : vector<2x128xf32>
    %1020 = math.exp %1019 : vector<2x128xf32>
    %cst_245 = arith.constant 1.000000e+00 : f32
    %1021 = vector.broadcast %cst_245 : f32 to vector<2x128xf32>
    %1022 = arith.addf %1021, %1020 : vector<2x128xf32>
    %1023 = arith.divf %1021, %1022 : vector<2x128xf32>
    %1024 = math.tanh %1018 : vector<2x128xf32>
    %1025 = arith.select %5, %1024, %1023 : vector<2x128xi1>, vector<2x128xf32>
    %1026 = vector.extract_strided_slice %1025 {offsets = [0, 0], sizes = [2, 32], strides = [1, 1]} : vector<2x128xf32> to vector<2x32xf32>
    %1027 = vector.extract_strided_slice %1025 {offsets = [0, 32], sizes = [2, 32], strides = [1, 1]} : vector<2x128xf32> to vector<2x32xf32>
    %1028 = vector.extract_strided_slice %1025 {offsets = [0, 64], sizes = [2, 32], strides = [1, 1]} : vector<2x128xf32> to vector<2x32xf32>
    %1029 = vector.extract_strided_slice %1025 {offsets = [0, 96], sizes = [2, 32], strides = [1, 1]} : vector<2x128xf32> to vector<2x32xf32>
    %1030 = arith.mulf %1027, %6 : vector<2x32xf32>
    %1031 = arith.mulf %1026, %1028 : vector<2x32xf32>
    %1032 = arith.addf %1030, %1031 : vector<2x32xf32>
    %1033 = math.tanh %1032 : vector<2x32xf32>
    %1034 = arith.mulf %1029, %1033 : vector<2x32xf32>
    %1035 = vector.extract_strided_slice %1011 {offsets = [0, 0], sizes = [2, 128], strides = [1, 1]} : vector<16x128xf32> to vector<2x128xf32>
    %cst_246 = arith.constant dense<0.000000e+00> : vector<2x128xf32>
    %1036 = tpu.matmul %6, %1017, %cst_246 {dimension_numbers = #tpu.dot_dimension_numbers<[1], [0], [0], [1], [0, 0, 1, 1], [], []>} : vector<2x32xf32>, vector<32x128xf32>, vector<2x128xf32> -> vector<2x128xf32>
    %1037 = arith.addf %1035, %1036 : vector<2x128xf32>
    %1038 = arith.negf %1037 : vector<2x128xf32>
    %1039 = math.exp %1038 : vector<2x128xf32>
    %cst_247 = arith.constant 1.000000e+00 : f32
    %1040 = vector.broadcast %cst_247 : f32 to vector<2x128xf32>
    %1041 = arith.addf %1040, %1039 : vector<2x128xf32>
    %1042 = arith.divf %1040, %1041 : vector<2x128xf32>
    %1043 = math.tanh %1037 : vector<2x128xf32>
    %1044 = arith.select %5, %1043, %1042 : vector<2x128xi1>, vector<2x128xf32>
    %1045 = vector.extract_strided_slice %1044 {offsets = [0, 0], sizes = [2, 32], strides = [1, 1]} : vector<2x128xf32> to vector<2x32xf32>
    %1046 = vector.extract_strided_slice %1044 {offsets = [0, 32], sizes = [2, 32], strides = [1, 1]} : vector<2x128xf32> to vector<2x32xf32>
    %1047 = vector.extract_strided_slice %1044 {offsets = [0, 64], sizes = [2, 32], strides = [1, 1]} : vector<2x128xf32> to vector<2x32xf32>
    %1048 = vector.extract_strided_slice %1044 {offsets = [0, 96], sizes = [2, 32], strides = [1, 1]} : vector<2x128xf32> to vector<2x32xf32>
    %1049 = arith.mulf %1046, %6 : vector<2x32xf32>
    %1050 = arith.mulf %1045, %1047 : vector<2x32xf32>
    %1051 = arith.addf %1049, %1050 : vector<2x32xf32>
    %1052 = math.tanh %1051 : vector<2x32xf32>
    %1053 = arith.mulf %1048, %1052 : vector<2x32xf32>
    %1054 = vector.extract_strided_slice %1011 {offsets = [2, 0], sizes = [2, 128], strides = [1, 1]} : vector<16x128xf32> to vector<2x128xf32>
    %cst_248 = arith.constant dense<0.000000e+00> : vector<2x128xf32>
    %1055 = tpu.matmul %1053, %1017, %cst_248 {dimension_numbers = #tpu.dot_dimension_numbers<[1], [0], [0], [1], [0, 0, 1, 1], [], []>} : vector<2x32xf32>, vector<32x128xf32>, vector<2x128xf32> -> vector<2x128xf32>
    %1056 = arith.addf %1054, %1055 : vector<2x128xf32>
    %1057 = arith.negf %1056 : vector<2x128xf32>
    %1058 = math.exp %1057 : vector<2x128xf32>
    %cst_249 = arith.constant 1.000000e+00 : f32
    %1059 = vector.broadcast %cst_249 : f32 to vector<2x128xf32>
    %1060 = arith.addf %1059, %1058 : vector<2x128xf32>
    %1061 = arith.divf %1059, %1060 : vector<2x128xf32>
    %1062 = math.tanh %1056 : vector<2x128xf32>
    %1063 = arith.select %5, %1062, %1061 : vector<2x128xi1>, vector<2x128xf32>
    %1064 = vector.extract_strided_slice %1063 {offsets = [0, 0], sizes = [2, 32], strides = [1, 1]} : vector<2x128xf32> to vector<2x32xf32>
    %1065 = vector.extract_strided_slice %1063 {offsets = [0, 32], sizes = [2, 32], strides = [1, 1]} : vector<2x128xf32> to vector<2x32xf32>
    %1066 = vector.extract_strided_slice %1063 {offsets = [0, 64], sizes = [2, 32], strides = [1, 1]} : vector<2x128xf32> to vector<2x32xf32>
    %1067 = vector.extract_strided_slice %1063 {offsets = [0, 96], sizes = [2, 32], strides = [1, 1]} : vector<2x128xf32> to vector<2x32xf32>
    %1068 = arith.mulf %1065, %1051 : vector<2x32xf32>
    %1069 = arith.mulf %1064, %1066 : vector<2x32xf32>
    %1070 = arith.addf %1068, %1069 : vector<2x32xf32>
    %1071 = math.tanh %1070 : vector<2x32xf32>
    %1072 = arith.mulf %1067, %1071 : vector<2x32xf32>
    %1073 = vector.extract_strided_slice %1011 {offsets = [4, 0], sizes = [2, 128], strides = [1, 1]} : vector<16x128xf32> to vector<2x128xf32>
    %cst_250 = arith.constant dense<0.000000e+00> : vector<2x128xf32>
    %1074 = tpu.matmul %1072, %1017, %cst_250 {dimension_numbers = #tpu.dot_dimension_numbers<[1], [0], [0], [1], [0, 0, 1, 1], [], []>} : vector<2x32xf32>, vector<32x128xf32>, vector<2x128xf32> -> vector<2x128xf32>
    %1075 = arith.addf %1073, %1074 : vector<2x128xf32>
    %1076 = arith.negf %1075 : vector<2x128xf32>
    %1077 = math.exp %1076 : vector<2x128xf32>
    %cst_251 = arith.constant 1.000000e+00 : f32
    %1078 = vector.broadcast %cst_251 : f32 to vector<2x128xf32>
    %1079 = arith.addf %1078, %1077 : vector<2x128xf32>
    %1080 = arith.divf %1078, %1079 : vector<2x128xf32>
    %1081 = math.tanh %1075 : vector<2x128xf32>
    %1082 = arith.select %5, %1081, %1080 : vector<2x128xi1>, vector<2x128xf32>
    %1083 = vector.extract_strided_slice %1082 {offsets = [0, 0], sizes = [2, 32], strides = [1, 1]} : vector<2x128xf32> to vector<2x32xf32>
    %1084 = vector.extract_strided_slice %1082 {offsets = [0, 32], sizes = [2, 32], strides = [1, 1]} : vector<2x128xf32> to vector<2x32xf32>
    %1085 = vector.extract_strided_slice %1082 {offsets = [0, 64], sizes = [2, 32], strides = [1, 1]} : vector<2x128xf32> to vector<2x32xf32>
    %1086 = vector.extract_strided_slice %1082 {offsets = [0, 96], sizes = [2, 32], strides = [1, 1]} : vector<2x128xf32> to vector<2x32xf32>
    %1087 = arith.mulf %1084, %1070 : vector<2x32xf32>
    %1088 = arith.mulf %1083, %1085 : vector<2x32xf32>
    %1089 = arith.addf %1087, %1088 : vector<2x32xf32>
    %1090 = math.tanh %1089 : vector<2x32xf32>
    %1091 = arith.mulf %1086, %1090 : vector<2x32xf32>
    %1092 = vector.extract_strided_slice %1011 {offsets = [6, 0], sizes = [2, 128], strides = [1, 1]} : vector<16x128xf32> to vector<2x128xf32>
    %cst_252 = arith.constant dense<0.000000e+00> : vector<2x128xf32>
    %1093 = tpu.matmul %1091, %1017, %cst_252 {dimension_numbers = #tpu.dot_dimension_numbers<[1], [0], [0], [1], [0, 0, 1, 1], [], []>} : vector<2x32xf32>, vector<32x128xf32>, vector<2x128xf32> -> vector<2x128xf32>
    %1094 = arith.addf %1092, %1093 : vector<2x128xf32>
    %1095 = arith.negf %1094 : vector<2x128xf32>
    %1096 = math.exp %1095 : vector<2x128xf32>
    %cst_253 = arith.constant 1.000000e+00 : f32
    %1097 = vector.broadcast %cst_253 : f32 to vector<2x128xf32>
    %1098 = arith.addf %1097, %1096 : vector<2x128xf32>
    %1099 = arith.divf %1097, %1098 : vector<2x128xf32>
    %1100 = math.tanh %1094 : vector<2x128xf32>
    %1101 = arith.select %5, %1100, %1099 : vector<2x128xi1>, vector<2x128xf32>
    %1102 = vector.extract_strided_slice %1101 {offsets = [0, 0], sizes = [2, 32], strides = [1, 1]} : vector<2x128xf32> to vector<2x32xf32>
    %1103 = vector.extract_strided_slice %1101 {offsets = [0, 32], sizes = [2, 32], strides = [1, 1]} : vector<2x128xf32> to vector<2x32xf32>
    %1104 = vector.extract_strided_slice %1101 {offsets = [0, 64], sizes = [2, 32], strides = [1, 1]} : vector<2x128xf32> to vector<2x32xf32>
    %1105 = vector.extract_strided_slice %1101 {offsets = [0, 96], sizes = [2, 32], strides = [1, 1]} : vector<2x128xf32> to vector<2x32xf32>
    %1106 = arith.mulf %1103, %1089 : vector<2x32xf32>
    %1107 = arith.mulf %1102, %1104 : vector<2x32xf32>
    %1108 = arith.addf %1106, %1107 : vector<2x32xf32>
    %1109 = math.tanh %1108 : vector<2x32xf32>
    %1110 = arith.mulf %1105, %1109 : vector<2x32xf32>
    %1111 = vector.extract_strided_slice %1011 {offsets = [8, 0], sizes = [2, 128], strides = [1, 1]} : vector<16x128xf32> to vector<2x128xf32>
    %cst_254 = arith.constant dense<0.000000e+00> : vector<2x128xf32>
    %1112 = tpu.matmul %1110, %1017, %cst_254 {dimension_numbers = #tpu.dot_dimension_numbers<[1], [0], [0], [1], [0, 0, 1, 1], [], []>} : vector<2x32xf32>, vector<32x128xf32>, vector<2x128xf32> -> vector<2x128xf32>
    %1113 = arith.addf %1111, %1112 : vector<2x128xf32>
    %1114 = arith.negf %1113 : vector<2x128xf32>
    %1115 = math.exp %1114 : vector<2x128xf32>
    %cst_255 = arith.constant 1.000000e+00 : f32
    %1116 = vector.broadcast %cst_255 : f32 to vector<2x128xf32>
    %1117 = arith.addf %1116, %1115 : vector<2x128xf32>
    %1118 = arith.divf %1116, %1117 : vector<2x128xf32>
    %1119 = math.tanh %1113 : vector<2x128xf32>
    %1120 = arith.select %5, %1119, %1118 : vector<2x128xi1>, vector<2x128xf32>
    %1121 = vector.extract_strided_slice %1120 {offsets = [0, 0], sizes = [2, 32], strides = [1, 1]} : vector<2x128xf32> to vector<2x32xf32>
    %1122 = vector.extract_strided_slice %1120 {offsets = [0, 32], sizes = [2, 32], strides = [1, 1]} : vector<2x128xf32> to vector<2x32xf32>
    %1123 = vector.extract_strided_slice %1120 {offsets = [0, 64], sizes = [2, 32], strides = [1, 1]} : vector<2x128xf32> to vector<2x32xf32>
    %1124 = vector.extract_strided_slice %1120 {offsets = [0, 96], sizes = [2, 32], strides = [1, 1]} : vector<2x128xf32> to vector<2x32xf32>
    %1125 = arith.mulf %1122, %1108 : vector<2x32xf32>
    %1126 = arith.mulf %1121, %1123 : vector<2x32xf32>
    %1127 = arith.addf %1125, %1126 : vector<2x32xf32>
    %1128 = math.tanh %1127 : vector<2x32xf32>
    %1129 = arith.mulf %1124, %1128 : vector<2x32xf32>
    %1130 = vector.extract_strided_slice %1011 {offsets = [10, 0], sizes = [2, 128], strides = [1, 1]} : vector<16x128xf32> to vector<2x128xf32>
    %cst_256 = arith.constant dense<0.000000e+00> : vector<2x128xf32>
    %1131 = tpu.matmul %1129, %1017, %cst_256 {dimension_numbers = #tpu.dot_dimension_numbers<[1], [0], [0], [1], [0, 0, 1, 1], [], []>} : vector<2x32xf32>, vector<32x128xf32>, vector<2x128xf32> -> vector<2x128xf32>
    %1132 = arith.addf %1130, %1131 : vector<2x128xf32>
    %1133 = arith.negf %1132 : vector<2x128xf32>
    %1134 = math.exp %1133 : vector<2x128xf32>
    %cst_257 = arith.constant 1.000000e+00 : f32
    %1135 = vector.broadcast %cst_257 : f32 to vector<2x128xf32>
    %1136 = arith.addf %1135, %1134 : vector<2x128xf32>
    %1137 = arith.divf %1135, %1136 : vector<2x128xf32>
    %1138 = math.tanh %1132 : vector<2x128xf32>
    %1139 = arith.select %5, %1138, %1137 : vector<2x128xi1>, vector<2x128xf32>
    %1140 = vector.extract_strided_slice %1139 {offsets = [0, 0], sizes = [2, 32], strides = [1, 1]} : vector<2x128xf32> to vector<2x32xf32>
    %1141 = vector.extract_strided_slice %1139 {offsets = [0, 32], sizes = [2, 32], strides = [1, 1]} : vector<2x128xf32> to vector<2x32xf32>
    %1142 = vector.extract_strided_slice %1139 {offsets = [0, 64], sizes = [2, 32], strides = [1, 1]} : vector<2x128xf32> to vector<2x32xf32>
    %1143 = vector.extract_strided_slice %1139 {offsets = [0, 96], sizes = [2, 32], strides = [1, 1]} : vector<2x128xf32> to vector<2x32xf32>
    %1144 = arith.mulf %1141, %1127 : vector<2x32xf32>
    %1145 = arith.mulf %1140, %1142 : vector<2x32xf32>
    %1146 = arith.addf %1144, %1145 : vector<2x32xf32>
    %1147 = math.tanh %1146 : vector<2x32xf32>
    %1148 = arith.mulf %1143, %1147 : vector<2x32xf32>
    %1149 = vector.extract_strided_slice %1011 {offsets = [12, 0], sizes = [2, 128], strides = [1, 1]} : vector<16x128xf32> to vector<2x128xf32>
    %cst_258 = arith.constant dense<0.000000e+00> : vector<2x128xf32>
    %1150 = tpu.matmul %1148, %1017, %cst_258 {dimension_numbers = #tpu.dot_dimension_numbers<[1], [0], [0], [1], [0, 0, 1, 1], [], []>} : vector<2x32xf32>, vector<32x128xf32>, vector<2x128xf32> -> vector<2x128xf32>
    %1151 = arith.addf %1149, %1150 : vector<2x128xf32>
    %1152 = arith.negf %1151 : vector<2x128xf32>
    %1153 = math.exp %1152 : vector<2x128xf32>
    %cst_259 = arith.constant 1.000000e+00 : f32
    %1154 = vector.broadcast %cst_259 : f32 to vector<2x128xf32>
    %1155 = arith.addf %1154, %1153 : vector<2x128xf32>
    %1156 = arith.divf %1154, %1155 : vector<2x128xf32>
    %1157 = math.tanh %1151 : vector<2x128xf32>
    %1158 = arith.select %5, %1157, %1156 : vector<2x128xi1>, vector<2x128xf32>
    %1159 = vector.extract_strided_slice %1158 {offsets = [0, 0], sizes = [2, 32], strides = [1, 1]} : vector<2x128xf32> to vector<2x32xf32>
    %1160 = vector.extract_strided_slice %1158 {offsets = [0, 32], sizes = [2, 32], strides = [1, 1]} : vector<2x128xf32> to vector<2x32xf32>
    %1161 = vector.extract_strided_slice %1158 {offsets = [0, 64], sizes = [2, 32], strides = [1, 1]} : vector<2x128xf32> to vector<2x32xf32>
    %1162 = vector.extract_strided_slice %1158 {offsets = [0, 96], sizes = [2, 32], strides = [1, 1]} : vector<2x128xf32> to vector<2x32xf32>
    %1163 = arith.mulf %1160, %1146 : vector<2x32xf32>
    %1164 = arith.mulf %1159, %1161 : vector<2x32xf32>
    %1165 = arith.addf %1163, %1164 : vector<2x32xf32>
    %1166 = math.tanh %1165 : vector<2x32xf32>
    %1167 = arith.mulf %1162, %1166 : vector<2x32xf32>
    %1168 = vector.extract_strided_slice %1011 {offsets = [14, 0], sizes = [2, 128], strides = [1, 1]} : vector<16x128xf32> to vector<2x128xf32>
    %cst_260 = arith.constant dense<0.000000e+00> : vector<2x128xf32>
    %1169 = tpu.matmul %1167, %1017, %cst_260 {dimension_numbers = #tpu.dot_dimension_numbers<[1], [0], [0], [1], [0, 0, 1, 1], [], []>} : vector<2x32xf32>, vector<32x128xf32>, vector<2x128xf32> -> vector<2x128xf32>
    %1170 = arith.addf %1168, %1169 : vector<2x128xf32>
    %1171 = arith.negf %1170 : vector<2x128xf32>
    %1172 = math.exp %1171 : vector<2x128xf32>
    %cst_261 = arith.constant 1.000000e+00 : f32
    %1173 = vector.broadcast %cst_261 : f32 to vector<2x128xf32>
    %1174 = arith.addf %1173, %1172 : vector<2x128xf32>
    %1175 = arith.divf %1173, %1174 : vector<2x128xf32>
    %1176 = math.tanh %1170 : vector<2x128xf32>
    %1177 = arith.select %5, %1176, %1175 : vector<2x128xi1>, vector<2x128xf32>
    %1178 = vector.extract_strided_slice %1177 {offsets = [0, 0], sizes = [2, 32], strides = [1, 1]} : vector<2x128xf32> to vector<2x32xf32>
    %1179 = vector.extract_strided_slice %1177 {offsets = [0, 32], sizes = [2, 32], strides = [1, 1]} : vector<2x128xf32> to vector<2x32xf32>
    %1180 = vector.extract_strided_slice %1177 {offsets = [0, 64], sizes = [2, 32], strides = [1, 1]} : vector<2x128xf32> to vector<2x32xf32>
    %1181 = vector.extract_strided_slice %1177 {offsets = [0, 96], sizes = [2, 32], strides = [1, 1]} : vector<2x128xf32> to vector<2x32xf32>
    %1182 = arith.mulf %1179, %1165 : vector<2x32xf32>
    %1183 = arith.mulf %1178, %1180 : vector<2x32xf32>
    %1184 = arith.addf %1182, %1183 : vector<2x32xf32>
    %1185 = math.tanh %1184 : vector<2x32xf32>
    %1186 = arith.mulf %1181, %1185 : vector<2x32xf32>
    %cst_262 = arith.constant 0.000000e+00 : f32
    %1187 = vector.broadcast %cst_262 : f32 to vector<2x32xf32>
    %1188 = arith.maximumf %1186, %1187 : vector<2x32xf32>
    %cst_263 = arith.constant 0.000000e+00 : f32
    %1189 = vector.broadcast %cst_263 : f32 to vector<2x32xf32>
    %1190 = arith.maximumf %1034, %1189 : vector<2x32xf32>
    %c0_264 = arith.constant 0 : index
    %c0_265 = arith.constant 0 : index
    %1191 = vector.load %arg25[%c0_264, %c0_265] : memref<64x10xf32, #tpu.memory_space<vmem>>, vector<64x10xf32>
    %1192 = vector.extract_strided_slice %1191 {offsets = [0, 0], sizes = [32, 10], strides = [1, 1]} : vector<64x10xf32> to vector<32x10xf32>
    %cst_266 = arith.constant dense<0.000000e+00> : vector<2x10xf32>
    %1193 = tpu.matmul %1188, %1192, %cst_266 {dimension_numbers = #tpu.dot_dimension_numbers<[1], [0], [0], [1], [0, 0, 1, 1], [], []>} : vector<2x32xf32>, vector<32x10xf32>, vector<2x10xf32> -> vector<2x10xf32>
    %1194 = vector.extract_strided_slice %1191 {offsets = [32, 0], sizes = [32, 10], strides = [1, 1]} : vector<64x10xf32> to vector<32x10xf32>
    %cst_267 = arith.constant dense<0.000000e+00> : vector<2x10xf32>
    %1195 = tpu.matmul %1190, %1194, %cst_267 {dimension_numbers = #tpu.dot_dimension_numbers<[1], [0], [0], [1], [0, 0, 1, 1], [], []>} : vector<2x32xf32>, vector<32x10xf32>, vector<2x10xf32> -> vector<2x10xf32>
    %1196 = arith.addf %1193, %1195 : vector<2x10xf32>
    %c0_268 = arith.constant 0 : index
    %c0_269 = arith.constant 0 : index
    %1197 = vector.load %arg26[%c0_268, %c0_269] : memref<1x10xf32, #tpu.memory_space<vmem>>, vector<1x10xf32>
    %1198 = vector.broadcast %1197 : vector<1x10xf32> to vector<2x10xf32>
    %1199 = arith.addf %1196, %1198 : vector<2x10xf32>
    %cst_270 = arith.constant dense<0xFF800000> : vector<2xf32>
    %1200 = vector.multi_reduction <maximumf>, %1199, %cst_270 [1] : vector<2x10xf32> to vector<2xf32>
    %1201 = vector.shape_cast %1200 : vector<2xf32> to vector<2x1xf32>
    %1202 = vector.broadcast %1201 : vector<2x1xf32> to vector<2x10xf32>
    %1203 = arith.subf %1199, %1202 : vector<2x10xf32>
    %1204 = math.exp %1203 : vector<2x10xf32>
    %cst_271 = arith.constant dense<0.000000e+00> : vector<2xf32>
    %1205 = vector.multi_reduction <add>, %1204, %cst_271 [1] : vector<2x10xf32> to vector<2xf32>
    %1206 = vector.shape_cast %1205 : vector<2xf32> to vector<2x1xf32>
    %1207 = tpu.reciprocal %1206 : vector<2x1xf32> -> vector<2x1xf32>
    %1208 = vector.broadcast %1207 : vector<2x1xf32> to vector<2x10xf32>
    %1209 = arith.mulf %1204, %1208 : vector<2x10xf32>
    %c0_272 = arith.constant 0 : index
    %c0_273 = arith.constant 0 : index
    %1210 = vector.load %arg27[%c0_272, %c0_273] : memref<2x10xf32, #tpu.memory_space<vmem>>, vector<2x10xf32>
    tpu.vector_store %arg27[%c0_272, %c0_273], %1209 {strides = array<i32>} : memref<2x10xf32, #tpu.memory_space<vmem>>, vector<2x10xf32>,
    return
  }
}

</mosaic_0001>

<llo_original>
// kernel: sequence_classifier_forward.1
$region0: #{sequence_classifier_forward.1}
  #allocation0 [shape = 'u32[]', space=smem, size = 0x4, offset = 0x4, fixed_abs, tag = 'smem constant byte address 0x4 - core index']
  #allocation1 [shape = 'u32[144,128]{1,0:T(1,128)}', space=vmem, size = 0x12000, scoped, tag = 'internal scratch']
  #allocation2 [shape = 'f32[16,64]{1,0:T(8,128)}', space=vmem, size = 0x2000, scoped, tag = 'scratch operand']
  #allocation3 [shape = 'f32[16,64]{1,0:T(8,128)}', space=vmem, size = 0x2000, scoped, tag = 'scratch operand']
  %s0 = inlined_call_operand.vmem [shape: f32[16,16], index: 0, kind: input, shape index: {}]
  %s1 = inlined_call_operand.hbm [shape: f32[16,128], index: 1, kind: input, shape index: {}]
  %s2 = inlined_call_operand.vmem [shape: f32[32,128], index: 2, kind: input, shape index: {}]
  %s3 = inlined_call_operand.vmem [shape: f32[1,128], index: 3, kind: input, shape index: {}]
  %s4 = inlined_call_operand.hbm [shape: f32[16,128], index: 4, kind: input, shape index: {}]
  %s5 = inlined_call_operand.hbm [shape: f32[32,128], index: 5, kind: input, shape index: {}]
  %s6 = inlined_call_operand.vmem [shape: f32[1,128], index: 6, kind: input, shape index: {}]
  %s7 = inlined_call_operand.vmem [shape: f32[64,128], index: 7, kind: input, shape index: {}]
  %s8 = inlined_call_operand.vmem [shape: f32[32,128], index: 8, kind: input, shape index: {}]
  %s9 = inlined_call_operand.vmem [shape: f32[1,128], index: 9, kind: input, shape index: {}]
  %s10 = inlined_call_operand.vmem [shape: f32[64,128], index: 10, kind: input, shape index: {}]
  %s11 = inlined_call_operand.hbm [shape: f32[32,128], index: 11, kind: input, shape index: {}]
  %s12 = inlined_call_operand.vmem [shape: f32[1,128], index: 12, kind: input, shape index: {}]
  %s13 = inlined_call_operand.vmem [shape: f32[64,128], index: 13, kind: input, shape index: {}]
  %s14 = inlined_call_operand.vmem [shape: f32[32,128], index: 14, kind: input, shape index: {}]
  %s15 = inlined_call_operand.vmem [shape: f32[1,128], index: 15, kind: input, shape index: {}]
  %s16 = inlined_call_operand.vmem [shape: f32[64,128], index: 16, kind: input, shape index: {}]
  %s17 = inlined_call_operand.hbm [shape: f32[32,128], index: 17, kind: input, shape index: {}]
  %s18 = inlined_call_operand.vmem [shape: f32[1,128], index: 18, kind: input, shape index: {}]
  %s19 = inlined_call_operand.vmem [shape: f32[64,128], index: 19, kind: input, shape index: {}]
  %s20 = inlined_call_operand.vmem [shape: f32[32,128], index: 20, kind: input, shape index: {}]
  %s21 = inlined_call_operand.vmem [shape: f32[1,128], index: 21, kind: input, shape index: {}]
  %s22 = inlined_call_operand.vmem [shape: f32[64,128], index: 22, kind: input, shape index: {}]
  %s23 = inlined_call_operand.hbm [shape: f32[32,128], index: 23, kind: input, shape index: {}]
  %s24 = inlined_call_operand.vmem [shape: f32[1,128], index: 24, kind: input, shape index: {}]
  %s25 = inlined_call_operand.vmem [shape: f32[64,10], index: 25, kind: input, shape index: {}]
  %s26 = inlined_call_operand.vmem [shape: f32[1,10], index: 26, kind: input, shape index: {}]
  %s27 = inlined_call_operand.hbm [shape: f32[2,10], index: 27, kind: output, shape index: {}]
  %s28 = sld [smem:[#allocation0]]
  $region142: #{sequence_classifier_forward.1} parent=0
    _
  %s30 = ssub.s32 1, %s28
  %s31 = scalar_select 0, %s30, %s28
  $region1: #{sequence_classifier_forward.1} parent=0
    #allocation4 [shape = 'u8[8192]{0}', space=vmem, size = 0x2000, scoped, tag = 'input window, operand 1, single buffered']
    #allocation5 [shape = 's32[1]{0}', space=sflag, size = 0x4, scoped, tag = 'scoped memory for sequence_classifier_forward.1']
    #allocation6 [shape = 's32[1]{0}', space=sflag, size = 0x4, scoped, tag = 'scoped memory for sequence_classifier_forward.1']
    #allocation7 [shape = 'u8[8192]{0}', space=vmem, size = 0x2000, scoped, tag = 'input window, operand 4, single buffered']
    #allocation8 [shape = 's32[1]{0}', space=sflag, size = 0x4, scoped, tag = 'scoped memory for sequence_classifier_forward.1']
    #allocation9 [shape = 'u8[16384]{0}', space=vmem, size = 0x4000, scoped, tag = 'input window, operand 5, single buffered']
    #allocation10 [shape = 'u8[16384]{0}', space=vmem, size = 0x4000, scoped, tag = 'input window, operand 11, single buffered']
    #allocation11 [shape = 's32[1]{0}', space=sflag, size = 0x4, scoped, tag = 'scoped memory for sequence_classifier_forward.1']
    #allocation12 [shape = 'u8[16384]{0}', space=vmem, size = 0x4000, scoped, tag = 'input window, operand 17, single buffered']
    #allocation13 [shape = 'u8[16384]{0}', space=vmem, size = 0x4000, scoped, tag = 'input window, operand 23, single buffered']
    #allocation14 [shape = 's32[1]{0}', space=sflag, size = 0x4, scoped, tag = 'scoped memory for sequence_classifier_forward.1']
    #allocation15 [shape = 'u8[1024]{0}', space=vmem, size = 0x400, scoped, tag = 'output window, operand 0, single buffered']
    %32 = vsyncpa [#allocation5], 0
    %33 = vsyncpa [#allocation8], 0
    %34 = vsyncpa [#allocation11], 0
    %35 = vsyncpa [#allocation14], 0
    %36 = vsyncpa [#allocation6], 0
    // Predicated region
    $region2: #{sequence_classifier_forward.1} parent=1 // pred_check
      _
    $region3: #{sequence_classifier_forward.1} parent=1 // pred_check_branch
      %38 = sbr.rel (0) target = $region5
    $region4: #{sequence_classifier_forward.1} parent=1 // pred_region
      _
    $region5: #{sequence_classifier_forward.1} parent=1 // pred_fallthru
      _
    // Predicated region
    $region6: #{sequence_classifier_forward.1} parent=1 // pred_check
      _
    $region7: #{sequence_classifier_forward.1} parent=1 // pred_check_branch
      %40 = sbr.rel (0) target = $region9
    $region8: #{sequence_classifier_forward.1} parent=1 // pred_region
      %s42 = ssub.s32 256, 256
      %43 = vsyncadd [#allocation5], %s42
      %s44 = sshll.u32 [#allocation4], 4
      %s45 = int_to_ptr.vmem [resolvable:$true] %s44
      %50 = dma.hbm_to_vmem [thread:$0]  %s1, 256, %s45, [#allocation5], 128, 128, 8
    $region9: #{sequence_classifier_forward.1} parent=1 // pred_fallthru
      _
    // Predicated region
    $region10: #{sequence_classifier_forward.1} parent=1 // pred_check
      _
    $region11: #{sequence_classifier_forward.1} parent=1 // pred_check_branch
      %52 = sbr.rel (0) target = $region13
    $region12: #{sequence_classifier_forward.1} parent=1 // pred_region
      _
    $region13: #{sequence_classifier_forward.1} parent=1 // pred_fallthru
      _
    // Predicated region
    $region14: #{sequence_classifier_forward.1} parent=1 // pred_check
      _
    $region15: #{sequence_classifier_forward.1} parent=1 // pred_check_branch
      %54 = sbr.rel (0) target = $region17
    $region16: #{sequence_classifier_forward.1} parent=1 // pred_region
      _
    $region17: #{sequence_classifier_forward.1} parent=1 // pred_fallthru
      _
    // Predicated region
    $region18: #{sequence_classifier_forward.1} parent=1 // pred_check
      _
    $region19: #{sequence_classifier_forward.1} parent=1 // pred_check_branch
      %56 = sbr.rel (0) target = $region21
    $region20: #{sequence_classifier_forward.1} parent=1 // pred_region
      %s58 = ssub.s32 256, 256
      %59 = vsyncadd [#allocation8], %s58
      %s60 = sshll.u32 [#allocation7], 4
      %s61 = int_to_ptr.vmem [resolvable:$true] %s60
      %66 = dma.hbm_to_vmem [thread:$0]  %s4, 256, %s61, [#allocation8], 128, 128, 8
    $region21: #{sequence_classifier_forward.1} parent=1 // pred_fallthru
      _
    // Predicated region
    $region22: #{sequence_classifier_forward.1} parent=1 // pred_check
      _
    $region23: #{sequence_classifier_forward.1} parent=1 // pred_check_branch
      %68 = sbr.rel (0) target = $region25
    $region24: #{sequence_classifier_forward.1} parent=1 // pred_region
      %s70 = ssub.s32 512, 512
      %71 = vsyncadd [#allocation8], %s70
      %s72 = sshll.u32 [#allocation9], 4
      %s73 = int_to_ptr.vmem [resolvable:$true] %s72
      %78 = dma.hbm_to_vmem [thread:$0]  %s5, 512, %s73, [#allocation8], 128, 128, 8
    $region25: #{sequence_classifier_forward.1} parent=1 // pred_fallthru
      _
    // Predicated region
    $region26: #{sequence_classifier_forward.1} parent=1 // pred_check
      _
    $region27: #{sequence_classifier_forward.1} parent=1 // pred_check_branch
      %80 = sbr.rel (0) target = $region29
    $region28: #{sequence_classifier_forward.1} parent=1 // pred_region
      _
    $region29: #{sequence_classifier_forward.1} parent=1 // pred_fallthru
      _
    // Predicated region
    $region30: #{sequence_classifier_forward.1} parent=1 // pred_check
      _
    $region31: #{sequence_classifier_forward.1} parent=1 // pred_check_branch
      %82 = sbr.rel (0) target = $region33
    $region32: #{sequence_classifier_forward.1} parent=1 // pred_region
      _
    $region33: #{sequence_classifier_forward.1} parent=1 // pred_fallthru
      _
    // Predicated region
    $region34: #{sequence_classifier_forward.1} parent=1 // pred_check
      _
    $region35: #{sequence_classifier_forward.1} parent=1 // pred_check_branch
      %84 = sbr.rel (0) target = $region37
    $region36: #{sequence_classifier_forward.1} parent=1 // pred_region
      _
    $region37: #{sequence_classifier_forward.1} parent=1 // pred_fallthru
      _
    // Predicated region
    $region38: #{sequence_classifier_forward.1} parent=1 // pred_check
      _
    $region39: #{sequence_classifier_forward.1} parent=1 // pred_check_branch
      %86 = sbr.rel (0) target = $region41
    $region40: #{sequence_classifier_forward.1} parent=1 // pred_region
      _
    $region41: #{sequence_classifier_forward.1} parent=1 // pred_fallthru
      _
    // Predicated region
    $region42: #{sequence_classifier_forward.1} parent=1 // pred_check
      _
    $region43: #{sequence_classifier_forward.1} parent=1 // pred_check_branch
      %88 = sbr.rel (0) target = $region45
    $region44: #{sequence_classifier_forward.1} parent=1 // pred_region
      _
    $region45: #{sequence_classifier_forward.1} parent=1 // pred_fallthru
      _
    // Predicated region
    $region46: #{sequence_classifier_forward.1} parent=1 // pred_check
      _
    $region47: #{sequence_classifier_forward.1} parent=1 // pred_check_branch
      %90 = sbr.rel (0) target = $region49
    $region48: #{sequence_classifier_forward.1} parent=1 // pred_region
      %s92 = ssub.s32 512, 512
      %93 = vsyncadd [#allocation11], %s92
      %s94 = sshll.u32 [#allocation10], 4
      %s95 = int_to_ptr.vmem [resolvable:$true] %s94
      %100 = dma.hbm_to_vmem [thread:$0]  %s11, 512, %s95, [#allocation11], 128, 128, 8
    $region49: #{sequence_classifier_forward.1} parent=1 // pred_fallthru
      _
    // Predicated region
    $region50: #{sequence_classifier_forward.1} parent=1 // pred_check
      _
    $region51: #{sequence_classifier_forward.1} parent=1 // pred_check_branch
      %102 = sbr.rel (0) target = $region53
    $region52: #{sequence_classifier_forward.1} parent=1 // pred_region
      _
    $region53: #{sequence_classifier_forward.1} parent=1 // pred_fallthru
      _
    // Predicated region
    $region54: #{sequence_classifier_forward.1} parent=1 // pred_check
      _
    $region55: #{sequence_classifier_forward.1} parent=1 // pred_check_branch
      %104 = sbr.rel (0) target = $region57
    $region56: #{sequence_classifier_forward.1} parent=1 // pred_region
      _
    $region57: #{sequence_classifier_forward.1} parent=1 // pred_fallthru
      _
    // Predicated region
    $region58: #{sequence_classifier_forward.1} parent=1 // pred_check
      _
    $region59: #{sequence_classifier_forward.1} parent=1 // pred_check_branch
      %106 = sbr.rel (0) target = $region61
    $region60: #{sequence_classifier_forward.1} parent=1 // pred_region
      _
    $region61: #{sequence_classifier_forward.1} parent=1 // pred_fallthru
      _
    // Predicated region
    $region62: #{sequence_classifier_forward.1} parent=1 // pred_check
      _
    $region63: #{sequence_classifier_forward.1} parent=1 // pred_check_branch
      %108 = sbr.rel (0) target = $region65
    $region64: #{sequence_classifier_forward.1} parent=1 // pred_region
      _
    $region65: #{sequence_classifier_forward.1} parent=1 // pred_fallthru
      _
    // Predicated region
    $region66: #{sequence_classifier_forward.1} parent=1 // pred_check
      _
    $region67: #{sequence_classifier_forward.1} parent=1 // pred_check_branch
      %110 = sbr.rel (0) target = $region69
    $region68: #{sequence_classifier_forward.1} parent=1 // pred_region
      _
    $region69: #{sequence_classifier_forward.1} parent=1 // pred_fallthru
      _
    // Predicated region
    $region70: #{sequence_classifier_forward.1} parent=1 // pred_check
      _
    $region71: #{sequence_classifier_forward.1} parent=1 // pred_check_branch
      %112 = sbr.rel (0) target = $region73
    $region72: #{sequence_classifier_forward.1} parent=1 // pred_region
      %s114 = ssub.s32 512, 512
      %115 = vsyncadd [#allocation11], %s114
      %s116 = sshll.u32 [#allocation12], 4
      %s117 = int_to_ptr.vmem [resolvable:$true] %s116
      %122 = dma.hbm_to_vmem [thread:$0]  %s17, 512, %s117, [#allocation11], 128, 128, 8
    $region73: #{sequence_classifier_forward.1} parent=1 // pred_fallthru
      _
    // Predicated region
    $region74: #{sequence_classifier_forward.1} parent=1 // pred_check
      _
    $region75: #{sequence_classifier_forward.1} parent=1 // pred_check_branch
      %124 = sbr.rel (0) target = $region77
    $region76: #{sequence_classifier_forward.1} parent=1 // pred_region
      _
    $region77: #{sequence_classifier_forward.1} parent=1 // pred_fallthru
      _
    // Predicated region
    $region78: #{sequence_classifier_forward.1} parent=1 // pred_check
      _
    $region79: #{sequence_classifier_forward.1} parent=1 // pred_check_branch
      %126 = sbr.rel (0) target = $region81
    $region80: #{sequence_classifier_forward.1} parent=1 // pred_region
      _
    $region81: #{sequence_classifier_forward.1} parent=1 // pred_fallthru
      _
    // Predicated region
    $region82: #{sequence_classifier_forward.1} parent=1 // pred_check
      _
    $region83: #{sequence_classifier_forward.1} parent=1 // pred_check_branch
      %128 = sbr.rel (0) target = $region85
    $region84: #{sequence_classifier_forward.1} parent=1 // pred_region
      _
    $region85: #{sequence_classifier_forward.1} parent=1 // pred_fallthru
      _
    // Predicated region
    $region86: #{sequence_classifier_forward.1} parent=1 // pred_check
      _
    $region87: #{sequence_classifier_forward.1} parent=1 // pred_check_branch
      %130 = sbr.rel (0) target = $region89
    $region88: #{sequence_classifier_forward.1} parent=1 // pred_region
      _
    $region89: #{sequence_classifier_forward.1} parent=1 // pred_fallthru
      _
    // Predicated region
    $region90: #{sequence_classifier_forward.1} parent=1 // pred_check
      _
    $region91: #{sequence_classifier_forward.1} parent=1 // pred_check_branch
      %132 = sbr.rel (0) target = $region93
    $region92: #{sequence_classifier_forward.1} parent=1 // pred_region
      _
    $region93: #{sequence_classifier_forward.1} parent=1 // pred_fallthru
      _
    // Predicated region
    $region94: #{sequence_classifier_forward.1} parent=1 // pred_check
      _
    $region95: #{sequence_classifier_forward.1} parent=1 // pred_check_branch
      %134 = sbr.rel (0) target = $region97
    $region96: #{sequence_classifier_forward.1} parent=1 // pred_region
      %s136 = ssub.s32 512, 512
      %137 = vsyncadd [#allocation14], %s136
      %s138 = sshll.u32 [#allocation13], 4
      %s139 = int_to_ptr.vmem [resolvable:$true] %s138
      %144 = dma.hbm_to_vmem [thread:$0]  %s23, 512, %s139, [#allocation14], 128, 128, 8
    $region97: #{sequence_classifier_forward.1} parent=1 // pred_fallthru
      _
    // Predicated region
    $region98: #{sequence_classifier_forward.1} parent=1 // pred_check
      _
    $region99: #{sequence_classifier_forward.1} parent=1 // pred_check_branch
      %146 = sbr.rel (0) target = $region101
    $region100: #{sequence_classifier_forward.1} parent=1 // pred_region
      _
    $region101: #{sequence_classifier_forward.1} parent=1 // pred_fallthru
      _
    // Predicated region
    $region102: #{sequence_classifier_forward.1} parent=1 // pred_check
      _
    $region103: #{sequence_classifier_forward.1} parent=1 // pred_check_branch
      %148 = sbr.rel (0) target = $region105
    $region104: #{sequence_classifier_forward.1} parent=1 // pred_region
      _
    $region105: #{sequence_classifier_forward.1} parent=1 // pred_fallthru
      _
    // Predicated region
    $region106: #{sequence_classifier_forward.1} parent=1 // pred_check
      _
    $region107: #{sequence_classifier_forward.1} parent=1 // pred_check_branch
      %150 = sbr.rel (0) target = $region109
    $region108: #{sequence_classifier_forward.1} parent=1 // pred_region
      _
    $region109: #{sequence_classifier_forward.1} parent=1 // pred_fallthru
      _
    // Predicated region
    $region110: #{sequence_classifier_forward.1} parent=1 // pred_check
      _
    $region111: #{sequence_classifier_forward.1} parent=1 // pred_check_branch
      %152 = sbr.rel (0) target = $region113
    $region112: #{sequence_classifier_forward.1} parent=1 // pred_region
      %153 = dma.done [#allocation5], 256
    $region113: #{sequence_classifier_forward.1} parent=1 // pred_fallthru
      _
    // Predicated region
    $region114: #{sequence_classifier_forward.1} parent=1 // pred_check
      _
    $region115: #{sequence_classifier_forward.1} parent=1 // pred_check_branch
      %155 = sbr.rel (0) target = $region117
    $region116: #{sequence_classifier_forward.1} parent=1 // pred_region
      %156 = dma.done [#allocation8], 256
    $region117: #{sequence_classifier_forward.1} parent=1 // pred_fallthru
      _
    // Predicated region
    $region118: #{sequence_classifier_forward.1} parent=1 // pred_check
      _
    $region119: #{sequence_classifier_forward.1} parent=1 // pred_check_branch
      %158 = sbr.rel (0) target = $region121
    $region120: #{sequence_classifier_forward.1} parent=1 // pred_region
      %159 = dma.done [#allocation8], 512
    $region121: #{sequence_classifier_forward.1} parent=1 // pred_fallthru
      _
    // Predicated region
    $region122: #{sequence_classifier_forward.1} parent=1 // pred_check
      _
    $region123: #{sequence_classifier_forward.1} parent=1 // pred_check_branch
      %161 = sbr.rel (0) target = $region125
    $region124: #{sequence_classifier_forward.1} parent=1 // pred_region
      %162 = dma.done [#allocation11], 512
    $region125: #{sequence_classifier_forward.1} parent=1 // pred_fallthru
      _
    // Predicated region
    $region126: #{sequence_classifier_forward.1} parent=1 // pred_check
      _
    $region127: #{sequence_classifier_forward.1} parent=1 // pred_check_branch
      %164 = sbr.rel (0) target = $region129
    $region128: #{sequence_classifier_forward.1} parent=1 // pred_region
      %165 = dma.done [#allocation11], 512
    $region129: #{sequence_classifier_forward.1} parent=1 // pred_fallthru
      _
    // Predicated region
    $region130: #{sequence_classifier_forward.1} parent=1 // pred_check
      _
    $region131: #{sequence_classifier_forward.1} parent=1 // pred_check_branch
      %167 = sbr.rel (0) target = $region133
    $region132: #{sequence_classifier_forward.1} parent=1 // pred_region
      %168 = dma.done [#allocation14], 512
    $region133: #{sequence_classifier_forward.1} parent=1 // pred_fallthru
      _
    %v169 = vlaneseq
    %v170 = vand.u32 %v169, 127
    %vm171 = vcmp.ge.s32.totalorder %v170, 64
    %vm172 = vcmp.lt.s32.totalorder %v170, 96
    %vm173 = vmand %vm171, %vm172
    %v174 = vld [vmem:[%s0] sm:$0xff]
    %v175 = vld [vmem:[%s0 + $0x8] sm:$0xff]
    %v176 = vld [vmem:[#allocation4] sm:$0xff]
    %v177 = vld [vmem:[#allocation4 + $0x8] sm:$0xff]
    %v178 = vld [vmem:[%s3] sm:$0x1]
    %v180 = vlaneseq
    %v181 = vshrl.u32 %v180, 7
    %v182 = vsub.s32 0, %v181
    %v183 = vrot.slane %v178, %v182
    %vm185 = vcmask 130048
    %v187 = vsel %vm185, %v174, 0
    %v190 = vsel %vm185, %v175, 0
    %192 = vmatprep.subr.mxu0 0.0
    %193 = vmatpush1.msra.mxu0 %v176
    %194 = vmatprep.subr.mxu0 0.0
    %195 = vmatpush1.msra.mxu0 %v177
    %196 = vmatprep.subr.mxu0 0.0
    %197 = vmatpush1.msra.mxu0 0.0
    %198 = vmatprep.subr.mxu0 0.0
    %199 = vmatpush1.msra.mxu0 0.0
    %200 = vmatprep.subr.mxu0 0.0
    %201 = vmatpush1.msra.mxu0 0.0
    %202 = vmatprep.subr.mxu0 0.0
    %203 = vmatpush1.msra.mxu0 0.0
    %204 = vmatprep.subr.mxu0 0.0
    %205 = vmatpush1.msra.mxu0 0.0
    %206 = vmatprep.subr.mxu0 0.0
    %207 = vmatpush1.msra.mxu0 0.0
    %208 = vmatprep.subr.mxu0 0.0
    %209 = vmatpush1.msra.mxu0 0.0
    %210 = vmatprep.subr.mxu0 0.0
    %211 = vmatpush1.msra.mxu0 0.0
    %212 = vmatprep.subr.mxu0 0.0
    %213 = vmatpush1.msra.mxu0 0.0
    %214 = vmatprep.subr.mxu0 0.0
    %215 = vmatpush1.msra.mxu0 0.0
    %216 = vmatprep.subr.mxu0 0.0
    %217 = vmatpush1.msra.mxu0 0.0
    %218 = vmatprep.subr.mxu0 0.0
    %219 = vmatpush1.msra.mxu0 0.0
    %220 = vmatprep.subr.mxu0 0.0
    %221 = vmatpush1.msra.mxu0 0.0
    %222 = vmatprep.subr.mxu0 0.0
    %223 = vmatpush1.msra.mxu0 0.0
    %224 = vmatprep.subr.mxu0 0.0
    %225 = vmatpush1.msra.mxu0 0.0
    %226 = vmatprep.subr.mxu0 0.0
    %227 = vmatpush1.msra.mxu0 0.0
    %228 = vmatprep.subr.mxu0 0.0
    %229 = vmatpush1.msra.mxu0 0.0
    %230 = vmatprep.subr.mxu0 0.0
    %231 = vmatpush1.msra.mxu0 0.0
    %232 = vmatprep.subr.mxu0 0.0
    %233 = vmatpush1.msra.mxu0 0.0
    %234 = vmatprep.subr.mxu0 0.0
    %235 = vmatpush1.msra.mxu0 0.0
    %236 = vmatprep.subr.mxu0 0.0
    %237 = vmatpush1.msra.mxu0 0.0
    %238 = vmatprep.subr.mxu0 0.0
    %239 = vmatpush1.msra.mxu0 0.0
    %240 = vmatprep.subr.mxu0 0.0
    %241 = vmatpush1.msra.mxu0 0.0
    %242 = vmatprep.subr.mxu0 0.0
    %243 = vmatpush1.msra.mxu0 0.0
    %244 = vmatprep.subr.mxu0 0.0
    %245 = vmatpush1.msra.mxu0 0.0
    %246 = vmatprep.subr.mxu0 0.0
    %247 = vmatpush1.msra.mxu0 0.0
    %248 = vmatprep.subr.mxu0 0.0
    %249 = vmatpush1.msra.mxu0 0.0
    %250 = vmatprep.subr.mxu0 0.0
    %251 = vmatpush1.msra.mxu0 0.0
    %252 = vmatprep.subr.mxu0 0.0
    %253 = vmatpush1.msra.mxu0 0.0
    %254 = vmatprep.subr.mxu0 0.0
    %255 = vmatpush1.msra.mxu0 0.0
    %256 = vmatprep.mubr.f32.mxu0 0.0
    %257 = vmatmul.mubr.f32.gmra.mrb[0].mxu0 %v187
    %v258 = vpop.f32.mrb[0].mxu0
    %v259 = vadd.f32 %v183, %v258
    %v260 = vpop.f32.mrb[0].mxu0
    %261 = vmatprep.mubr.f32.mxu0 0.0
    %262 = vmatmul.mubr.f32.gmra.mrb[0].mxu0 %v190
    %v263 = vpop.f32.mrb[0].mxu0
    %v264 = vadd.f32 %v183, %v263
    %v265 = vpop.f32.mrb[0].mxu0
    %266 = vdwg.mxu0
    %v267 = vld [vmem:[#allocation7] sm:$0xff]
    %v268 = vld [vmem:[#allocation7 + $0x8] sm:$0xff]
    %v269 = vld [vmem:[%s6] sm:$0x1]
    %v271 = vlaneseq
    %v272 = vshrl.u32 %v271, 7
    %v273 = vsub.s32 0, %v272
    %v274 = vrot.slane %v269, %v273
    %276 = vmatprep.subr.mxu0 0.0
    %277 = vmatpush1.msra.mxu0 %v267
    %278 = vmatprep.subr.mxu0 0.0
    %279 = vmatpush1.msra.mxu0 %v268
    %280 = vmatprep.subr.mxu0 0.0
    %281 = vmatpush1.msra.mxu0 0.0
    %282 = vmatprep.subr.mxu0 0.0
    %283 = vmatpush1.msra.mxu0 0.0
    %284 = vmatprep.subr.mxu0 0.0
    %285 = vmatpush1.msra.mxu0 0.0
    %286 = vmatprep.subr.mxu0 0.0
    %287 = vmatpush1.msra.mxu0 0.0
    %288 = vmatprep.subr.mxu0 0.0
    %289 = vmatpush1.msra.mxu0 0.0
    %290 = vmatprep.subr.mxu0 0.0
    %291 = vmatpush1.msra.mxu0 0.0
    %292 = vmatprep.subr.mxu0 0.0
    %293 = vmatpush1.msra.mxu0 0.0
    %294 = vmatprep.subr.mxu0 0.0
    %295 = vmatpush1.msra.mxu0 0.0
    %296 = vmatprep.subr.mxu0 0.0
    %297 = vmatpush1.msra.mxu0 0.0
    %298 = vmatprep.subr.mxu0 0.0
    %299 = vmatpush1.msra.mxu0 0.0
    %300 = vmatprep.subr.mxu0 0.0
    %301 = vmatpush1.msra.mxu0 0.0
    %302 = vmatprep.subr.mxu0 0.0
    %303 = vmatpush1.msra.mxu0 0.0
    %304 = vmatprep.subr.mxu0 0.0
    %305 = vmatpush1.msra.mxu0 0.0
    %306 = vmatprep.subr.mxu0 0.0
    %307 = vmatpush1.msra.mxu0 0.0
    %308 = vmatprep.subr.mxu0 0.0
    %309 = vmatpush1.msra.mxu0 0.0
    %310 = vmatprep.subr.mxu0 0.0
    %311 = vmatpush1.msra.mxu0 0.0
    %312 = vmatprep.subr.mxu0 0.0
    %313 = vmatpush1.msra.mxu0 0.0
    %314 = vmatprep.subr.mxu0 0.0
    %315 = vmatpush1.msra.mxu0 0.0
    %316 = vmatprep.subr.mxu0 0.0
    %317 = vmatpush1.msra.mxu0 0.0
    %318 = vmatprep.subr.mxu0 0.0
    %319 = vmatpush1.msra.mxu0 0.0
    %320 = vmatprep.subr.mxu0 0.0
    %321 = vmatpush1.msra.mxu0 0.0
    %322 = vmatprep.subr.mxu0 0.0
    %323 = vmatpush1.msra.mxu0 0.0
    %324 = vmatprep.subr.mxu0 0.0
    %325 = vmatpush1.msra.mxu0 0.0
    %326 = vmatprep.subr.mxu0 0.0
    %327 = vmatpush1.msra.mxu0 0.0
    %328 = vmatprep.subr.mxu0 0.0
    %329 = vmatpush1.msra.mxu0 0.0
    %330 = vmatprep.subr.mxu0 0.0
    %331 = vmatpush1.msra.mxu0 0.0
    %332 = vmatprep.subr.mxu0 0.0
    %333 = vmatpush1.msra.mxu0 0.0
    %334 = vmatprep.subr.mxu0 0.0
    %335 = vmatpush1.msra.mxu0 0.0
    %336 = vmatprep.subr.mxu0 0.0
    %337 = vmatpush1.msra.mxu0 0.0
    %338 = vmatprep.subr.mxu0 0.0
    %339 = vmatpush1.msra.mxu0 0.0
    %340 = vmatprep.mubr.f32.mxu0 0.0
    %341 = vmatmul.mubr.f32.gmra.mrb[0].mxu0 %v187
    %v342 = vpop.f32.mrb[0].mxu0
    %v343 = vadd.f32 %v274, %v342
    %v344 = vpop.f32.mrb[0].mxu0
    %345 = vmatprep.mubr.f32.mxu0 0.0
    %346 = vmatmul.mubr.f32.gmra.mrb[0].mxu0 %v190
    %v347 = vpop.f32.mrb[0].mxu0
    %v348 = vadd.f32 %v274, %v347
    %v349 = vpop.f32.mrb[0].mxu0
    %350 = vdwg.mxu0
    %v351 = vld [vmem:[%s2] sm:$0xff]
    %v352 = vld [vmem:[%s2 + $0x8] sm:$0xff]
    %v353 = vld [vmem:[%s2 + $0x10] sm:$0xff]
    %v354 = vld [vmem:[%s2 + $0x18] sm:$0xff]
    %v355 = vld [vmem:[#allocation9] sm:$0xff]
    %v356 = vld [vmem:[#allocation9 + $0x8] sm:$0xff]
    %v357 = vld [vmem:[#allocation9 + $0x10] sm:$0xff]
    %v358 = vld [vmem:[#allocation9 + $0x18] sm:$0xff]
    %vm359 = vcmask 261120
    %v361 = vsel %vm359, 0.0, 0
    %363 = vmatprep.subr.mxu0 0.0
    %364 = vmatpush1.msra.mxu0 %v351
    %365 = vmatprep.subr.mxu0 0.0
    %366 = vmatpush1.msra.mxu0 %v352
    %367 = vmatprep.subr.mxu0 0.0
    %368 = vmatpush1.msra.mxu0 %v353
    %369 = vmatprep.subr.mxu0 0.0
    %370 = vmatpush1.msra.mxu0 %v354
    %371 = vmatprep.subr.mxu0 0.0
    %372 = vmatpush1.msra.mxu0 0.0
    %373 = vmatprep.subr.mxu0 0.0
    %374 = vmatpush1.msra.mxu0 0.0
    %375 = vmatprep.subr.mxu0 0.0
    %376 = vmatpush1.msra.mxu0 0.0
    %377 = vmatprep.subr.mxu0 0.0
    %378 = vmatpush1.msra.mxu0 0.0
    %379 = vmatprep.subr.mxu0 0.0
    %380 = vmatpush1.msra.mxu0 0.0
    %381 = vmatprep.subr.mxu0 0.0
    %382 = vmatpush1.msra.mxu0 0.0
    %383 = vmatprep.subr.mxu0 0.0
    %384 = vmatpush1.msra.mxu0 0.0
    %385 = vmatprep.subr.mxu0 0.0
    %386 = vmatpush1.msra.mxu0 0.0
    %387 = vmatprep.subr.mxu0 0.0
    %388 = vmatpush1.msra.mxu0 0.0
    %389 = vmatprep.subr.mxu0 0.0
    %390 = vmatpush1.msra.mxu0 0.0
    %391 = vmatprep.subr.mxu0 0.0
    %392 = vmatpush1.msra.mxu0 0.0
    %393 = vmatprep.subr.mxu0 0.0
    %394 = vmatpush1.msra.mxu0 0.0
    %395 = vmatprep.subr.mxu0 0.0
    %396 = vmatpush1.msra.mxu0 0.0
    %397 = vmatprep.subr.mxu0 0.0
    %398 = vmatpush1.msra.mxu0 0.0
    %399 = vmatprep.subr.mxu0 0.0
    %400 = vmatpush1.msra.mxu0 0.0
    %401 = vmatprep.subr.mxu0 0.0
    %402 = vmatpush1.msra.mxu0 0.0
    %403 = vmatprep.subr.mxu0 0.0
    %404 = vmatpush1.msra.mxu0 0.0
    %405 = vmatprep.subr.mxu0 0.0
    %406 = vmatpush1.msra.mxu0 0.0
    %407 = vmatprep.subr.mxu0 0.0
    %408 = vmatpush1.msra.mxu0 0.0
    %409 = vmatprep.subr.mxu0 0.0
    %410 = vmatpush1.msra.mxu0 0.0
    %411 = vmatprep.subr.mxu0 0.0
    %412 = vmatpush1.msra.mxu0 0.0
    %413 = vmatprep.subr.mxu0 0.0
    %414 = vmatpush1.msra.mxu0 0.0
    %415 = vmatprep.subr.mxu0 0.0
    %416 = vmatpush1.msra.mxu0 0.0
    %417 = vmatprep.subr.mxu0 0.0
    %418 = vmatpush1.msra.mxu0 0.0
    %419 = vmatprep.subr.mxu0 0.0
    %420 = vmatpush1.msra.mxu0 0.0
    %421 = vmatprep.subr.mxu0 0.0
    %422 = vmatpush1.msra.mxu0 0.0
    %423 = vmatprep.subr.mxu0 0.0
    %424 = vmatpush1.msra.mxu0 0.0
    %425 = vmatprep.subr.mxu0 0.0
    %426 = vmatpush1.msra.mxu0 0.0
    %427 = vmatprep.mubr.f32.mxu0 0.0
    %428 = vmatmul.mubr.f32.gmra.mrb[0].mxu0 %v361
    %v429 = vpop.f32.mrb[0].mxu0
    %v430 = vadd.f32 0.0, %v429
    %v431 = vpop.f32.mrb[0].mxu0
    %432 = vdwg.mxu0
    %v433 = vadd.f32 %v259, %v430
    %434 = vmatprep.subr.mxu0 0.0
    %435 = vmatpush1.msra.mxu0 %v355
    %436 = vmatprep.subr.mxu0 0.0
    %437 = vmatpush1.msra.mxu0 %v356
    %438 = vmatprep.subr.mxu0 0.0
    %439 = vmatpush1.msra.mxu0 %v357
    %440 = vmatprep.subr.mxu0 0.0
    %441 = vmatpush1.msra.mxu0 %v358
    %442 = vmatprep.subr.mxu0 0.0
    %443 = vmatpush1.msra.mxu0 0.0
    %444 = vmatprep.subr.mxu0 0.0
    %445 = vmatpush1.msra.mxu0 0.0
    %446 = vmatprep.subr.mxu0 0.0
    %447 = vmatpush1.msra.mxu0 0.0
    %448 = vmatprep.subr.mxu0 0.0
    %449 = vmatpush1.msra.mxu0 0.0
    %450 = vmatprep.subr.mxu0 0.0
    %451 = vmatpush1.msra.mxu0 0.0
    %452 = vmatprep.subr.mxu0 0.0
    %453 = vmatpush1.msra.mxu0 0.0
    %454 = vmatprep.subr.mxu0 0.0
    %455 = vmatpush1.msra.mxu0 0.0
    %456 = vmatprep.subr.mxu0 0.0
    %457 = vmatpush1.msra.mxu0 0.0
    %458 = vmatprep.subr.mxu0 0.0
    %459 = vmatpush1.msra.mxu0 0.0
    %460 = vmatprep.subr.mxu0 0.0
    %461 = vmatpush1.msra.mxu0 0.0
    %462 = vmatprep.subr.mxu0 0.0
    %463 = vmatpush1.msra.mxu0 0.0
    %464 = vmatprep.subr.mxu0 0.0
    %465 = vmatpush1.msra.mxu0 0.0
    %466 = vmatprep.subr.mxu0 0.0
    %467 = vmatpush1.msra.mxu0 0.0
    %468 = vmatprep.subr.mxu0 0.0
    %469 = vmatpush1.msra.mxu0 0.0
    %470 = vmatprep.subr.mxu0 0.0
    %471 = vmatpush1.msra.mxu0 0.0
    %472 = vmatprep.subr.mxu0 0.0
    %473 = vmatpush1.msra.mxu0 0.0
    %474 = vmatprep.subr.mxu0 0.0
    %475 = vmatpush1.msra.mxu0 0.0
    %476 = vmatprep.subr.mxu0 0.0
    %477 = vmatpush1.msra.mxu0 0.0
    %478 = vmatprep.subr.mxu0 0.0
    %479 = vmatpush1.msra.mxu0 0.0
    %480 = vmatprep.subr.mxu0 0.0
    %481 = vmatpush1.msra.mxu0 0.0
    %482 = vmatprep.subr.mxu0 0.0
    %483 = vmatpush1.msra.mxu0 0.0
    %484 = vmatprep.subr.mxu0 0.0
    %485 = vmatpush1.msra.mxu0 0.0
    %486 = vmatprep.subr.mxu0 0.0
    %487 = vmatpush1.msra.mxu0 0.0
    %488 = vmatprep.subr.mxu0 0.0
    %489 = vmatpush1.msra.mxu0 0.0
    %490 = vmatprep.subr.mxu0 0.0
    %491 = vmatpush1.msra.mxu0 0.0
    %492 = vmatprep.subr.mxu0 0.0
    %493 = vmatpush1.msra.mxu0 0.0
    %494 = vmatprep.subr.mxu0 0.0
    %495 = vmatpush1.msra.mxu0 0.0
    %496 = vmatprep.subr.mxu0 0.0
    %497 = vmatpush1.msra.mxu0 0.0
    %498 = vmatprep.mubr.f32.mxu0 0.0
    %499 = vmatmul.mubr.f32.gmra.mrb[0].mxu0 %v361
    %v500 = vpop.f32.mrb[0].mxu0
    %v501 = vadd.f32 0.0, %v500
    %v502 = vpop.f32.mrb[0].mxu0
    %503 = vdwg.mxu0
    %v505 = vrot.slane %v501, 2
    %v507 = vadd.f32 %v348, %v505
    %v508 = vxor.u32 %v433, 2147483648
    %v509 = vmul.f32 %v508, 1.442695
    %v510 = vpow.pop %v509
    %v511 = vadd.f32 %v510, 1.0
    %v512 = vrcp.pop %v511
    %v513 = vmul.f32 1.0, %v512
    %v514 = vtanh.pop %v433
    %v515 = vsel %vm173, %v514, %v513
    %v516 = vmul.f32 %v515, 0.0
    %518 = vrot.lane.b32.xlu0 %v515, 64
    %v519 = vpop.permute.xlu0 %518
    %v521 = vmul.f32 %v515, %v519
    %523 = vrot.lane.b32.xlu0 %v521, 32
    %v524 = vpop.permute.xlu0 %523
    %v526 = vadd.f32 %v516, %v524
    %v527 = vtanh.pop %v526
    %529 = vrot.lane.b32.xlu0 %v527, 64
    %v530 = vpop.permute.xlu0 %529
    %v532 = vmul.f32 %v515, %v530
    %v533 = vxor.u32 %v507, 2147483648
    %v534 = vmul.f32 %v533, 1.442695
    %v535 = vpow.pop %v534
    %v536 = vadd.f32 %v535, 1.0
    %v537 = vrcp.pop %v536
    %v538 = vmul.f32 1.0, %v537
    %v539 = vtanh.pop %v507
    %v540 = vsel %vm173, %v539, %v538
    %v541 = vmul.f32 %v540, 0.0
    %543 = vrot.lane.b32.xlu0 %v540, 64
    %v544 = vpop.permute.xlu0 %543
    %v546 = vmul.f32 %v540, %v544
    %548 = vrot.lane.b32.xlu0 %v546, 32
    %v549 = vpop.permute.xlu0 %548
    %v551 = vadd.f32 %v541, %v549
    %v552 = vtanh.pop %v551
    %554 = vrot.lane.b32.xlu0 %v552, 64
    %v555 = vpop.permute.xlu0 %554
    %v557 = vmul.f32 %v540, %v555
    %559 = vrot.lane.b32.xlu0 %v532, 32
    %v560 = vpop.permute.xlu0 %559
    %vm562 = vcmask 254976
    %563 = vst.msk [vmem:[#allocation2] sm:$0x3] %vm562, %v560
    %565 = vrot.lane.b32.xlu0 %v557, 64
    %v566 = vpop.permute.xlu0 %565
    %vm568 = vcmask 523526
    %569 = vst.msk [vmem:[#allocation2 + $0x8] sm:$0xc0] %vm568, %v566
    %v570 = vsel %vm359, %v560, 0
    %572 = vmatprep.subr.mxu0 0.0
    %573 = vmatpush1.msra.mxu0 %v351
    %574 = vmatprep.subr.mxu0 0.0
    %575 = vmatpush1.msra.mxu0 %v352
    %576 = vmatprep.subr.mxu0 0.0
    %577 = vmatpush1.msra.mxu0 %v353
    %578 = vmatprep.subr.mxu0 0.0
    %579 = vmatpush1.msra.mxu0 %v354
    %580 = vmatprep.subr.mxu0 0.0
    %581 = vmatpush1.msra.mxu0 0.0
    %582 = vmatprep.subr.mxu0 0.0
    %583 = vmatpush1.msra.mxu0 0.0
    %584 = vmatprep.subr.mxu0 0.0
    %585 = vmatpush1.msra.mxu0 0.0
    %586 = vmatprep.subr.mxu0 0.0
    %587 = vmatpush1.msra.mxu0 0.0
    %588 = vmatprep.subr.mxu0 0.0
    %589 = vmatpush1.msra.mxu0 0.0
    %590 = vmatprep.subr.mxu0 0.0
    %591 = vmatpush1.msra.mxu0 0.0
    %592 = vmatprep.subr.mxu0 0.0
    %593 = vmatpush1.msra.mxu0 0.0
    %594 = vmatprep.subr.mxu0 0.0
    %595 = vmatpush1.msra.mxu0 0.0
    %596 = vmatprep.subr.mxu0 0.0
    %597 = vmatpush1.msra.mxu0 0.0
    %598 = vmatprep.subr.mxu0 0.0
    %599 = vmatpush1.msra.mxu0 0.0
    %600 = vmatprep.subr.mxu0 0.0
    %601 = vmatpush1.msra.mxu0 0.0
    %602 = vmatprep.subr.mxu0 0.0
    %603 = vmatpush1.msra.mxu0 0.0
    %604 = vmatprep.subr.mxu0 0.0
    %605 = vmatpush1.msra.mxu0 0.0
    %606 = vmatprep.subr.mxu0 0.0
    %607 = vmatpush1.msra.mxu0 0.0
    %608 = vmatprep.subr.mxu0 0.0
    %609 = vmatpush1.msra.mxu0 0.0
    %610 = vmatprep.subr.mxu0 0.0
    %611 = vmatpush1.msra.mxu0 0.0
    %612 = vmatprep.subr.mxu0 0.0
    %613 = vmatpush1.msra.mxu0 0.0
    %614 = vmatprep.subr.mxu0 0.0
    %615 = vmatpush1.msra.mxu0 0.0
    %616 = vmatprep.subr.mxu0 0.0
    %617 = vmatpush1.msra.mxu0 0.0
    %618 = vmatprep.subr.mxu0 0.0
    %619 = vmatpush1.msra.mxu0 0.0
    %620 = vmatprep.subr.mxu0 0.0
    %621 = vmatpush1.msra.mxu0 0.0
    %622 = vmatprep.subr.mxu0 0.0
    %623 = vmatpush1.msra.mxu0 0.0
    %624 = vmatprep.subr.mxu0 0.0
    %625 = vmatpush1.msra.mxu0 0.0
    %626 = vmatprep.subr.mxu0 0.0
    %627 = vmatpush1.msra.mxu0 0.0
    %628 = vmatprep.subr.mxu0 0.0
    %629 = vmatpush1.msra.mxu0 0.0
    %630 = vmatprep.subr.mxu0 0.0
    %631 = vmatpush1.msra.mxu0 0.0
    %632 = vmatprep.subr.mxu0 0.0
    %633 = vmatpush1.msra.mxu0 0.0
    %634 = vmatprep.subr.mxu0 0.0
    %635 = vmatpush1.msra.mxu0 0.0
    %636 = vmatprep.mubr.f32.mxu0 0.0
    %637 = vmatmul.mubr.f32.gmra.mrb[0].mxu0 %v570
    %v638 = vpop.f32.mrb[0].mxu0
    %v639 = vadd.f32 0.0, %v638
    %v640 = vpop.f32.mrb[0].mxu0
    %641 = vdwg.mxu0
    %v643 = vrot.slane %v639, 6
    %v645 = vadd.f32 %v259, %v643
    %v646 = vrot.slane %v557, 6
    %647 = vrot.lane.b32.xlu0 %v646, 32
    %v648 = vpop.permute.xlu0 %647
    %v649 = vsel %vm359, %v648, 0
    %651 = vmatprep.subr.mxu0 0.0
    %652 = vmatpush1.msra.mxu0 %v355
    %653 = vmatprep.subr.mxu0 0.0
    %654 = vmatpush1.msra.mxu0 %v356
    %655 = vmatprep.subr.mxu0 0.0
    %656 = vmatpush1.msra.mxu0 %v357
    %657 = vmatprep.subr.mxu0 0.0
    %658 = vmatpush1.msra.mxu0 %v358
    %659 = vmatprep.subr.mxu0 0.0
    %660 = vmatpush1.msra.mxu0 0.0
    %661 = vmatprep.subr.mxu0 0.0
    %662 = vmatpush1.msra.mxu0 0.0
    %663 = vmatprep.subr.mxu0 0.0
    %664 = vmatpush1.msra.mxu0 0.0
    %665 = vmatprep.subr.mxu0 0.0
    %666 = vmatpush1.msra.mxu0 0.0
    %667 = vmatprep.subr.mxu0 0.0
    %668 = vmatpush1.msra.mxu0 0.0
    %669 = vmatprep.subr.mxu0 0.0
    %670 = vmatpush1.msra.mxu0 0.0
    %671 = vmatprep.subr.mxu0 0.0
    %672 = vmatpush1.msra.mxu0 0.0
    %673 = vmatprep.subr.mxu0 0.0
    %674 = vmatpush1.msra.mxu0 0.0
    %675 = vmatprep.subr.mxu0 0.0
    %676 = vmatpush1.msra.mxu0 0.0
    %677 = vmatprep.subr.mxu0 0.0
    %678 = vmatpush1.msra.mxu0 0.0
    %679 = vmatprep.subr.mxu0 0.0
    %680 = vmatpush1.msra.mxu0 0.0
    %681 = vmatprep.subr.mxu0 0.0
    %682 = vmatpush1.msra.mxu0 0.0
    %683 = vmatprep.subr.mxu0 0.0
    %684 = vmatpush1.msra.mxu0 0.0
    %685 = vmatprep.subr.mxu0 0.0
    %686 = vmatpush1.msra.mxu0 0.0
    %687 = vmatprep.subr.mxu0 0.0
    %688 = vmatpush1.msra.mxu0 0.0
    %689 = vmatprep.subr.mxu0 0.0
    %690 = vmatpush1.msra.mxu0 0.0
    %691 = vmatprep.subr.mxu0 0.0
    %692 = vmatpush1.msra.mxu0 0.0
    %693 = vmatprep.subr.mxu0 0.0
    %694 = vmatpush1.msra.mxu0 0.0
    %695 = vmatprep.subr.mxu0 0.0
    %696 = vmatpush1.msra.mxu0 0.0
    %697 = vmatprep.subr.mxu0 0.0
    %698 = vmatpush1.msra.mxu0 0.0
    %699 = vmatprep.subr.mxu0 0.0
    %700 = vmatpush1.msra.mxu0 0.0
    %701 = vmatprep.subr.mxu0 0.0
    %702 = vmatpush1.msra.mxu0 0.0
    %703 = vmatprep.subr.mxu0 0.0
    %704 = vmatpush1.msra.mxu0 0.0
    %705 = vmatprep.subr.mxu0 0.0
    %706 = vmatpush1.msra.mxu0 0.0
    %707 = vmatprep.subr.mxu0 0.0
    %708 = vmatpush1.msra.mxu0 0.0
    %709 = vmatprep.subr.mxu0 0.0
    %710 = vmatpush1.msra.mxu0 0.0
    %711 = vmatprep.subr.mxu0 0.0
    %712 = vmatpush1.msra.mxu0 0.0
    %713 = vmatprep.subr.mxu0 0.0
    %714 = vmatpush1.msra.mxu0 0.0
    %715 = vmatprep.mubr.f32.mxu0 0.0
    %716 = vmatmul.mubr.f32.gmra.mrb[0].mxu0 %v649
    %v717 = vpop.f32.mrb[0].mxu0
    %v718 = vadd.f32 0.0, %v717
    %v719 = vpop.f32.mrb[0].mxu0
    %720 = vdwg.mxu0
    %v722 = vrot.slane %v718, 4
    %v724 = vadd.f32 %v348, %v722
    %v725 = vxor.u32 %v645, 2147483648
    %v726 = vmul.f32 %v725, 1.442695
    %v727 = vpow.pop %v726
    %v728 = vadd.f32 %v727, 1.0
    %v729 = vrcp.pop %v728
    %v730 = vmul.f32 1.0, %v729
    %v731 = vtanh.pop %v645
    %v732 = vsel %vm173, %v731, %v730
    %v734 = vrot.slane %v526, 6
    %v736 = vmul.f32 %v732, %v734
    %738 = vrot.lane.b32.xlu0 %v732, 64
    %v739 = vpop.permute.xlu0 %738
    %v741 = vmul.f32 %v732, %v739
    %743 = vrot.lane.b32.xlu0 %v741, 32
    %v744 = vpop.permute.xlu0 %743
    %v746 = vadd.f32 %v736, %v744
    %v747 = vtanh.pop %v746
    %749 = vrot.lane.b32.xlu0 %v747, 64
    %v750 = vpop.permute.xlu0 %749
    %v752 = vmul.f32 %v732, %v750
    %v753 = vxor.u32 %v724, 2147483648
    %v754 = vmul.f32 %v753, 1.442695
    %v755 = vpow.pop %v754
    %v756 = vadd.f32 %v755, 1.0
    %v757 = vrcp.pop %v756
    %v758 = vmul.f32 1.0, %v757
    %v759 = vtanh.pop %v724
    %v760 = vsel %vm173, %v759, %v758
    %v762 = vrot.slane %v551, 2
    %v764 = vmul.f32 %v760, %v762
    %766 = vrot.lane.b32.xlu0 %v760, 64
    %v767 = vpop.permute.xlu0 %766
    %v769 = vmul.f32 %v760, %v767
    %771 = vrot.lane.b32.xlu0 %v769, 32
    %v772 = vpop.permute.xlu0 %771
    %v774 = vadd.f32 %v764, %v772
    %v775 = vtanh.pop %v774
    %777 = vrot.lane.b32.xlu0 %v775, 64
    %v778 = vpop.permute.xlu0 %777
    %v780 = vmul.f32 %v760, %v778
    %782 = vrot.lane.b32.xlu0 %v752, 32
    %v783 = vpop.permute.xlu0 %782
    %vm785 = vcmask 257026
    %786 = vst.msk [vmem:[#allocation2] sm:$0xc] %vm785, %v783
    %788 = vrot.lane.b32.xlu0 %v780, 64
    %v789 = vpop.permute.xlu0 %788
    %vm791 = vcmask 521476
    %792 = vst.msk [vmem:[#allocation2 + $0x8] sm:$0x30] %vm791, %v789
    %v793 = vrot.slane %v752, 2
    %794 = vrot.lane.b32.xlu0 %v793, 32
    %v795 = vpop.permute.xlu0 %794
    %v796 = vsel %vm359, %v795, 0
    %798 = vmatprep.subr.mxu0 0.0
    %799 = vmatpush1.msra.mxu0 %v351
    %800 = vmatprep.subr.mxu0 0.0
    %801 = vmatpush1.msra.mxu0 %v352
    %802 = vmatprep.subr.mxu0 0.0
    %803 = vmatpush1.msra.mxu0 %v353
    %804 = vmatprep.subr.mxu0 0.0
    %805 = vmatpush1.msra.mxu0 %v354
    %806 = vmatprep.subr.mxu0 0.0
    %807 = vmatpush1.msra.mxu0 0.0
    %808 = vmatprep.subr.mxu0 0.0
    %809 = vmatpush1.msra.mxu0 0.0
    %810 = vmatprep.subr.mxu0 0.0
    %811 = vmatpush1.msra.mxu0 0.0
    %812 = vmatprep.subr.mxu0 0.0
    %813 = vmatpush1.msra.mxu0 0.0
    %814 = vmatprep.subr.mxu0 0.0
    %815 = vmatpush1.msra.mxu0 0.0
    %816 = vmatprep.subr.mxu0 0.0
    %817 = vmatpush1.msra.mxu0 0.0
    %818 = vmatprep.subr.mxu0 0.0
    %819 = vmatpush1.msra.mxu0 0.0
    %820 = vmatprep.subr.mxu0 0.0
    %821 = vmatpush1.msra.mxu0 0.0
    %822 = vmatprep.subr.mxu0 0.0
    %823 = vmatpush1.msra.mxu0 0.0
    %824 = vmatprep.subr.mxu0 0.0
    %825 = vmatpush1.msra.mxu0 0.0
    %826 = vmatprep.subr.mxu0 0.0
    %827 = vmatpush1.msra.mxu0 0.0
    %828 = vmatprep.subr.mxu0 0.0
    %829 = vmatpush1.msra.mxu0 0.0
    %830 = vmatprep.subr.mxu0 0.0
    %831 = vmatpush1.msra.mxu0 0.0
    %832 = vmatprep.subr.mxu0 0.0
    %833 = vmatpush1.msra.mxu0 0.0
    %834 = vmatprep.subr.mxu0 0.0
    %835 = vmatpush1.msra.mxu0 0.0
    %836 = vmatprep.subr.mxu0 0.0
    %837 = vmatpush1.msra.mxu0 0.0
    %838 = vmatprep.subr.mxu0 0.0
    %839 = vmatpush1.msra.mxu0 0.0
    %840 = vmatprep.subr.mxu0 0.0
    %841 = vmatpush1.msra.mxu0 0.0
    %842 = vmatprep.subr.mxu0 0.0
    %843 = vmatpush1.msra.mxu0 0.0
    %844 = vmatprep.subr.mxu0 0.0
    %845 = vmatpush1.msra.mxu0 0.0
    %846 = vmatprep.subr.mxu0 0.0
    %847 = vmatpush1.msra.mxu0 0.0
    %848 = vmatprep.subr.mxu0 0.0
    %849 = vmatpush1.msra.mxu0 0.0
    %850 = vmatprep.subr.mxu0 0.0
    %851 = vmatpush1.msra.mxu0 0.0
    %852 = vmatprep.subr.mxu0 0.0
    %853 = vmatpush1.msra.mxu0 0.0
    %854 = vmatprep.subr.mxu0 0.0
    %855 = vmatpush1.msra.mxu0 0.0
    %856 = vmatprep.subr.mxu0 0.0
    %857 = vmatpush1.msra.mxu0 0.0
    %858 = vmatprep.subr.mxu0 0.0
    %859 = vmatpush1.msra.mxu0 0.0
    %860 = vmatprep.subr.mxu0 0.0
    %861 = vmatpush1.msra.mxu0 0.0
    %862 = vmatprep.mubr.f32.mxu0 0.0
    %863 = vmatmul.mubr.f32.gmra.mrb[0].mxu0 %v796
    %v864 = vpop.f32.mrb[0].mxu0
    %v865 = vadd.f32 0.0, %v864
    %v866 = vpop.f32.mrb[0].mxu0
    %867 = vdwg.mxu0
    %v869 = vrot.slane %v865, 4
    %v871 = vadd.f32 %v259, %v869
    %v872 = vrot.slane %v780, 4
    %873 = vrot.lane.b32.xlu0 %v872, 32
    %v874 = vpop.permute.xlu0 %873
    %v875 = vsel %vm359, %v874, 0
    %877 = vmatprep.subr.mxu0 0.0
    %878 = vmatpush1.msra.mxu0 %v355
    %879 = vmatprep.subr.mxu0 0.0
    %880 = vmatpush1.msra.mxu0 %v356
    %881 = vmatprep.subr.mxu0 0.0
    %882 = vmatpush1.msra.mxu0 %v357
    %883 = vmatprep.subr.mxu0 0.0
    %884 = vmatpush1.msra.mxu0 %v358
    %885 = vmatprep.subr.mxu0 0.0
    %886 = vmatpush1.msra.mxu0 0.0
    %887 = vmatprep.subr.mxu0 0.0
    %888 = vmatpush1.msra.mxu0 0.0
    %889 = vmatprep.subr.mxu0 0.0
    %890 = vmatpush1.msra.mxu0 0.0
    %891 = vmatprep.subr.mxu0 0.0
    %892 = vmatpush1.msra.mxu0 0.0
    %893 = vmatprep.subr.mxu0 0.0
    %894 = vmatpush1.msra.mxu0 0.0
    %895 = vmatprep.subr.mxu0 0.0
    %896 = vmatpush1.msra.mxu0 0.0
    %897 = vmatprep.subr.mxu0 0.0
    %898 = vmatpush1.msra.mxu0 0.0
    %899 = vmatprep.subr.mxu0 0.0
    %900 = vmatpush1.msra.mxu0 0.0
    %901 = vmatprep.subr.mxu0 0.0
    %902 = vmatpush1.msra.mxu0 0.0
    %903 = vmatprep.subr.mxu0 0.0
    %904 = vmatpush1.msra.mxu0 0.0
    %905 = vmatprep.subr.mxu0 0.0
    %906 = vmatpush1.msra.mxu0 0.0
    %907 = vmatprep.subr.mxu0 0.0
    %908 = vmatpush1.msra.mxu0 0.0
    %909 = vmatprep.subr.mxu0 0.0
    %910 = vmatpush1.msra.mxu0 0.0
    %911 = vmatprep.subr.mxu0 0.0
    %912 = vmatpush1.msra.mxu0 0.0
    %913 = vmatprep.subr.mxu0 0.0
    %914 = vmatpush1.msra.mxu0 0.0
    %915 = vmatprep.subr.mxu0 0.0
    %916 = vmatpush1.msra.mxu0 0.0
    %917 = vmatprep.subr.mxu0 0.0
    %918 = vmatpush1.msra.mxu0 0.0
    %919 = vmatprep.subr.mxu0 0.0
    %920 = vmatpush1.msra.mxu0 0.0
    %921 = vmatprep.subr.mxu0 0.0
    %922 = vmatpush1.msra.mxu0 0.0
    %923 = vmatprep.subr.mxu0 0.0
    %924 = vmatpush1.msra.mxu0 0.0
    %925 = vmatprep.subr.mxu0 0.0
    %926 = vmatpush1.msra.mxu0 0.0
    %927 = vmatprep.subr.mxu0 0.0
    %928 = vmatpush1.msra.mxu0 0.0
    %929 = vmatprep.subr.mxu0 0.0
    %930 = vmatpush1.msra.mxu0 0.0
    %931 = vmatprep.subr.mxu0 0.0
    %932 = vmatpush1.msra.mxu0 0.0
    %933 = vmatprep.subr.mxu0 0.0
    %934 = vmatpush1.msra.mxu0 0.0
    %935 = vmatprep.subr.mxu0 0.0
    %936 = vmatpush1.msra.mxu0 0.0
    %937 = vmatprep.subr.mxu0 0.0
    %938 = vmatpush1.msra.mxu0 0.0
    %939 = vmatprep.subr.mxu0 0.0
    %940 = vmatpush1.msra.mxu0 0.0
    %941 = vmatprep.mubr.f32.mxu0 0.0
    %942 = vmatmul.mubr.f32.gmra.mrb[0].mxu0 %v875
    %v943 = vpop.f32.mrb[0].mxu0
    %v944 = vadd.f32 0.0, %v943
    %v945 = vpop.f32.mrb[0].mxu0
    %946 = vdwg.mxu0
    %v948 = vrot.slane %v944, 6
    %v950 = vadd.f32 %v348, %v948
    %v951 = vxor.u32 %v871, 2147483648
    %v952 = vmul.f32 %v951, 1.442695
    %v953 = vpow.pop %v952
    %v954 = vadd.f32 %v953, 1.0
    %v955 = vrcp.pop %v954
    %v956 = vmul.f32 1.0, %v955
    %v957 = vtanh.pop %v871
    %v958 = vsel %vm173, %v957, %v956
    %v960 = vrot.slane %v746, 6
    %v962 = vmul.f32 %v958, %v960
    %964 = vrot.lane.b32.xlu0 %v958, 64
    %v965 = vpop.permute.xlu0 %964
    %v967 = vmul.f32 %v958, %v965
    %969 = vrot.lane.b32.xlu0 %v967, 32
    %v970 = vpop.permute.xlu0 %969
    %v972 = vadd.f32 %v962, %v970
    %v973 = vtanh.pop %v972
    %975 = vrot.lane.b32.xlu0 %v973, 64
    %v976 = vpop.permute.xlu0 %975
    %v978 = vmul.f32 %v958, %v976
    %v979 = vxor.u32 %v950, 2147483648
    %v980 = vmul.f32 %v979, 1.442695
    %v981 = vpow.pop %v980
    %v982 = vadd.f32 %v981, 1.0
    %v983 = vrcp.pop %v982
    %v984 = vmul.f32 1.0, %v983
    %v985 = vtanh.pop %v950
    %v986 = vsel %vm173, %v985, %v984
    %v988 = vrot.slane %v774, 2
    %v990 = vmul.f32 %v986, %v988
    %992 = vrot.lane.b32.xlu0 %v986, 64
    %v993 = vpop.permute.xlu0 %992
    %v995 = vmul.f32 %v986, %v993
    %997 = vrot.lane.b32.xlu0 %v995, 32
    %v998 = vpop.permute.xlu0 %997
    %v1000 = vadd.f32 %v990, %v998
    %v1001 = vtanh.pop %v1000
    %1003 = vrot.lane.b32.xlu0 %v1001, 64
    %v1004 = vpop.permute.xlu0 %1003
    %v1006 = vmul.f32 %v986, %v1004
    %1008 = vrot.lane.b32.xlu0 %v978, 32
    %v1009 = vpop.permute.xlu0 %1008
    %vm1011 = vcmask 259076
    %1012 = vst.msk [vmem:[#allocation2] sm:$0x30] %vm1011, %v1009
    %1014 = vrot.lane.b32.xlu0 %v1006, 64
    %v1015 = vpop.permute.xlu0 %1014
    %vm1017 = vcmask 519426
    %1018 = vst.msk [vmem:[#allocation2 + $0x8] sm:$0xc] %vm1017, %v1015
    %v1019 = vrot.slane %v978, 4
    %1020 = vrot.lane.b32.xlu0 %v1019, 32
    %v1021 = vpop.permute.xlu0 %1020
    %v1022 = vsel %vm359, %v1021, 0
    %1024 = vmatprep.subr.mxu0 0.0
    %1025 = vmatpush1.msra.mxu0 %v351
    %1026 = vmatprep.subr.mxu0 0.0
    %1027 = vmatpush1.msra.mxu0 %v352
    %1028 = vmatprep.subr.mxu0 0.0
    %1029 = vmatpush1.msra.mxu0 %v353
    %1030 = vmatprep.subr.mxu0 0.0
    %1031 = vmatpush1.msra.mxu0 %v354
    %1032 = vmatprep.subr.mxu0 0.0
    %1033 = vmatpush1.msra.mxu0 0.0
    %1034 = vmatprep.subr.mxu0 0.0
    %1035 = vmatpush1.msra.mxu0 0.0
    %1036 = vmatprep.subr.mxu0 0.0
    %1037 = vmatpush1.msra.mxu0 0.0
    %1038 = vmatprep.subr.mxu0 0.0
    %1039 = vmatpush1.msra.mxu0 0.0
    %1040 = vmatprep.subr.mxu0 0.0
    %1041 = vmatpush1.msra.mxu0 0.0
    %1042 = vmatprep.subr.mxu0 0.0
    %1043 = vmatpush1.msra.mxu0 0.0
    %1044 = vmatprep.subr.mxu0 0.0
    %1045 = vmatpush1.msra.mxu0 0.0
    %1046 = vmatprep.subr.mxu0 0.0
    %1047 = vmatpush1.msra.mxu0 0.0
    %1048 = vmatprep.subr.mxu0 0.0
    %1049 = vmatpush1.msra.mxu0 0.0
    %1050 = vmatprep.subr.mxu0 0.0
    %1051 = vmatpush1.msra.mxu0 0.0
    %1052 = vmatprep.subr.mxu0 0.0
    %1053 = vmatpush1.msra.mxu0 0.0
    %1054 = vmatprep.subr.mxu0 0.0
    %1055 = vmatpush1.msra.mxu0 0.0
    %1056 = vmatprep.subr.mxu0 0.0
    %1057 = vmatpush1.msra.mxu0 0.0
    %1058 = vmatprep.subr.mxu0 0.0
    %1059 = vmatpush1.msra.mxu0 0.0
    %1060 = vmatprep.subr.mxu0 0.0
    %1061 = vmatpush1.msra.mxu0 0.0
    %1062 = vmatprep.subr.mxu0 0.0
    %1063 = vmatpush1.msra.mxu0 0.0
    %1064 = vmatprep.subr.mxu0 0.0
    %1065 = vmatpush1.msra.mxu0 0.0
    %1066 = vmatprep.subr.mxu0 0.0
    %1067 = vmatpush1.msra.mxu0 0.0
    %1068 = vmatprep.subr.mxu0 0.0
    %1069 = vmatpush1.msra.mxu0 0.0
    %1070 = vmatprep.subr.mxu0 0.0
    %1071 = vmatpush1.msra.mxu0 0.0
    %1072 = vmatprep.subr.mxu0 0.0
    %1073 = vmatpush1.msra.mxu0 0.0
    %1074 = vmatprep.subr.mxu0 0.0
    %1075 = vmatpush1.msra.mxu0 0.0
    %1076 = vmatprep.subr.mxu0 0.0
    %1077 = vmatpush1.msra.mxu0 0.0
    %1078 = vmatprep.subr.mxu0 0.0
    %1079 = vmatpush1.msra.mxu0 0.0
    %1080 = vmatprep.subr.mxu0 0.0
    %1081 = vmatpush1.msra.mxu0 0.0
    %1082 = vmatprep.subr.mxu0 0.0
    %1083 = vmatpush1.msra.mxu0 0.0
    %1084 = vmatprep.subr.mxu0 0.0
    %1085 = vmatpush1.msra.mxu0 0.0
    %1086 = vmatprep.subr.mxu0 0.0
    %1087 = vmatpush1.msra.mxu0 0.0
    %1088 = vmatprep.mubr.f32.mxu0 0.0
    %1089 = vmatmul.mubr.f32.gmra.mrb[0].mxu0 %v1022
    %v1090 = vpop.f32.mrb[0].mxu0
    %v1091 = vadd.f32 0.0, %v1090
    %v1092 = vpop.f32.mrb[0].mxu0
    %1093 = vdwg.mxu0
    %v1095 = vrot.slane %v1091, 2
    %v1097 = vadd.f32 %v259, %v1095
    %v1098 = vrot.slane %v1006, 2
    %1099 = vrot.lane.b32.xlu0 %v1098, 32
    %v1100 = vpop.permute.xlu0 %1099
    %v1101 = vsel %vm359, %v1100, 0
    %1103 = vmatprep.subr.mxu0 0.0
    %1104 = vmatpush1.msra.mxu0 %v355
    %1105 = vmatprep.subr.mxu0 0.0
    %1106 = vmatpush1.msra.mxu0 %v356
    %1107 = vmatprep.subr.mxu0 0.0
    %1108 = vmatpush1.msra.mxu0 %v357
    %1109 = vmatprep.subr.mxu0 0.0
    %1110 = vmatpush1.msra.mxu0 %v358
    %1111 = vmatprep.subr.mxu0 0.0
    %1112 = vmatpush1.msra.mxu0 0.0
    %1113 = vmatprep.subr.mxu0 0.0
    %1114 = vmatpush1.msra.mxu0 0.0
    %1115 = vmatprep.subr.mxu0 0.0
    %1116 = vmatpush1.msra.mxu0 0.0
    %1117 = vmatprep.subr.mxu0 0.0
    %1118 = vmatpush1.msra.mxu0 0.0
    %1119 = vmatprep.subr.mxu0 0.0
    %1120 = vmatpush1.msra.mxu0 0.0
    %1121 = vmatprep.subr.mxu0 0.0
    %1122 = vmatpush1.msra.mxu0 0.0
    %1123 = vmatprep.subr.mxu0 0.0
    %1124 = vmatpush1.msra.mxu0 0.0
    %1125 = vmatprep.subr.mxu0 0.0
    %1126 = vmatpush1.msra.mxu0 0.0
    %1127 = vmatprep.subr.mxu0 0.0
    %1128 = vmatpush1.msra.mxu0 0.0
    %1129 = vmatprep.subr.mxu0 0.0
    %1130 = vmatpush1.msra.mxu0 0.0
    %1131 = vmatprep.subr.mxu0 0.0
    %1132 = vmatpush1.msra.mxu0 0.0
    %1133 = vmatprep.subr.mxu0 0.0
    %1134 = vmatpush1.msra.mxu0 0.0
    %1135 = vmatprep.subr.mxu0 0.0
    %1136 = vmatpush1.msra.mxu0 0.0
    %1137 = vmatprep.subr.mxu0 0.0
    %1138 = vmatpush1.msra.mxu0 0.0
    %1139 = vmatprep.subr.mxu0 0.0
    %1140 = vmatpush1.msra.mxu0 0.0
    %1141 = vmatprep.subr.mxu0 0.0
    %1142 = vmatpush1.msra.mxu0 0.0
    %1143 = vmatprep.subr.mxu0 0.0
    %1144 = vmatpush1.msra.mxu0 0.0
    %1145 = vmatprep.subr.mxu0 0.0
    %1146 = vmatpush1.msra.mxu0 0.0
    %1147 = vmatprep.subr.mxu0 0.0
    %1148 = vmatpush1.msra.mxu0 0.0
    %1149 = vmatprep.subr.mxu0 0.0
    %1150 = vmatpush1.msra.mxu0 0.0
    %1151 = vmatprep.subr.mxu0 0.0
    %1152 = vmatpush1.msra.mxu0 0.0
    %1153 = vmatprep.subr.mxu0 0.0
    %1154 = vmatpush1.msra.mxu0 0.0
    %1155 = vmatprep.subr.mxu0 0.0
    %1156 = vmatpush1.msra.mxu0 0.0
    %1157 = vmatprep.subr.mxu0 0.0
    %1158 = vmatpush1.msra.mxu0 0.0
    %1159 = vmatprep.subr.mxu0 0.0
    %1160 = vmatpush1.msra.mxu0 0.0
    %1161 = vmatprep.subr.mxu0 0.0
    %1162 = vmatpush1.msra.mxu0 0.0
    %1163 = vmatprep.subr.mxu0 0.0
    %1164 = vmatpush1.msra.mxu0 0.0
    %1165 = vmatprep.subr.mxu0 0.0
    %1166 = vmatpush1.msra.mxu0 0.0
    %1167 = vmatprep.mubr.f32.mxu0 0.0
    %1168 = vmatmul.mubr.f32.gmra.mrb[0].mxu0 %v1101
    %v1169 = vpop.f32.mrb[0].mxu0
    %v1170 = vadd.f32 0.0, %v1169
    %v1171 = vpop.f32.mrb[0].mxu0
    %1172 = vdwg.mxu0
    %v1173 = vadd.f32 %v348, %v1170
    %v1174 = vxor.u32 %v1097, 2147483648
    %v1175 = vmul.f32 %v1174, 1.442695
    %v1176 = vpow.pop %v1175
    %v1177 = vadd.f32 %v1176, 1.0
    %v1178 = vrcp.pop %v1177
    %v1179 = vmul.f32 1.0, %v1178
    %v1180 = vtanh.pop %v1097
    %v1181 = vsel %vm173, %v1180, %v1179
    %v1183 = vrot.slane %v972, 6
    %v1185 = vmul.f32 %v1181, %v1183
    %1187 = vrot.lane.b32.xlu0 %v1181, 64
    %v1188 = vpop.permute.xlu0 %1187
    %v1190 = vmul.f32 %v1181, %v1188
    %1192 = vrot.lane.b32.xlu0 %v1190, 32
    %v1193 = vpop.permute.xlu0 %1192
    %v1195 = vadd.f32 %v1185, %v1193
    %v1196 = vtanh.pop %v1195
    %1198 = vrot.lane.b32.xlu0 %v1196, 64
    %v1199 = vpop.permute.xlu0 %1198
    %v1201 = vmul.f32 %v1181, %v1199
    %v1202 = vxor.u32 %v1173, 2147483648
    %v1203 = vmul.f32 %v1202, 1.442695
    %v1204 = vpow.pop %v1203
    %v1205 = vadd.f32 %v1204, 1.0
    %v1206 = vrcp.pop %v1205
    %v1207 = vmul.f32 1.0, %v1206
    %v1208 = vtanh.pop %v1173
    %v1209 = vsel %vm173, %v1208, %v1207
    %v1211 = vrot.slane %v1000, 2
    %v1213 = vmul.f32 %v1209, %v1211
    %1215 = vrot.lane.b32.xlu0 %v1209, 64
    %v1216 = vpop.permute.xlu0 %1215
    %v1218 = vmul.f32 %v1209, %v1216
    %1220 = vrot.lane.b32.xlu0 %v1218, 32
    %v1221 = vpop.permute.xlu0 %1220
    %v1223 = vadd.f32 %v1213, %v1221
    %v1224 = vtanh.pop %v1223
    %1226 = vrot.lane.b32.xlu0 %v1224, 64
    %v1227 = vpop.permute.xlu0 %1226
    %v1229 = vmul.f32 %v1209, %v1227
    %1231 = vrot.lane.b32.xlu0 %v1201, 32
    %v1232 = vpop.permute.xlu0 %1231
    %vm1234 = vcmask 261126
    %1235 = vst.msk [vmem:[#allocation2] sm:$0xc0] %vm1234, %v1232
    %1237 = vrot.lane.b32.xlu0 %v1229, 64
    %v1238 = vpop.permute.xlu0 %1237
    %vm1240 = vcmask 517376
    %1241 = vst.msk [vmem:[#allocation2 + $0x8] sm:$0x3] %vm1240, %v1238
    %v1242 = vrot.slane %v1201, 6
    %1243 = vrot.lane.b32.xlu0 %v1242, 32
    %v1244 = vpop.permute.xlu0 %1243
    %v1245 = vsel %vm359, %v1244, 0
    %1247 = vmatprep.subr.mxu0 0.0
    %1248 = vmatpush1.msra.mxu0 %v351
    %1249 = vmatprep.subr.mxu0 0.0
    %1250 = vmatpush1.msra.mxu0 %v352
    %1251 = vmatprep.subr.mxu0 0.0
    %1252 = vmatpush1.msra.mxu0 %v353
    %1253 = vmatprep.subr.mxu0 0.0
    %1254 = vmatpush1.msra.mxu0 %v354
    %1255 = vmatprep.subr.mxu0 0.0
    %1256 = vmatpush1.msra.mxu0 0.0
    %1257 = vmatprep.subr.mxu0 0.0
    %1258 = vmatpush1.msra.mxu0 0.0
    %1259 = vmatprep.subr.mxu0 0.0
    %1260 = vmatpush1.msra.mxu0 0.0
    %1261 = vmatprep.subr.mxu0 0.0
    %1262 = vmatpush1.msra.mxu0 0.0
    %1263 = vmatprep.subr.mxu0 0.0
    %1264 = vmatpush1.msra.mxu0 0.0
    %1265 = vmatprep.subr.mxu0 0.0
    %1266 = vmatpush1.msra.mxu0 0.0
    %1267 = vmatprep.subr.mxu0 0.0
    %1268 = vmatpush1.msra.mxu0 0.0
    %1269 = vmatprep.subr.mxu0 0.0
    %1270 = vmatpush1.msra.mxu0 0.0
    %1271 = vmatprep.subr.mxu0 0.0
    %1272 = vmatpush1.msra.mxu0 0.0
    %1273 = vmatprep.subr.mxu0 0.0
    %1274 = vmatpush1.msra.mxu0 0.0
    %1275 = vmatprep.subr.mxu0 0.0
    %1276 = vmatpush1.msra.mxu0 0.0
    %1277 = vmatprep.subr.mxu0 0.0
    %1278 = vmatpush1.msra.mxu0 0.0
    %1279 = vmatprep.subr.mxu0 0.0
    %1280 = vmatpush1.msra.mxu0 0.0
    %1281 = vmatprep.subr.mxu0 0.0
    %1282 = vmatpush1.msra.mxu0 0.0
    %1283 = vmatprep.subr.mxu0 0.0
    %1284 = vmatpush1.msra.mxu0 0.0
    %1285 = vmatprep.subr.mxu0 0.0
    %1286 = vmatpush1.msra.mxu0 0.0
    %1287 = vmatprep.subr.mxu0 0.0
    %1288 = vmatpush1.msra.mxu0 0.0
    %1289 = vmatprep.subr.mxu0 0.0
    %1290 = vmatpush1.msra.mxu0 0.0
    %1291 = vmatprep.subr.mxu0 0.0
    %1292 = vmatpush1.msra.mxu0 0.0
    %1293 = vmatprep.subr.mxu0 0.0
    %1294 = vmatpush1.msra.mxu0 0.0
    %1295 = vmatprep.subr.mxu0 0.0
    %1296 = vmatpush1.msra.mxu0 0.0
    %1297 = vmatprep.subr.mxu0 0.0
    %1298 = vmatpush1.msra.mxu0 0.0
    %1299 = vmatprep.subr.mxu0 0.0
    %1300 = vmatpush1.msra.mxu0 0.0
    %1301 = vmatprep.subr.mxu0 0.0
    %1302 = vmatpush1.msra.mxu0 0.0
    %1303 = vmatprep.subr.mxu0 0.0
    %1304 = vmatpush1.msra.mxu0 0.0
    %1305 = vmatprep.subr.mxu0 0.0
    %1306 = vmatpush1.msra.mxu0 0.0
    %1307 = vmatprep.subr.mxu0 0.0
    %1308 = vmatpush1.msra.mxu0 0.0
    %1309 = vmatprep.subr.mxu0 0.0
    %1310 = vmatpush1.msra.mxu0 0.0
    %1311 = vmatprep.mubr.f32.mxu0 0.0
    %1312 = vmatmul.mubr.f32.gmra.mrb[0].mxu0 %v1245
    %v1313 = vpop.f32.mrb[0].mxu0
    %v1314 = vadd.f32 0.0, %v1313
    %v1315 = vpop.f32.mrb[0].mxu0
    %1316 = vdwg.mxu0
    %v1317 = vadd.f32 %v264, %v1314
    %1318 = vrot.lane.b32.xlu0 %v1229, 32
    %v1319 = vpop.permute.xlu0 %1318
    %v1320 = vsel %vm359, %v1319, 0
    %1322 = vmatprep.subr.mxu0 0.0
    %1323 = vmatpush1.msra.mxu0 %v355
    %1324 = vmatprep.subr.mxu0 0.0
    %1325 = vmatpush1.msra.mxu0 %v356
    %1326 = vmatprep.subr.mxu0 0.0
    %1327 = vmatpush1.msra.mxu0 %v357
    %1328 = vmatprep.subr.mxu0 0.0
    %1329 = vmatpush1.msra.mxu0 %v358
    %1330 = vmatprep.subr.mxu0 0.0
    %1331 = vmatpush1.msra.mxu0 0.0
    %1332 = vmatprep.subr.mxu0 0.0
    %1333 = vmatpush1.msra.mxu0 0.0
    %1334 = vmatprep.subr.mxu0 0.0
    %1335 = vmatpush1.msra.mxu0 0.0
    %1336 = vmatprep.subr.mxu0 0.0
    %1337 = vmatpush1.msra.mxu0 0.0
    %1338 = vmatprep.subr.mxu0 0.0
    %1339 = vmatpush1.msra.mxu0 0.0
    %1340 = vmatprep.subr.mxu0 0.0
    %1341 = vmatpush1.msra.mxu0 0.0
    %1342 = vmatprep.subr.mxu0 0.0
    %1343 = vmatpush1.msra.mxu0 0.0
    %1344 = vmatprep.subr.mxu0 0.0
    %1345 = vmatpush1.msra.mxu0 0.0
    %1346 = vmatprep.subr.mxu0 0.0
    %1347 = vmatpush1.msra.mxu0 0.0
    %1348 = vmatprep.subr.mxu0 0.0
    %1349 = vmatpush1.msra.mxu0 0.0
    %1350 = vmatprep.subr.mxu0 0.0
    %1351 = vmatpush1.msra.mxu0 0.0
    %1352 = vmatprep.subr.mxu0 0.0
    %1353 = vmatpush1.msra.mxu0 0.0
    %1354 = vmatprep.subr.mxu0 0.0
    %1355 = vmatpush1.msra.mxu0 0.0
    %1356 = vmatprep.subr.mxu0 0.0
    %1357 = vmatpush1.msra.mxu0 0.0
    %1358 = vmatprep.subr.mxu0 0.0
    %1359 = vmatpush1.msra.mxu0 0.0
    %1360 = vmatprep.subr.mxu0 0.0
    %1361 = vmatpush1.msra.mxu0 0.0
    %1362 = vmatprep.subr.mxu0 0.0
    %1363 = vmatpush1.msra.mxu0 0.0
    %1364 = vmatprep.subr.mxu0 0.0
    %1365 = vmatpush1.msra.mxu0 0.0
    %1366 = vmatprep.subr.mxu0 0.0
    %1367 = vmatpush1.msra.mxu0 0.0
    %1368 = vmatprep.subr.mxu0 0.0
    %1369 = vmatpush1.msra.mxu0 0.0
    %1370 = vmatprep.subr.mxu0 0.0
    %1371 = vmatpush1.msra.mxu0 0.0
    %1372 = vmatprep.subr.mxu0 0.0
    %1373 = vmatpush1.msra.mxu0 0.0
    %1374 = vmatprep.subr.mxu0 0.0
    %1375 = vmatpush1.msra.mxu0 0.0
    %1376 = vmatprep.subr.mxu0 0.0
    %1377 = vmatpush1.msra.mxu0 0.0
    %1378 = vmatprep.subr.mxu0 0.0
    %1379 = vmatpush1.msra.mxu0 0.0
    %1380 = vmatprep.subr.mxu0 0.0
    %1381 = vmatpush1.msra.mxu0 0.0
    %1382 = vmatprep.subr.mxu0 0.0
    %1383 = vmatpush1.msra.mxu0 0.0
    %1384 = vmatprep.subr.mxu0 0.0
    %1385 = vmatpush1.msra.mxu0 0.0
    %1386 = vmatprep.mubr.f32.mxu0 0.0
    %1387 = vmatmul.mubr.f32.gmra.mrb[0].mxu0 %v1320
    %v1388 = vpop.f32.mrb[0].mxu0
    %v1389 = vadd.f32 0.0, %v1388
    %v1390 = vpop.f32.mrb[0].mxu0
    %1391 = vdwg.mxu0
    %v1393 = vrot.slane %v1389, 2
    %v1395 = vadd.f32 %v343, %v1393
    %v1396 = vxor.u32 %v1317, 2147483648
    %v1397 = vmul.f32 %v1396, 1.442695
    %v1398 = vpow.pop %v1397
    %v1399 = vadd.f32 %v1398, 1.0
    %v1400 = vrcp.pop %v1399
    %v1401 = vmul.f32 1.0, %v1400
    %v1402 = vtanh.pop %v1317
    %v1403 = vsel %vm173, %v1402, %v1401
    %v1405 = vrot.slane %v1195, 6
    %v1407 = vmul.f32 %v1403, %v1405
    %1409 = vrot.lane.b32.xlu0 %v1403, 64
    %v1410 = vpop.permute.xlu0 %1409
    %v1412 = vmul.f32 %v1403, %v1410
    %1414 = vrot.lane.b32.xlu0 %v1412, 32
    %v1415 = vpop.permute.xlu0 %1414
    %v1417 = vadd.f32 %v1407, %v1415
    %v1418 = vtanh.pop %v1417
    %1420 = vrot.lane.b32.xlu0 %v1418, 64
    %v1421 = vpop.permute.xlu0 %1420
    %v1423 = vmul.f32 %v1403, %v1421
    %v1424 = vxor.u32 %v1395, 2147483648
    %v1425 = vmul.f32 %v1424, 1.442695
    %v1426 = vpow.pop %v1425
    %v1427 = vadd.f32 %v1426, 1.0
    %v1428 = vrcp.pop %v1427
    %v1429 = vmul.f32 1.0, %v1428
    %v1430 = vtanh.pop %v1395
    %v1431 = vsel %vm173, %v1430, %v1429
    %v1433 = vrot.slane %v1223, 2
    %v1435 = vmul.f32 %v1431, %v1433
    %1437 = vrot.lane.b32.xlu0 %v1431, 64
    %v1438 = vpop.permute.xlu0 %1437
    %v1440 = vmul.f32 %v1431, %v1438
    %1442 = vrot.lane.b32.xlu0 %v1440, 32
    %v1443 = vpop.permute.xlu0 %1442
    %v1445 = vadd.f32 %v1435, %v1443
    %v1446 = vtanh.pop %v1445
    %1448 = vrot.lane.b32.xlu0 %v1446, 64
    %v1449 = vpop.permute.xlu0 %1448
    %v1451 = vmul.f32 %v1431, %v1449
    %1453 = vrot.lane.b32.xlu0 %v1423, 32
    %v1454 = vpop.permute.xlu0 %1453
    %1456 = vst.msk [vmem:[#allocation2 + $0x8] sm:$0x3] %vm562, %v1454
    %1458 = vrot.lane.b32.xlu0 %v1451, 64
    %v1459 = vpop.permute.xlu0 %1458
    %1461 = vst.msk [vmem:[#allocation2] sm:$0xc0] %vm568, %v1459
    %v1462 = vsel %vm359, %v1454, 0
    %1464 = vmatprep.subr.mxu0 0.0
    %1465 = vmatpush1.msra.mxu0 %v351
    %1466 = vmatprep.subr.mxu0 0.0
    %1467 = vmatpush1.msra.mxu0 %v352
    %1468 = vmatprep.subr.mxu0 0.0
    %1469 = vmatpush1.msra.mxu0 %v353
    %1470 = vmatprep.subr.mxu0 0.0
    %1471 = vmatpush1.msra.mxu0 %v354
    %1472 = vmatprep.subr.mxu0 0.0
    %1473 = vmatpush1.msra.mxu0 0.0
    %1474 = vmatprep.subr.mxu0 0.0
    %1475 = vmatpush1.msra.mxu0 0.0
    %1476 = vmatprep.subr.mxu0 0.0
    %1477 = vmatpush1.msra.mxu0 0.0
    %1478 = vmatprep.subr.mxu0 0.0
    %1479 = vmatpush1.msra.mxu0 0.0
    %1480 = vmatprep.subr.mxu0 0.0
    %1481 = vmatpush1.msra.mxu0 0.0
    %1482 = vmatprep.subr.mxu0 0.0
    %1483 = vmatpush1.msra.mxu0 0.0
    %1484 = vmatprep.subr.mxu0 0.0
    %1485 = vmatpush1.msra.mxu0 0.0
    %1486 = vmatprep.subr.mxu0 0.0
    %1487 = vmatpush1.msra.mxu0 0.0
    %1488 = vmatprep.subr.mxu0 0.0
    %1489 = vmatpush1.msra.mxu0 0.0
    %1490 = vmatprep.subr.mxu0 0.0
    %1491 = vmatpush1.msra.mxu0 0.0
    %1492 = vmatprep.subr.mxu0 0.0
    %1493 = vmatpush1.msra.mxu0 0.0
    %1494 = vmatprep.subr.mxu0 0.0
    %1495 = vmatpush1.msra.mxu0 0.0
    %1496 = vmatprep.subr.mxu0 0.0
    %1497 = vmatpush1.msra.mxu0 0.0
    %1498 = vmatprep.subr.mxu0 0.0
    %1499 = vmatpush1.msra.mxu0 0.0
    %1500 = vmatprep.subr.mxu0 0.0
    %1501 = vmatpush1.msra.mxu0 0.0
    %1502 = vmatprep.subr.mxu0 0.0
    %1503 = vmatpush1.msra.mxu0 0.0
    %1504 = vmatprep.subr.mxu0 0.0
    %1505 = vmatpush1.msra.mxu0 0.0
    %1506 = vmatprep.subr.mxu0 0.0
    %1507 = vmatpush1.msra.mxu0 0.0
    %1508 = vmatprep.subr.mxu0 0.0
    %1509 = vmatpush1.msra.mxu0 0.0
    %1510 = vmatprep.subr.mxu0 0.0
    %1511 = vmatpush1.msra.mxu0 0.0
    %1512 = vmatprep.subr.mxu0 0.0
    %1513 = vmatpush1.msra.mxu0 0.0
    %1514 = vmatprep.subr.mxu0 0.0
    %1515 = vmatpush1.msra.mxu0 0.0
    %1516 = vmatprep.subr.mxu0 0.0
    %1517 = vmatpush1.msra.mxu0 0.0
    %1518 = vmatprep.subr.mxu0 0.0
    %1519 = vmatpush1.msra.mxu0 0.0
    %1520 = vmatprep.subr.mxu0 0.0
    %1521 = vmatpush1.msra.mxu0 0.0
    %1522 = vmatprep.subr.mxu0 0.0
    %1523 = vmatpush1.msra.mxu0 0.0
    %1524 = vmatprep.subr.mxu0 0.0
    %1525 = vmatpush1.msra.mxu0 0.0
    %1526 = vmatprep.subr.mxu0 0.0
    %1527 = vmatpush1.msra.mxu0 0.0
    %1528 = vmatprep.mubr.f32.mxu0 0.0
    %1529 = vmatmul.mubr.f32.gmra.mrb[0].mxu0 %v1462
    %v1530 = vpop.f32.mrb[0].mxu0
    %v1531 = vadd.f32 0.0, %v1530
    %v1532 = vpop.f32.mrb[0].mxu0
    %1533 = vdwg.mxu0
    %v1535 = vrot.slane %v1531, 6
    %v1537 = vadd.f32 %v264, %v1535
    %v1538 = vrot.slane %v1451, 6
    %1539 = vrot.lane.b32.xlu0 %v1538, 32
    %v1540 = vpop.permute.xlu0 %1539
    %v1541 = vsel %vm359, %v1540, 0
    %1543 = vmatprep.subr.mxu0 0.0
    %1544 = vmatpush1.msra.mxu0 %v355
    %1545 = vmatprep.subr.mxu0 0.0
    %1546 = vmatpush1.msra.mxu0 %v356
    %1547 = vmatprep.subr.mxu0 0.0
    %1548 = vmatpush1.msra.mxu0 %v357
    %1549 = vmatprep.subr.mxu0 0.0
    %1550 = vmatpush1.msra.mxu0 %v358
    %1551 = vmatprep.subr.mxu0 0.0
    %1552 = vmatpush1.msra.mxu0 0.0
    %1553 = vmatprep.subr.mxu0 0.0
    %1554 = vmatpush1.msra.mxu0 0.0
    %1555 = vmatprep.subr.mxu0 0.0
    %1556 = vmatpush1.msra.mxu0 0.0
    %1557 = vmatprep.subr.mxu0 0.0
    %1558 = vmatpush1.msra.mxu0 0.0
    %1559 = vmatprep.subr.mxu0 0.0
    %1560 = vmatpush1.msra.mxu0 0.0
    %1561 = vmatprep.subr.mxu0 0.0
    %1562 = vmatpush1.msra.mxu0 0.0
    %1563 = vmatprep.subr.mxu0 0.0
    %1564 = vmatpush1.msra.mxu0 0.0
    %1565 = vmatprep.subr.mxu0 0.0
    %1566 = vmatpush1.msra.mxu0 0.0
    %1567 = vmatprep.subr.mxu0 0.0
    %1568 = vmatpush1.msra.mxu0 0.0
    %1569 = vmatprep.subr.mxu0 0.0
    %1570 = vmatpush1.msra.mxu0 0.0
    %1571 = vmatprep.subr.mxu0 0.0
    %1572 = vmatpush1.msra.mxu0 0.0
    %1573 = vmatprep.subr.mxu0 0.0
    %1574 = vmatpush1.msra.mxu0 0.0
    %1575 = vmatprep.subr.mxu0 0.0
    %1576 = vmatpush1.msra.mxu0 0.0
    %1577 = vmatprep.subr.mxu0 0.0
    %1578 = vmatpush1.msra.mxu0 0.0
    %1579 = vmatprep.subr.mxu0 0.0
    %1580 = vmatpush1.msra.mxu0 0.0
    %1581 = vmatprep.subr.mxu0 0.0
    %1582 = vmatpush1.msra.mxu0 0.0
    %1583 = vmatprep.subr.mxu0 0.0
    %1584 = vmatpush1.msra.mxu0 0.0
    %1585 = vmatprep.subr.mxu0 0.0
    %1586 = vmatpush1.msra.mxu0 0.0
    %1587 = vmatprep.subr.mxu0 0.0
    %1588 = vmatpush1.msra.mxu0 0.0
    %1589 = vmatprep.subr.mxu0 0.0
    %1590 = vmatpush1.msra.mxu0 0.0
    %1591 = vmatprep.subr.mxu0 0.0
    %1592 = vmatpush1.msra.mxu0 0.0
    %1593 = vmatprep.subr.mxu0 0.0
    %1594 = vmatpush1.msra.mxu0 0.0
    %1595 = vmatprep.subr.mxu0 0.0
    %1596 = vmatpush1.msra.mxu0 0.0
    %1597 = vmatprep.subr.mxu0 0.0
    %1598 = vmatpush1.msra.mxu0 0.0
    %1599 = vmatprep.subr.mxu0 0.0
    %1600 = vmatpush1.msra.mxu0 0.0
    %1601 = vmatprep.subr.mxu0 0.0
    %1602 = vmatpush1.msra.mxu0 0.0
    %1603 = vmatprep.subr.mxu0 0.0
    %1604 = vmatpush1.msra.mxu0 0.0
    %1605 = vmatprep.subr.mxu0 0.0
    %1606 = vmatpush1.msra.mxu0 0.0
    %1607 = vmatprep.mubr.f32.mxu0 0.0
    %1608 = vmatmul.mubr.f32.gmra.mrb[0].mxu0 %v1541
    %v1609 = vpop.f32.mrb[0].mxu0
    %v1610 = vadd.f32 0.0, %v1609
    %v1611 = vpop.f32.mrb[0].mxu0
    %1612 = vdwg.mxu0
    %v1614 = vrot.slane %v1610, 4
    %v1616 = vadd.f32 %v343, %v1614
    %v1617 = vxor.u32 %v1537, 2147483648
    %v1618 = vmul.f32 %v1617, 1.442695
    %v1619 = vpow.pop %v1618
    %v1620 = vadd.f32 %v1619, 1.0
    %v1621 = vrcp.pop %v1620
    %v1622 = vmul.f32 1.0, %v1621
    %v1623 = vtanh.pop %v1537
    %v1624 = vsel %vm173, %v1623, %v1622
    %v1626 = vrot.slane %v1417, 6
    %v1628 = vmul.f32 %v1624, %v1626
    %1630 = vrot.lane.b32.xlu0 %v1624, 64
    %v1631 = vpop.permute.xlu0 %1630
    %v1633 = vmul.f32 %v1624, %v1631
    %1635 = vrot.lane.b32.xlu0 %v1633, 32
    %v1636 = vpop.permute.xlu0 %1635
    %v1638 = vadd.f32 %v1628, %v1636
    %v1639 = vtanh.pop %v1638
    %1641 = vrot.lane.b32.xlu0 %v1639, 64
    %v1642 = vpop.permute.xlu0 %1641
    %v1644 = vmul.f32 %v1624, %v1642
    %v1645 = vxor.u32 %v1616, 2147483648
    %v1646 = vmul.f32 %v1645, 1.442695
    %v1647 = vpow.pop %v1646
    %v1648 = vadd.f32 %v1647, 1.0
    %v1649 = vrcp.pop %v1648
    %v1650 = vmul.f32 1.0, %v1649
    %v1651 = vtanh.pop %v1616
    %v1652 = vsel %vm173, %v1651, %v1650
    %v1654 = vrot.slane %v1445, 2
    %v1656 = vmul.f32 %v1652, %v1654
    %1658 = vrot.lane.b32.xlu0 %v1652, 64
    %v1659 = vpop.permute.xlu0 %1658
    %v1661 = vmul.f32 %v1652, %v1659
    %1663 = vrot.lane.b32.xlu0 %v1661, 32
    %v1664 = vpop.permute.xlu0 %1663
    %v1666 = vadd.f32 %v1656, %v1664
    %v1667 = vtanh.pop %v1666
    %1669 = vrot.lane.b32.xlu0 %v1667, 64
    %v1670 = vpop.permute.xlu0 %1669
    %v1672 = vmul.f32 %v1652, %v1670
    %1674 = vrot.lane.b32.xlu0 %v1644, 32
    %v1675 = vpop.permute.xlu0 %1674
    %1677 = vst.msk [vmem:[#allocation2 + $0x8] sm:$0xc] %vm785, %v1675
    %1679 = vrot.lane.b32.xlu0 %v1672, 64
    %v1680 = vpop.permute.xlu0 %1679
    %1682 = vst.msk [vmem:[#allocation2] sm:$0x30] %vm791, %v1680
    %v1683 = vrot.slane %v1644, 2
    %1684 = vrot.lane.b32.xlu0 %v1683, 32
    %v1685 = vpop.permute.xlu0 %1684
    %v1686 = vsel %vm359, %v1685, 0
    %1688 = vmatprep.subr.mxu0 0.0
    %1689 = vmatpush1.msra.mxu0 %v351
    %1690 = vmatprep.subr.mxu0 0.0
    %1691 = vmatpush1.msra.mxu0 %v352
    %1692 = vmatprep.subr.mxu0 0.0
    %1693 = vmatpush1.msra.mxu0 %v353
    %1694 = vmatprep.subr.mxu0 0.0
    %1695 = vmatpush1.msra.mxu0 %v354
    %1696 = vmatprep.subr.mxu0 0.0
    %1697 = vmatpush1.msra.mxu0 0.0
    %1698 = vmatprep.subr.mxu0 0.0
    %1699 = vmatpush1.msra.mxu0 0.0
    %1700 = vmatprep.subr.mxu0 0.0
    %1701 = vmatpush1.msra.mxu0 0.0
    %1702 = vmatprep.subr.mxu0 0.0
    %1703 = vmatpush1.msra.mxu0 0.0
    %1704 = vmatprep.subr.mxu0 0.0
    %1705 = vmatpush1.msra.mxu0 0.0
    %1706 = vmatprep.subr.mxu0 0.0
    %1707 = vmatpush1.msra.mxu0 0.0
    %1708 = vmatprep.subr.mxu0 0.0
    %1709 = vmatpush1.msra.mxu0 0.0
    %1710 = vmatprep.subr.mxu0 0.0
    %1711 = vmatpush1.msra.mxu0 0.0
    %1712 = vmatprep.subr.mxu0 0.0
    %1713 = vmatpush1.msra.mxu0 0.0
    %1714 = vmatprep.subr.mxu0 0.0
    %1715 = vmatpush1.msra.mxu0 0.0
    %1716 = vmatprep.subr.mxu0 0.0
    %1717 = vmatpush1.msra.mxu0 0.0
    %1718 = vmatprep.subr.mxu0 0.0
    %1719 = vmatpush1.msra.mxu0 0.0
    %1720 = vmatprep.subr.mxu0 0.0
    %1721 = vmatpush1.msra.mxu0 0.0
    %1722 = vmatprep.subr.mxu0 0.0
    %1723 = vmatpush1.msra.mxu0 0.0
    %1724 = vmatprep.subr.mxu0 0.0
    %1725 = vmatpush1.msra.mxu0 0.0
    %1726 = vmatprep.subr.mxu0 0.0
    %1727 = vmatpush1.msra.mxu0 0.0
    %1728 = vmatprep.subr.mxu0 0.0
    %1729 = vmatpush1.msra.mxu0 0.0
    %1730 = vmatprep.subr.mxu0 0.0
    %1731 = vmatpush1.msra.mxu0 0.0
    %1732 = vmatprep.subr.mxu0 0.0
    %1733 = vmatpush1.msra.mxu0 0.0
    %1734 = vmatprep.subr.mxu0 0.0
    %1735 = vmatpush1.msra.mxu0 0.0
    %1736 = vmatprep.subr.mxu0 0.0
    %1737 = vmatpush1.msra.mxu0 0.0
    %1738 = vmatprep.subr.mxu0 0.0
    %1739 = vmatpush1.msra.mxu0 0.0
    %1740 = vmatprep.subr.mxu0 0.0
    %1741 = vmatpush1.msra.mxu0 0.0
    %1742 = vmatprep.subr.mxu0 0.0
    %1743 = vmatpush1.msra.mxu0 0.0
    %1744 = vmatprep.subr.mxu0 0.0
    %1745 = vmatpush1.msra.mxu0 0.0
    %1746 = vmatprep.subr.mxu0 0.0
    %1747 = vmatpush1.msra.mxu0 0.0
    %1748 = vmatprep.subr.mxu0 0.0
    %1749 = vmatpush1.msra.mxu0 0.0
    %1750 = vmatprep.subr.mxu0 0.0
    %1751 = vmatpush1.msra.mxu0 0.0
    %1752 = vmatprep.mubr.f32.mxu0 0.0
    %1753 = vmatmul.mubr.f32.gmra.mrb[0].mxu0 %v1686
    %v1754 = vpop.f32.mrb[0].mxu0
    %v1755 = vadd.f32 0.0, %v1754
    %v1756 = vpop.f32.mrb[0].mxu0
    %1757 = vdwg.mxu0
    %v1759 = vrot.slane %v1755, 4
    %v1761 = vadd.f32 %v264, %v1759
    %v1762 = vrot.slane %v1672, 4
    %1763 = vrot.lane.b32.xlu0 %v1762, 32
    %v1764 = vpop.permute.xlu0 %1763
    %v1765 = vsel %vm359, %v1764, 0
    %1767 = vmatprep.subr.mxu0 0.0
    %1768 = vmatpush1.msra.mxu0 %v355
    %1769 = vmatprep.subr.mxu0 0.0
    %1770 = vmatpush1.msra.mxu0 %v356
    %1771 = vmatprep.subr.mxu0 0.0
    %1772 = vmatpush1.msra.mxu0 %v357
    %1773 = vmatprep.subr.mxu0 0.0
    %1774 = vmatpush1.msra.mxu0 %v358
    %1775 = vmatprep.subr.mxu0 0.0
    %1776 = vmatpush1.msra.mxu0 0.0
    %1777 = vmatprep.subr.mxu0 0.0
    %1778 = vmatpush1.msra.mxu0 0.0
    %1779 = vmatprep.subr.mxu0 0.0
    %1780 = vmatpush1.msra.mxu0 0.0
    %1781 = vmatprep.subr.mxu0 0.0
    %1782 = vmatpush1.msra.mxu0 0.0
    %1783 = vmatprep.subr.mxu0 0.0
    %1784 = vmatpush1.msra.mxu0 0.0
    %1785 = vmatprep.subr.mxu0 0.0
    %1786 = vmatpush1.msra.mxu0 0.0
    %1787 = vmatprep.subr.mxu0 0.0
    %1788 = vmatpush1.msra.mxu0 0.0
    %1789 = vmatprep.subr.mxu0 0.0
    %1790 = vmatpush1.msra.mxu0 0.0
    %1791 = vmatprep.subr.mxu0 0.0
    %1792 = vmatpush1.msra.mxu0 0.0
    %1793 = vmatprep.subr.mxu0 0.0
    %1794 = vmatpush1.msra.mxu0 0.0
    %1795 = vmatprep.subr.mxu0 0.0
    %1796 = vmatpush1.msra.mxu0 0.0
    %1797 = vmatprep.subr.mxu0 0.0
    %1798 = vmatpush1.msra.mxu0 0.0
    %1799 = vmatprep.subr.mxu0 0.0
    %1800 = vmatpush1.msra.mxu0 0.0
    %1801 = vmatprep.subr.mxu0 0.0
    %1802 = vmatpush1.msra.mxu0 0.0
    %1803 = vmatprep.subr.mxu0 0.0
    %1804 = vmatpush1.msra.mxu0 0.0
    %1805 = vmatprep.subr.mxu0 0.0
    %1806 = vmatpush1.msra.mxu0 0.0
    %1807 = vmatprep.subr.mxu0 0.0
    %1808 = vmatpush1.msra.mxu0 0.0
    %1809 = vmatprep.subr.mxu0 0.0
    %1810 = vmatpush1.msra.mxu0 0.0
    %1811 = vmatprep.subr.mxu0 0.0
    %1812 = vmatpush1.msra.mxu0 0.0
    %1813 = vmatprep.subr.mxu0 0.0
    %1814 = vmatpush1.msra.mxu0 0.0
    %1815 = vmatprep.subr.mxu0 0.0
    %1816 = vmatpush1.msra.mxu0 0.0
    %1817 = vmatprep.subr.mxu0 0.0
    %1818 = vmatpush1.msra.mxu0 0.0
    %1819 = vmatprep.subr.mxu0 0.0
    %1820 = vmatpush1.msra.mxu0 0.0
    %1821 = vmatprep.subr.mxu0 0.0
    %1822 = vmatpush1.msra.mxu0 0.0
    %1823 = vmatprep.subr.mxu0 0.0
    %1824 = vmatpush1.msra.mxu0 0.0
    %1825 = vmatprep.subr.mxu0 0.0
    %1826 = vmatpush1.msra.mxu0 0.0
    %1827 = vmatprep.subr.mxu0 0.0
    %1828 = vmatpush1.msra.mxu0 0.0
    %1829 = vmatprep.subr.mxu0 0.0
    %1830 = vmatpush1.msra.mxu0 0.0
    %1831 = vmatprep.mubr.f32.mxu0 0.0
    %1832 = vmatmul.mubr.f32.gmra.mrb[0].mxu0 %v1765
    %v1833 = vpop.f32.mrb[0].mxu0
    %v1834 = vadd.f32 0.0, %v1833
    %v1835 = vpop.f32.mrb[0].mxu0
    %1836 = vdwg.mxu0
    %v1838 = vrot.slane %v1834, 6
    %v1840 = vadd.f32 %v343, %v1838
    %v1841 = vxor.u32 %v1761, 2147483648
    %v1842 = vmul.f32 %v1841, 1.442695
    %v1843 = vpow.pop %v1842
    %v1844 = vadd.f32 %v1843, 1.0
    %v1845 = vrcp.pop %v1844
    %v1846 = vmul.f32 1.0, %v1845
    %v1847 = vtanh.pop %v1761
    %v1848 = vsel %vm173, %v1847, %v1846
    %v1850 = vrot.slane %v1638, 6
    %v1852 = vmul.f32 %v1848, %v1850
    %1854 = vrot.lane.b32.xlu0 %v1848, 64
    %v1855 = vpop.permute.xlu0 %1854
    %v1857 = vmul.f32 %v1848, %v1855
    %1859 = vrot.lane.b32.xlu0 %v1857, 32
    %v1860 = vpop.permute.xlu0 %1859
    %v1862 = vadd.f32 %v1852, %v1860
    %v1863 = vtanh.pop %v1862
    %1865 = vrot.lane.b32.xlu0 %v1863, 64
    %v1866 = vpop.permute.xlu0 %1865
    %v1868 = vmul.f32 %v1848, %v1866
    %v1869 = vxor.u32 %v1840, 2147483648
    %v1870 = vmul.f32 %v1869, 1.442695
    %v1871 = vpow.pop %v1870
    %v1872 = vadd.f32 %v1871, 1.0
    %v1873 = vrcp.pop %v1872
    %v1874 = vmul.f32 1.0, %v1873
    %v1875 = vtanh.pop %v1840
    %v1876 = vsel %vm173, %v1875, %v1874
    %v1878 = vrot.slane %v1666, 2
    %v1880 = vmul.f32 %v1876, %v1878
    %1882 = vrot.lane.b32.xlu0 %v1876, 64
    %v1883 = vpop.permute.xlu0 %1882
    %v1885 = vmul.f32 %v1876, %v1883
    %1887 = vrot.lane.b32.xlu0 %v1885, 32
    %v1888 = vpop.permute.xlu0 %1887
    %v1890 = vadd.f32 %v1880, %v1888
    %v1891 = vtanh.pop %v1890
    %1893 = vrot.lane.b32.xlu0 %v1891, 64
    %v1894 = vpop.permute.xlu0 %1893
    %v1896 = vmul.f32 %v1876, %v1894
    %1898 = vrot.lane.b32.xlu0 %v1868, 32
    %v1899 = vpop.permute.xlu0 %1898
    %1901 = vst.msk [vmem:[#allocation2 + $0x8] sm:$0x30] %vm1011, %v1899
    %1903 = vrot.lane.b32.xlu0 %v1896, 64
    %v1904 = vpop.permute.xlu0 %1903
    %1906 = vst.msk [vmem:[#allocation2] sm:$0xc] %vm1017, %v1904
    %v1907 = vrot.slane %v1868, 4
    %1908 = vrot.lane.b32.xlu0 %v1907, 32
    %v1909 = vpop.permute.xlu0 %1908
    %v1910 = vsel %vm359, %v1909, 0
    %1912 = vmatprep.subr.mxu0 0.0
    %1913 = vmatpush1.msra.mxu0 %v351
    %1914 = vmatprep.subr.mxu0 0.0
    %1915 = vmatpush1.msra.mxu0 %v352
    %1916 = vmatprep.subr.mxu0 0.0
    %1917 = vmatpush1.msra.mxu0 %v353
    %1918 = vmatprep.subr.mxu0 0.0
    %1919 = vmatpush1.msra.mxu0 %v354
    %1920 = vmatprep.subr.mxu0 0.0
    %1921 = vmatpush1.msra.mxu0 0.0
    %1922 = vmatprep.subr.mxu0 0.0
    %1923 = vmatpush1.msra.mxu0 0.0
    %1924 = vmatprep.subr.mxu0 0.0
    %1925 = vmatpush1.msra.mxu0 0.0
    %1926 = vmatprep.subr.mxu0 0.0
    %1927 = vmatpush1.msra.mxu0 0.0
    %1928 = vmatprep.subr.mxu0 0.0
    %1929 = vmatpush1.msra.mxu0 0.0
    %1930 = vmatprep.subr.mxu0 0.0
    %1931 = vmatpush1.msra.mxu0 0.0
    %1932 = vmatprep.subr.mxu0 0.0
    %1933 = vmatpush1.msra.mxu0 0.0
    %1934 = vmatprep.subr.mxu0 0.0
    %1935 = vmatpush1.msra.mxu0 0.0
    %1936 = vmatprep.subr.mxu0 0.0
    %1937 = vmatpush1.msra.mxu0 0.0
    %1938 = vmatprep.subr.mxu0 0.0
    %1939 = vmatpush1.msra.mxu0 0.0
    %1940 = vmatprep.subr.mxu0 0.0
    %1941 = vmatpush1.msra.mxu0 0.0
    %1942 = vmatprep.subr.mxu0 0.0
    %1943 = vmatpush1.msra.mxu0 0.0
    %1944 = vmatprep.subr.mxu0 0.0
    %1945 = vmatpush1.msra.mxu0 0.0
    %1946 = vmatprep.subr.mxu0 0.0
    %1947 = vmatpush1.msra.mxu0 0.0
    %1948 = vmatprep.subr.mxu0 0.0
    %1949 = vmatpush1.msra.mxu0 0.0
    %1950 = vmatprep.subr.mxu0 0.0
    %1951 = vmatpush1.msra.mxu0 0.0
    %1952 = vmatprep.subr.mxu0 0.0
    %1953 = vmatpush1.msra.mxu0 0.0
    %1954 = vmatprep.subr.mxu0 0.0
    %1955 = vmatpush1.msra.mxu0 0.0
    %1956 = vmatprep.subr.mxu0 0.0
    %1957 = vmatpush1.msra.mxu0 0.0
    %1958 = vmatprep.subr.mxu0 0.0
    %1959 = vmatpush1.msra.mxu0 0.0
    %1960 = vmatprep.subr.mxu0 0.0
    %1961 = vmatpush1.msra.mxu0 0.0
    %1962 = vmatprep.subr.mxu0 0.0
    %1963 = vmatpush1.msra.mxu0 0.0
    %1964 = vmatprep.subr.mxu0 0.0
    %1965 = vmatpush1.msra.mxu0 0.0
    %1966 = vmatprep.subr.mxu0 0.0
    %1967 = vmatpush1.msra.mxu0 0.0
    %1968 = vmatprep.subr.mxu0 0.0
    %1969 = vmatpush1.msra.mxu0 0.0
    %1970 = vmatprep.subr.mxu0 0.0
    %1971 = vmatpush1.msra.mxu0 0.0
    %1972 = vmatprep.subr.mxu0 0.0
    %1973 = vmatpush1.msra.mxu0 0.0
    %1974 = vmatprep.subr.mxu0 0.0
    %1975 = vmatpush1.msra.mxu0 0.0
    %1976 = vmatprep.mubr.f32.mxu0 0.0
    %1977 = vmatmul.mubr.f32.gmra.mrb[0].mxu0 %v1910
    %v1978 = vpop.f32.mrb[0].mxu0
    %v1979 = vadd.f32 0.0, %v1978
    %v1980 = vpop.f32.mrb[0].mxu0
    %1981 = vdwg.mxu0
    %v1983 = vrot.slane %v1979, 2
    %v1985 = vadd.f32 %v264, %v1983
    %v1986 = vrot.slane %v1896, 2
    %1987 = vrot.lane.b32.xlu0 %v1986, 32
    %v1988 = vpop.permute.xlu0 %1987
    %v1989 = vsel %vm359, %v1988, 0
    %1991 = vmatprep.subr.mxu0 0.0
    %1992 = vmatpush1.msra.mxu0 %v355
    %1993 = vmatprep.subr.mxu0 0.0
    %1994 = vmatpush1.msra.mxu0 %v356
    %1995 = vmatprep.subr.mxu0 0.0
    %1996 = vmatpush1.msra.mxu0 %v357
    %1997 = vmatprep.subr.mxu0 0.0
    %1998 = vmatpush1.msra.mxu0 %v358
    %1999 = vmatprep.subr.mxu0 0.0
    %2000 = vmatpush1.msra.mxu0 0.0
    %2001 = vmatprep.subr.mxu0 0.0
    %2002 = vmatpush1.msra.mxu0 0.0
    %2003 = vmatprep.subr.mxu0 0.0
    %2004 = vmatpush1.msra.mxu0 0.0
    %2005 = vmatprep.subr.mxu0 0.0
    %2006 = vmatpush1.msra.mxu0 0.0
    %2007 = vmatprep.subr.mxu0 0.0
    %2008 = vmatpush1.msra.mxu0 0.0
    %2009 = vmatprep.subr.mxu0 0.0
    %2010 = vmatpush1.msra.mxu0 0.0
    %2011 = vmatprep.subr.mxu0 0.0
    %2012 = vmatpush1.msra.mxu0 0.0
    %2013 = vmatprep.subr.mxu0 0.0
    %2014 = vmatpush1.msra.mxu0 0.0
    %2015 = vmatprep.subr.mxu0 0.0
    %2016 = vmatpush1.msra.mxu0 0.0
    %2017 = vmatprep.subr.mxu0 0.0
    %2018 = vmatpush1.msra.mxu0 0.0
    %2019 = vmatprep.subr.mxu0 0.0
    %2020 = vmatpush1.msra.mxu0 0.0
    %2021 = vmatprep.subr.mxu0 0.0
    %2022 = vmatpush1.msra.mxu0 0.0
    %2023 = vmatprep.subr.mxu0 0.0
    %2024 = vmatpush1.msra.mxu0 0.0
    %2025 = vmatprep.subr.mxu0 0.0
    %2026 = vmatpush1.msra.mxu0 0.0
    %2027 = vmatprep.subr.mxu0 0.0
    %2028 = vmatpush1.msra.mxu0 0.0
    %2029 = vmatprep.subr.mxu0 0.0
    %2030 = vmatpush1.msra.mxu0 0.0
    %2031 = vmatprep.subr.mxu0 0.0
    %2032 = vmatpush1.msra.mxu0 0.0
    %2033 = vmatprep.subr.mxu0 0.0
    %2034 = vmatpush1.msra.mxu0 0.0
    %2035 = vmatprep.subr.mxu0 0.0
    %2036 = vmatpush1.msra.mxu0 0.0
    %2037 = vmatprep.subr.mxu0 0.0
    %2038 = vmatpush1.msra.mxu0 0.0
    %2039 = vmatprep.subr.mxu0 0.0
    %2040 = vmatpush1.msra.mxu0 0.0
    %2041 = vmatprep.subr.mxu0 0.0
    %2042 = vmatpush1.msra.mxu0 0.0
    %2043 = vmatprep.subr.mxu0 0.0
    %2044 = vmatpush1.msra.mxu0 0.0
    %2045 = vmatprep.subr.mxu0 0.0
    %2046 = vmatpush1.msra.mxu0 0.0
    %2047 = vmatprep.subr.mxu0 0.0
    %2048 = vmatpush1.msra.mxu0 0.0
    %2049 = vmatprep.subr.mxu0 0.0
    %2050 = vmatpush1.msra.mxu0 0.0
    %2051 = vmatprep.subr.mxu0 0.0
    %2052 = vmatpush1.msra.mxu0 0.0
    %2053 = vmatprep.subr.mxu0 0.0
    %2054 = vmatpush1.msra.mxu0 0.0
    %2055 = vmatprep.mubr.f32.mxu0 0.0
    %2056 = vmatmul.mubr.f32.gmra.mrb[0].mxu0 %v1989
    %v2057 = vpop.f32.mrb[0].mxu0
    %v2058 = vadd.f32 0.0, %v2057
    %v2059 = vpop.f32.mrb[0].mxu0
    %2060 = vdwg.mxu0
    %v2061 = vadd.f32 %v343, %v2058
    %v2062 = vxor.u32 %v1985, 2147483648
    %v2063 = vmul.f32 %v2062, 1.442695
    %v2064 = vpow.pop %v2063
    %v2065 = vadd.f32 %v2064, 1.0
    %v2066 = vrcp.pop %v2065
    %v2067 = vmul.f32 1.0, %v2066
    %v2068 = vtanh.pop %v1985
    %v2069 = vsel %vm173, %v2068, %v2067
    %v2071 = vrot.slane %v1862, 6
    %v2073 = vmul.f32 %v2069, %v2071
    %2075 = vrot.lane.b32.xlu0 %v2069, 64
    %v2076 = vpop.permute.xlu0 %2075
    %v2078 = vmul.f32 %v2069, %v2076
    %2080 = vrot.lane.b32.xlu0 %v2078, 32
    %v2081 = vpop.permute.xlu0 %2080
    %v2083 = vadd.f32 %v2073, %v2081
    %v2084 = vtanh.pop %v2083
    %2086 = vrot.lane.b32.xlu0 %v2084, 64
    %v2087 = vpop.permute.xlu0 %2086
    %v2089 = vmul.f32 %v2069, %v2087
    %v2090 = vxor.u32 %v2061, 2147483648
    %v2091 = vmul.f32 %v2090, 1.442695
    %v2092 = vpow.pop %v2091
    %v2093 = vadd.f32 %v2092, 1.0
    %v2094 = vrcp.pop %v2093
    %v2095 = vmul.f32 1.0, %v2094
    %v2096 = vtanh.pop %v2061
    %v2097 = vsel %vm173, %v2096, %v2095
    %v2099 = vrot.slane %v1890, 2
    %v2101 = vmul.f32 %v2097, %v2099
    %2103 = vrot.lane.b32.xlu0 %v2097, 64
    %v2104 = vpop.permute.xlu0 %2103
    %v2106 = vmul.f32 %v2097, %v2104
    %2108 = vrot.lane.b32.xlu0 %v2106, 32
    %v2109 = vpop.permute.xlu0 %2108
    %v2111 = vadd.f32 %v2101, %v2109
    %v2112 = vtanh.pop %v2111
    %2114 = vrot.lane.b32.xlu0 %v2112, 64
    %v2115 = vpop.permute.xlu0 %2114
    %v2117 = vmul.f32 %v2097, %v2115
    %2119 = vrot.lane.b32.xlu0 %v2089, 32
    %v2120 = vpop.permute.xlu0 %2119
    %2122 = vst.msk [vmem:[#allocation2 + $0x8] sm:$0xc0] %vm1234, %v2120
    %2124 = vrot.lane.b32.xlu0 %v2117, 64
    %v2125 = vpop.permute.xlu0 %2124
    %2127 = vst.msk [vmem:[#allocation2] sm:$0x3] %vm1240, %v2125
    %v2128 = vld [vmem:[#allocation2] sm:$0xff]
    %v2129 = vld [vmem:[#allocation2 + $0x8] sm:$0xff]
    %v2130 = vld [vmem:[%s7] sm:$0xff]
    %v2131 = vld [vmem:[%s7 + $0x8] sm:$0xff]
    %v2132 = vld [vmem:[%s7 + $0x10] sm:$0xff]
    %v2133 = vld [vmem:[%s7 + $0x18] sm:$0xff]
    %v2134 = vld [vmem:[%s7 + $0x20] sm:$0xff]
    %v2135 = vld [vmem:[%s7 + $0x28] sm:$0xff]
    %v2136 = vld [vmem:[%s7 + $0x30] sm:$0xff]
    %v2137 = vld [vmem:[%s7 + $0x38] sm:$0xff]
    %v2138 = vld [vmem:[%s9] sm:$0x1]
    %v2140 = vlaneseq
    %v2141 = vshrl.u32 %v2140, 7
    %v2142 = vsub.s32 0, %v2141
    %v2143 = vrot.slane %v2138, %v2142
    %vm2145 = vcmask 523264
    %v2147 = vsel %vm2145, %v2128, 0
    %v2150 = vsel %vm2145, %v2129, 0
    %2152 = vmatprep.subr.mxu0 0.0
    %2153 = vmatpush1.msra.mxu0 %v2130
    %2154 = vmatprep.subr.mxu0 0.0
    %2155 = vmatpush1.msra.mxu0 %v2131
    %2156 = vmatprep.subr.mxu0 0.0
    %2157 = vmatpush1.msra.mxu0 %v2132
    %2158 = vmatprep.subr.mxu0 0.0
    %2159 = vmatpush1.msra.mxu0 %v2133
    %2160 = vmatprep.subr.mxu0 0.0
    %2161 = vmatpush1.msra.mxu0 %v2134
    %2162 = vmatprep.subr.mxu0 0.0
    %2163 = vmatpush1.msra.mxu0 %v2135
    %2164 = vmatprep.subr.mxu0 0.0
    %2165 = vmatpush1.msra.mxu0 %v2136
    %2166 = vmatprep.subr.mxu0 0.0
    %2167 = vmatpush1.msra.mxu0 %v2137
    %2168 = vmatprep.subr.mxu0 0.0
    %2169 = vmatpush1.msra.mxu0 0.0
    %2170 = vmatprep.subr.mxu0 0.0
    %2171 = vmatpush1.msra.mxu0 0.0
    %2172 = vmatprep.subr.mxu0 0.0
    %2173 = vmatpush1.msra.mxu0 0.0
    %2174 = vmatprep.subr.mxu0 0.0
    %2175 = vmatpush1.msra.mxu0 0.0
    %2176 = vmatprep.subr.mxu0 0.0
    %2177 = vmatpush1.msra.mxu0 0.0
    %2178 = vmatprep.subr.mxu0 0.0
    %2179 = vmatpush1.msra.mxu0 0.0
    %2180 = vmatprep.subr.mxu0 0.0
    %2181 = vmatpush1.msra.mxu0 0.0
    %2182 = vmatprep.subr.mxu0 0.0
    %2183 = vmatpush1.msra.mxu0 0.0
    %2184 = vmatprep.subr.mxu0 0.0
    %2185 = vmatpush1.msra.mxu0 0.0
    %2186 = vmatprep.subr.mxu0 0.0
    %2187 = vmatpush1.msra.mxu0 0.0
    %2188 = vmatprep.subr.mxu0 0.0
    %2189 = vmatpush1.msra.mxu0 0.0
    %2190 = vmatprep.subr.mxu0 0.0
    %2191 = vmatpush1.msra.mxu0 0.0
    %2192 = vmatprep.subr.mxu0 0.0
    %2193 = vmatpush1.msra.mxu0 0.0
    %2194 = vmatprep.subr.mxu0 0.0
    %2195 = vmatpush1.msra.mxu0 0.0
    %2196 = vmatprep.subr.mxu0 0.0
    %2197 = vmatpush1.msra.mxu0 0.0
    %2198 = vmatprep.subr.mxu0 0.0
    %2199 = vmatpush1.msra.mxu0 0.0
    %2200 = vmatprep.subr.mxu0 0.0
    %2201 = vmatpush1.msra.mxu0 0.0
    %2202 = vmatprep.subr.mxu0 0.0
    %2203 = vmatpush1.msra.mxu0 0.0
    %2204 = vmatprep.subr.mxu0 0.0
    %2205 = vmatpush1.msra.mxu0 0.0
    %2206 = vmatprep.subr.mxu0 0.0
    %2207 = vmatpush1.msra.mxu0 0.0
    %2208 = vmatprep.subr.mxu0 0.0
    %2209 = vmatpush1.msra.mxu0 0.0
    %2210 = vmatprep.subr.mxu0 0.0
    %2211 = vmatpush1.msra.mxu0 0.0
    %2212 = vmatprep.subr.mxu0 0.0
    %2213 = vmatpush1.msra.mxu0 0.0
    %2214 = vmatprep.subr.mxu0 0.0
    %2215 = vmatpush1.msra.mxu0 0.0
    %2216 = vmatprep.mubr.f32.mxu0 0.0
    %2217 = vmatmul.mubr.f32.gmra.mrb[0].mxu0 %v2147
    %v2218 = vpop.f32.mrb[0].mxu0
    %v2219 = vadd.f32 %v2143, %v2218
    %v2220 = vpop.f32.mrb[0].mxu0
    %2221 = vmatprep.mubr.f32.mxu0 0.0
    %2222 = vmatmul.mubr.f32.gmra.mrb[0].mxu0 %v2150
    %v2223 = vpop.f32.mrb[0].mxu0
    %v2224 = vadd.f32 %v2143, %v2223
    %v2225 = vpop.f32.mrb[0].mxu0
    %2226 = vdwg.mxu0
    %v2227 = vld [vmem:[%s10] sm:$0xff]
    %v2228 = vld [vmem:[%s10 + $0x8] sm:$0xff]
    %v2229 = vld [vmem:[%s10 + $0x10] sm:$0xff]
    %v2230 = vld [vmem:[%s10 + $0x18] sm:$0xff]
    %v2231 = vld [vmem:[%s10 + $0x20] sm:$0xff]
    %v2232 = vld [vmem:[%s10 + $0x28] sm:$0xff]
    %v2233 = vld [vmem:[%s10 + $0x30] sm:$0xff]
    %v2234 = vld [vmem:[%s10 + $0x38] sm:$0xff]
    %v2235 = vld [vmem:[%s12] sm:$0x1]
    %v2237 = vlaneseq
    %v2238 = vshrl.u32 %v2237, 7
    %v2239 = vsub.s32 0, %v2238
    %v2240 = vrot.slane %v2235, %v2239
    %2242 = vmatprep.subr.mxu0 0.0
    %2243 = vmatpush1.msra.mxu0 %v2227
    %2244 = vmatprep.subr.mxu0 0.0
    %2245 = vmatpush1.msra.mxu0 %v2228
    %2246 = vmatprep.subr.mxu0 0.0
    %2247 = vmatpush1.msra.mxu0 %v2229
    %2248 = vmatprep.subr.mxu0 0.0
    %2249 = vmatpush1.msra.mxu0 %v2230
    %2250 = vmatprep.subr.mxu0 0.0
    %2251 = vmatpush1.msra.mxu0 %v2231
    %2252 = vmatprep.subr.mxu0 0.0
    %2253 = vmatpush1.msra.mxu0 %v2232
    %2254 = vmatprep.subr.mxu0 0.0
    %2255 = vmatpush1.msra.mxu0 %v2233
    %2256 = vmatprep.subr.mxu0 0.0
    %2257 = vmatpush1.msra.mxu0 %v2234
    %2258 = vmatprep.subr.mxu0 0.0
    %2259 = vmatpush1.msra.mxu0 0.0
    %2260 = vmatprep.subr.mxu0 0.0
    %2261 = vmatpush1.msra.mxu0 0.0
    %2262 = vmatprep.subr.mxu0 0.0
    %2263 = vmatpush1.msra.mxu0 0.0
    %2264 = vmatprep.subr.mxu0 0.0
    %2265 = vmatpush1.msra.mxu0 0.0
    %2266 = vmatprep.subr.mxu0 0.0
    %2267 = vmatpush1.msra.mxu0 0.0
    %2268 = vmatprep.subr.mxu0 0.0
    %2269 = vmatpush1.msra.mxu0 0.0
    %2270 = vmatprep.subr.mxu0 0.0
    %2271 = vmatpush1.msra.mxu0 0.0
    %2272 = vmatprep.subr.mxu0 0.0
    %2273 = vmatpush1.msra.mxu0 0.0
    %2274 = vmatprep.subr.mxu0 0.0
    %2275 = vmatpush1.msra.mxu0 0.0
    %2276 = vmatprep.subr.mxu0 0.0
    %2277 = vmatpush1.msra.mxu0 0.0
    %2278 = vmatprep.subr.mxu0 0.0
    %2279 = vmatpush1.msra.mxu0 0.0
    %2280 = vmatprep.subr.mxu0 0.0
    %2281 = vmatpush1.msra.mxu0 0.0
    %2282 = vmatprep.subr.mxu0 0.0
    %2283 = vmatpush1.msra.mxu0 0.0
    %2284 = vmatprep.subr.mxu0 0.0
    %2285 = vmatpush1.msra.mxu0 0.0
    %2286 = vmatprep.subr.mxu0 0.0
    %2287 = vmatpush1.msra.mxu0 0.0
    %2288 = vmatprep.subr.mxu0 0.0
    %2289 = vmatpush1.msra.mxu0 0.0
    %2290 = vmatprep.subr.mxu0 0.0
    %2291 = vmatpush1.msra.mxu0 0.0
    %2292 = vmatprep.subr.mxu0 0.0
    %2293 = vmatpush1.msra.mxu0 0.0
    %2294 = vmatprep.subr.mxu0 0.0
    %2295 = vmatpush1.msra.mxu0 0.0
    %2296 = vmatprep.subr.mxu0 0.0
    %2297 = vmatpush1.msra.mxu0 0.0
    %2298 = vmatprep.subr.mxu0 0.0
    %2299 = vmatpush1.msra.mxu0 0.0
    %2300 = vmatprep.subr.mxu0 0.0
    %2301 = vmatpush1.msra.mxu0 0.0
    %2302 = vmatprep.subr.mxu0 0.0
    %2303 = vmatpush1.msra.mxu0 0.0
    %2304 = vmatprep.subr.mxu0 0.0
    %2305 = vmatpush1.msra.mxu0 0.0
    %2306 = vmatprep.mubr.f32.mxu0 0.0
    %2307 = vmatmul.mubr.f32.gmra.mrb[0].mxu0 %v2147
    %v2308 = vpop.f32.mrb[0].mxu0
    %v2309 = vadd.f32 %v2240, %v2308
    %v2310 = vpop.f32.mrb[0].mxu0
    %2311 = vmatprep.mubr.f32.mxu0 0.0
    %2312 = vmatmul.mubr.f32.gmra.mrb[0].mxu0 %v2150
    %v2313 = vpop.f32.mrb[0].mxu0
    %v2314 = vadd.f32 %v2240, %v2313
    %v2315 = vpop.f32.mrb[0].mxu0
    %2316 = vdwg.mxu0
    %v2317 = vld [vmem:[%s8] sm:$0xff]
    %v2318 = vld [vmem:[%s8 + $0x8] sm:$0xff]
    %v2319 = vld [vmem:[%s8 + $0x10] sm:$0xff]
    %v2320 = vld [vmem:[%s8 + $0x18] sm:$0xff]
    %v2321 = vld [vmem:[#allocation10] sm:$0xff]
    %v2322 = vld [vmem:[#allocation10 + $0x8] sm:$0xff]
    %v2323 = vld [vmem:[#allocation10 + $0x10] sm:$0xff]
    %v2324 = vld [vmem:[#allocation10 + $0x18] sm:$0xff]
    %2325 = vmatprep.subr.mxu0 0.0
    %2326 = vmatpush1.msra.mxu0 %v2317
    %2327 = vmatprep.subr.mxu0 0.0
    %2328 = vmatpush1.msra.mxu0 %v2318
    %2329 = vmatprep.subr.mxu0 0.0
    %2330 = vmatpush1.msra.mxu0 %v2319
    %2331 = vmatprep.subr.mxu0 0.0
    %2332 = vmatpush1.msra.mxu0 %v2320
    %2333 = vmatprep.subr.mxu0 0.0
    %2334 = vmatpush1.msra.mxu0 0.0
    %2335 = vmatprep.subr.mxu0 0.0
    %2336 = vmatpush1.msra.mxu0 0.0
    %2337 = vmatprep.subr.mxu0 0.0
    %2338 = vmatpush1.msra.mxu0 0.0
    %2339 = vmatprep.subr.mxu0 0.0
    %2340 = vmatpush1.msra.mxu0 0.0
    %2341 = vmatprep.subr.mxu0 0.0
    %2342 = vmatpush1.msra.mxu0 0.0
    %2343 = vmatprep.subr.mxu0 0.0
    %2344 = vmatpush1.msra.mxu0 0.0
    %2345 = vmatprep.subr.mxu0 0.0
    %2346 = vmatpush1.msra.mxu0 0.0
    %2347 = vmatprep.subr.mxu0 0.0
    %2348 = vmatpush1.msra.mxu0 0.0
    %2349 = vmatprep.subr.mxu0 0.0
    %2350 = vmatpush1.msra.mxu0 0.0
    %2351 = vmatprep.subr.mxu0 0.0
    %2352 = vmatpush1.msra.mxu0 0.0
    %2353 = vmatprep.subr.mxu0 0.0
    %2354 = vmatpush1.msra.mxu0 0.0
    %2355 = vmatprep.subr.mxu0 0.0
    %2356 = vmatpush1.msra.mxu0 0.0
    %2357 = vmatprep.subr.mxu0 0.0
    %2358 = vmatpush1.msra.mxu0 0.0
    %2359 = vmatprep.subr.mxu0 0.0
    %2360 = vmatpush1.msra.mxu0 0.0
    %2361 = vmatprep.subr.mxu0 0.0
    %2362 = vmatpush1.msra.mxu0 0.0
    %2363 = vmatprep.subr.mxu0 0.0
    %2364 = vmatpush1.msra.mxu0 0.0
    %2365 = vmatprep.subr.mxu0 0.0
    %2366 = vmatpush1.msra.mxu0 0.0
    %2367 = vmatprep.subr.mxu0 0.0
    %2368 = vmatpush1.msra.mxu0 0.0
    %2369 = vmatprep.subr.mxu0 0.0
    %2370 = vmatpush1.msra.mxu0 0.0
    %2371 = vmatprep.subr.mxu0 0.0
    %2372 = vmatpush1.msra.mxu0 0.0
    %2373 = vmatprep.subr.mxu0 0.0
    %2374 = vmatpush1.msra.mxu0 0.0
    %2375 = vmatprep.subr.mxu0 0.0
    %2376 = vmatpush1.msra.mxu0 0.0
    %2377 = vmatprep.subr.mxu0 0.0
    %2378 = vmatpush1.msra.mxu0 0.0
    %2379 = vmatprep.subr.mxu0 0.0
    %2380 = vmatpush1.msra.mxu0 0.0
    %2381 = vmatprep.subr.mxu0 0.0
    %2382 = vmatpush1.msra.mxu0 0.0
    %2383 = vmatprep.subr.mxu0 0.0
    %2384 = vmatpush1.msra.mxu0 0.0
    %2385 = vmatprep.subr.mxu0 0.0
    %2386 = vmatpush1.msra.mxu0 0.0
    %2387 = vmatprep.subr.mxu0 0.0
    %2388 = vmatpush1.msra.mxu0 0.0
    %2389 = vmatprep.mubr.f32.mxu0 0.0
    %2390 = vmatmul.mubr.f32.gmra.mrb[0].mxu0 %v361
    %v2391 = vpop.f32.mrb[0].mxu0
    %v2392 = vadd.f32 0.0, %v2391
    %v2393 = vpop.f32.mrb[0].mxu0
    %2394 = vdwg.mxu0
    %v2395 = vadd.f32 %v2219, %v2392
    %2396 = vmatprep.subr.mxu0 0.0
    %2397 = vmatpush1.msra.mxu0 %v2321
    %2398 = vmatprep.subr.mxu0 0.0
    %2399 = vmatpush1.msra.mxu0 %v2322
    %2400 = vmatprep.subr.mxu0 0.0
    %2401 = vmatpush1.msra.mxu0 %v2323
    %2402 = vmatprep.subr.mxu0 0.0
    %2403 = vmatpush1.msra.mxu0 %v2324
    %2404 = vmatprep.subr.mxu0 0.0
    %2405 = vmatpush1.msra.mxu0 0.0
    %2406 = vmatprep.subr.mxu0 0.0
    %2407 = vmatpush1.msra.mxu0 0.0
    %2408 = vmatprep.subr.mxu0 0.0
    %2409 = vmatpush1.msra.mxu0 0.0
    %2410 = vmatprep.subr.mxu0 0.0
    %2411 = vmatpush1.msra.mxu0 0.0
    %2412 = vmatprep.subr.mxu0 0.0
    %2413 = vmatpush1.msra.mxu0 0.0
    %2414 = vmatprep.subr.mxu0 0.0
    %2415 = vmatpush1.msra.mxu0 0.0
    %2416 = vmatprep.subr.mxu0 0.0
    %2417 = vmatpush1.msra.mxu0 0.0
    %2418 = vmatprep.subr.mxu0 0.0
    %2419 = vmatpush1.msra.mxu0 0.0
    %2420 = vmatprep.subr.mxu0 0.0
    %2421 = vmatpush1.msra.mxu0 0.0
    %2422 = vmatprep.subr.mxu0 0.0
    %2423 = vmatpush1.msra.mxu0 0.0
    %2424 = vmatprep.subr.mxu0 0.0
    %2425 = vmatpush1.msra.mxu0 0.0
    %2426 = vmatprep.subr.mxu0 0.0
    %2427 = vmatpush1.msra.mxu0 0.0
    %2428 = vmatprep.subr.mxu0 0.0
    %2429 = vmatpush1.msra.mxu0 0.0
    %2430 = vmatprep.subr.mxu0 0.0
    %2431 = vmatpush1.msra.mxu0 0.0
    %2432 = vmatprep.subr.mxu0 0.0
    %2433 = vmatpush1.msra.mxu0 0.0
    %2434 = vmatprep.subr.mxu0 0.0
    %2435 = vmatpush1.msra.mxu0 0.0
    %2436 = vmatprep.subr.mxu0 0.0
    %2437 = vmatpush1.msra.mxu0 0.0
    %2438 = vmatprep.subr.mxu0 0.0
    %2439 = vmatpush1.msra.mxu0 0.0
    %2440 = vmatprep.subr.mxu0 0.0
    %2441 = vmatpush1.msra.mxu0 0.0
    %2442 = vmatprep.subr.mxu0 0.0
    %2443 = vmatpush1.msra.mxu0 0.0
    %2444 = vmatprep.subr.mxu0 0.0
    %2445 = vmatpush1.msra.mxu0 0.0
    %2446 = vmatprep.subr.mxu0 0.0
    %2447 = vmatpush1.msra.mxu0 0.0
    %2448 = vmatprep.subr.mxu0 0.0
    %2449 = vmatpush1.msra.mxu0 0.0
    %2450 = vmatprep.subr.mxu0 0.0
    %2451 = vmatpush1.msra.mxu0 0.0
    %2452 = vmatprep.subr.mxu0 0.0
    %2453 = vmatpush1.msra.mxu0 0.0
    %2454 = vmatprep.subr.mxu0 0.0
    %2455 = vmatpush1.msra.mxu0 0.0
    %2456 = vmatprep.subr.mxu0 0.0
    %2457 = vmatpush1.msra.mxu0 0.0
    %2458 = vmatprep.subr.mxu0 0.0
    %2459 = vmatpush1.msra.mxu0 0.0
    %2460 = vmatprep.mubr.f32.mxu0 0.0
    %2461 = vmatmul.mubr.f32.gmra.mrb[0].mxu0 %v361
    %v2462 = vpop.f32.mrb[0].mxu0
    %v2463 = vadd.f32 0.0, %v2462
    %v2464 = vpop.f32.mrb[0].mxu0
    %2465 = vdwg.mxu0
    %v2467 = vrot.slane %v2463, 2
    %v2469 = vadd.f32 %v2314, %v2467
    %v2470 = vxor.u32 %v2395, 2147483648
    %v2471 = vmul.f32 %v2470, 1.442695
    %v2472 = vpow.pop %v2471
    %v2473 = vadd.f32 %v2472, 1.0
    %v2474 = vrcp.pop %v2473
    %v2475 = vmul.f32 1.0, %v2474
    %v2476 = vtanh.pop %v2395
    %v2477 = vsel %vm173, %v2476, %v2475
    %v2478 = vmul.f32 %v2477, 0.0
    %2480 = vrot.lane.b32.xlu0 %v2477, 64
    %v2481 = vpop.permute.xlu0 %2480
    %v2483 = vmul.f32 %v2477, %v2481
    %2485 = vrot.lane.b32.xlu0 %v2483, 32
    %v2486 = vpop.permute.xlu0 %2485
    %v2488 = vadd.f32 %v2478, %v2486
    %v2489 = vtanh.pop %v2488
    %2491 = vrot.lane.b32.xlu0 %v2489, 64
    %v2492 = vpop.permute.xlu0 %2491
    %v2494 = vmul.f32 %v2477, %v2492
    %v2495 = vxor.u32 %v2469, 2147483648
    %v2496 = vmul.f32 %v2495, 1.442695
    %v2497 = vpow.pop %v2496
    %v2498 = vadd.f32 %v2497, 1.0
    %v2499 = vrcp.pop %v2498
    %v2500 = vmul.f32 1.0, %v2499
    %v2501 = vtanh.pop %v2469
    %v2502 = vsel %vm173, %v2501, %v2500
    %v2503 = vmul.f32 %v2502, 0.0
    %2505 = vrot.lane.b32.xlu0 %v2502, 64
    %v2506 = vpop.permute.xlu0 %2505
    %v2508 = vmul.f32 %v2502, %v2506
    %2510 = vrot.lane.b32.xlu0 %v2508, 32
    %v2511 = vpop.permute.xlu0 %2510
    %v2513 = vadd.f32 %v2503, %v2511
    %v2514 = vtanh.pop %v2513
    %2516 = vrot.lane.b32.xlu0 %v2514, 64
    %v2517 = vpop.permute.xlu0 %2516
    %v2519 = vmul.f32 %v2502, %v2517
    %2521 = vrot.lane.b32.xlu0 %v2494, 32
    %v2522 = vpop.permute.xlu0 %2521
    %2524 = vst.msk [vmem:[#allocation3] sm:$0x3] %vm562, %v2522
    %2526 = vrot.lane.b32.xlu0 %v2519, 64
    %v2527 = vpop.permute.xlu0 %2526
    %2529 = vst.msk [vmem:[#allocation3 + $0x8] sm:$0xc0] %vm568, %v2527
    %v2530 = vsel %vm359, %v2522, 0
    %2532 = vmatprep.subr.mxu0 0.0
    %2533 = vmatpush1.msra.mxu0 %v2317
    %2534 = vmatprep.subr.mxu0 0.0
    %2535 = vmatpush1.msra.mxu0 %v2318
    %2536 = vmatprep.subr.mxu0 0.0
    %2537 = vmatpush1.msra.mxu0 %v2319
    %2538 = vmatprep.subr.mxu0 0.0
    %2539 = vmatpush1.msra.mxu0 %v2320
    %2540 = vmatprep.subr.mxu0 0.0
    %2541 = vmatpush1.msra.mxu0 0.0
    %2542 = vmatprep.subr.mxu0 0.0
    %2543 = vmatpush1.msra.mxu0 0.0
    %2544 = vmatprep.subr.mxu0 0.0
    %2545 = vmatpush1.msra.mxu0 0.0
    %2546 = vmatprep.subr.mxu0 0.0
    %2547 = vmatpush1.msra.mxu0 0.0
    %2548 = vmatprep.subr.mxu0 0.0
    %2549 = vmatpush1.msra.mxu0 0.0
    %2550 = vmatprep.subr.mxu0 0.0
    %2551 = vmatpush1.msra.mxu0 0.0
    %2552 = vmatprep.subr.mxu0 0.0
    %2553 = vmatpush1.msra.mxu0 0.0
    %2554 = vmatprep.subr.mxu0 0.0
    %2555 = vmatpush1.msra.mxu0 0.0
    %2556 = vmatprep.subr.mxu0 0.0
    %2557 = vmatpush1.msra.mxu0 0.0
    %2558 = vmatprep.subr.mxu0 0.0
    %2559 = vmatpush1.msra.mxu0 0.0
    %2560 = vmatprep.subr.mxu0 0.0
    %2561 = vmatpush1.msra.mxu0 0.0
    %2562 = vmatprep.subr.mxu0 0.0
    %2563 = vmatpush1.msra.mxu0 0.0
    %2564 = vmatprep.subr.mxu0 0.0
    %2565 = vmatpush1.msra.mxu0 0.0
    %2566 = vmatprep.subr.mxu0 0.0
    %2567 = vmatpush1.msra.mxu0 0.0
    %2568 = vmatprep.subr.mxu0 0.0
    %2569 = vmatpush1.msra.mxu0 0.0
    %2570 = vmatprep.subr.mxu0 0.0
    %2571 = vmatpush1.msra.mxu0 0.0
    %2572 = vmatprep.subr.mxu0 0.0
    %2573 = vmatpush1.msra.mxu0 0.0
    %2574 = vmatprep.subr.mxu0 0.0
    %2575 = vmatpush1.msra.mxu0 0.0
    %2576 = vmatprep.subr.mxu0 0.0
    %2577 = vmatpush1.msra.mxu0 0.0
    %2578 = vmatprep.subr.mxu0 0.0
    %2579 = vmatpush1.msra.mxu0 0.0
    %2580 = vmatprep.subr.mxu0 0.0
    %2581 = vmatpush1.msra.mxu0 0.0
    %2582 = vmatprep.subr.mxu0 0.0
    %2583 = vmatpush1.msra.mxu0 0.0
    %2584 = vmatprep.subr.mxu0 0.0
    %2585 = vmatpush1.msra.mxu0 0.0
    %2586 = vmatprep.subr.mxu0 0.0
    %2587 = vmatpush1.msra.mxu0 0.0
    %2588 = vmatprep.subr.mxu0 0.0
    %2589 = vmatpush1.msra.mxu0 0.0
    %2590 = vmatprep.subr.mxu0 0.0
    %2591 = vmatpush1.msra.mxu0 0.0
    %2592 = vmatprep.subr.mxu0 0.0
    %2593 = vmatpush1.msra.mxu0 0.0
    %2594 = vmatprep.subr.mxu0 0.0
    %2595 = vmatpush1.msra.mxu0 0.0
    %2596 = vmatprep.mubr.f32.mxu0 0.0
    %2597 = vmatmul.mubr.f32.gmra.mrb[0].mxu0 %v2530
    %v2598 = vpop.f32.mrb[0].mxu0
    %v2599 = vadd.f32 0.0, %v2598
    %v2600 = vpop.f32.mrb[0].mxu0
    %2601 = vdwg.mxu0
    %v2603 = vrot.slane %v2599, 6
    %v2605 = vadd.f32 %v2219, %v2603
    %v2606 = vrot.slane %v2519, 6
    %2607 = vrot.lane.b32.xlu0 %v2606, 32
    %v2608 = vpop.permute.xlu0 %2607
    %v2609 = vsel %vm359, %v2608, 0
    %2611 = vmatprep.subr.mxu0 0.0
    %2612 = vmatpush1.msra.mxu0 %v2321
    %2613 = vmatprep.subr.mxu0 0.0
    %2614 = vmatpush1.msra.mxu0 %v2322
    %2615 = vmatprep.subr.mxu0 0.0
    %2616 = vmatpush1.msra.mxu0 %v2323
    %2617 = vmatprep.subr.mxu0 0.0
    %2618 = vmatpush1.msra.mxu0 %v2324
    %2619 = vmatprep.subr.mxu0 0.0
    %2620 = vmatpush1.msra.mxu0 0.0
    %2621 = vmatprep.subr.mxu0 0.0
    %2622 = vmatpush1.msra.mxu0 0.0
    %2623 = vmatprep.subr.mxu0 0.0
    %2624 = vmatpush1.msra.mxu0 0.0
    %2625 = vmatprep.subr.mxu0 0.0
    %2626 = vmatpush1.msra.mxu0 0.0
    %2627 = vmatprep.subr.mxu0 0.0
    %2628 = vmatpush1.msra.mxu0 0.0
    %2629 = vmatprep.subr.mxu0 0.0
    %2630 = vmatpush1.msra.mxu0 0.0
    %2631 = vmatprep.subr.mxu0 0.0
    %2632 = vmatpush1.msra.mxu0 0.0
    %2633 = vmatprep.subr.mxu0 0.0
    %2634 = vmatpush1.msra.mxu0 0.0
    %2635 = vmatprep.subr.mxu0 0.0
    %2636 = vmatpush1.msra.mxu0 0.0
    %2637 = vmatprep.subr.mxu0 0.0
    %2638 = vmatpush1.msra.mxu0 0.0
    %2639 = vmatprep.subr.mxu0 0.0
    %2640 = vmatpush1.msra.mxu0 0.0
    %2641 = vmatprep.subr.mxu0 0.0
    %2642 = vmatpush1.msra.mxu0 0.0
    %2643 = vmatprep.subr.mxu0 0.0
    %2644 = vmatpush1.msra.mxu0 0.0
    %2645 = vmatprep.subr.mxu0 0.0
    %2646 = vmatpush1.msra.mxu0 0.0
    %2647 = vmatprep.subr.mxu0 0.0
    %2648 = vmatpush1.msra.mxu0 0.0
    %2649 = vmatprep.subr.mxu0 0.0
    %2650 = vmatpush1.msra.mxu0 0.0
    %2651 = vmatprep.subr.mxu0 0.0
    %2652 = vmatpush1.msra.mxu0 0.0
    %2653 = vmatprep.subr.mxu0 0.0
    %2654 = vmatpush1.msra.mxu0 0.0
    %2655 = vmatprep.subr.mxu0 0.0
    %2656 = vmatpush1.msra.mxu0 0.0
    %2657 = vmatprep.subr.mxu0 0.0
    %2658 = vmatpush1.msra.mxu0 0.0
    %2659 = vmatprep.subr.mxu0 0.0
    %2660 = vmatpush1.msra.mxu0 0.0
    %2661 = vmatprep.subr.mxu0 0.0
    %2662 = vmatpush1.msra.mxu0 0.0
    %2663 = vmatprep.subr.mxu0 0.0
    %2664 = vmatpush1.msra.mxu0 0.0
    %2665 = vmatprep.subr.mxu0 0.0
    %2666 = vmatpush1.msra.mxu0 0.0
    %2667 = vmatprep.subr.mxu0 0.0
    %2668 = vmatpush1.msra.mxu0 0.0
    %2669 = vmatprep.subr.mxu0 0.0
    %2670 = vmatpush1.msra.mxu0 0.0
    %2671 = vmatprep.subr.mxu0 0.0
    %2672 = vmatpush1.msra.mxu0 0.0
    %2673 = vmatprep.subr.mxu0 0.0
    %2674 = vmatpush1.msra.mxu0 0.0
    %2675 = vmatprep.mubr.f32.mxu0 0.0
    %2676 = vmatmul.mubr.f32.gmra.mrb[0].mxu0 %v2609
    %v2677 = vpop.f32.mrb[0].mxu0
    %v2678 = vadd.f32 0.0, %v2677
    %v2679 = vpop.f32.mrb[0].mxu0
    %2680 = vdwg.mxu0
    %v2682 = vrot.slane %v2678, 4
    %v2684 = vadd.f32 %v2314, %v2682
    %v2685 = vxor.u32 %v2605, 2147483648
    %v2686 = vmul.f32 %v2685, 1.442695
    %v2687 = vpow.pop %v2686
    %v2688 = vadd.f32 %v2687, 1.0
    %v2689 = vrcp.pop %v2688
    %v2690 = vmul.f32 1.0, %v2689
    %v2691 = vtanh.pop %v2605
    %v2692 = vsel %vm173, %v2691, %v2690
    %v2694 = vrot.slane %v2488, 6
    %v2696 = vmul.f32 %v2692, %v2694
    %2698 = vrot.lane.b32.xlu0 %v2692, 64
    %v2699 = vpop.permute.xlu0 %2698
    %v2701 = vmul.f32 %v2692, %v2699
    %2703 = vrot.lane.b32.xlu0 %v2701, 32
    %v2704 = vpop.permute.xlu0 %2703
    %v2706 = vadd.f32 %v2696, %v2704
    %v2707 = vtanh.pop %v2706
    %2709 = vrot.lane.b32.xlu0 %v2707, 64
    %v2710 = vpop.permute.xlu0 %2709
    %v2712 = vmul.f32 %v2692, %v2710
    %v2713 = vxor.u32 %v2684, 2147483648
    %v2714 = vmul.f32 %v2713, 1.442695
    %v2715 = vpow.pop %v2714
    %v2716 = vadd.f32 %v2715, 1.0
    %v2717 = vrcp.pop %v2716
    %v2718 = vmul.f32 1.0, %v2717
    %v2719 = vtanh.pop %v2684
    %v2720 = vsel %vm173, %v2719, %v2718
    %v2722 = vrot.slane %v2513, 2
    %v2724 = vmul.f32 %v2720, %v2722
    %2726 = vrot.lane.b32.xlu0 %v2720, 64
    %v2727 = vpop.permute.xlu0 %2726
    %v2729 = vmul.f32 %v2720, %v2727
    %2731 = vrot.lane.b32.xlu0 %v2729, 32
    %v2732 = vpop.permute.xlu0 %2731
    %v2734 = vadd.f32 %v2724, %v2732
    %v2735 = vtanh.pop %v2734
    %2737 = vrot.lane.b32.xlu0 %v2735, 64
    %v2738 = vpop.permute.xlu0 %2737
    %v2740 = vmul.f32 %v2720, %v2738
    %2742 = vrot.lane.b32.xlu0 %v2712, 32
    %v2743 = vpop.permute.xlu0 %2742
    %2745 = vst.msk [vmem:[#allocation3] sm:$0xc] %vm785, %v2743
    %2747 = vrot.lane.b32.xlu0 %v2740, 64
    %v2748 = vpop.permute.xlu0 %2747
    %2750 = vst.msk [vmem:[#allocation3 + $0x8] sm:$0x30] %vm791, %v2748
    %v2751 = vrot.slane %v2712, 2
    %2752 = vrot.lane.b32.xlu0 %v2751, 32
    %v2753 = vpop.permute.xlu0 %2752
    %v2754 = vsel %vm359, %v2753, 0
    %2756 = vmatprep.subr.mxu0 0.0
    %2757 = vmatpush1.msra.mxu0 %v2317
    %2758 = vmatprep.subr.mxu0 0.0
    %2759 = vmatpush1.msra.mxu0 %v2318
    %2760 = vmatprep.subr.mxu0 0.0
    %2761 = vmatpush1.msra.mxu0 %v2319
    %2762 = vmatprep.subr.mxu0 0.0
    %2763 = vmatpush1.msra.mxu0 %v2320
    %2764 = vmatprep.subr.mxu0 0.0
    %2765 = vmatpush1.msra.mxu0 0.0
    %2766 = vmatprep.subr.mxu0 0.0
    %2767 = vmatpush1.msra.mxu0 0.0
    %2768 = vmatprep.subr.mxu0 0.0
    %2769 = vmatpush1.msra.mxu0 0.0
    %2770 = vmatprep.subr.mxu0 0.0
    %2771 = vmatpush1.msra.mxu0 0.0
    %2772 = vmatprep.subr.mxu0 0.0
    %2773 = vmatpush1.msra.mxu0 0.0
    %2774 = vmatprep.subr.mxu0 0.0
    %2775 = vmatpush1.msra.mxu0 0.0
    %2776 = vmatprep.subr.mxu0 0.0
    %2777 = vmatpush1.msra.mxu0 0.0
    %2778 = vmatprep.subr.mxu0 0.0
    %2779 = vmatpush1.msra.mxu0 0.0
    %2780 = vmatprep.subr.mxu0 0.0
    %2781 = vmatpush1.msra.mxu0 0.0
    %2782 = vmatprep.subr.mxu0 0.0
    %2783 = vmatpush1.msra.mxu0 0.0
    %2784 = vmatprep.subr.mxu0 0.0
    %2785 = vmatpush1.msra.mxu0 0.0
    %2786 = vmatprep.subr.mxu0 0.0
    %2787 = vmatpush1.msra.mxu0 0.0
    %2788 = vmatprep.subr.mxu0 0.0
    %2789 = vmatpush1.msra.mxu0 0.0
    %2790 = vmatprep.subr.mxu0 0.0
    %2791 = vmatpush1.msra.mxu0 0.0
    %2792 = vmatprep.subr.mxu0 0.0
    %2793 = vmatpush1.msra.mxu0 0.0
    %2794 = vmatprep.subr.mxu0 0.0
    %2795 = vmatpush1.msra.mxu0 0.0
    %2796 = vmatprep.subr.mxu0 0.0
    %2797 = vmatpush1.msra.mxu0 0.0
    %2798 = vmatprep.subr.mxu0 0.0
    %2799 = vmatpush1.msra.mxu0 0.0
    %2800 = vmatprep.subr.mxu0 0.0
    %2801 = vmatpush1.msra.mxu0 0.0
    %2802 = vmatprep.subr.mxu0 0.0
    %2803 = vmatpush1.msra.mxu0 0.0
    %2804 = vmatprep.subr.mxu0 0.0
    %2805 = vmatpush1.msra.mxu0 0.0
    %2806 = vmatprep.subr.mxu0 0.0
    %2807 = vmatpush1.msra.mxu0 0.0
    %2808 = vmatprep.subr.mxu0 0.0
    %2809 = vmatpush1.msra.mxu0 0.0
    %2810 = vmatprep.subr.mxu0 0.0
    %2811 = vmatpush1.msra.mxu0 0.0
    %2812 = vmatprep.subr.mxu0 0.0
    %2813 = vmatpush1.msra.mxu0 0.0
    %2814 = vmatprep.subr.mxu0 0.0
    %2815 = vmatpush1.msra.mxu0 0.0
    %2816 = vmatprep.subr.mxu0 0.0
    %2817 = vmatpush1.msra.mxu0 0.0
    %2818 = vmatprep.subr.mxu0 0.0
    %2819 = vmatpush1.msra.mxu0 0.0
    %2820 = vmatprep.mubr.f32.mxu0 0.0
    %2821 = vmatmul.mubr.f32.gmra.mrb[0].mxu0 %v2754
    %v2822 = vpop.f32.mrb[0].mxu0
    %v2823 = vadd.f32 0.0, %v2822
    %v2824 = vpop.f32.mrb[0].mxu0
    %2825 = vdwg.mxu0
    %v2827 = vrot.slane %v2823, 4
    %v2829 = vadd.f32 %v2219, %v2827
    %v2830 = vrot.slane %v2740, 4
    %2831 = vrot.lane.b32.xlu0 %v2830, 32
    %v2832 = vpop.permute.xlu0 %2831
    %v2833 = vsel %vm359, %v2832, 0
    %2835 = vmatprep.subr.mxu0 0.0
    %2836 = vmatpush1.msra.mxu0 %v2321
    %2837 = vmatprep.subr.mxu0 0.0
    %2838 = vmatpush1.msra.mxu0 %v2322
    %2839 = vmatprep.subr.mxu0 0.0
    %2840 = vmatpush1.msra.mxu0 %v2323
    %2841 = vmatprep.subr.mxu0 0.0
    %2842 = vmatpush1.msra.mxu0 %v2324
    %2843 = vmatprep.subr.mxu0 0.0
    %2844 = vmatpush1.msra.mxu0 0.0
    %2845 = vmatprep.subr.mxu0 0.0
    %2846 = vmatpush1.msra.mxu0 0.0
    %2847 = vmatprep.subr.mxu0 0.0
    %2848 = vmatpush1.msra.mxu0 0.0
    %2849 = vmatprep.subr.mxu0 0.0
    %2850 = vmatpush1.msra.mxu0 0.0
    %2851 = vmatprep.subr.mxu0 0.0
    %2852 = vmatpush1.msra.mxu0 0.0
    %2853 = vmatprep.subr.mxu0 0.0
    %2854 = vmatpush1.msra.mxu0 0.0
    %2855 = vmatprep.subr.mxu0 0.0
    %2856 = vmatpush1.msra.mxu0 0.0
    %2857 = vmatprep.subr.mxu0 0.0
    %2858 = vmatpush1.msra.mxu0 0.0
    %2859 = vmatprep.subr.mxu0 0.0
    %2860 = vmatpush1.msra.mxu0 0.0
    %2861 = vmatprep.subr.mxu0 0.0
    %2862 = vmatpush1.msra.mxu0 0.0
    %2863 = vmatprep.subr.mxu0 0.0
    %2864 = vmatpush1.msra.mxu0 0.0
    %2865 = vmatprep.subr.mxu0 0.0
    %2866 = vmatpush1.msra.mxu0 0.0
    %2867 = vmatprep.subr.mxu0 0.0
    %2868 = vmatpush1.msra.mxu0 0.0
    %2869 = vmatprep.subr.mxu0 0.0
    %2870 = vmatpush1.msra.mxu0 0.0
    %2871 = vmatprep.subr.mxu0 0.0
    %2872 = vmatpush1.msra.mxu0 0.0
    %2873 = vmatprep.subr.mxu0 0.0
    %2874 = vmatpush1.msra.mxu0 0.0
    %2875 = vmatprep.subr.mxu0 0.0
    %2876 = vmatpush1.msra.mxu0 0.0
    %2877 = vmatprep.subr.mxu0 0.0
    %2878 = vmatpush1.msra.mxu0 0.0
    %2879 = vmatprep.subr.mxu0 0.0
    %2880 = vmatpush1.msra.mxu0 0.0
    %2881 = vmatprep.subr.mxu0 0.0
    %2882 = vmatpush1.msra.mxu0 0.0
    %2883 = vmatprep.subr.mxu0 0.0
    %2884 = vmatpush1.msra.mxu0 0.0
    %2885 = vmatprep.subr.mxu0 0.0
    %2886 = vmatpush1.msra.mxu0 0.0
    %2887 = vmatprep.subr.mxu0 0.0
    %2888 = vmatpush1.msra.mxu0 0.0
    %2889 = vmatprep.subr.mxu0 0.0
    %2890 = vmatpush1.msra.mxu0 0.0
    %2891 = vmatprep.subr.mxu0 0.0
    %2892 = vmatpush1.msra.mxu0 0.0
    %2893 = vmatprep.subr.mxu0 0.0
    %2894 = vmatpush1.msra.mxu0 0.0
    %2895 = vmatprep.subr.mxu0 0.0
    %2896 = vmatpush1.msra.mxu0 0.0
    %2897 = vmatprep.subr.mxu0 0.0
    %2898 = vmatpush1.msra.mxu0 0.0
    %2899 = vmatprep.mubr.f32.mxu0 0.0
    %2900 = vmatmul.mubr.f32.gmra.mrb[0].mxu0 %v2833
    %v2901 = vpop.f32.mrb[0].mxu0
    %v2902 = vadd.f32 0.0, %v2901
    %v2903 = vpop.f32.mrb[0].mxu0
    %2904 = vdwg.mxu0
    %v2906 = vrot.slane %v2902, 6
    %v2908 = vadd.f32 %v2314, %v2906
    %v2909 = vxor.u32 %v2829, 2147483648
    %v2910 = vmul.f32 %v2909, 1.442695
    %v2911 = vpow.pop %v2910
    %v2912 = vadd.f32 %v2911, 1.0
    %v2913 = vrcp.pop %v2912
    %v2914 = vmul.f32 1.0, %v2913
    %v2915 = vtanh.pop %v2829
    %v2916 = vsel %vm173, %v2915, %v2914
    %v2918 = vrot.slane %v2706, 6
    %v2920 = vmul.f32 %v2916, %v2918
    %2922 = vrot.lane.b32.xlu0 %v2916, 64
    %v2923 = vpop.permute.xlu0 %2922
    %v2925 = vmul.f32 %v2916, %v2923
    %2927 = vrot.lane.b32.xlu0 %v2925, 32
    %v2928 = vpop.permute.xlu0 %2927
    %v2930 = vadd.f32 %v2920, %v2928
    %v2931 = vtanh.pop %v2930
    %2933 = vrot.lane.b32.xlu0 %v2931, 64
    %v2934 = vpop.permute.xlu0 %2933
    %v2936 = vmul.f32 %v2916, %v2934
    %v2937 = vxor.u32 %v2908, 2147483648
    %v2938 = vmul.f32 %v2937, 1.442695
    %v2939 = vpow.pop %v2938
    %v2940 = vadd.f32 %v2939, 1.0
    %v2941 = vrcp.pop %v2940
    %v2942 = vmul.f32 1.0, %v2941
    %v2943 = vtanh.pop %v2908
    %v2944 = vsel %vm173, %v2943, %v2942
    %v2946 = vrot.slane %v2734, 2
    %v2948 = vmul.f32 %v2944, %v2946
    %2950 = vrot.lane.b32.xlu0 %v2944, 64
    %v2951 = vpop.permute.xlu0 %2950
    %v2953 = vmul.f32 %v2944, %v2951
    %2955 = vrot.lane.b32.xlu0 %v2953, 32
    %v2956 = vpop.permute.xlu0 %2955
    %v2958 = vadd.f32 %v2948, %v2956
    %v2959 = vtanh.pop %v2958
    %2961 = vrot.lane.b32.xlu0 %v2959, 64
    %v2962 = vpop.permute.xlu0 %2961
    %v2964 = vmul.f32 %v2944, %v2962
    %2966 = vrot.lane.b32.xlu0 %v2936, 32
    %v2967 = vpop.permute.xlu0 %2966
    %2969 = vst.msk [vmem:[#allocation3] sm:$0x30] %vm1011, %v2967
    %2971 = vrot.lane.b32.xlu0 %v2964, 64
    %v2972 = vpop.permute.xlu0 %2971
    %2974 = vst.msk [vmem:[#allocation3 + $0x8] sm:$0xc] %vm1017, %v2972
    %v2975 = vrot.slane %v2936, 4
    %2976 = vrot.lane.b32.xlu0 %v2975, 32
    %v2977 = vpop.permute.xlu0 %2976
    %v2978 = vsel %vm359, %v2977, 0
    %2980 = vmatprep.subr.mxu0 0.0
    %2981 = vmatpush1.msra.mxu0 %v2317
    %2982 = vmatprep.subr.mxu0 0.0
    %2983 = vmatpush1.msra.mxu0 %v2318
    %2984 = vmatprep.subr.mxu0 0.0
    %2985 = vmatpush1.msra.mxu0 %v2319
    %2986 = vmatprep.subr.mxu0 0.0
    %2987 = vmatpush1.msra.mxu0 %v2320
    %2988 = vmatprep.subr.mxu0 0.0
    %2989 = vmatpush1.msra.mxu0 0.0
    %2990 = vmatprep.subr.mxu0 0.0
    %2991 = vmatpush1.msra.mxu0 0.0
    %2992 = vmatprep.subr.mxu0 0.0
    %2993 = vmatpush1.msra.mxu0 0.0
    %2994 = vmatprep.subr.mxu0 0.0
    %2995 = vmatpush1.msra.mxu0 0.0
    %2996 = vmatprep.subr.mxu0 0.0
    %2997 = vmatpush1.msra.mxu0 0.0
    %2998 = vmatprep.subr.mxu0 0.0
    %2999 = vmatpush1.msra.mxu0 0.0
    %3000 = vmatprep.subr.mxu0 0.0
    %3001 = vmatpush1.msra.mxu0 0.0
    %3002 = vmatprep.subr.mxu0 0.0
    %3003 = vmatpush1.msra.mxu0 0.0
    %3004 = vmatprep.subr.mxu0 0.0
    %3005 = vmatpush1.msra.mxu0 0.0
    %3006 = vmatprep.subr.mxu0 0.0
    %3007 = vmatpush1.msra.mxu0 0.0
    %3008 = vmatprep.subr.mxu0 0.0
    %3009 = vmatpush1.msra.mxu0 0.0
    %3010 = vmatprep.subr.mxu0 0.0
    %3011 = vmatpush1.msra.mxu0 0.0
    %3012 = vmatprep.subr.mxu0 0.0
    %3013 = vmatpush1.msra.mxu0 0.0
    %3014 = vmatprep.subr.mxu0 0.0
    %3015 = vmatpush1.msra.mxu0 0.0
    %3016 = vmatprep.subr.mxu0 0.0
    %3017 = vmatpush1.msra.mxu0 0.0
    %3018 = vmatprep.subr.mxu0 0.0
    %3019 = vmatpush1.msra.mxu0 0.0
    %3020 = vmatprep.subr.mxu0 0.0
    %3021 = vmatpush1.msra.mxu0 0.0
    %3022 = vmatprep.subr.mxu0 0.0
    %3023 = vmatpush1.msra.mxu0 0.0
    %3024 = vmatprep.subr.mxu0 0.0
    %3025 = vmatpush1.msra.mxu0 0.0
    %3026 = vmatprep.subr.mxu0 0.0
    %3027 = vmatpush1.msra.mxu0 0.0
    %3028 = vmatprep.subr.mxu0 0.0
    %3029 = vmatpush1.msra.mxu0 0.0
    %3030 = vmatprep.subr.mxu0 0.0
    %3031 = vmatpush1.msra.mxu0 0.0
    %3032 = vmatprep.subr.mxu0 0.0
    %3033 = vmatpush1.msra.mxu0 0.0
    %3034 = vmatprep.subr.mxu0 0.0
    %3035 = vmatpush1.msra.mxu0 0.0
    %3036 = vmatprep.subr.mxu0 0.0
    %3037 = vmatpush1.msra.mxu0 0.0
    %3038 = vmatprep.subr.mxu0 0.0
    %3039 = vmatpush1.msra.mxu0 0.0
    %3040 = vmatprep.subr.mxu0 0.0
    %3041 = vmatpush1.msra.mxu0 0.0
    %3042 = vmatprep.subr.mxu0 0.0
    %3043 = vmatpush1.msra.mxu0 0.0
    %3044 = vmatprep.mubr.f32.mxu0 0.0
    %3045 = vmatmul.mubr.f32.gmra.mrb[0].mxu0 %v2978
    %v3046 = vpop.f32.mrb[0].mxu0
    %v3047 = vadd.f32 0.0, %v3046
    %v3048 = vpop.f32.mrb[0].mxu0
    %3049 = vdwg.mxu0
    %v3051 = vrot.slane %v3047, 2
    %v3053 = vadd.f32 %v2219, %v3051
    %v3054 = vrot.slane %v2964, 2
    %3055 = vrot.lane.b32.xlu0 %v3054, 32
    %v3056 = vpop.permute.xlu0 %3055
    %v3057 = vsel %vm359, %v3056, 0
    %3059 = vmatprep.subr.mxu0 0.0
    %3060 = vmatpush1.msra.mxu0 %v2321
    %3061 = vmatprep.subr.mxu0 0.0
    %3062 = vmatpush1.msra.mxu0 %v2322
    %3063 = vmatprep.subr.mxu0 0.0
    %3064 = vmatpush1.msra.mxu0 %v2323
    %3065 = vmatprep.subr.mxu0 0.0
    %3066 = vmatpush1.msra.mxu0 %v2324
    %3067 = vmatprep.subr.mxu0 0.0
    %3068 = vmatpush1.msra.mxu0 0.0
    %3069 = vmatprep.subr.mxu0 0.0
    %3070 = vmatpush1.msra.mxu0 0.0
    %3071 = vmatprep.subr.mxu0 0.0
    %3072 = vmatpush1.msra.mxu0 0.0
    %3073 = vmatprep.subr.mxu0 0.0
    %3074 = vmatpush1.msra.mxu0 0.0
    %3075 = vmatprep.subr.mxu0 0.0
    %3076 = vmatpush1.msra.mxu0 0.0
    %3077 = vmatprep.subr.mxu0 0.0
    %3078 = vmatpush1.msra.mxu0 0.0
    %3079 = vmatprep.subr.mxu0 0.0
    %3080 = vmatpush1.msra.mxu0 0.0
    %3081 = vmatprep.subr.mxu0 0.0
    %3082 = vmatpush1.msra.mxu0 0.0
    %3083 = vmatprep.subr.mxu0 0.0
    %3084 = vmatpush1.msra.mxu0 0.0
    %3085 = vmatprep.subr.mxu0 0.0
    %3086 = vmatpush1.msra.mxu0 0.0
    %3087 = vmatprep.subr.mxu0 0.0
    %3088 = vmatpush1.msra.mxu0 0.0
    %3089 = vmatprep.subr.mxu0 0.0
    %3090 = vmatpush1.msra.mxu0 0.0
    %3091 = vmatprep.subr.mxu0 0.0
    %3092 = vmatpush1.msra.mxu0 0.0
    %3093 = vmatprep.subr.mxu0 0.0
    %3094 = vmatpush1.msra.mxu0 0.0
    %3095 = vmatprep.subr.mxu0 0.0
    %3096 = vmatpush1.msra.mxu0 0.0
    %3097 = vmatprep.subr.mxu0 0.0
    %3098 = vmatpush1.msra.mxu0 0.0
    %3099 = vmatprep.subr.mxu0 0.0
    %3100 = vmatpush1.msra.mxu0 0.0
    %3101 = vmatprep.subr.mxu0 0.0
    %3102 = vmatpush1.msra.mxu0 0.0
    %3103 = vmatprep.subr.mxu0 0.0
    %3104 = vmatpush1.msra.mxu0 0.0
    %3105 = vmatprep.subr.mxu0 0.0
    %3106 = vmatpush1.msra.mxu0 0.0
    %3107 = vmatprep.subr.mxu0 0.0
    %3108 = vmatpush1.msra.mxu0 0.0
    %3109 = vmatprep.subr.mxu0 0.0
    %3110 = vmatpush1.msra.mxu0 0.0
    %3111 = vmatprep.subr.mxu0 0.0
    %3112 = vmatpush1.msra.mxu0 0.0
    %3113 = vmatprep.subr.mxu0 0.0
    %3114 = vmatpush1.msra.mxu0 0.0
    %3115 = vmatprep.subr.mxu0 0.0
    %3116 = vmatpush1.msra.mxu0 0.0
    %3117 = vmatprep.subr.mxu0 0.0
    %3118 = vmatpush1.msra.mxu0 0.0
    %3119 = vmatprep.subr.mxu0 0.0
    %3120 = vmatpush1.msra.mxu0 0.0
    %3121 = vmatprep.subr.mxu0 0.0
    %3122 = vmatpush1.msra.mxu0 0.0
    %3123 = vmatprep.mubr.f32.mxu0 0.0
    %3124 = vmatmul.mubr.f32.gmra.mrb[0].mxu0 %v3057
    %v3125 = vpop.f32.mrb[0].mxu0
    %v3126 = vadd.f32 0.0, %v3125
    %v3127 = vpop.f32.mrb[0].mxu0
    %3128 = vdwg.mxu0
    %v3129 = vadd.f32 %v2314, %v3126
    %v3130 = vxor.u32 %v3053, 2147483648
    %v3131 = vmul.f32 %v3130, 1.442695
    %v3132 = vpow.pop %v3131
    %v3133 = vadd.f32 %v3132, 1.0
    %v3134 = vrcp.pop %v3133
    %v3135 = vmul.f32 1.0, %v3134
    %v3136 = vtanh.pop %v3053
    %v3137 = vsel %vm173, %v3136, %v3135
    %v3139 = vrot.slane %v2930, 6
    %v3141 = vmul.f32 %v3137, %v3139
    %3143 = vrot.lane.b32.xlu0 %v3137, 64
    %v3144 = vpop.permute.xlu0 %3143
    %v3146 = vmul.f32 %v3137, %v3144
    %3148 = vrot.lane.b32.xlu0 %v3146, 32
    %v3149 = vpop.permute.xlu0 %3148
    %v3151 = vadd.f32 %v3141, %v3149
    %v3152 = vtanh.pop %v3151
    %3154 = vrot.lane.b32.xlu0 %v3152, 64
    %v3155 = vpop.permute.xlu0 %3154
    %v3157 = vmul.f32 %v3137, %v3155
    %v3158 = vxor.u32 %v3129, 2147483648
    %v3159 = vmul.f32 %v3158, 1.442695
    %v3160 = vpow.pop %v3159
    %v3161 = vadd.f32 %v3160, 1.0
    %v3162 = vrcp.pop %v3161
    %v3163 = vmul.f32 1.0, %v3162
    %v3164 = vtanh.pop %v3129
    %v3165 = vsel %vm173, %v3164, %v3163
    %v3167 = vrot.slane %v2958, 2
    %v3169 = vmul.f32 %v3165, %v3167
    %3171 = vrot.lane.b32.xlu0 %v3165, 64
    %v3172 = vpop.permute.xlu0 %3171
    %v3174 = vmul.f32 %v3165, %v3172
    %3176 = vrot.lane.b32.xlu0 %v3174, 32
    %v3177 = vpop.permute.xlu0 %3176
    %v3179 = vadd.f32 %v3169, %v3177
    %v3180 = vtanh.pop %v3179
    %3182 = vrot.lane.b32.xlu0 %v3180, 64
    %v3183 = vpop.permute.xlu0 %3182
    %v3185 = vmul.f32 %v3165, %v3183
    %3187 = vrot.lane.b32.xlu0 %v3157, 32
    %v3188 = vpop.permute.xlu0 %3187
    %3190 = vst.msk [vmem:[#allocation3] sm:$0xc0] %vm1234, %v3188
    %3192 = vrot.lane.b32.xlu0 %v3185, 64
    %v3193 = vpop.permute.xlu0 %3192
    %3195 = vst.msk [vmem:[#allocation3 + $0x8] sm:$0x3] %vm1240, %v3193
    %v3196 = vrot.slane %v3157, 6
    %3197 = vrot.lane.b32.xlu0 %v3196, 32
    %v3198 = vpop.permute.xlu0 %3197
    %v3199 = vsel %vm359, %v3198, 0
    %3201 = vmatprep.subr.mxu0 0.0
    %3202 = vmatpush1.msra.mxu0 %v2317
    %3203 = vmatprep.subr.mxu0 0.0
    %3204 = vmatpush1.msra.mxu0 %v2318
    %3205 = vmatprep.subr.mxu0 0.0
    %3206 = vmatpush1.msra.mxu0 %v2319
    %3207 = vmatprep.subr.mxu0 0.0
    %3208 = vmatpush1.msra.mxu0 %v2320
    %3209 = vmatprep.subr.mxu0 0.0
    %3210 = vmatpush1.msra.mxu0 0.0
    %3211 = vmatprep.subr.mxu0 0.0
    %3212 = vmatpush1.msra.mxu0 0.0
    %3213 = vmatprep.subr.mxu0 0.0
    %3214 = vmatpush1.msra.mxu0 0.0
    %3215 = vmatprep.subr.mxu0 0.0
    %3216 = vmatpush1.msra.mxu0 0.0
    %3217 = vmatprep.subr.mxu0 0.0
    %3218 = vmatpush1.msra.mxu0 0.0
    %3219 = vmatprep.subr.mxu0 0.0
    %3220 = vmatpush1.msra.mxu0 0.0
    %3221 = vmatprep.subr.mxu0 0.0
    %3222 = vmatpush1.msra.mxu0 0.0
    %3223 = vmatprep.subr.mxu0 0.0
    %3224 = vmatpush1.msra.mxu0 0.0
    %3225 = vmatprep.subr.mxu0 0.0
    %3226 = vmatpush1.msra.mxu0 0.0
    %3227 = vmatprep.subr.mxu0 0.0
    %3228 = vmatpush1.msra.mxu0 0.0
    %3229 = vmatprep.subr.mxu0 0.0
    %3230 = vmatpush1.msra.mxu0 0.0
    %3231 = vmatprep.subr.mxu0 0.0
    %3232 = vmatpush1.msra.mxu0 0.0
    %3233 = vmatprep.subr.mxu0 0.0
    %3234 = vmatpush1.msra.mxu0 0.0
    %3235 = vmatprep.subr.mxu0 0.0
    %3236 = vmatpush1.msra.mxu0 0.0
    %3237 = vmatprep.subr.mxu0 0.0
    %3238 = vmatpush1.msra.mxu0 0.0
    %3239 = vmatprep.subr.mxu0 0.0
    %3240 = vmatpush1.msra.mxu0 0.0
    %3241 = vmatprep.subr.mxu0 0.0
    %3242 = vmatpush1.msra.mxu0 0.0
    %3243 = vmatprep.subr.mxu0 0.0
    %3244 = vmatpush1.msra.mxu0 0.0
    %3245 = vmatprep.subr.mxu0 0.0
    %3246 = vmatpush1.msra.mxu0 0.0
    %3247 = vmatprep.subr.mxu0 0.0
    %3248 = vmatpush1.msra.mxu0 0.0
    %3249 = vmatprep.subr.mxu0 0.0
    %3250 = vmatpush1.msra.mxu0 0.0
    %3251 = vmatprep.subr.mxu0 0.0
    %3252 = vmatpush1.msra.mxu0 0.0
    %3253 = vmatprep.subr.mxu0 0.0
    %3254 = vmatpush1.msra.mxu0 0.0
    %3255 = vmatprep.subr.mxu0 0.0
    %3256 = vmatpush1.msra.mxu0 0.0
    %3257 = vmatprep.subr.mxu0 0.0
    %3258 = vmatpush1.msra.mxu0 0.0
    %3259 = vmatprep.subr.mxu0 0.0
    %3260 = vmatpush1.msra.mxu0 0.0
    %3261 = vmatprep.subr.mxu0 0.0
    %3262 = vmatpush1.msra.mxu0 0.0
    %3263 = vmatprep.subr.mxu0 0.0
    %3264 = vmatpush1.msra.mxu0 0.0
    %3265 = vmatprep.mubr.f32.mxu0 0.0
    %3266 = vmatmul.mubr.f32.gmra.mrb[0].mxu0 %v3199
    %v3267 = vpop.f32.mrb[0].mxu0
    %v3268 = vadd.f32 0.0, %v3267
    %v3269 = vpop.f32.mrb[0].mxu0
    %3270 = vdwg.mxu0
    %v3271 = vadd.f32 %v2224, %v3268
    %3272 = vrot.lane.b32.xlu0 %v3185, 32
    %v3273 = vpop.permute.xlu0 %3272
    %v3274 = vsel %vm359, %v3273, 0
    %3276 = vmatprep.subr.mxu0 0.0
    %3277 = vmatpush1.msra.mxu0 %v2321
    %3278 = vmatprep.subr.mxu0 0.0
    %3279 = vmatpush1.msra.mxu0 %v2322
    %3280 = vmatprep.subr.mxu0 0.0
    %3281 = vmatpush1.msra.mxu0 %v2323
    %3282 = vmatprep.subr.mxu0 0.0
    %3283 = vmatpush1.msra.mxu0 %v2324
    %3284 = vmatprep.subr.mxu0 0.0
    %3285 = vmatpush1.msra.mxu0 0.0
    %3286 = vmatprep.subr.mxu0 0.0
    %3287 = vmatpush1.msra.mxu0 0.0
    %3288 = vmatprep.subr.mxu0 0.0
    %3289 = vmatpush1.msra.mxu0 0.0
    %3290 = vmatprep.subr.mxu0 0.0
    %3291 = vmatpush1.msra.mxu0 0.0
    %3292 = vmatprep.subr.mxu0 0.0
    %3293 = vmatpush1.msra.mxu0 0.0
    %3294 = vmatprep.subr.mxu0 0.0
    %3295 = vmatpush1.msra.mxu0 0.0
    %3296 = vmatprep.subr.mxu0 0.0
    %3297 = vmatpush1.msra.mxu0 0.0
    %3298 = vmatprep.subr.mxu0 0.0
    %3299 = vmatpush1.msra.mxu0 0.0
    %3300 = vmatprep.subr.mxu0 0.0
    %3301 = vmatpush1.msra.mxu0 0.0
    %3302 = vmatprep.subr.mxu0 0.0
    %3303 = vmatpush1.msra.mxu0 0.0
    %3304 = vmatprep.subr.mxu0 0.0
    %3305 = vmatpush1.msra.mxu0 0.0
    %3306 = vmatprep.subr.mxu0 0.0
    %3307 = vmatpush1.msra.mxu0 0.0
    %3308 = vmatprep.subr.mxu0 0.0
    %3309 = vmatpush1.msra.mxu0 0.0
    %3310 = vmatprep.subr.mxu0 0.0
    %3311 = vmatpush1.msra.mxu0 0.0
    %3312 = vmatprep.subr.mxu0 0.0
    %3313 = vmatpush1.msra.mxu0 0.0
    %3314 = vmatprep.subr.mxu0 0.0
    %3315 = vmatpush1.msra.mxu0 0.0
    %3316 = vmatprep.subr.mxu0 0.0
    %3317 = vmatpush1.msra.mxu0 0.0
    %3318 = vmatprep.subr.mxu0 0.0
    %3319 = vmatpush1.msra.mxu0 0.0
    %3320 = vmatprep.subr.mxu0 0.0
    %3321 = vmatpush1.msra.mxu0 0.0
    %3322 = vmatprep.subr.mxu0 0.0
    %3323 = vmatpush1.msra.mxu0 0.0
    %3324 = vmatprep.subr.mxu0 0.0
    %3325 = vmatpush1.msra.mxu0 0.0
    %3326 = vmatprep.subr.mxu0 0.0
    %3327 = vmatpush1.msra.mxu0 0.0
    %3328 = vmatprep.subr.mxu0 0.0
    %3329 = vmatpush1.msra.mxu0 0.0
    %3330 = vmatprep.subr.mxu0 0.0
    %3331 = vmatpush1.msra.mxu0 0.0
    %3332 = vmatprep.subr.mxu0 0.0
    %3333 = vmatpush1.msra.mxu0 0.0
    %3334 = vmatprep.subr.mxu0 0.0
    %3335 = vmatpush1.msra.mxu0 0.0
    %3336 = vmatprep.subr.mxu0 0.0
    %3337 = vmatpush1.msra.mxu0 0.0
    %3338 = vmatprep.subr.mxu0 0.0
    %3339 = vmatpush1.msra.mxu0 0.0
    %3340 = vmatprep.mubr.f32.mxu0 0.0
    %3341 = vmatmul.mubr.f32.gmra.mrb[0].mxu0 %v3274
    %v3342 = vpop.f32.mrb[0].mxu0
    %v3343 = vadd.f32 0.0, %v3342
    %v3344 = vpop.f32.mrb[0].mxu0
    %3345 = vdwg.mxu0
    %v3347 = vrot.slane %v3343, 2
    %v3349 = vadd.f32 %v2309, %v3347
    %v3350 = vxor.u32 %v3271, 2147483648
    %v3351 = vmul.f32 %v3350, 1.442695
    %v3352 = vpow.pop %v3351
    %v3353 = vadd.f32 %v3352, 1.0
    %v3354 = vrcp.pop %v3353
    %v3355 = vmul.f32 1.0, %v3354
    %v3356 = vtanh.pop %v3271
    %v3357 = vsel %vm173, %v3356, %v3355
    %v3359 = vrot.slane %v3151, 6
    %v3361 = vmul.f32 %v3357, %v3359
    %3363 = vrot.lane.b32.xlu0 %v3357, 64
    %v3364 = vpop.permute.xlu0 %3363
    %v3366 = vmul.f32 %v3357, %v3364
    %3368 = vrot.lane.b32.xlu0 %v3366, 32
    %v3369 = vpop.permute.xlu0 %3368
    %v3371 = vadd.f32 %v3361, %v3369
    %v3372 = vtanh.pop %v3371
    %3374 = vrot.lane.b32.xlu0 %v3372, 64
    %v3375 = vpop.permute.xlu0 %3374
    %v3377 = vmul.f32 %v3357, %v3375
    %v3378 = vxor.u32 %v3349, 2147483648
    %v3379 = vmul.f32 %v3378, 1.442695
    %v3380 = vpow.pop %v3379
    %v3381 = vadd.f32 %v3380, 1.0
    %v3382 = vrcp.pop %v3381
    %v3383 = vmul.f32 1.0, %v3382
    %v3384 = vtanh.pop %v3349
    %v3385 = vsel %vm173, %v3384, %v3383
    %v3387 = vrot.slane %v3179, 2
    %v3389 = vmul.f32 %v3385, %v3387
    %3391 = vrot.lane.b32.xlu0 %v3385, 64
    %v3392 = vpop.permute.xlu0 %3391
    %v3394 = vmul.f32 %v3385, %v3392
    %3396 = vrot.lane.b32.xlu0 %v3394, 32
    %v3397 = vpop.permute.xlu0 %3396
    %v3399 = vadd.f32 %v3389, %v3397
    %v3400 = vtanh.pop %v3399
    %3402 = vrot.lane.b32.xlu0 %v3400, 64
    %v3403 = vpop.permute.xlu0 %3402
    %v3405 = vmul.f32 %v3385, %v3403
    %3407 = vrot.lane.b32.xlu0 %v3377, 32
    %v3408 = vpop.permute.xlu0 %3407
    %3410 = vst.msk [vmem:[#allocation3 + $0x8] sm:$0x3] %vm562, %v3408
    %3412 = vrot.lane.b32.xlu0 %v3405, 64
    %v3413 = vpop.permute.xlu0 %3412
    %3415 = vst.msk [vmem:[#allocation3] sm:$0xc0] %vm568, %v3413
    %v3416 = vsel %vm359, %v3408, 0
    %3418 = vmatprep.subr.mxu0 0.0
    %3419 = vmatpush1.msra.mxu0 %v2317
    %3420 = vmatprep.subr.mxu0 0.0
    %3421 = vmatpush1.msra.mxu0 %v2318
    %3422 = vmatprep.subr.mxu0 0.0
    %3423 = vmatpush1.msra.mxu0 %v2319
    %3424 = vmatprep.subr.mxu0 0.0
    %3425 = vmatpush1.msra.mxu0 %v2320
    %3426 = vmatprep.subr.mxu0 0.0
    %3427 = vmatpush1.msra.mxu0 0.0
    %3428 = vmatprep.subr.mxu0 0.0
    %3429 = vmatpush1.msra.mxu0 0.0
    %3430 = vmatprep.subr.mxu0 0.0
    %3431 = vmatpush1.msra.mxu0 0.0
    %3432 = vmatprep.subr.mxu0 0.0
    %3433 = vmatpush1.msra.mxu0 0.0
    %3434 = vmatprep.subr.mxu0 0.0
    %3435 = vmatpush1.msra.mxu0 0.0
    %3436 = vmatprep.subr.mxu0 0.0
    %3437 = vmatpush1.msra.mxu0 0.0
    %3438 = vmatprep.subr.mxu0 0.0
    %3439 = vmatpush1.msra.mxu0 0.0
    %3440 = vmatprep.subr.mxu0 0.0
    %3441 = vmatpush1.msra.mxu0 0.0
    %3442 = vmatprep.subr.mxu0 0.0
    %3443 = vmatpush1.msra.mxu0 0.0
    %3444 = vmatprep.subr.mxu0 0.0
    %3445 = vmatpush1.msra.mxu0 0.0
    %3446 = vmatprep.subr.mxu0 0.0
    %3447 = vmatpush1.msra.mxu0 0.0
    %3448 = vmatprep.subr.mxu0 0.0
    %3449 = vmatpush1.msra.mxu0 0.0
    %3450 = vmatprep.subr.mxu0 0.0
    %3451 = vmatpush1.msra.mxu0 0.0
    %3452 = vmatprep.subr.mxu0 0.0
    %3453 = vmatpush1.msra.mxu0 0.0
    %3454 = vmatprep.subr.mxu0 0.0
    %3455 = vmatpush1.msra.mxu0 0.0
    %3456 = vmatprep.subr.mxu0 0.0
    %3457 = vmatpush1.msra.mxu0 0.0
    %3458 = vmatprep.subr.mxu0 0.0
    %3459 = vmatpush1.msra.mxu0 0.0
    %3460 = vmatprep.subr.mxu0 0.0
    %3461 = vmatpush1.msra.mxu0 0.0
    %3462 = vmatprep.subr.mxu0 0.0
    %3463 = vmatpush1.msra.mxu0 0.0
    %3464 = vmatprep.subr.mxu0 0.0
    %3465 = vmatpush1.msra.mxu0 0.0
    %3466 = vmatprep.subr.mxu0 0.0
    %3467 = vmatpush1.msra.mxu0 0.0
    %3468 = vmatprep.subr.mxu0 0.0
    %3469 = vmatpush1.msra.mxu0 0.0
    %3470 = vmatprep.subr.mxu0 0.0
    %3471 = vmatpush1.msra.mxu0 0.0
    %3472 = vmatprep.subr.mxu0 0.0
    %3473 = vmatpush1.msra.mxu0 0.0
    %3474 = vmatprep.subr.mxu0 0.0
    %3475 = vmatpush1.msra.mxu0 0.0
    %3476 = vmatprep.subr.mxu0 0.0
    %3477 = vmatpush1.msra.mxu0 0.0
    %3478 = vmatprep.subr.mxu0 0.0
    %3479 = vmatpush1.msra.mxu0 0.0
    %3480 = vmatprep.subr.mxu0 0.0
    %3481 = vmatpush1.msra.mxu0 0.0
    %3482 = vmatprep.mubr.f32.mxu0 0.0
    %3483 = vmatmul.mubr.f32.gmra.mrb[0].mxu0 %v3416
    %v3484 = vpop.f32.mrb[0].mxu0
    %v3485 = vadd.f32 0.0, %v3484
    %v3486 = vpop.f32.mrb[0].mxu0
    %3487 = vdwg.mxu0
    %v3489 = vrot.slane %v3485, 6
    %v3491 = vadd.f32 %v2224, %v3489
    %v3492 = vrot.slane %v3405, 6
    %3493 = vrot.lane.b32.xlu0 %v3492, 32
    %v3494 = vpop.permute.xlu0 %3493
    %v3495 = vsel %vm359, %v3494, 0
    %3497 = vmatprep.subr.mxu0 0.0
    %3498 = vmatpush1.msra.mxu0 %v2321
    %3499 = vmatprep.subr.mxu0 0.0
    %3500 = vmatpush1.msra.mxu0 %v2322
    %3501 = vmatprep.subr.mxu0 0.0
    %3502 = vmatpush1.msra.mxu0 %v2323
    %3503 = vmatprep.subr.mxu0 0.0
    %3504 = vmatpush1.msra.mxu0 %v2324
    %3505 = vmatprep.subr.mxu0 0.0
    %3506 = vmatpush1.msra.mxu0 0.0
    %3507 = vmatprep.subr.mxu0 0.0
    %3508 = vmatpush1.msra.mxu0 0.0
    %3509 = vmatprep.subr.mxu0 0.0
    %3510 = vmatpush1.msra.mxu0 0.0
    %3511 = vmatprep.subr.mxu0 0.0
    %3512 = vmatpush1.msra.mxu0 0.0
    %3513 = vmatprep.subr.mxu0 0.0
    %3514 = vmatpush1.msra.mxu0 0.0
    %3515 = vmatprep.subr.mxu0 0.0
    %3516 = vmatpush1.msra.mxu0 0.0
    %3517 = vmatprep.subr.mxu0 0.0
    %3518 = vmatpush1.msra.mxu0 0.0
    %3519 = vmatprep.subr.mxu0 0.0
    %3520 = vmatpush1.msra.mxu0 0.0
    %3521 = vmatprep.subr.mxu0 0.0
    %3522 = vmatpush1.msra.mxu0 0.0
    %3523 = vmatprep.subr.mxu0 0.0
    %3524 = vmatpush1.msra.mxu0 0.0
    %3525 = vmatprep.subr.mxu0 0.0
    %3526 = vmatpush1.msra.mxu0 0.0
    %3527 = vmatprep.subr.mxu0 0.0
    %3528 = vmatpush1.msra.mxu0 0.0
    %3529 = vmatprep.subr.mxu0 0.0
    %3530 = vmatpush1.msra.mxu0 0.0
    %3531 = vmatprep.subr.mxu0 0.0
    %3532 = vmatpush1.msra.mxu0 0.0
    %3533 = vmatprep.subr.mxu0 0.0
    %3534 = vmatpush1.msra.mxu0 0.0
    %3535 = vmatprep.subr.mxu0 0.0
    %3536 = vmatpush1.msra.mxu0 0.0
    %3537 = vmatprep.subr.mxu0 0.0
    %3538 = vmatpush1.msra.mxu0 0.0
    %3539 = vmatprep.subr.mxu0 0.0
    %3540 = vmatpush1.msra.mxu0 0.0
    %3541 = vmatprep.subr.mxu0 0.0
    %3542 = vmatpush1.msra.mxu0 0.0
    %3543 = vmatprep.subr.mxu0 0.0
    %3544 = vmatpush1.msra.mxu0 0.0
    %3545 = vmatprep.subr.mxu0 0.0
    %3546 = vmatpush1.msra.mxu0 0.0
    %3547 = vmatprep.subr.mxu0 0.0
    %3548 = vmatpush1.msra.mxu0 0.0
    %3549 = vmatprep.subr.mxu0 0.0
    %3550 = vmatpush1.msra.mxu0 0.0
    %3551 = vmatprep.subr.mxu0 0.0
    %3552 = vmatpush1.msra.mxu0 0.0
    %3553 = vmatprep.subr.mxu0 0.0
    %3554 = vmatpush1.msra.mxu0 0.0
    %3555 = vmatprep.subr.mxu0 0.0
    %3556 = vmatpush1.msra.mxu0 0.0
    %3557 = vmatprep.subr.mxu0 0.0
    %3558 = vmatpush1.msra.mxu0 0.0
    %3559 = vmatprep.subr.mxu0 0.0
    %3560 = vmatpush1.msra.mxu0 0.0
    %3561 = vmatprep.mubr.f32.mxu0 0.0
    %3562 = vmatmul.mubr.f32.gmra.mrb[0].mxu0 %v3495
    %v3563 = vpop.f32.mrb[0].mxu0
    %v3564 = vadd.f32 0.0, %v3563
    %v3565 = vpop.f32.mrb[0].mxu0
    %3566 = vdwg.mxu0
    %v3568 = vrot.slane %v3564, 4
    %v3570 = vadd.f32 %v2309, %v3568
    %v3571 = vxor.u32 %v3491, 2147483648
    %v3572 = vmul.f32 %v3571, 1.442695
    %v3573 = vpow.pop %v3572
    %v3574 = vadd.f32 %v3573, 1.0
    %v3575 = vrcp.pop %v3574
    %v3576 = vmul.f32 1.0, %v3575
    %v3577 = vtanh.pop %v3491
    %v3578 = vsel %vm173, %v3577, %v3576
    %v3580 = vrot.slane %v3371, 6
    %v3582 = vmul.f32 %v3578, %v3580
    %3584 = vrot.lane.b32.xlu0 %v3578, 64
    %v3585 = vpop.permute.xlu0 %3584
    %v3587 = vmul.f32 %v3578, %v3585
    %3589 = vrot.lane.b32.xlu0 %v3587, 32
    %v3590 = vpop.permute.xlu0 %3589
    %v3592 = vadd.f32 %v3582, %v3590
    %v3593 = vtanh.pop %v3592
    %3595 = vrot.lane.b32.xlu0 %v3593, 64
    %v3596 = vpop.permute.xlu0 %3595
    %v3598 = vmul.f32 %v3578, %v3596
    %v3599 = vxor.u32 %v3570, 2147483648
    %v3600 = vmul.f32 %v3599, 1.442695
    %v3601 = vpow.pop %v3600
    %v3602 = vadd.f32 %v3601, 1.0
    %v3603 = vrcp.pop %v3602
    %v3604 = vmul.f32 1.0, %v3603
    %v3605 = vtanh.pop %v3570
    %v3606 = vsel %vm173, %v3605, %v3604
    %v3608 = vrot.slane %v3399, 2
    %v3610 = vmul.f32 %v3606, %v3608
    %3612 = vrot.lane.b32.xlu0 %v3606, 64
    %v3613 = vpop.permute.xlu0 %3612
    %v3615 = vmul.f32 %v3606, %v3613
    %3617 = vrot.lane.b32.xlu0 %v3615, 32
    %v3618 = vpop.permute.xlu0 %3617
    %v3620 = vadd.f32 %v3610, %v3618
    %v3621 = vtanh.pop %v3620
    %3623 = vrot.lane.b32.xlu0 %v3621, 64
    %v3624 = vpop.permute.xlu0 %3623
    %v3626 = vmul.f32 %v3606, %v3624
    %3628 = vrot.lane.b32.xlu0 %v3598, 32
    %v3629 = vpop.permute.xlu0 %3628
    %3631 = vst.msk [vmem:[#allocation3 + $0x8] sm:$0xc] %vm785, %v3629
    %3633 = vrot.lane.b32.xlu0 %v3626, 64
    %v3634 = vpop.permute.xlu0 %3633
    %3636 = vst.msk [vmem:[#allocation3] sm:$0x30] %vm791, %v3634
    %v3637 = vrot.slane %v3598, 2
    %3638 = vrot.lane.b32.xlu0 %v3637, 32
    %v3639 = vpop.permute.xlu0 %3638
    %v3640 = vsel %vm359, %v3639, 0
    %3642 = vmatprep.subr.mxu0 0.0
    %3643 = vmatpush1.msra.mxu0 %v2317
    %3644 = vmatprep.subr.mxu0 0.0
    %3645 = vmatpush1.msra.mxu0 %v2318
    %3646 = vmatprep.subr.mxu0 0.0
    %3647 = vmatpush1.msra.mxu0 %v2319
    %3648 = vmatprep.subr.mxu0 0.0
    %3649 = vmatpush1.msra.mxu0 %v2320
    %3650 = vmatprep.subr.mxu0 0.0
    %3651 = vmatpush1.msra.mxu0 0.0
    %3652 = vmatprep.subr.mxu0 0.0
    %3653 = vmatpush1.msra.mxu0 0.0
    %3654 = vmatprep.subr.mxu0 0.0
    %3655 = vmatpush1.msra.mxu0 0.0
    %3656 = vmatprep.subr.mxu0 0.0
    %3657 = vmatpush1.msra.mxu0 0.0
    %3658 = vmatprep.subr.mxu0 0.0
    %3659 = vmatpush1.msra.mxu0 0.0
    %3660 = vmatprep.subr.mxu0 0.0
    %3661 = vmatpush1.msra.mxu0 0.0
    %3662 = vmatprep.subr.mxu0 0.0
    %3663 = vmatpush1.msra.mxu0 0.0
    %3664 = vmatprep.subr.mxu0 0.0
    %3665 = vmatpush1.msra.mxu0 0.0
    %3666 = vmatprep.subr.mxu0 0.0
    %3667 = vmatpush1.msra.mxu0 0.0
    %3668 = vmatprep.subr.mxu0 0.0
    %3669 = vmatpush1.msra.mxu0 0.0
    %3670 = vmatprep.subr.mxu0 0.0
    %3671 = vmatpush1.msra.mxu0 0.0
    %3672 = vmatprep.subr.mxu0 0.0
    %3673 = vmatpush1.msra.mxu0 0.0
    %3674 = vmatprep.subr.mxu0 0.0
    %3675 = vmatpush1.msra.mxu0 0.0
    %3676 = vmatprep.subr.mxu0 0.0
    %3677 = vmatpush1.msra.mxu0 0.0
    %3678 = vmatprep.subr.mxu0 0.0
    %3679 = vmatpush1.msra.mxu0 0.0
    %3680 = vmatprep.subr.mxu0 0.0
    %3681 = vmatpush1.msra.mxu0 0.0
    %3682 = vmatprep.subr.mxu0 0.0
    %3683 = vmatpush1.msra.mxu0 0.0
    %3684 = vmatprep.subr.mxu0 0.0
    %3685 = vmatpush1.msra.mxu0 0.0
    %3686 = vmatprep.subr.mxu0 0.0
    %3687 = vmatpush1.msra.mxu0 0.0
    %3688 = vmatprep.subr.mxu0 0.0
    %3689 = vmatpush1.msra.mxu0 0.0
    %3690 = vmatprep.subr.mxu0 0.0
    %3691 = vmatpush1.msra.mxu0 0.0
    %3692 = vmatprep.subr.mxu0 0.0
    %3693 = vmatpush1.msra.mxu0 0.0
    %3694 = vmatprep.subr.mxu0 0.0
    %3695 = vmatpush1.msra.mxu0 0.0
    %3696 = vmatprep.subr.mxu0 0.0
    %3697 = vmatpush1.msra.mxu0 0.0
    %3698 = vmatprep.subr.mxu0 0.0
    %3699 = vmatpush1.msra.mxu0 0.0
    %3700 = vmatprep.subr.mxu0 0.0
    %3701 = vmatpush1.msra.mxu0 0.0
    %3702 = vmatprep.subr.mxu0 0.0
    %3703 = vmatpush1.msra.mxu0 0.0
    %3704 = vmatprep.subr.mxu0 0.0
    %3705 = vmatpush1.msra.mxu0 0.0
    %3706 = vmatprep.mubr.f32.mxu0 0.0
    %3707 = vmatmul.mubr.f32.gmra.mrb[0].mxu0 %v3640
    %v3708 = vpop.f32.mrb[0].mxu0
    %v3709 = vadd.f32 0.0, %v3708
    %v3710 = vpop.f32.mrb[0].mxu0
    %3711 = vdwg.mxu0
    %v3713 = vrot.slane %v3709, 4
    %v3715 = vadd.f32 %v2224, %v3713
    %v3716 = vrot.slane %v3626, 4
    %3717 = vrot.lane.b32.xlu0 %v3716, 32
    %v3718 = vpop.permute.xlu0 %3717
    %v3719 = vsel %vm359, %v3718, 0
    %3721 = vmatprep.subr.mxu0 0.0
    %3722 = vmatpush1.msra.mxu0 %v2321
    %3723 = vmatprep.subr.mxu0 0.0
    %3724 = vmatpush1.msra.mxu0 %v2322
    %3725 = vmatprep.subr.mxu0 0.0
    %3726 = vmatpush1.msra.mxu0 %v2323
    %3727 = vmatprep.subr.mxu0 0.0
    %3728 = vmatpush1.msra.mxu0 %v2324
    %3729 = vmatprep.subr.mxu0 0.0
    %3730 = vmatpush1.msra.mxu0 0.0
    %3731 = vmatprep.subr.mxu0 0.0
    %3732 = vmatpush1.msra.mxu0 0.0
    %3733 = vmatprep.subr.mxu0 0.0
    %3734 = vmatpush1.msra.mxu0 0.0
    %3735 = vmatprep.subr.mxu0 0.0
    %3736 = vmatpush1.msra.mxu0 0.0
    %3737 = vmatprep.subr.mxu0 0.0
    %3738 = vmatpush1.msra.mxu0 0.0
    %3739 = vmatprep.subr.mxu0 0.0
    %3740 = vmatpush1.msra.mxu0 0.0
    %3741 = vmatprep.subr.mxu0 0.0
    %3742 = vmatpush1.msra.mxu0 0.0
    %3743 = vmatprep.subr.mxu0 0.0
    %3744 = vmatpush1.msra.mxu0 0.0
    %3745 = vmatprep.subr.mxu0 0.0
    %3746 = vmatpush1.msra.mxu0 0.0
    %3747 = vmatprep.subr.mxu0 0.0
    %3748 = vmatpush1.msra.mxu0 0.0
    %3749 = vmatprep.subr.mxu0 0.0
    %3750 = vmatpush1.msra.mxu0 0.0
    %3751 = vmatprep.subr.mxu0 0.0
    %3752 = vmatpush1.msra.mxu0 0.0
    %3753 = vmatprep.subr.mxu0 0.0
    %3754 = vmatpush1.msra.mxu0 0.0
    %3755 = vmatprep.subr.mxu0 0.0
    %3756 = vmatpush1.msra.mxu0 0.0
    %3757 = vmatprep.subr.mxu0 0.0
    %3758 = vmatpush1.msra.mxu0 0.0
    %3759 = vmatprep.subr.mxu0 0.0
    %3760 = vmatpush1.msra.mxu0 0.0
    %3761 = vmatprep.subr.mxu0 0.0
    %3762 = vmatpush1.msra.mxu0 0.0
    %3763 = vmatprep.subr.mxu0 0.0
    %3764 = vmatpush1.msra.mxu0 0.0
    %3765 = vmatprep.subr.mxu0 0.0
    %3766 = vmatpush1.msra.mxu0 0.0
    %3767 = vmatprep.subr.mxu0 0.0
    %3768 = vmatpush1.msra.mxu0 0.0
    %3769 = vmatprep.subr.mxu0 0.0
    %3770 = vmatpush1.msra.mxu0 0.0
    %3771 = vmatprep.subr.mxu0 0.0
    %3772 = vmatpush1.msra.mxu0 0.0
    %3773 = vmatprep.subr.mxu0 0.0
    %3774 = vmatpush1.msra.mxu0 0.0
    %3775 = vmatprep.subr.mxu0 0.0
    %3776 = vmatpush1.msra.mxu0 0.0
    %3777 = vmatprep.subr.mxu0 0.0
    %3778 = vmatpush1.msra.mxu0 0.0
    %3779 = vmatprep.subr.mxu0 0.0
    %3780 = vmatpush1.msra.mxu0 0.0
    %3781 = vmatprep.subr.mxu0 0.0
    %3782 = vmatpush1.msra.mxu0 0.0
    %3783 = vmatprep.subr.mxu0 0.0
    %3784 = vmatpush1.msra.mxu0 0.0
    %3785 = vmatprep.mubr.f32.mxu0 0.0
    %3786 = vmatmul.mubr.f32.gmra.mrb[0].mxu0 %v3719
    %v3787 = vpop.f32.mrb[0].mxu0
    %v3788 = vadd.f32 0.0, %v3787
    %v3789 = vpop.f32.mrb[0].mxu0
    %3790 = vdwg.mxu0
    %v3792 = vrot.slane %v3788, 6
    %v3794 = vadd.f32 %v2309, %v3792
    %v3795 = vxor.u32 %v3715, 2147483648
    %v3796 = vmul.f32 %v3795, 1.442695
    %v3797 = vpow.pop %v3796
    %v3798 = vadd.f32 %v3797, 1.0
    %v3799 = vrcp.pop %v3798
    %v3800 = vmul.f32 1.0, %v3799
    %v3801 = vtanh.pop %v3715
    %v3802 = vsel %vm173, %v3801, %v3800
    %v3804 = vrot.slane %v3592, 6
    %v3806 = vmul.f32 %v3802, %v3804
    %3808 = vrot.lane.b32.xlu0 %v3802, 64
    %v3809 = vpop.permute.xlu0 %3808
    %v3811 = vmul.f32 %v3802, %v3809
    %3813 = vrot.lane.b32.xlu0 %v3811, 32
    %v3814 = vpop.permute.xlu0 %3813
    %v3816 = vadd.f32 %v3806, %v3814
    %v3817 = vtanh.pop %v3816
    %3819 = vrot.lane.b32.xlu0 %v3817, 64
    %v3820 = vpop.permute.xlu0 %3819
    %v3822 = vmul.f32 %v3802, %v3820
    %v3823 = vxor.u32 %v3794, 2147483648
    %v3824 = vmul.f32 %v3823, 1.442695
    %v3825 = vpow.pop %v3824
    %v3826 = vadd.f32 %v3825, 1.0
    %v3827 = vrcp.pop %v3826
    %v3828 = vmul.f32 1.0, %v3827
    %v3829 = vtanh.pop %v3794
    %v3830 = vsel %vm173, %v3829, %v3828
    %v3832 = vrot.slane %v3620, 2
    %v3834 = vmul.f32 %v3830, %v3832
    %3836 = vrot.lane.b32.xlu0 %v3830, 64
    %v3837 = vpop.permute.xlu0 %3836
    %v3839 = vmul.f32 %v3830, %v3837
    %3841 = vrot.lane.b32.xlu0 %v3839, 32
    %v3842 = vpop.permute.xlu0 %3841
    %v3844 = vadd.f32 %v3834, %v3842
    %v3845 = vtanh.pop %v3844
    %3847 = vrot.lane.b32.xlu0 %v3845, 64
    %v3848 = vpop.permute.xlu0 %3847
    %v3850 = vmul.f32 %v3830, %v3848
    %3852 = vrot.lane.b32.xlu0 %v3822, 32
    %v3853 = vpop.permute.xlu0 %3852
    %3855 = vst.msk [vmem:[#allocation3 + $0x8] sm:$0x30] %vm1011, %v3853
    %3857 = vrot.lane.b32.xlu0 %v3850, 64
    %v3858 = vpop.permute.xlu0 %3857
    %3860 = vst.msk [vmem:[#allocation3] sm:$0xc] %vm1017, %v3858
    %v3861 = vrot.slane %v3822, 4
    %3862 = vrot.lane.b32.xlu0 %v3861, 32
    %v3863 = vpop.permute.xlu0 %3862
    %v3864 = vsel %vm359, %v3863, 0
    %3866 = vmatprep.subr.mxu0 0.0
    %3867 = vmatpush1.msra.mxu0 %v2317
    %3868 = vmatprep.subr.mxu0 0.0
    %3869 = vmatpush1.msra.mxu0 %v2318
    %3870 = vmatprep.subr.mxu0 0.0
    %3871 = vmatpush1.msra.mxu0 %v2319
    %3872 = vmatprep.subr.mxu0 0.0
    %3873 = vmatpush1.msra.mxu0 %v2320
    %3874 = vmatprep.subr.mxu0 0.0
    %3875 = vmatpush1.msra.mxu0 0.0
    %3876 = vmatprep.subr.mxu0 0.0
    %3877 = vmatpush1.msra.mxu0 0.0
    %3878 = vmatprep.subr.mxu0 0.0
    %3879 = vmatpush1.msra.mxu0 0.0
    %3880 = vmatprep.subr.mxu0 0.0
    %3881 = vmatpush1.msra.mxu0 0.0
    %3882 = vmatprep.subr.mxu0 0.0
    %3883 = vmatpush1.msra.mxu0 0.0
    %3884 = vmatprep.subr.mxu0 0.0
    %3885 = vmatpush1.msra.mxu0 0.0
    %3886 = vmatprep.subr.mxu0 0.0
    %3887 = vmatpush1.msra.mxu0 0.0
    %3888 = vmatprep.subr.mxu0 0.0
    %3889 = vmatpush1.msra.mxu0 0.0
    %3890 = vmatprep.subr.mxu0 0.0
    %3891 = vmatpush1.msra.mxu0 0.0
    %3892 = vmatprep.subr.mxu0 0.0
    %3893 = vmatpush1.msra.mxu0 0.0
    %3894 = vmatprep.subr.mxu0 0.0
    %3895 = vmatpush1.msra.mxu0 0.0
    %3896 = vmatprep.subr.mxu0 0.0
    %3897 = vmatpush1.msra.mxu0 0.0
    %3898 = vmatprep.subr.mxu0 0.0
    %3899 = vmatpush1.msra.mxu0 0.0
    %3900 = vmatprep.subr.mxu0 0.0
    %3901 = vmatpush1.msra.mxu0 0.0
    %3902 = vmatprep.subr.mxu0 0.0
    %3903 = vmatpush1.msra.mxu0 0.0
    %3904 = vmatprep.subr.mxu0 0.0
    %3905 = vmatpush1.msra.mxu0 0.0
    %3906 = vmatprep.subr.mxu0 0.0
    %3907 = vmatpush1.msra.mxu0 0.0
    %3908 = vmatprep.subr.mxu0 0.0
    %3909 = vmatpush1.msra.mxu0 0.0
    %3910 = vmatprep.subr.mxu0 0.0
    %3911 = vmatpush1.msra.mxu0 0.0
    %3912 = vmatprep.subr.mxu0 0.0
    %3913 = vmatpush1.msra.mxu0 0.0
    %3914 = vmatprep.subr.mxu0 0.0
    %3915 = vmatpush1.msra.mxu0 0.0
    %3916 = vmatprep.subr.mxu0 0.0
    %3917 = vmatpush1.msra.mxu0 0.0
    %3918 = vmatprep.subr.mxu0 0.0
    %3919 = vmatpush1.msra.mxu0 0.0
    %3920 = vmatprep.subr.mxu0 0.0
    %3921 = vmatpush1.msra.mxu0 0.0
    %3922 = vmatprep.subr.mxu0 0.0
    %3923 = vmatpush1.msra.mxu0 0.0
    %3924 = vmatprep.subr.mxu0 0.0
    %3925 = vmatpush1.msra.mxu0 0.0
    %3926 = vmatprep.subr.mxu0 0.0
    %3927 = vmatpush1.msra.mxu0 0.0
    %3928 = vmatprep.subr.mxu0 0.0
    %3929 = vmatpush1.msra.mxu0 0.0
    %3930 = vmatprep.mubr.f32.mxu0 0.0
    %3931 = vmatmul.mubr.f32.gmra.mrb[0].mxu0 %v3864
    %v3932 = vpop.f32.mrb[0].mxu0
    %v3933 = vadd.f32 0.0, %v3932
    %v3934 = vpop.f32.mrb[0].mxu0
    %3935 = vdwg.mxu0
    %v3937 = vrot.slane %v3933, 2
    %v3939 = vadd.f32 %v2224, %v3937
    %v3940 = vrot.slane %v3850, 2
    %3941 = vrot.lane.b32.xlu0 %v3940, 32
    %v3942 = vpop.permute.xlu0 %3941
    %v3943 = vsel %vm359, %v3942, 0
    %3945 = vmatprep.subr.mxu0 0.0
    %3946 = vmatpush1.msra.mxu0 %v2321
    %3947 = vmatprep.subr.mxu0 0.0
    %3948 = vmatpush1.msra.mxu0 %v2322
    %3949 = vmatprep.subr.mxu0 0.0
    %3950 = vmatpush1.msra.mxu0 %v2323
    %3951 = vmatprep.subr.mxu0 0.0
    %3952 = vmatpush1.msra.mxu0 %v2324
    %3953 = vmatprep.subr.mxu0 0.0
    %3954 = vmatpush1.msra.mxu0 0.0
    %3955 = vmatprep.subr.mxu0 0.0
    %3956 = vmatpush1.msra.mxu0 0.0
    %3957 = vmatprep.subr.mxu0 0.0
    %3958 = vmatpush1.msra.mxu0 0.0
    %3959 = vmatprep.subr.mxu0 0.0
    %3960 = vmatpush1.msra.mxu0 0.0
    %3961 = vmatprep.subr.mxu0 0.0
    %3962 = vmatpush1.msra.mxu0 0.0
    %3963 = vmatprep.subr.mxu0 0.0
    %3964 = vmatpush1.msra.mxu0 0.0
    %3965 = vmatprep.subr.mxu0 0.0
    %3966 = vmatpush1.msra.mxu0 0.0
    %3967 = vmatprep.subr.mxu0 0.0
    %3968 = vmatpush1.msra.mxu0 0.0
    %3969 = vmatprep.subr.mxu0 0.0
    %3970 = vmatpush1.msra.mxu0 0.0
    %3971 = vmatprep.subr.mxu0 0.0
    %3972 = vmatpush1.msra.mxu0 0.0
    %3973 = vmatprep.subr.mxu0 0.0
    %3974 = vmatpush1.msra.mxu0 0.0
    %3975 = vmatprep.subr.mxu0 0.0
    %3976 = vmatpush1.msra.mxu0 0.0
    %3977 = vmatprep.subr.mxu0 0.0
    %3978 = vmatpush1.msra.mxu0 0.0
    %3979 = vmatprep.subr.mxu0 0.0
    %3980 = vmatpush1.msra.mxu0 0.0
    %3981 = vmatprep.subr.mxu0 0.0
    %3982 = vmatpush1.msra.mxu0 0.0
    %3983 = vmatprep.subr.mxu0 0.0
    %3984 = vmatpush1.msra.mxu0 0.0
    %3985 = vmatprep.subr.mxu0 0.0
    %3986 = vmatpush1.msra.mxu0 0.0
    %3987 = vmatprep.subr.mxu0 0.0
    %3988 = vmatpush1.msra.mxu0 0.0
    %3989 = vmatprep.subr.mxu0 0.0
    %3990 = vmatpush1.msra.mxu0 0.0
    %3991 = vmatprep.subr.mxu0 0.0
    %3992 = vmatpush1.msra.mxu0 0.0
    %3993 = vmatprep.subr.mxu0 0.0
    %3994 = vmatpush1.msra.mxu0 0.0
    %3995 = vmatprep.subr.mxu0 0.0
    %3996 = vmatpush1.msra.mxu0 0.0
    %3997 = vmatprep.subr.mxu0 0.0
    %3998 = vmatpush1.msra.mxu0 0.0
    %3999 = vmatprep.subr.mxu0 0.0
    %4000 = vmatpush1.msra.mxu0 0.0
    %4001 = vmatprep.subr.mxu0 0.0
    %4002 = vmatpush1.msra.mxu0 0.0
    %4003 = vmatprep.subr.mxu0 0.0
    %4004 = vmatpush1.msra.mxu0 0.0
    %4005 = vmatprep.subr.mxu0 0.0
    %4006 = vmatpush1.msra.mxu0 0.0
    %4007 = vmatprep.subr.mxu0 0.0
    %4008 = vmatpush1.msra.mxu0 0.0
    %4009 = vmatprep.mubr.f32.mxu0 0.0
    %4010 = vmatmul.mubr.f32.gmra.mrb[0].mxu0 %v3943
    %v4011 = vpop.f32.mrb[0].mxu0
    %v4012 = vadd.f32 0.0, %v4011
    %v4013 = vpop.f32.mrb[0].mxu0
    %4014 = vdwg.mxu0
    %v4015 = vadd.f32 %v2309, %v4012
    %v4016 = vxor.u32 %v3939, 2147483648
    %v4017 = vmul.f32 %v4016, 1.442695
    %v4018 = vpow.pop %v4017
    %v4019 = vadd.f32 %v4018, 1.0
    %v4020 = vrcp.pop %v4019
    %v4021 = vmul.f32 1.0, %v4020
    %v4022 = vtanh.pop %v3939
    %v4023 = vsel %vm173, %v4022, %v4021
    %v4025 = vrot.slane %v3816, 6
    %v4027 = vmul.f32 %v4023, %v4025
    %4029 = vrot.lane.b32.xlu0 %v4023, 64
    %v4030 = vpop.permute.xlu0 %4029
    %v4032 = vmul.f32 %v4023, %v4030
    %4034 = vrot.lane.b32.xlu0 %v4032, 32
    %v4035 = vpop.permute.xlu0 %4034
    %v4037 = vadd.f32 %v4027, %v4035
    %v4038 = vtanh.pop %v4037
    %4040 = vrot.lane.b32.xlu0 %v4038, 64
    %v4041 = vpop.permute.xlu0 %4040
    %v4043 = vmul.f32 %v4023, %v4041
    %v4044 = vxor.u32 %v4015, 2147483648
    %v4045 = vmul.f32 %v4044, 1.442695
    %v4046 = vpow.pop %v4045
    %v4047 = vadd.f32 %v4046, 1.0
    %v4048 = vrcp.pop %v4047
    %v4049 = vmul.f32 1.0, %v4048
    %v4050 = vtanh.pop %v4015
    %v4051 = vsel %vm173, %v4050, %v4049
    %v4053 = vrot.slane %v3844, 2
    %v4055 = vmul.f32 %v4051, %v4053
    %4057 = vrot.lane.b32.xlu0 %v4051, 64
    %v4058 = vpop.permute.xlu0 %4057
    %v4060 = vmul.f32 %v4051, %v4058
    %4062 = vrot.lane.b32.xlu0 %v4060, 32
    %v4063 = vpop.permute.xlu0 %4062
    %v4065 = vadd.f32 %v4055, %v4063
    %v4066 = vtanh.pop %v4065
    %4068 = vrot.lane.b32.xlu0 %v4066, 64
    %v4069 = vpop.permute.xlu0 %4068
    %v4071 = vmul.f32 %v4051, %v4069
    %4073 = vrot.lane.b32.xlu0 %v4043, 32
    %v4074 = vpop.permute.xlu0 %4073
    %4076 = vst.msk [vmem:[#allocation3 + $0x8] sm:$0xc0] %vm1234, %v4074
    %4078 = vrot.lane.b32.xlu0 %v4071, 64
    %v4079 = vpop.permute.xlu0 %4078
    %4081 = vst.msk [vmem:[#allocation3] sm:$0x3] %vm1240, %v4079
    %v4082 = vld [vmem:[#allocation3] sm:$0xff]
    %v4083 = vld [vmem:[#allocation3 + $0x8] sm:$0xff]
    %v4084 = vld [vmem:[%s13] sm:$0xff]
    %v4085 = vld [vmem:[%s13 + $0x8] sm:$0xff]
    %v4086 = vld [vmem:[%s13 + $0x10] sm:$0xff]
    %v4087 = vld [vmem:[%s13 + $0x18] sm:$0xff]
    %v4088 = vld [vmem:[%s13 + $0x20] sm:$0xff]
    %v4089 = vld [vmem:[%s13 + $0x28] sm:$0xff]
    %v4090 = vld [vmem:[%s13 + $0x30] sm:$0xff]
    %v4091 = vld [vmem:[%s13 + $0x38] sm:$0xff]
    %v4092 = vld [vmem:[%s15] sm:$0x1]
    %v4094 = vlaneseq
    %v4095 = vshrl.u32 %v4094, 7
    %v4096 = vsub.s32 0, %v4095
    %v4097 = vrot.slane %v4092, %v4096
    %v4100 = vsel %vm2145, %v4082, 0
    %v4103 = vsel %vm2145, %v4083, 0
    %4105 = vmatprep.subr.mxu0 0.0
    %4106 = vmatpush1.msra.mxu0 %v4084
    %4107 = vmatprep.subr.mxu0 0.0
    %4108 = vmatpush1.msra.mxu0 %v4085
    %4109 = vmatprep.subr.mxu0 0.0
    %4110 = vmatpush1.msra.mxu0 %v4086
    %4111 = vmatprep.subr.mxu0 0.0
    %4112 = vmatpush1.msra.mxu0 %v4087
    %4113 = vmatprep.subr.mxu0 0.0
    %4114 = vmatpush1.msra.mxu0 %v4088
    %4115 = vmatprep.subr.mxu0 0.0
    %4116 = vmatpush1.msra.mxu0 %v4089
    %4117 = vmatprep.subr.mxu0 0.0
    %4118 = vmatpush1.msra.mxu0 %v4090
    %4119 = vmatprep.subr.mxu0 0.0
    %4120 = vmatpush1.msra.mxu0 %v4091
    %4121 = vmatprep.subr.mxu0 0.0
    %4122 = vmatpush1.msra.mxu0 0.0
    %4123 = vmatprep.subr.mxu0 0.0
    %4124 = vmatpush1.msra.mxu0 0.0
    %4125 = vmatprep.subr.mxu0 0.0
    %4126 = vmatpush1.msra.mxu0 0.0
    %4127 = vmatprep.subr.mxu0 0.0
    %4128 = vmatpush1.msra.mxu0 0.0
    %4129 = vmatprep.subr.mxu0 0.0
    %4130 = vmatpush1.msra.mxu0 0.0
    %4131 = vmatprep.subr.mxu0 0.0
    %4132 = vmatpush1.msra.mxu0 0.0
    %4133 = vmatprep.subr.mxu0 0.0
    %4134 = vmatpush1.msra.mxu0 0.0
    %4135 = vmatprep.subr.mxu0 0.0
    %4136 = vmatpush1.msra.mxu0 0.0
    %4137 = vmatprep.subr.mxu0 0.0
    %4138 = vmatpush1.msra.mxu0 0.0
    %4139 = vmatprep.subr.mxu0 0.0
    %4140 = vmatpush1.msra.mxu0 0.0
    %4141 = vmatprep.subr.mxu0 0.0
    %4142 = vmatpush1.msra.mxu0 0.0
    %4143 = vmatprep.subr.mxu0 0.0
    %4144 = vmatpush1.msra.mxu0 0.0
    %4145 = vmatprep.subr.mxu0 0.0
    %4146 = vmatpush1.msra.mxu0 0.0
    %4147 = vmatprep.subr.mxu0 0.0
    %4148 = vmatpush1.msra.mxu0 0.0
    %4149 = vmatprep.subr.mxu0 0.0
    %4150 = vmatpush1.msra.mxu0 0.0
    %4151 = vmatprep.subr.mxu0 0.0
    %4152 = vmatpush1.msra.mxu0 0.0
    %4153 = vmatprep.subr.mxu0 0.0
    %4154 = vmatpush1.msra.mxu0 0.0
    %4155 = vmatprep.subr.mxu0 0.0
    %4156 = vmatpush1.msra.mxu0 0.0
    %4157 = vmatprep.subr.mxu0 0.0
    %4158 = vmatpush1.msra.mxu0 0.0
    %4159 = vmatprep.subr.mxu0 0.0
    %4160 = vmatpush1.msra.mxu0 0.0
    %4161 = vmatprep.subr.mxu0 0.0
    %4162 = vmatpush1.msra.mxu0 0.0
    %4163 = vmatprep.subr.mxu0 0.0
    %4164 = vmatpush1.msra.mxu0 0.0
    %4165 = vmatprep.subr.mxu0 0.0
    %4166 = vmatpush1.msra.mxu0 0.0
    %4167 = vmatprep.subr.mxu0 0.0
    %4168 = vmatpush1.msra.mxu0 0.0
    %4169 = vmatprep.mubr.f32.mxu0 0.0
    %4170 = vmatmul.mubr.f32.gmra.mrb[0].mxu0 %v4100
    %v4171 = vpop.f32.mrb[0].mxu0
    %v4172 = vadd.f32 %v4097, %v4171
    %v4173 = vpop.f32.mrb[0].mxu0
    %4174 = vmatprep.mubr.f32.mxu0 0.0
    %4175 = vmatmul.mubr.f32.gmra.mrb[0].mxu0 %v4103
    %v4176 = vpop.f32.mrb[0].mxu0
    %v4177 = vadd.f32 %v4097, %v4176
    %v4178 = vpop.f32.mrb[0].mxu0
    %4179 = vdwg.mxu0
    %v4180 = vld [vmem:[%s16] sm:$0xff]
    %v4181 = vld [vmem:[%s16 + $0x8] sm:$0xff]
    %v4182 = vld [vmem:[%s16 + $0x10] sm:$0xff]
    %v4183 = vld [vmem:[%s16 + $0x18] sm:$0xff]
    %v4184 = vld [vmem:[%s16 + $0x20] sm:$0xff]
    %v4185 = vld [vmem:[%s16 + $0x28] sm:$0xff]
    %v4186 = vld [vmem:[%s16 + $0x30] sm:$0xff]
    %v4187 = vld [vmem:[%s16 + $0x38] sm:$0xff]
    %v4188 = vld [vmem:[%s18] sm:$0x1]
    %v4190 = vlaneseq
    %v4191 = vshrl.u32 %v4190, 7
    %v4192 = vsub.s32 0, %v4191
    %v4193 = vrot.slane %v4188, %v4192
    %4195 = vmatprep.subr.mxu0 0.0
    %4196 = vmatpush1.msra.mxu0 %v4180
    %4197 = vmatprep.subr.mxu0 0.0
    %4198 = vmatpush1.msra.mxu0 %v4181
    %4199 = vmatprep.subr.mxu0 0.0
    %4200 = vmatpush1.msra.mxu0 %v4182
    %4201 = vmatprep.subr.mxu0 0.0
    %4202 = vmatpush1.msra.mxu0 %v4183
    %4203 = vmatprep.subr.mxu0 0.0
    %4204 = vmatpush1.msra.mxu0 %v4184
    %4205 = vmatprep.subr.mxu0 0.0
    %4206 = vmatpush1.msra.mxu0 %v4185
    %4207 = vmatprep.subr.mxu0 0.0
    %4208 = vmatpush1.msra.mxu0 %v4186
    %4209 = vmatprep.subr.mxu0 0.0
    %4210 = vmatpush1.msra.mxu0 %v4187
    %4211 = vmatprep.subr.mxu0 0.0
    %4212 = vmatpush1.msra.mxu0 0.0
    %4213 = vmatprep.subr.mxu0 0.0
    %4214 = vmatpush1.msra.mxu0 0.0
    %4215 = vmatprep.subr.mxu0 0.0
    %4216 = vmatpush1.msra.mxu0 0.0
    %4217 = vmatprep.subr.mxu0 0.0
    %4218 = vmatpush1.msra.mxu0 0.0
    %4219 = vmatprep.subr.mxu0 0.0
    %4220 = vmatpush1.msra.mxu0 0.0
    %4221 = vmatprep.subr.mxu0 0.0
    %4222 = vmatpush1.msra.mxu0 0.0
    %4223 = vmatprep.subr.mxu0 0.0
    %4224 = vmatpush1.msra.mxu0 0.0
    %4225 = vmatprep.subr.mxu0 0.0
    %4226 = vmatpush1.msra.mxu0 0.0
    %4227 = vmatprep.subr.mxu0 0.0
    %4228 = vmatpush1.msra.mxu0 0.0
    %4229 = vmatprep.subr.mxu0 0.0
    %4230 = vmatpush1.msra.mxu0 0.0
    %4231 = vmatprep.subr.mxu0 0.0
    %4232 = vmatpush1.msra.mxu0 0.0
    %4233 = vmatprep.subr.mxu0 0.0
    %4234 = vmatpush1.msra.mxu0 0.0
    %4235 = vmatprep.subr.mxu0 0.0
    %4236 = vmatpush1.msra.mxu0 0.0
    %4237 = vmatprep.subr.mxu0 0.0
    %4238 = vmatpush1.msra.mxu0 0.0
    %4239 = vmatprep.subr.mxu0 0.0
    %4240 = vmatpush1.msra.mxu0 0.0
    %4241 = vmatprep.subr.mxu0 0.0
    %4242 = vmatpush1.msra.mxu0 0.0
    %4243 = vmatprep.subr.mxu0 0.0
    %4244 = vmatpush1.msra.mxu0 0.0
    %4245 = vmatprep.subr.mxu0 0.0
    %4246 = vmatpush1.msra.mxu0 0.0
    %4247 = vmatprep.subr.mxu0 0.0
    %4248 = vmatpush1.msra.mxu0 0.0
    %4249 = vmatprep.subr.mxu0 0.0
    %4250 = vmatpush1.msra.mxu0 0.0
    %4251 = vmatprep.subr.mxu0 0.0
    %4252 = vmatpush1.msra.mxu0 0.0
    %4253 = vmatprep.subr.mxu0 0.0
    %4254 = vmatpush1.msra.mxu0 0.0
    %4255 = vmatprep.subr.mxu0 0.0
    %4256 = vmatpush1.msra.mxu0 0.0
    %4257 = vmatprep.subr.mxu0 0.0
    %4258 = vmatpush1.msra.mxu0 0.0
    %4259 = vmatprep.mubr.f32.mxu0 0.0
    %4260 = vmatmul.mubr.f32.gmra.mrb[0].mxu0 %v4100
    %v4261 = vpop.f32.mrb[0].mxu0
    %v4262 = vadd.f32 %v4193, %v4261
    %v4263 = vpop.f32.mrb[0].mxu0
    %4264 = vmatprep.mubr.f32.mxu0 0.0
    %4265 = vmatmul.mubr.f32.gmra.mrb[0].mxu0 %v4103
    %v4266 = vpop.f32.mrb[0].mxu0
    %v4267 = vadd.f32 %v4193, %v4266
    %v4268 = vpop.f32.mrb[0].mxu0
    %4269 = vdwg.mxu0
    %v4270 = vld [vmem:[%s14] sm:$0xff]
    %v4271 = vld [vmem:[%s14 + $0x8] sm:$0xff]
    %v4272 = vld [vmem:[%s14 + $0x10] sm:$0xff]
    %v4273 = vld [vmem:[%s14 + $0x18] sm:$0xff]
    %v4274 = vld [vmem:[#allocation12] sm:$0xff]
    %v4275 = vld [vmem:[#allocation12 + $0x8] sm:$0xff]
    %v4276 = vld [vmem:[#allocation12 + $0x10] sm:$0xff]
    %v4277 = vld [vmem:[#allocation12 + $0x18] sm:$0xff]
    %4278 = vmatprep.subr.mxu0 0.0
    %4279 = vmatpush1.msra.mxu0 %v4270
    %4280 = vmatprep.subr.mxu0 0.0
    %4281 = vmatpush1.msra.mxu0 %v4271
    %4282 = vmatprep.subr.mxu0 0.0
    %4283 = vmatpush1.msra.mxu0 %v4272
    %4284 = vmatprep.subr.mxu0 0.0
    %4285 = vmatpush1.msra.mxu0 %v4273
    %4286 = vmatprep.subr.mxu0 0.0
    %4287 = vmatpush1.msra.mxu0 0.0
    %4288 = vmatprep.subr.mxu0 0.0
    %4289 = vmatpush1.msra.mxu0 0.0
    %4290 = vmatprep.subr.mxu0 0.0
    %4291 = vmatpush1.msra.mxu0 0.0
    %4292 = vmatprep.subr.mxu0 0.0
    %4293 = vmatpush1.msra.mxu0 0.0
    %4294 = vmatprep.subr.mxu0 0.0
    %4295 = vmatpush1.msra.mxu0 0.0
    %4296 = vmatprep.subr.mxu0 0.0
    %4297 = vmatpush1.msra.mxu0 0.0
    %4298 = vmatprep.subr.mxu0 0.0
    %4299 = vmatpush1.msra.mxu0 0.0
    %4300 = vmatprep.subr.mxu0 0.0
    %4301 = vmatpush1.msra.mxu0 0.0
    %4302 = vmatprep.subr.mxu0 0.0
    %4303 = vmatpush1.msra.mxu0 0.0
    %4304 = vmatprep.subr.mxu0 0.0
    %4305 = vmatpush1.msra.mxu0 0.0
    %4306 = vmatprep.subr.mxu0 0.0
    %4307 = vmatpush1.msra.mxu0 0.0
    %4308 = vmatprep.subr.mxu0 0.0
    %4309 = vmatpush1.msra.mxu0 0.0
    %4310 = vmatprep.subr.mxu0 0.0
    %4311 = vmatpush1.msra.mxu0 0.0
    %4312 = vmatprep.subr.mxu0 0.0
    %4313 = vmatpush1.msra.mxu0 0.0
    %4314 = vmatprep.subr.mxu0 0.0
    %4315 = vmatpush1.msra.mxu0 0.0
    %4316 = vmatprep.subr.mxu0 0.0
    %4317 = vmatpush1.msra.mxu0 0.0
    %4318 = vmatprep.subr.mxu0 0.0
    %4319 = vmatpush1.msra.mxu0 0.0
    %4320 = vmatprep.subr.mxu0 0.0
    %4321 = vmatpush1.msra.mxu0 0.0
    %4322 = vmatprep.subr.mxu0 0.0
    %4323 = vmatpush1.msra.mxu0 0.0
    %4324 = vmatprep.subr.mxu0 0.0
    %4325 = vmatpush1.msra.mxu0 0.0
    %4326 = vmatprep.subr.mxu0 0.0
    %4327 = vmatpush1.msra.mxu0 0.0
    %4328 = vmatprep.subr.mxu0 0.0
    %4329 = vmatpush1.msra.mxu0 0.0
    %4330 = vmatprep.subr.mxu0 0.0
    %4331 = vmatpush1.msra.mxu0 0.0
    %4332 = vmatprep.subr.mxu0 0.0
    %4333 = vmatpush1.msra.mxu0 0.0
    %4334 = vmatprep.subr.mxu0 0.0
    %4335 = vmatpush1.msra.mxu0 0.0
    %4336 = vmatprep.subr.mxu0 0.0
    %4337 = vmatpush1.msra.mxu0 0.0
    %4338 = vmatprep.subr.mxu0 0.0
    %4339 = vmatpush1.msra.mxu0 0.0
    %4340 = vmatprep.subr.mxu0 0.0
    %4341 = vmatpush1.msra.mxu0 0.0
    %4342 = vmatprep.mubr.f32.mxu0 0.0
    %4343 = vmatmul.mubr.f32.gmra.mrb[0].mxu0 %v361
    %v4344 = vpop.f32.mrb[0].mxu0
    %v4345 = vadd.f32 0.0, %v4344
    %v4346 = vpop.f32.mrb[0].mxu0
    %4347 = vdwg.mxu0
    %v4348 = vadd.f32 %v4172, %v4345
    %4349 = vmatprep.subr.mxu0 0.0
    %4350 = vmatpush1.msra.mxu0 %v4274
    %4351 = vmatprep.subr.mxu0 0.0
    %4352 = vmatpush1.msra.mxu0 %v4275
    %4353 = vmatprep.subr.mxu0 0.0
    %4354 = vmatpush1.msra.mxu0 %v4276
    %4355 = vmatprep.subr.mxu0 0.0
    %4356 = vmatpush1.msra.mxu0 %v4277
    %4357 = vmatprep.subr.mxu0 0.0
    %4358 = vmatpush1.msra.mxu0 0.0
    %4359 = vmatprep.subr.mxu0 0.0
    %4360 = vmatpush1.msra.mxu0 0.0
    %4361 = vmatprep.subr.mxu0 0.0
    %4362 = vmatpush1.msra.mxu0 0.0
    %4363 = vmatprep.subr.mxu0 0.0
    %4364 = vmatpush1.msra.mxu0 0.0
    %4365 = vmatprep.subr.mxu0 0.0
    %4366 = vmatpush1.msra.mxu0 0.0
    %4367 = vmatprep.subr.mxu0 0.0
    %4368 = vmatpush1.msra.mxu0 0.0
    %4369 = vmatprep.subr.mxu0 0.0
    %4370 = vmatpush1.msra.mxu0 0.0
    %4371 = vmatprep.subr.mxu0 0.0
    %4372 = vmatpush1.msra.mxu0 0.0
    %4373 = vmatprep.subr.mxu0 0.0
    %4374 = vmatpush1.msra.mxu0 0.0
    %4375 = vmatprep.subr.mxu0 0.0
    %4376 = vmatpush1.msra.mxu0 0.0
    %4377 = vmatprep.subr.mxu0 0.0
    %4378 = vmatpush1.msra.mxu0 0.0
    %4379 = vmatprep.subr.mxu0 0.0
    %4380 = vmatpush1.msra.mxu0 0.0
    %4381 = vmatprep.subr.mxu0 0.0
    %4382 = vmatpush1.msra.mxu0 0.0
    %4383 = vmatprep.subr.mxu0 0.0
    %4384 = vmatpush1.msra.mxu0 0.0
    %4385 = vmatprep.subr.mxu0 0.0
    %4386 = vmatpush1.msra.mxu0 0.0
    %4387 = vmatprep.subr.mxu0 0.0
    %4388 = vmatpush1.msra.mxu0 0.0
    %4389 = vmatprep.subr.mxu0 0.0
    %4390 = vmatpush1.msra.mxu0 0.0
    %4391 = vmatprep.subr.mxu0 0.0
    %4392 = vmatpush1.msra.mxu0 0.0
    %4393 = vmatprep.subr.mxu0 0.0
    %4394 = vmatpush1.msra.mxu0 0.0
    %4395 = vmatprep.subr.mxu0 0.0
    %4396 = vmatpush1.msra.mxu0 0.0
    %4397 = vmatprep.subr.mxu0 0.0
    %4398 = vmatpush1.msra.mxu0 0.0
    %4399 = vmatprep.subr.mxu0 0.0
    %4400 = vmatpush1.msra.mxu0 0.0
    %4401 = vmatprep.subr.mxu0 0.0
    %4402 = vmatpush1.msra.mxu0 0.0
    %4403 = vmatprep.subr.mxu0 0.0
    %4404 = vmatpush1.msra.mxu0 0.0
    %4405 = vmatprep.subr.mxu0 0.0
    %4406 = vmatpush1.msra.mxu0 0.0
    %4407 = vmatprep.subr.mxu0 0.0
    %4408 = vmatpush1.msra.mxu0 0.0
    %4409 = vmatprep.subr.mxu0 0.0
    %4410 = vmatpush1.msra.mxu0 0.0
    %4411 = vmatprep.subr.mxu0 0.0
    %4412 = vmatpush1.msra.mxu0 0.0
    %4413 = vmatprep.mubr.f32.mxu0 0.0
    %4414 = vmatmul.mubr.f32.gmra.mrb[0].mxu0 %v361
    %v4415 = vpop.f32.mrb[0].mxu0
    %v4416 = vadd.f32 0.0, %v4415
    %v4417 = vpop.f32.mrb[0].mxu0
    %4418 = vdwg.mxu0
    %v4420 = vrot.slane %v4416, 2
    %v4422 = vadd.f32 %v4267, %v4420
    %v4423 = vxor.u32 %v4348, 2147483648
    %v4424 = vmul.f32 %v4423, 1.442695
    %v4425 = vpow.pop %v4424
    %v4426 = vadd.f32 %v4425, 1.0
    %v4427 = vrcp.pop %v4426
    %v4428 = vmul.f32 1.0, %v4427
    %v4429 = vtanh.pop %v4348
    %v4430 = vsel %vm173, %v4429, %v4428
    %v4431 = vmul.f32 %v4430, 0.0
    %4433 = vrot.lane.b32.xlu0 %v4430, 64
    %v4434 = vpop.permute.xlu0 %4433
    %v4436 = vmul.f32 %v4430, %v4434
    %4438 = vrot.lane.b32.xlu0 %v4436, 32
    %v4439 = vpop.permute.xlu0 %4438
    %v4441 = vadd.f32 %v4431, %v4439
    %v4442 = vtanh.pop %v4441
    %4444 = vrot.lane.b32.xlu0 %v4442, 64
    %v4445 = vpop.permute.xlu0 %4444
    %v4447 = vmul.f32 %v4430, %v4445
    %v4448 = vxor.u32 %v4422, 2147483648
    %v4449 = vmul.f32 %v4448, 1.442695
    %v4450 = vpow.pop %v4449
    %v4451 = vadd.f32 %v4450, 1.0
    %v4452 = vrcp.pop %v4451
    %v4453 = vmul.f32 1.0, %v4452
    %v4454 = vtanh.pop %v4422
    %v4455 = vsel %vm173, %v4454, %v4453
    %v4456 = vmul.f32 %v4455, 0.0
    %4458 = vrot.lane.b32.xlu0 %v4455, 64
    %v4459 = vpop.permute.xlu0 %4458
    %v4461 = vmul.f32 %v4455, %v4459
    %4463 = vrot.lane.b32.xlu0 %v4461, 32
    %v4464 = vpop.permute.xlu0 %4463
    %v4466 = vadd.f32 %v4456, %v4464
    %v4467 = vtanh.pop %v4466
    %4469 = vrot.lane.b32.xlu0 %v4467, 64
    %v4470 = vpop.permute.xlu0 %4469
    %v4472 = vmul.f32 %v4455, %v4470
    %4474 = vrot.lane.b32.xlu0 %v4447, 32
    %v4475 = vpop.permute.xlu0 %4474
    %4477 = vst.msk [vmem:[#allocation2] sm:$0x3] %vm562, %v4475
    %4479 = vrot.lane.b32.xlu0 %v4472, 64
    %v4480 = vpop.permute.xlu0 %4479
    %4482 = vst.msk [vmem:[#allocation2 + $0x8] sm:$0xc0] %vm568, %v4480
    %v4483 = vsel %vm359, %v4475, 0
    %4485 = vmatprep.subr.mxu0 0.0
    %4486 = vmatpush1.msra.mxu0 %v4270
    %4487 = vmatprep.subr.mxu0 0.0
    %4488 = vmatpush1.msra.mxu0 %v4271
    %4489 = vmatprep.subr.mxu0 0.0
    %4490 = vmatpush1.msra.mxu0 %v4272
    %4491 = vmatprep.subr.mxu0 0.0
    %4492 = vmatpush1.msra.mxu0 %v4273
    %4493 = vmatprep.subr.mxu0 0.0
    %4494 = vmatpush1.msra.mxu0 0.0
    %4495 = vmatprep.subr.mxu0 0.0
    %4496 = vmatpush1.msra.mxu0 0.0
    %4497 = vmatprep.subr.mxu0 0.0
    %4498 = vmatpush1.msra.mxu0 0.0
    %4499 = vmatprep.subr.mxu0 0.0
    %4500 = vmatpush1.msra.mxu0 0.0
    %4501 = vmatprep.subr.mxu0 0.0
    %4502 = vmatpush1.msra.mxu0 0.0
    %4503 = vmatprep.subr.mxu0 0.0
    %4504 = vmatpush1.msra.mxu0 0.0
    %4505 = vmatprep.subr.mxu0 0.0
    %4506 = vmatpush1.msra.mxu0 0.0
    %4507 = vmatprep.subr.mxu0 0.0
    %4508 = vmatpush1.msra.mxu0 0.0
    %4509 = vmatprep.subr.mxu0 0.0
    %4510 = vmatpush1.msra.mxu0 0.0
    %4511 = vmatprep.subr.mxu0 0.0
    %4512 = vmatpush1.msra.mxu0 0.0
    %4513 = vmatprep.subr.mxu0 0.0
    %4514 = vmatpush1.msra.mxu0 0.0
    %4515 = vmatprep.subr.mxu0 0.0
    %4516 = vmatpush1.msra.mxu0 0.0
    %4517 = vmatprep.subr.mxu0 0.0
    %4518 = vmatpush1.msra.mxu0 0.0
    %4519 = vmatprep.subr.mxu0 0.0
    %4520 = vmatpush1.msra.mxu0 0.0
    %4521 = vmatprep.subr.mxu0 0.0
    %4522 = vmatpush1.msra.mxu0 0.0
    %4523 = vmatprep.subr.mxu0 0.0
    %4524 = vmatpush1.msra.mxu0 0.0
    %4525 = vmatprep.subr.mxu0 0.0
    %4526 = vmatpush1.msra.mxu0 0.0
    %4527 = vmatprep.subr.mxu0 0.0
    %4528 = vmatpush1.msra.mxu0 0.0
    %4529 = vmatprep.subr.mxu0 0.0
    %4530 = vmatpush1.msra.mxu0 0.0
    %4531 = vmatprep.subr.mxu0 0.0
    %4532 = vmatpush1.msra.mxu0 0.0
    %4533 = vmatprep.subr.mxu0 0.0
    %4534 = vmatpush1.msra.mxu0 0.0
    %4535 = vmatprep.subr.mxu0 0.0
    %4536 = vmatpush1.msra.mxu0 0.0
    %4537 = vmatprep.subr.mxu0 0.0
    %4538 = vmatpush1.msra.mxu0 0.0
    %4539 = vmatprep.subr.mxu0 0.0
    %4540 = vmatpush1.msra.mxu0 0.0
    %4541 = vmatprep.subr.mxu0 0.0
    %4542 = vmatpush1.msra.mxu0 0.0
    %4543 = vmatprep.subr.mxu0 0.0
    %4544 = vmatpush1.msra.mxu0 0.0
    %4545 = vmatprep.subr.mxu0 0.0
    %4546 = vmatpush1.msra.mxu0 0.0
    %4547 = vmatprep.subr.mxu0 0.0
    %4548 = vmatpush1.msra.mxu0 0.0
    %4549 = vmatprep.mubr.f32.mxu0 0.0
    %4550 = vmatmul.mubr.f32.gmra.mrb[0].mxu0 %v4483
    %v4551 = vpop.f32.mrb[0].mxu0
    %v4552 = vadd.f32 0.0, %v4551
    %v4553 = vpop.f32.mrb[0].mxu0
    %4554 = vdwg.mxu0
    %v4556 = vrot.slane %v4552, 6
    %v4558 = vadd.f32 %v4172, %v4556
    %v4559 = vrot.slane %v4472, 6
    %4560 = vrot.lane.b32.xlu0 %v4559, 32
    %v4561 = vpop.permute.xlu0 %4560
    %v4562 = vsel %vm359, %v4561, 0
    %4564 = vmatprep.subr.mxu0 0.0
    %4565 = vmatpush1.msra.mxu0 %v4274
    %4566 = vmatprep.subr.mxu0 0.0
    %4567 = vmatpush1.msra.mxu0 %v4275
    %4568 = vmatprep.subr.mxu0 0.0
    %4569 = vmatpush1.msra.mxu0 %v4276
    %4570 = vmatprep.subr.mxu0 0.0
    %4571 = vmatpush1.msra.mxu0 %v4277
    %4572 = vmatprep.subr.mxu0 0.0
    %4573 = vmatpush1.msra.mxu0 0.0
    %4574 = vmatprep.subr.mxu0 0.0
    %4575 = vmatpush1.msra.mxu0 0.0
    %4576 = vmatprep.subr.mxu0 0.0
    %4577 = vmatpush1.msra.mxu0 0.0
    %4578 = vmatprep.subr.mxu0 0.0
    %4579 = vmatpush1.msra.mxu0 0.0
    %4580 = vmatprep.subr.mxu0 0.0
    %4581 = vmatpush1.msra.mxu0 0.0
    %4582 = vmatprep.subr.mxu0 0.0
    %4583 = vmatpush1.msra.mxu0 0.0
    %4584 = vmatprep.subr.mxu0 0.0
    %4585 = vmatpush1.msra.mxu0 0.0
    %4586 = vmatprep.subr.mxu0 0.0
    %4587 = vmatpush1.msra.mxu0 0.0
    %4588 = vmatprep.subr.mxu0 0.0
    %4589 = vmatpush1.msra.mxu0 0.0
    %4590 = vmatprep.subr.mxu0 0.0
    %4591 = vmatpush1.msra.mxu0 0.0
    %4592 = vmatprep.subr.mxu0 0.0
    %4593 = vmatpush1.msra.mxu0 0.0
    %4594 = vmatprep.subr.mxu0 0.0
    %4595 = vmatpush1.msra.mxu0 0.0
    %4596 = vmatprep.subr.mxu0 0.0
    %4597 = vmatpush1.msra.mxu0 0.0
    %4598 = vmatprep.subr.mxu0 0.0
    %4599 = vmatpush1.msra.mxu0 0.0
    %4600 = vmatprep.subr.mxu0 0.0
    %4601 = vmatpush1.msra.mxu0 0.0
    %4602 = vmatprep.subr.mxu0 0.0
    %4603 = vmatpush1.msra.mxu0 0.0
    %4604 = vmatprep.subr.mxu0 0.0
    %4605 = vmatpush1.msra.mxu0 0.0
    %4606 = vmatprep.subr.mxu0 0.0
    %4607 = vmatpush1.msra.mxu0 0.0
    %4608 = vmatprep.subr.mxu0 0.0
    %4609 = vmatpush1.msra.mxu0 0.0
    %4610 = vmatprep.subr.mxu0 0.0
    %4611 = vmatpush1.msra.mxu0 0.0
    %4612 = vmatprep.subr.mxu0 0.0
    %4613 = vmatpush1.msra.mxu0 0.0
    %4614 = vmatprep.subr.mxu0 0.0
    %4615 = vmatpush1.msra.mxu0 0.0
    %4616 = vmatprep.subr.mxu0 0.0
    %4617 = vmatpush1.msra.mxu0 0.0
    %4618 = vmatprep.subr.mxu0 0.0
    %4619 = vmatpush1.msra.mxu0 0.0
    %4620 = vmatprep.subr.mxu0 0.0
    %4621 = vmatpush1.msra.mxu0 0.0
    %4622 = vmatprep.subr.mxu0 0.0
    %4623 = vmatpush1.msra.mxu0 0.0
    %4624 = vmatprep.subr.mxu0 0.0
    %4625 = vmatpush1.msra.mxu0 0.0
    %4626 = vmatprep.subr.mxu0 0.0
    %4627 = vmatpush1.msra.mxu0 0.0
    %4628 = vmatprep.mubr.f32.mxu0 0.0
    %4629 = vmatmul.mubr.f32.gmra.mrb[0].mxu0 %v4562
    %v4630 = vpop.f32.mrb[0].mxu0
    %v4631 = vadd.f32 0.0, %v4630
    %v4632 = vpop.f32.mrb[0].mxu0
    %4633 = vdwg.mxu0
    %v4635 = vrot.slane %v4631, 4
    %v4637 = vadd.f32 %v4267, %v4635
    %v4638 = vxor.u32 %v4558, 2147483648
    %v4639 = vmul.f32 %v4638, 1.442695
    %v4640 = vpow.pop %v4639
    %v4641 = vadd.f32 %v4640, 1.0
    %v4642 = vrcp.pop %v4641
    %v4643 = vmul.f32 1.0, %v4642
    %v4644 = vtanh.pop %v4558
    %v4645 = vsel %vm173, %v4644, %v4643
    %v4647 = vrot.slane %v4441, 6
    %v4649 = vmul.f32 %v4645, %v4647
    %4651 = vrot.lane.b32.xlu0 %v4645, 64
    %v4652 = vpop.permute.xlu0 %4651
    %v4654 = vmul.f32 %v4645, %v4652
    %4656 = vrot.lane.b32.xlu0 %v4654, 32
    %v4657 = vpop.permute.xlu0 %4656
    %v4659 = vadd.f32 %v4649, %v4657
    %v4660 = vtanh.pop %v4659
    %4662 = vrot.lane.b32.xlu0 %v4660, 64
    %v4663 = vpop.permute.xlu0 %4662
    %v4665 = vmul.f32 %v4645, %v4663
    %v4666 = vxor.u32 %v4637, 2147483648
    %v4667 = vmul.f32 %v4666, 1.442695
    %v4668 = vpow.pop %v4667
    %v4669 = vadd.f32 %v4668, 1.0
    %v4670 = vrcp.pop %v4669
    %v4671 = vmul.f32 1.0, %v4670
    %v4672 = vtanh.pop %v4637
    %v4673 = vsel %vm173, %v4672, %v4671
    %v4675 = vrot.slane %v4466, 2
    %v4677 = vmul.f32 %v4673, %v4675
    %4679 = vrot.lane.b32.xlu0 %v4673, 64
    %v4680 = vpop.permute.xlu0 %4679
    %v4682 = vmul.f32 %v4673, %v4680
    %4684 = vrot.lane.b32.xlu0 %v4682, 32
    %v4685 = vpop.permute.xlu0 %4684
    %v4687 = vadd.f32 %v4677, %v4685
    %v4688 = vtanh.pop %v4687
    %4690 = vrot.lane.b32.xlu0 %v4688, 64
    %v4691 = vpop.permute.xlu0 %4690
    %v4693 = vmul.f32 %v4673, %v4691
    %4695 = vrot.lane.b32.xlu0 %v4665, 32
    %v4696 = vpop.permute.xlu0 %4695
    %4698 = vst.msk [vmem:[#allocation2] sm:$0xc] %vm785, %v4696
    %4700 = vrot.lane.b32.xlu0 %v4693, 64
    %v4701 = vpop.permute.xlu0 %4700
    %4703 = vst.msk [vmem:[#allocation2 + $0x8] sm:$0x30] %vm791, %v4701
    %v4704 = vrot.slane %v4665, 2
    %4705 = vrot.lane.b32.xlu0 %v4704, 32
    %v4706 = vpop.permute.xlu0 %4705
    %v4707 = vsel %vm359, %v4706, 0
    %4709 = vmatprep.subr.mxu0 0.0
    %4710 = vmatpush1.msra.mxu0 %v4270
    %4711 = vmatprep.subr.mxu0 0.0
    %4712 = vmatpush1.msra.mxu0 %v4271
    %4713 = vmatprep.subr.mxu0 0.0
    %4714 = vmatpush1.msra.mxu0 %v4272
    %4715 = vmatprep.subr.mxu0 0.0
    %4716 = vmatpush1.msra.mxu0 %v4273
    %4717 = vmatprep.subr.mxu0 0.0
    %4718 = vmatpush1.msra.mxu0 0.0
    %4719 = vmatprep.subr.mxu0 0.0
    %4720 = vmatpush1.msra.mxu0 0.0
    %4721 = vmatprep.subr.mxu0 0.0
    %4722 = vmatpush1.msra.mxu0 0.0
    %4723 = vmatprep.subr.mxu0 0.0
    %4724 = vmatpush1.msra.mxu0 0.0
    %4725 = vmatprep.subr.mxu0 0.0
    %4726 = vmatpush1.msra.mxu0 0.0
    %4727 = vmatprep.subr.mxu0 0.0
    %4728 = vmatpush1.msra.mxu0 0.0
    %4729 = vmatprep.subr.mxu0 0.0
    %4730 = vmatpush1.msra.mxu0 0.0
    %4731 = vmatprep.subr.mxu0 0.0
    %4732 = vmatpush1.msra.mxu0 0.0
    %4733 = vmatprep.subr.mxu0 0.0
    %4734 = vmatpush1.msra.mxu0 0.0
    %4735 = vmatprep.subr.mxu0 0.0
    %4736 = vmatpush1.msra.mxu0 0.0
    %4737 = vmatprep.subr.mxu0 0.0
    %4738 = vmatpush1.msra.mxu0 0.0
    %4739 = vmatprep.subr.mxu0 0.0
    %4740 = vmatpush1.msra.mxu0 0.0
    %4741 = vmatprep.subr.mxu0 0.0
    %4742 = vmatpush1.msra.mxu0 0.0
    %4743 = vmatprep.subr.mxu0 0.0
    %4744 = vmatpush1.msra.mxu0 0.0
    %4745 = vmatprep.subr.mxu0 0.0
    %4746 = vmatpush1.msra.mxu0 0.0
    %4747 = vmatprep.subr.mxu0 0.0
    %4748 = vmatpush1.msra.mxu0 0.0
    %4749 = vmatprep.subr.mxu0 0.0
    %4750 = vmatpush1.msra.mxu0 0.0
    %4751 = vmatprep.subr.mxu0 0.0
    %4752 = vmatpush1.msra.mxu0 0.0
    %4753 = vmatprep.subr.mxu0 0.0
    %4754 = vmatpush1.msra.mxu0 0.0
    %4755 = vmatprep.subr.mxu0 0.0
    %4756 = vmatpush1.msra.mxu0 0.0
    %4757 = vmatprep.subr.mxu0 0.0
    %4758 = vmatpush1.msra.mxu0 0.0
    %4759 = vmatprep.subr.mxu0 0.0
    %4760 = vmatpush1.msra.mxu0 0.0
    %4761 = vmatprep.subr.mxu0 0.0
    %4762 = vmatpush1.msra.mxu0 0.0
    %4763 = vmatprep.subr.mxu0 0.0
    %4764 = vmatpush1.msra.mxu0 0.0
    %4765 = vmatprep.subr.mxu0 0.0
    %4766 = vmatpush1.msra.mxu0 0.0
    %4767 = vmatprep.subr.mxu0 0.0
    %4768 = vmatpush1.msra.mxu0 0.0
    %4769 = vmatprep.subr.mxu0 0.0
    %4770 = vmatpush1.msra.mxu0 0.0
    %4771 = vmatprep.subr.mxu0 0.0
    %4772 = vmatpush1.msra.mxu0 0.0
    %4773 = vmatprep.mubr.f32.mxu0 0.0
    %4774 = vmatmul.mubr.f32.gmra.mrb[0].mxu0 %v4707
    %v4775 = vpop.f32.mrb[0].mxu0
    %v4776 = vadd.f32 0.0, %v4775
    %v4777 = vpop.f32.mrb[0].mxu0
    %4778 = vdwg.mxu0
    %v4780 = vrot.slane %v4776, 4
    %v4782 = vadd.f32 %v4172, %v4780
    %v4783 = vrot.slane %v4693, 4
    %4784 = vrot.lane.b32.xlu0 %v4783, 32
    %v4785 = vpop.permute.xlu0 %4784
    %v4786 = vsel %vm359, %v4785, 0
    %4788 = vmatprep.subr.mxu0 0.0
    %4789 = vmatpush1.msra.mxu0 %v4274
    %4790 = vmatprep.subr.mxu0 0.0
    %4791 = vmatpush1.msra.mxu0 %v4275
    %4792 = vmatprep.subr.mxu0 0.0
    %4793 = vmatpush1.msra.mxu0 %v4276
    %4794 = vmatprep.subr.mxu0 0.0
    %4795 = vmatpush1.msra.mxu0 %v4277
    %4796 = vmatprep.subr.mxu0 0.0
    %4797 = vmatpush1.msra.mxu0 0.0
    %4798 = vmatprep.subr.mxu0 0.0
    %4799 = vmatpush1.msra.mxu0 0.0
    %4800 = vmatprep.subr.mxu0 0.0
    %4801 = vmatpush1.msra.mxu0 0.0
    %4802 = vmatprep.subr.mxu0 0.0
    %4803 = vmatpush1.msra.mxu0 0.0
    %4804 = vmatprep.subr.mxu0 0.0
    %4805 = vmatpush1.msra.mxu0 0.0
    %4806 = vmatprep.subr.mxu0 0.0
    %4807 = vmatpush1.msra.mxu0 0.0
    %4808 = vmatprep.subr.mxu0 0.0
    %4809 = vmatpush1.msra.mxu0 0.0
    %4810 = vmatprep.subr.mxu0 0.0
    %4811 = vmatpush1.msra.mxu0 0.0
    %4812 = vmatprep.subr.mxu0 0.0
    %4813 = vmatpush1.msra.mxu0 0.0
    %4814 = vmatprep.subr.mxu0 0.0
    %4815 = vmatpush1.msra.mxu0 0.0
    %4816 = vmatprep.subr.mxu0 0.0
    %4817 = vmatpush1.msra.mxu0 0.0
    %4818 = vmatprep.subr.mxu0 0.0
    %4819 = vmatpush1.msra.mxu0 0.0
    %4820 = vmatprep.subr.mxu0 0.0
    %4821 = vmatpush1.msra.mxu0 0.0
    %4822 = vmatprep.subr.mxu0 0.0
    %4823 = vmatpush1.msra.mxu0 0.0
    %4824 = vmatprep.subr.mxu0 0.0
    %4825 = vmatpush1.msra.mxu0 0.0
    %4826 = vmatprep.subr.mxu0 0.0
    %4827 = vmatpush1.msra.mxu0 0.0
    %4828 = vmatprep.subr.mxu0 0.0
    %4829 = vmatpush1.msra.mxu0 0.0
    %4830 = vmatprep.subr.mxu0 0.0
    %4831 = vmatpush1.msra.mxu0 0.0
    %4832 = vmatprep.subr.mxu0 0.0
    %4833 = vmatpush1.msra.mxu0 0.0
    %4834 = vmatprep.subr.mxu0 0.0
    %4835 = vmatpush1.msra.mxu0 0.0
    %4836 = vmatprep.subr.mxu0 0.0
    %4837 = vmatpush1.msra.mxu0 0.0
    %4838 = vmatprep.subr.mxu0 0.0
    %4839 = vmatpush1.msra.mxu0 0.0
    %4840 = vmatprep.subr.mxu0 0.0
    %4841 = vmatpush1.msra.mxu0 0.0
    %4842 = vmatprep.subr.mxu0 0.0
    %4843 = vmatpush1.msra.mxu0 0.0
    %4844 = vmatprep.subr.mxu0 0.0
    %4845 = vmatpush1.msra.mxu0 0.0
    %4846 = vmatprep.subr.mxu0 0.0
    %4847 = vmatpush1.msra.mxu0 0.0
    %4848 = vmatprep.subr.mxu0 0.0
    %4849 = vmatpush1.msra.mxu0 0.0
    %4850 = vmatprep.subr.mxu0 0.0
    %4851 = vmatpush1.msra.mxu0 0.0
    %4852 = vmatprep.mubr.f32.mxu0 0.0
    %4853 = vmatmul.mubr.f32.gmra.mrb[0].mxu0 %v4786
    %v4854 = vpop.f32.mrb[0].mxu0
    %v4855 = vadd.f32 0.0, %v4854
    %v4856 = vpop.f32.mrb[0].mxu0
    %4857 = vdwg.mxu0
    %v4859 = vrot.slane %v4855, 6
    %v4861 = vadd.f32 %v4267, %v4859
    %v4862 = vxor.u32 %v4782, 2147483648
    %v4863 = vmul.f32 %v4862, 1.442695
    %v4864 = vpow.pop %v4863
    %v4865 = vadd.f32 %v4864, 1.0
    %v4866 = vrcp.pop %v4865
    %v4867 = vmul.f32 1.0, %v4866
    %v4868 = vtanh.pop %v4782
    %v4869 = vsel %vm173, %v4868, %v4867
    %v4871 = vrot.slane %v4659, 6
    %v4873 = vmul.f32 %v4869, %v4871
    %4875 = vrot.lane.b32.xlu0 %v4869, 64
    %v4876 = vpop.permute.xlu0 %4875
    %v4878 = vmul.f32 %v4869, %v4876
    %4880 = vrot.lane.b32.xlu0 %v4878, 32
    %v4881 = vpop.permute.xlu0 %4880
    %v4883 = vadd.f32 %v4873, %v4881
    %v4884 = vtanh.pop %v4883
    %4886 = vrot.lane.b32.xlu0 %v4884, 64
    %v4887 = vpop.permute.xlu0 %4886
    %v4889 = vmul.f32 %v4869, %v4887
    %v4890 = vxor.u32 %v4861, 2147483648
    %v4891 = vmul.f32 %v4890, 1.442695
    %v4892 = vpow.pop %v4891
    %v4893 = vadd.f32 %v4892, 1.0
    %v4894 = vrcp.pop %v4893
    %v4895 = vmul.f32 1.0, %v4894
    %v4896 = vtanh.pop %v4861
    %v4897 = vsel %vm173, %v4896, %v4895
    %v4899 = vrot.slane %v4687, 2
    %v4901 = vmul.f32 %v4897, %v4899
    %4903 = vrot.lane.b32.xlu0 %v4897, 64
    %v4904 = vpop.permute.xlu0 %4903
    %v4906 = vmul.f32 %v4897, %v4904
    %4908 = vrot.lane.b32.xlu0 %v4906, 32
    %v4909 = vpop.permute.xlu0 %4908
    %v4911 = vadd.f32 %v4901, %v4909
    %v4912 = vtanh.pop %v4911
    %4914 = vrot.lane.b32.xlu0 %v4912, 64
    %v4915 = vpop.permute.xlu0 %4914
    %v4917 = vmul.f32 %v4897, %v4915
    %4919 = vrot.lane.b32.xlu0 %v4889, 32
    %v4920 = vpop.permute.xlu0 %4919
    %4922 = vst.msk [vmem:[#allocation2] sm:$0x30] %vm1011, %v4920
    %4924 = vrot.lane.b32.xlu0 %v4917, 64
    %v4925 = vpop.permute.xlu0 %4924
    %4927 = vst.msk [vmem:[#allocation2 + $0x8] sm:$0xc] %vm1017, %v4925
    %v4928 = vrot.slane %v4889, 4
    %4929 = vrot.lane.b32.xlu0 %v4928, 32
    %v4930 = vpop.permute.xlu0 %4929
    %v4931 = vsel %vm359, %v4930, 0
    %4933 = vmatprep.subr.mxu0 0.0
    %4934 = vmatpush1.msra.mxu0 %v4270
    %4935 = vmatprep.subr.mxu0 0.0
    %4936 = vmatpush1.msra.mxu0 %v4271
    %4937 = vmatprep.subr.mxu0 0.0
    %4938 = vmatpush1.msra.mxu0 %v4272
    %4939 = vmatprep.subr.mxu0 0.0
    %4940 = vmatpush1.msra.mxu0 %v4273
    %4941 = vmatprep.subr.mxu0 0.0
    %4942 = vmatpush1.msra.mxu0 0.0
    %4943 = vmatprep.subr.mxu0 0.0
    %4944 = vmatpush1.msra.mxu0 0.0
    %4945 = vmatprep.subr.mxu0 0.0
    %4946 = vmatpush1.msra.mxu0 0.0
    %4947 = vmatprep.subr.mxu0 0.0
    %4948 = vmatpush1.msra.mxu0 0.0
    %4949 = vmatprep.subr.mxu0 0.0
    %4950 = vmatpush1.msra.mxu0 0.0
    %4951 = vmatprep.subr.mxu0 0.0
    %4952 = vmatpush1.msra.mxu0 0.0
    %4953 = vmatprep.subr.mxu0 0.0
    %4954 = vmatpush1.msra.mxu0 0.0
    %4955 = vmatprep.subr.mxu0 0.0
    %4956 = vmatpush1.msra.mxu0 0.0
    %4957 = vmatprep.subr.mxu0 0.0
    %4958 = vmatpush1.msra.mxu0 0.0
    %4959 = vmatprep.subr.mxu0 0.0
    %4960 = vmatpush1.msra.mxu0 0.0
    %4961 = vmatprep.subr.mxu0 0.0
    %4962 = vmatpush1.msra.mxu0 0.0
    %4963 = vmatprep.subr.mxu0 0.0
    %4964 = vmatpush1.msra.mxu0 0.0
    %4965 = vmatprep.subr.mxu0 0.0
    %4966 = vmatpush1.msra.mxu0 0.0
    %4967 = vmatprep.subr.mxu0 0.0
    %4968 = vmatpush1.msra.mxu0 0.0
    %4969 = vmatprep.subr.mxu0 0.0
    %4970 = vmatpush1.msra.mxu0 0.0
    %4971 = vmatprep.subr.mxu0 0.0
    %4972 = vmatpush1.msra.mxu0 0.0
    %4973 = vmatprep.subr.mxu0 0.0
    %4974 = vmatpush1.msra.mxu0 0.0
    %4975 = vmatprep.subr.mxu0 0.0
    %4976 = vmatpush1.msra.mxu0 0.0
    %4977 = vmatprep.subr.mxu0 0.0
    %4978 = vmatpush1.msra.mxu0 0.0
    %4979 = vmatprep.subr.mxu0 0.0
    %4980 = vmatpush1.msra.mxu0 0.0
    %4981 = vmatprep.subr.mxu0 0.0
    %4982 = vmatpush1.msra.mxu0 0.0
    %4983 = vmatprep.subr.mxu0 0.0
    %4984 = vmatpush1.msra.mxu0 0.0
    %4985 = vmatprep.subr.mxu0 0.0
    %4986 = vmatpush1.msra.mxu0 0.0
    %4987 = vmatprep.subr.mxu0 0.0
    %4988 = vmatpush1.msra.mxu0 0.0
    %4989 = vmatprep.subr.mxu0 0.0
    %4990 = vmatpush1.msra.mxu0 0.0
    %4991 = vmatprep.subr.mxu0 0.0
    %4992 = vmatpush1.msra.mxu0 0.0
    %4993 = vmatprep.subr.mxu0 0.0
    %4994 = vmatpush1.msra.mxu0 0.0
    %4995 = vmatprep.subr.mxu0 0.0
    %4996 = vmatpush1.msra.mxu0 0.0
    %4997 = vmatprep.mubr.f32.mxu0 0.0
    %4998 = vmatmul.mubr.f32.gmra.mrb[0].mxu0 %v4931
    %v4999 = vpop.f32.mrb[0].mxu0
    %v5000 = vadd.f32 0.0, %v4999
    %v5001 = vpop.f32.mrb[0].mxu0
    %5002 = vdwg.mxu0
    %v5004 = vrot.slane %v5000, 2
    %v5006 = vadd.f32 %v4172, %v5004
    %v5007 = vrot.slane %v4917, 2
    %5008 = vrot.lane.b32.xlu0 %v5007, 32
    %v5009 = vpop.permute.xlu0 %5008
    %v5010 = vsel %vm359, %v5009, 0
    %5012 = vmatprep.subr.mxu0 0.0
    %5013 = vmatpush1.msra.mxu0 %v4274
    %5014 = vmatprep.subr.mxu0 0.0
    %5015 = vmatpush1.msra.mxu0 %v4275
    %5016 = vmatprep.subr.mxu0 0.0
    %5017 = vmatpush1.msra.mxu0 %v4276
    %5018 = vmatprep.subr.mxu0 0.0
    %5019 = vmatpush1.msra.mxu0 %v4277
    %5020 = vmatprep.subr.mxu0 0.0
    %5021 = vmatpush1.msra.mxu0 0.0
    %5022 = vmatprep.subr.mxu0 0.0
    %5023 = vmatpush1.msra.mxu0 0.0
    %5024 = vmatprep.subr.mxu0 0.0
    %5025 = vmatpush1.msra.mxu0 0.0
    %5026 = vmatprep.subr.mxu0 0.0
    %5027 = vmatpush1.msra.mxu0 0.0
    %5028 = vmatprep.subr.mxu0 0.0
    %5029 = vmatpush1.msra.mxu0 0.0
    %5030 = vmatprep.subr.mxu0 0.0
    %5031 = vmatpush1.msra.mxu0 0.0
    %5032 = vmatprep.subr.mxu0 0.0
    %5033 = vmatpush1.msra.mxu0 0.0
    %5034 = vmatprep.subr.mxu0 0.0
    %5035 = vmatpush1.msra.mxu0 0.0
    %5036 = vmatprep.subr.mxu0 0.0
    %5037 = vmatpush1.msra.mxu0 0.0
    %5038 = vmatprep.subr.mxu0 0.0
    %5039 = vmatpush1.msra.mxu0 0.0
    %5040 = vmatprep.subr.mxu0 0.0
    %5041 = vmatpush1.msra.mxu0 0.0
    %5042 = vmatprep.subr.mxu0 0.0
    %5043 = vmatpush1.msra.mxu0 0.0
    %5044 = vmatprep.subr.mxu0 0.0
    %5045 = vmatpush1.msra.mxu0 0.0
    %5046 = vmatprep.subr.mxu0 0.0
    %5047 = vmatpush1.msra.mxu0 0.0
    %5048 = vmatprep.subr.mxu0 0.0
    %5049 = vmatpush1.msra.mxu0 0.0
    %5050 = vmatprep.subr.mxu0 0.0
    %5051 = vmatpush1.msra.mxu0 0.0
    %5052 = vmatprep.subr.mxu0 0.0
    %5053 = vmatpush1.msra.mxu0 0.0
    %5054 = vmatprep.subr.mxu0 0.0
    %5055 = vmatpush1.msra.mxu0 0.0
    %5056 = vmatprep.subr.mxu0 0.0
    %5057 = vmatpush1.msra.mxu0 0.0
    %5058 = vmatprep.subr.mxu0 0.0
    %5059 = vmatpush1.msra.mxu0 0.0
    %5060 = vmatprep.subr.mxu0 0.0
    %5061 = vmatpush1.msra.mxu0 0.0
    %5062 = vmatprep.subr.mxu0 0.0
    %5063 = vmatpush1.msra.mxu0 0.0
    %5064 = vmatprep.subr.mxu0 0.0
    %5065 = vmatpush1.msra.mxu0 0.0
    %5066 = vmatprep.subr.mxu0 0.0
    %5067 = vmatpush1.msra.mxu0 0.0
    %5068 = vmatprep.subr.mxu0 0.0
    %5069 = vmatpush1.msra.mxu0 0.0
    %5070 = vmatprep.subr.mxu0 0.0
    %5071 = vmatpush1.msra.mxu0 0.0
    %5072 = vmatprep.subr.mxu0 0.0
    %5073 = vmatpush1.msra.mxu0 0.0
    %5074 = vmatprep.subr.mxu0 0.0
    %5075 = vmatpush1.msra.mxu0 0.0
    %5076 = vmatprep.mubr.f32.mxu0 0.0
    %5077 = vmatmul.mubr.f32.gmra.mrb[0].mxu0 %v5010
    %v5078 = vpop.f32.mrb[0].mxu0
    %v5079 = vadd.f32 0.0, %v5078
    %v5080 = vpop.f32.mrb[0].mxu0
    %5081 = vdwg.mxu0
    %v5082 = vadd.f32 %v4267, %v5079
    %v5083 = vxor.u32 %v5006, 2147483648
    %v5084 = vmul.f32 %v5083, 1.442695
    %v5085 = vpow.pop %v5084
    %v5086 = vadd.f32 %v5085, 1.0
    %v5087 = vrcp.pop %v5086
    %v5088 = vmul.f32 1.0, %v5087
    %v5089 = vtanh.pop %v5006
    %v5090 = vsel %vm173, %v5089, %v5088
    %v5092 = vrot.slane %v4883, 6
    %v5094 = vmul.f32 %v5090, %v5092
    %5096 = vrot.lane.b32.xlu0 %v5090, 64
    %v5097 = vpop.permute.xlu0 %5096
    %v5099 = vmul.f32 %v5090, %v5097
    %5101 = vrot.lane.b32.xlu0 %v5099, 32
    %v5102 = vpop.permute.xlu0 %5101
    %v5104 = vadd.f32 %v5094, %v5102
    %v5105 = vtanh.pop %v5104
    %5107 = vrot.lane.b32.xlu0 %v5105, 64
    %v5108 = vpop.permute.xlu0 %5107
    %v5110 = vmul.f32 %v5090, %v5108
    %v5111 = vxor.u32 %v5082, 2147483648
    %v5112 = vmul.f32 %v5111, 1.442695
    %v5113 = vpow.pop %v5112
    %v5114 = vadd.f32 %v5113, 1.0
    %v5115 = vrcp.pop %v5114
    %v5116 = vmul.f32 1.0, %v5115
    %v5117 = vtanh.pop %v5082
    %v5118 = vsel %vm173, %v5117, %v5116
    %v5120 = vrot.slane %v4911, 2
    %v5122 = vmul.f32 %v5118, %v5120
    %5124 = vrot.lane.b32.xlu0 %v5118, 64
    %v5125 = vpop.permute.xlu0 %5124
    %v5127 = vmul.f32 %v5118, %v5125
    %5129 = vrot.lane.b32.xlu0 %v5127, 32
    %v5130 = vpop.permute.xlu0 %5129
    %v5132 = vadd.f32 %v5122, %v5130
    %v5133 = vtanh.pop %v5132
    %5135 = vrot.lane.b32.xlu0 %v5133, 64
    %v5136 = vpop.permute.xlu0 %5135
    %v5138 = vmul.f32 %v5118, %v5136
    %5140 = vrot.lane.b32.xlu0 %v5110, 32
    %v5141 = vpop.permute.xlu0 %5140
    %5143 = vst.msk [vmem:[#allocation2] sm:$0xc0] %vm1234, %v5141
    %5145 = vrot.lane.b32.xlu0 %v5138, 64
    %v5146 = vpop.permute.xlu0 %5145
    %5148 = vst.msk [vmem:[#allocation2 + $0x8] sm:$0x3] %vm1240, %v5146
    %v5149 = vrot.slane %v5110, 6
    %5150 = vrot.lane.b32.xlu0 %v5149, 32
    %v5151 = vpop.permute.xlu0 %5150
    %v5152 = vsel %vm359, %v5151, 0
    %5154 = vmatprep.subr.mxu0 0.0
    %5155 = vmatpush1.msra.mxu0 %v4270
    %5156 = vmatprep.subr.mxu0 0.0
    %5157 = vmatpush1.msra.mxu0 %v4271
    %5158 = vmatprep.subr.mxu0 0.0
    %5159 = vmatpush1.msra.mxu0 %v4272
    %5160 = vmatprep.subr.mxu0 0.0
    %5161 = vmatpush1.msra.mxu0 %v4273
    %5162 = vmatprep.subr.mxu0 0.0
    %5163 = vmatpush1.msra.mxu0 0.0
    %5164 = vmatprep.subr.mxu0 0.0
    %5165 = vmatpush1.msra.mxu0 0.0
    %5166 = vmatprep.subr.mxu0 0.0
    %5167 = vmatpush1.msra.mxu0 0.0
    %5168 = vmatprep.subr.mxu0 0.0
    %5169 = vmatpush1.msra.mxu0 0.0
    %5170 = vmatprep.subr.mxu0 0.0
    %5171 = vmatpush1.msra.mxu0 0.0
    %5172 = vmatprep.subr.mxu0 0.0
    %5173 = vmatpush1.msra.mxu0 0.0
    %5174 = vmatprep.subr.mxu0 0.0
    %5175 = vmatpush1.msra.mxu0 0.0
    %5176 = vmatprep.subr.mxu0 0.0
    %5177 = vmatpush1.msra.mxu0 0.0
    %5178 = vmatprep.subr.mxu0 0.0
    %5179 = vmatpush1.msra.mxu0 0.0
    %5180 = vmatprep.subr.mxu0 0.0
    %5181 = vmatpush1.msra.mxu0 0.0
    %5182 = vmatprep.subr.mxu0 0.0
    %5183 = vmatpush1.msra.mxu0 0.0
    %5184 = vmatprep.subr.mxu0 0.0
    %5185 = vmatpush1.msra.mxu0 0.0
    %5186 = vmatprep.subr.mxu0 0.0
    %5187 = vmatpush1.msra.mxu0 0.0
    %5188 = vmatprep.subr.mxu0 0.0
    %5189 = vmatpush1.msra.mxu0 0.0
    %5190 = vmatprep.subr.mxu0 0.0
    %5191 = vmatpush1.msra.mxu0 0.0
    %5192 = vmatprep.subr.mxu0 0.0
    %5193 = vmatpush1.msra.mxu0 0.0
    %5194 = vmatprep.subr.mxu0 0.0
    %5195 = vmatpush1.msra.mxu0 0.0
    %5196 = vmatprep.subr.mxu0 0.0
    %5197 = vmatpush1.msra.mxu0 0.0
    %5198 = vmatprep.subr.mxu0 0.0
    %5199 = vmatpush1.msra.mxu0 0.0
    %5200 = vmatprep.subr.mxu0 0.0
    %5201 = vmatpush1.msra.mxu0 0.0
    %5202 = vmatprep.subr.mxu0 0.0
    %5203 = vmatpush1.msra.mxu0 0.0
    %5204 = vmatprep.subr.mxu0 0.0
    %5205 = vmatpush1.msra.mxu0 0.0
    %5206 = vmatprep.subr.mxu0 0.0
    %5207 = vmatpush1.msra.mxu0 0.0
    %5208 = vmatprep.subr.mxu0 0.0
    %5209 = vmatpush1.msra.mxu0 0.0
    %5210 = vmatprep.subr.mxu0 0.0
    %5211 = vmatpush1.msra.mxu0 0.0
    %5212 = vmatprep.subr.mxu0 0.0
    %5213 = vmatpush1.msra.mxu0 0.0
    %5214 = vmatprep.subr.mxu0 0.0
    %5215 = vmatpush1.msra.mxu0 0.0
    %5216 = vmatprep.subr.mxu0 0.0
    %5217 = vmatpush1.msra.mxu0 0.0
    %5218 = vmatprep.mubr.f32.mxu0 0.0
    %5219 = vmatmul.mubr.f32.gmra.mrb[0].mxu0 %v5152
    %v5220 = vpop.f32.mrb[0].mxu0
    %v5221 = vadd.f32 0.0, %v5220
    %v5222 = vpop.f32.mrb[0].mxu0
    %5223 = vdwg.mxu0
    %v5224 = vadd.f32 %v4177, %v5221
    %5225 = vrot.lane.b32.xlu0 %v5138, 32
    %v5226 = vpop.permute.xlu0 %5225
    %v5227 = vsel %vm359, %v5226, 0
    %5229 = vmatprep.subr.mxu0 0.0
    %5230 = vmatpush1.msra.mxu0 %v4274
    %5231 = vmatprep.subr.mxu0 0.0
    %5232 = vmatpush1.msra.mxu0 %v4275
    %5233 = vmatprep.subr.mxu0 0.0
    %5234 = vmatpush1.msra.mxu0 %v4276
    %5235 = vmatprep.subr.mxu0 0.0
    %5236 = vmatpush1.msra.mxu0 %v4277
    %5237 = vmatprep.subr.mxu0 0.0
    %5238 = vmatpush1.msra.mxu0 0.0
    %5239 = vmatprep.subr.mxu0 0.0
    %5240 = vmatpush1.msra.mxu0 0.0
    %5241 = vmatprep.subr.mxu0 0.0
    %5242 = vmatpush1.msra.mxu0 0.0
    %5243 = vmatprep.subr.mxu0 0.0
    %5244 = vmatpush1.msra.mxu0 0.0
    %5245 = vmatprep.subr.mxu0 0.0
    %5246 = vmatpush1.msra.mxu0 0.0
    %5247 = vmatprep.subr.mxu0 0.0
    %5248 = vmatpush1.msra.mxu0 0.0
    %5249 = vmatprep.subr.mxu0 0.0
    %5250 = vmatpush1.msra.mxu0 0.0
    %5251 = vmatprep.subr.mxu0 0.0
    %5252 = vmatpush1.msra.mxu0 0.0
    %5253 = vmatprep.subr.mxu0 0.0
    %5254 = vmatpush1.msra.mxu0 0.0
    %5255 = vmatprep.subr.mxu0 0.0
    %5256 = vmatpush1.msra.mxu0 0.0
    %5257 = vmatprep.subr.mxu0 0.0
    %5258 = vmatpush1.msra.mxu0 0.0
    %5259 = vmatprep.subr.mxu0 0.0
    %5260 = vmatpush1.msra.mxu0 0.0
    %5261 = vmatprep.subr.mxu0 0.0
    %5262 = vmatpush1.msra.mxu0 0.0
    %5263 = vmatprep.subr.mxu0 0.0
    %5264 = vmatpush1.msra.mxu0 0.0
    %5265 = vmatprep.subr.mxu0 0.0
    %5266 = vmatpush1.msra.mxu0 0.0
    %5267 = vmatprep.subr.mxu0 0.0
    %5268 = vmatpush1.msra.mxu0 0.0
    %5269 = vmatprep.subr.mxu0 0.0
    %5270 = vmatpush1.msra.mxu0 0.0
    %5271 = vmatprep.subr.mxu0 0.0
    %5272 = vmatpush1.msra.mxu0 0.0
    %5273 = vmatprep.subr.mxu0 0.0
    %5274 = vmatpush1.msra.mxu0 0.0
    %5275 = vmatprep.subr.mxu0 0.0
    %5276 = vmatpush1.msra.mxu0 0.0
    %5277 = vmatprep.subr.mxu0 0.0
    %5278 = vmatpush1.msra.mxu0 0.0
    %5279 = vmatprep.subr.mxu0 0.0
    %5280 = vmatpush1.msra.mxu0 0.0
    %5281 = vmatprep.subr.mxu0 0.0
    %5282 = vmatpush1.msra.mxu0 0.0
    %5283 = vmatprep.subr.mxu0 0.0
    %5284 = vmatpush1.msra.mxu0 0.0
    %5285 = vmatprep.subr.mxu0 0.0
    %5286 = vmatpush1.msra.mxu0 0.0
    %5287 = vmatprep.subr.mxu0 0.0
    %5288 = vmatpush1.msra.mxu0 0.0
    %5289 = vmatprep.subr.mxu0 0.0
    %5290 = vmatpush1.msra.mxu0 0.0
    %5291 = vmatprep.subr.mxu0 0.0
    %5292 = vmatpush1.msra.mxu0 0.0
    %5293 = vmatprep.mubr.f32.mxu0 0.0
    %5294 = vmatmul.mubr.f32.gmra.mrb[0].mxu0 %v5227
    %v5295 = vpop.f32.mrb[0].mxu0
    %v5296 = vadd.f32 0.0, %v5295
    %v5297 = vpop.f32.mrb[0].mxu0
    %5298 = vdwg.mxu0
    %v5300 = vrot.slane %v5296, 2
    %v5302 = vadd.f32 %v4262, %v5300
    %v5303 = vxor.u32 %v5224, 2147483648
    %v5304 = vmul.f32 %v5303, 1.442695
    %v5305 = vpow.pop %v5304
    %v5306 = vadd.f32 %v5305, 1.0
    %v5307 = vrcp.pop %v5306
    %v5308 = vmul.f32 1.0, %v5307
    %v5309 = vtanh.pop %v5224
    %v5310 = vsel %vm173, %v5309, %v5308
    %v5312 = vrot.slane %v5104, 6
    %v5314 = vmul.f32 %v5310, %v5312
    %5316 = vrot.lane.b32.xlu0 %v5310, 64
    %v5317 = vpop.permute.xlu0 %5316
    %v5319 = vmul.f32 %v5310, %v5317
    %5321 = vrot.lane.b32.xlu0 %v5319, 32
    %v5322 = vpop.permute.xlu0 %5321
    %v5324 = vadd.f32 %v5314, %v5322
    %v5325 = vtanh.pop %v5324
    %5327 = vrot.lane.b32.xlu0 %v5325, 64
    %v5328 = vpop.permute.xlu0 %5327
    %v5330 = vmul.f32 %v5310, %v5328
    %v5331 = vxor.u32 %v5302, 2147483648
    %v5332 = vmul.f32 %v5331, 1.442695
    %v5333 = vpow.pop %v5332
    %v5334 = vadd.f32 %v5333, 1.0
    %v5335 = vrcp.pop %v5334
    %v5336 = vmul.f32 1.0, %v5335
    %v5337 = vtanh.pop %v5302
    %v5338 = vsel %vm173, %v5337, %v5336
    %v5340 = vrot.slane %v5132, 2
    %v5342 = vmul.f32 %v5338, %v5340
    %5344 = vrot.lane.b32.xlu0 %v5338, 64
    %v5345 = vpop.permute.xlu0 %5344
    %v5347 = vmul.f32 %v5338, %v5345
    %5349 = vrot.lane.b32.xlu0 %v5347, 32
    %v5350 = vpop.permute.xlu0 %5349
    %v5352 = vadd.f32 %v5342, %v5350
    %v5353 = vtanh.pop %v5352
    %5355 = vrot.lane.b32.xlu0 %v5353, 64
    %v5356 = vpop.permute.xlu0 %5355
    %v5358 = vmul.f32 %v5338, %v5356
    %5360 = vrot.lane.b32.xlu0 %v5330, 32
    %v5361 = vpop.permute.xlu0 %5360
    %5363 = vst.msk [vmem:[#allocation2 + $0x8] sm:$0x3] %vm562, %v5361
    %5365 = vrot.lane.b32.xlu0 %v5358, 64
    %v5366 = vpop.permute.xlu0 %5365
    %5368 = vst.msk [vmem:[#allocation2] sm:$0xc0] %vm568, %v5366
    %v5369 = vsel %vm359, %v5361, 0
    %5371 = vmatprep.subr.mxu0 0.0
    %5372 = vmatpush1.msra.mxu0 %v4270
    %5373 = vmatprep.subr.mxu0 0.0
    %5374 = vmatpush1.msra.mxu0 %v4271
    %5375 = vmatprep.subr.mxu0 0.0
    %5376 = vmatpush1.msra.mxu0 %v4272
    %5377 = vmatprep.subr.mxu0 0.0
    %5378 = vmatpush1.msra.mxu0 %v4273
    %5379 = vmatprep.subr.mxu0 0.0
    %5380 = vmatpush1.msra.mxu0 0.0
    %5381 = vmatprep.subr.mxu0 0.0
    %5382 = vmatpush1.msra.mxu0 0.0
    %5383 = vmatprep.subr.mxu0 0.0
    %5384 = vmatpush1.msra.mxu0 0.0
    %5385 = vmatprep.subr.mxu0 0.0
    %5386 = vmatpush1.msra.mxu0 0.0
    %5387 = vmatprep.subr.mxu0 0.0
    %5388 = vmatpush1.msra.mxu0 0.0
    %5389 = vmatprep.subr.mxu0 0.0
    %5390 = vmatpush1.msra.mxu0 0.0
    %5391 = vmatprep.subr.mxu0 0.0
    %5392 = vmatpush1.msra.mxu0 0.0
    %5393 = vmatprep.subr.mxu0 0.0
    %5394 = vmatpush1.msra.mxu0 0.0
    %5395 = vmatprep.subr.mxu0 0.0
    %5396 = vmatpush1.msra.mxu0 0.0
    %5397 = vmatprep.subr.mxu0 0.0
    %5398 = vmatpush1.msra.mxu0 0.0
    %5399 = vmatprep.subr.mxu0 0.0
    %5400 = vmatpush1.msra.mxu0 0.0
    %5401 = vmatprep.subr.mxu0 0.0
    %5402 = vmatpush1.msra.mxu0 0.0
    %5403 = vmatprep.subr.mxu0 0.0
    %5404 = vmatpush1.msra.mxu0 0.0
    %5405 = vmatprep.subr.mxu0 0.0
    %5406 = vmatpush1.msra.mxu0 0.0
    %5407 = vmatprep.subr.mxu0 0.0
    %5408 = vmatpush1.msra.mxu0 0.0
    %5409 = vmatprep.subr.mxu0 0.0
    %5410 = vmatpush1.msra.mxu0 0.0
    %5411 = vmatprep.subr.mxu0 0.0
    %5412 = vmatpush1.msra.mxu0 0.0
    %5413 = vmatprep.subr.mxu0 0.0
    %5414 = vmatpush1.msra.mxu0 0.0
    %5415 = vmatprep.subr.mxu0 0.0
    %5416 = vmatpush1.msra.mxu0 0.0
    %5417 = vmatprep.subr.mxu0 0.0
    %5418 = vmatpush1.msra.mxu0 0.0
    %5419 = vmatprep.subr.mxu0 0.0
    %5420 = vmatpush1.msra.mxu0 0.0
    %5421 = vmatprep.subr.mxu0 0.0
    %5422 = vmatpush1.msra.mxu0 0.0
    %5423 = vmatprep.subr.mxu0 0.0
    %5424 = vmatpush1.msra.mxu0 0.0
    %5425 = vmatprep.subr.mxu0 0.0
    %5426 = vmatpush1.msra.mxu0 0.0
    %5427 = vmatprep.subr.mxu0 0.0
    %5428 = vmatpush1.msra.mxu0 0.0
    %5429 = vmatprep.subr.mxu0 0.0
    %5430 = vmatpush1.msra.mxu0 0.0
    %5431 = vmatprep.subr.mxu0 0.0
    %5432 = vmatpush1.msra.mxu0 0.0
    %5433 = vmatprep.subr.mxu0 0.0
    %5434 = vmatpush1.msra.mxu0 0.0
    %5435 = vmatprep.mubr.f32.mxu0 0.0
    %5436 = vmatmul.mubr.f32.gmra.mrb[0].mxu0 %v5369
    %v5437 = vpop.f32.mrb[0].mxu0
    %v5438 = vadd.f32 0.0, %v5437
    %v5439 = vpop.f32.mrb[0].mxu0
    %5440 = vdwg.mxu0
    %v5442 = vrot.slane %v5438, 6
    %v5444 = vadd.f32 %v4177, %v5442
    %v5445 = vrot.slane %v5358, 6
    %5446 = vrot.lane.b32.xlu0 %v5445, 32
    %v5447 = vpop.permute.xlu0 %5446
    %v5448 = vsel %vm359, %v5447, 0
    %5450 = vmatprep.subr.mxu0 0.0
    %5451 = vmatpush1.msra.mxu0 %v4274
    %5452 = vmatprep.subr.mxu0 0.0
    %5453 = vmatpush1.msra.mxu0 %v4275
    %5454 = vmatprep.subr.mxu0 0.0
    %5455 = vmatpush1.msra.mxu0 %v4276
    %5456 = vmatprep.subr.mxu0 0.0
    %5457 = vmatpush1.msra.mxu0 %v4277
    %5458 = vmatprep.subr.mxu0 0.0
    %5459 = vmatpush1.msra.mxu0 0.0
    %5460 = vmatprep.subr.mxu0 0.0
    %5461 = vmatpush1.msra.mxu0 0.0
    %5462 = vmatprep.subr.mxu0 0.0
    %5463 = vmatpush1.msra.mxu0 0.0
    %5464 = vmatprep.subr.mxu0 0.0
    %5465 = vmatpush1.msra.mxu0 0.0
    %5466 = vmatprep.subr.mxu0 0.0
    %5467 = vmatpush1.msra.mxu0 0.0
    %5468 = vmatprep.subr.mxu0 0.0
    %5469 = vmatpush1.msra.mxu0 0.0
    %5470 = vmatprep.subr.mxu0 0.0
    %5471 = vmatpush1.msra.mxu0 0.0
    %5472 = vmatprep.subr.mxu0 0.0
    %5473 = vmatpush1.msra.mxu0 0.0
    %5474 = vmatprep.subr.mxu0 0.0
    %5475 = vmatpush1.msra.mxu0 0.0
    %5476 = vmatprep.subr.mxu0 0.0
    %5477 = vmatpush1.msra.mxu0 0.0
    %5478 = vmatprep.subr.mxu0 0.0
    %5479 = vmatpush1.msra.mxu0 0.0
    %5480 = vmatprep.subr.mxu0 0.0
    %5481 = vmatpush1.msra.mxu0 0.0
    %5482 = vmatprep.subr.mxu0 0.0
    %5483 = vmatpush1.msra.mxu0 0.0
    %5484 = vmatprep.subr.mxu0 0.0
    %5485 = vmatpush1.msra.mxu0 0.0
    %5486 = vmatprep.subr.mxu0 0.0
    %5487 = vmatpush1.msra.mxu0 0.0
    %5488 = vmatprep.subr.mxu0 0.0
    %5489 = vmatpush1.msra.mxu0 0.0
    %5490 = vmatprep.subr.mxu0 0.0
    %5491 = vmatpush1.msra.mxu0 0.0
    %5492 = vmatprep.subr.mxu0 0.0
    %5493 = vmatpush1.msra.mxu0 0.0
    %5494 = vmatprep.subr.mxu0 0.0
    %5495 = vmatpush1.msra.mxu0 0.0
    %5496 = vmatprep.subr.mxu0 0.0
    %5497 = vmatpush1.msra.mxu0 0.0
    %5498 = vmatprep.subr.mxu0 0.0
    %5499 = vmatpush1.msra.mxu0 0.0
    %5500 = vmatprep.subr.mxu0 0.0
    %5501 = vmatpush1.msra.mxu0 0.0
    %5502 = vmatprep.subr.mxu0 0.0
    %5503 = vmatpush1.msra.mxu0 0.0
    %5504 = vmatprep.subr.mxu0 0.0
    %5505 = vmatpush1.msra.mxu0 0.0
    %5506 = vmatprep.subr.mxu0 0.0
    %5507 = vmatpush1.msra.mxu0 0.0
    %5508 = vmatprep.subr.mxu0 0.0
    %5509 = vmatpush1.msra.mxu0 0.0
    %5510 = vmatprep.subr.mxu0 0.0
    %5511 = vmatpush1.msra.mxu0 0.0
    %5512 = vmatprep.subr.mxu0 0.0
    %5513 = vmatpush1.msra.mxu0 0.0
    %5514 = vmatprep.mubr.f32.mxu0 0.0
    %5515 = vmatmul.mubr.f32.gmra.mrb[0].mxu0 %v5448
    %v5516 = vpop.f32.mrb[0].mxu0
    %v5517 = vadd.f32 0.0, %v5516
    %v5518 = vpop.f32.mrb[0].mxu0
    %5519 = vdwg.mxu0
    %v5521 = vrot.slane %v5517, 4
    %v5523 = vadd.f32 %v4262, %v5521
    %v5524 = vxor.u32 %v5444, 2147483648
    %v5525 = vmul.f32 %v5524, 1.442695
    %v5526 = vpow.pop %v5525
    %v5527 = vadd.f32 %v5526, 1.0
    %v5528 = vrcp.pop %v5527
    %v5529 = vmul.f32 1.0, %v5528
    %v5530 = vtanh.pop %v5444
    %v5531 = vsel %vm173, %v5530, %v5529
    %v5533 = vrot.slane %v5324, 6
    %v5535 = vmul.f32 %v5531, %v5533
    %5537 = vrot.lane.b32.xlu0 %v5531, 64
    %v5538 = vpop.permute.xlu0 %5537
    %v5540 = vmul.f32 %v5531, %v5538
    %5542 = vrot.lane.b32.xlu0 %v5540, 32
    %v5543 = vpop.permute.xlu0 %5542
    %v5545 = vadd.f32 %v5535, %v5543
    %v5546 = vtanh.pop %v5545
    %5548 = vrot.lane.b32.xlu0 %v5546, 64
    %v5549 = vpop.permute.xlu0 %5548
    %v5551 = vmul.f32 %v5531, %v5549
    %v5552 = vxor.u32 %v5523, 2147483648
    %v5553 = vmul.f32 %v5552, 1.442695
    %v5554 = vpow.pop %v5553
    %v5555 = vadd.f32 %v5554, 1.0
    %v5556 = vrcp.pop %v5555
    %v5557 = vmul.f32 1.0, %v5556
    %v5558 = vtanh.pop %v5523
    %v5559 = vsel %vm173, %v5558, %v5557
    %v5561 = vrot.slane %v5352, 2
    %v5563 = vmul.f32 %v5559, %v5561
    %5565 = vrot.lane.b32.xlu0 %v5559, 64
    %v5566 = vpop.permute.xlu0 %5565
    %v5568 = vmul.f32 %v5559, %v5566
    %5570 = vrot.lane.b32.xlu0 %v5568, 32
    %v5571 = vpop.permute.xlu0 %5570
    %v5573 = vadd.f32 %v5563, %v5571
    %v5574 = vtanh.pop %v5573
    %5576 = vrot.lane.b32.xlu0 %v5574, 64
    %v5577 = vpop.permute.xlu0 %5576
    %v5579 = vmul.f32 %v5559, %v5577
    %5581 = vrot.lane.b32.xlu0 %v5551, 32
    %v5582 = vpop.permute.xlu0 %5581
    %5584 = vst.msk [vmem:[#allocation2 + $0x8] sm:$0xc] %vm785, %v5582
    %5586 = vrot.lane.b32.xlu0 %v5579, 64
    %v5587 = vpop.permute.xlu0 %5586
    %5589 = vst.msk [vmem:[#allocation2] sm:$0x30] %vm791, %v5587
    %v5590 = vrot.slane %v5551, 2
    %5591 = vrot.lane.b32.xlu0 %v5590, 32
    %v5592 = vpop.permute.xlu0 %5591
    %v5593 = vsel %vm359, %v5592, 0
    %5595 = vmatprep.subr.mxu0 0.0
    %5596 = vmatpush1.msra.mxu0 %v4270
    %5597 = vmatprep.subr.mxu0 0.0
    %5598 = vmatpush1.msra.mxu0 %v4271
    %5599 = vmatprep.subr.mxu0 0.0
    %5600 = vmatpush1.msra.mxu0 %v4272
    %5601 = vmatprep.subr.mxu0 0.0
    %5602 = vmatpush1.msra.mxu0 %v4273
    %5603 = vmatprep.subr.mxu0 0.0
    %5604 = vmatpush1.msra.mxu0 0.0
    %5605 = vmatprep.subr.mxu0 0.0
    %5606 = vmatpush1.msra.mxu0 0.0
    %5607 = vmatprep.subr.mxu0 0.0
    %5608 = vmatpush1.msra.mxu0 0.0
    %5609 = vmatprep.subr.mxu0 0.0
    %5610 = vmatpush1.msra.mxu0 0.0
    %5611 = vmatprep.subr.mxu0 0.0
    %5612 = vmatpush1.msra.mxu0 0.0
    %5613 = vmatprep.subr.mxu0 0.0
    %5614 = vmatpush1.msra.mxu0 0.0
    %5615 = vmatprep.subr.mxu0 0.0
    %5616 = vmatpush1.msra.mxu0 0.0
    %5617 = vmatprep.subr.mxu0 0.0
    %5618 = vmatpush1.msra.mxu0 0.0
    %5619 = vmatprep.subr.mxu0 0.0
    %5620 = vmatpush1.msra.mxu0 0.0
    %5621 = vmatprep.subr.mxu0 0.0
    %5622 = vmatpush1.msra.mxu0 0.0
    %5623 = vmatprep.subr.mxu0 0.0
    %5624 = vmatpush1.msra.mxu0 0.0
    %5625 = vmatprep.subr.mxu0 0.0
    %5626 = vmatpush1.msra.mxu0 0.0
    %5627 = vmatprep.subr.mxu0 0.0
    %5628 = vmatpush1.msra.mxu0 0.0
    %5629 = vmatprep.subr.mxu0 0.0
    %5630 = vmatpush1.msra.mxu0 0.0
    %5631 = vmatprep.subr.mxu0 0.0
    %5632 = vmatpush1.msra.mxu0 0.0
    %5633 = vmatprep.subr.mxu0 0.0
    %5634 = vmatpush1.msra.mxu0 0.0
    %5635 = vmatprep.subr.mxu0 0.0
    %5636 = vmatpush1.msra.mxu0 0.0
    %5637 = vmatprep.subr.mxu0 0.0
    %5638 = vmatpush1.msra.mxu0 0.0
    %5639 = vmatprep.subr.mxu0 0.0
    %5640 = vmatpush1.msra.mxu0 0.0
    %5641 = vmatprep.subr.mxu0 0.0
    %5642 = vmatpush1.msra.mxu0 0.0
    %5643 = vmatprep.subr.mxu0 0.0
    %5644 = vmatpush1.msra.mxu0 0.0
    %5645 = vmatprep.subr.mxu0 0.0
    %5646 = vmatpush1.msra.mxu0 0.0
    %5647 = vmatprep.subr.mxu0 0.0
    %5648 = vmatpush1.msra.mxu0 0.0
    %5649 = vmatprep.subr.mxu0 0.0
    %5650 = vmatpush1.msra.mxu0 0.0
    %5651 = vmatprep.subr.mxu0 0.0
    %5652 = vmatpush1.msra.mxu0 0.0
    %5653 = vmatprep.subr.mxu0 0.0
    %5654 = vmatpush1.msra.mxu0 0.0
    %5655 = vmatprep.subr.mxu0 0.0
    %5656 = vmatpush1.msra.mxu0 0.0
    %5657 = vmatprep.subr.mxu0 0.0
    %5658 = vmatpush1.msra.mxu0 0.0
    %5659 = vmatprep.mubr.f32.mxu0 0.0
    %5660 = vmatmul.mubr.f32.gmra.mrb[0].mxu0 %v5593
    %v5661 = vpop.f32.mrb[0].mxu0
    %v5662 = vadd.f32 0.0, %v5661
    %v5663 = vpop.f32.mrb[0].mxu0
    %5664 = vdwg.mxu0
    %v5666 = vrot.slane %v5662, 4
    %v5668 = vadd.f32 %v4177, %v5666
    %v5669 = vrot.slane %v5579, 4
    %5670 = vrot.lane.b32.xlu0 %v5669, 32
    %v5671 = vpop.permute.xlu0 %5670
    %v5672 = vsel %vm359, %v5671, 0
    %5674 = vmatprep.subr.mxu0 0.0
    %5675 = vmatpush1.msra.mxu0 %v4274
    %5676 = vmatprep.subr.mxu0 0.0
    %5677 = vmatpush1.msra.mxu0 %v4275
    %5678 = vmatprep.subr.mxu0 0.0
    %5679 = vmatpush1.msra.mxu0 %v4276
    %5680 = vmatprep.subr.mxu0 0.0
    %5681 = vmatpush1.msra.mxu0 %v4277
    %5682 = vmatprep.subr.mxu0 0.0
    %5683 = vmatpush1.msra.mxu0 0.0
    %5684 = vmatprep.subr.mxu0 0.0
    %5685 = vmatpush1.msra.mxu0 0.0
    %5686 = vmatprep.subr.mxu0 0.0
    %5687 = vmatpush1.msra.mxu0 0.0
    %5688 = vmatprep.subr.mxu0 0.0
    %5689 = vmatpush1.msra.mxu0 0.0
    %5690 = vmatprep.subr.mxu0 0.0
    %5691 = vmatpush1.msra.mxu0 0.0
    %5692 = vmatprep.subr.mxu0 0.0
    %5693 = vmatpush1.msra.mxu0 0.0
    %5694 = vmatprep.subr.mxu0 0.0
    %5695 = vmatpush1.msra.mxu0 0.0
    %5696 = vmatprep.subr.mxu0 0.0
    %5697 = vmatpush1.msra.mxu0 0.0
    %5698 = vmatprep.subr.mxu0 0.0
    %5699 = vmatpush1.msra.mxu0 0.0
    %5700 = vmatprep.subr.mxu0 0.0
    %5701 = vmatpush1.msra.mxu0 0.0
    %5702 = vmatprep.subr.mxu0 0.0
    %5703 = vmatpush1.msra.mxu0 0.0
    %5704 = vmatprep.subr.mxu0 0.0
    %5705 = vmatpush1.msra.mxu0 0.0
    %5706 = vmatprep.subr.mxu0 0.0
    %5707 = vmatpush1.msra.mxu0 0.0
    %5708 = vmatprep.subr.mxu0 0.0
    %5709 = vmatpush1.msra.mxu0 0.0
    %5710 = vmatprep.subr.mxu0 0.0
    %5711 = vmatpush1.msra.mxu0 0.0
    %5712 = vmatprep.subr.mxu0 0.0
    %5713 = vmatpush1.msra.mxu0 0.0
    %5714 = vmatprep.subr.mxu0 0.0
    %5715 = vmatpush1.msra.mxu0 0.0
    %5716 = vmatprep.subr.mxu0 0.0
    %5717 = vmatpush1.msra.mxu0 0.0
    %5718 = vmatprep.subr.mxu0 0.0
    %5719 = vmatpush1.msra.mxu0 0.0
    %5720 = vmatprep.subr.mxu0 0.0
    %5721 = vmatpush1.msra.mxu0 0.0
    %5722 = vmatprep.subr.mxu0 0.0
    %5723 = vmatpush1.msra.mxu0 0.0
    %5724 = vmatprep.subr.mxu0 0.0
    %5725 = vmatpush1.msra.mxu0 0.0
    %5726 = vmatprep.subr.mxu0 0.0
    %5727 = vmatpush1.msra.mxu0 0.0
    %5728 = vmatprep.subr.mxu0 0.0
    %5729 = vmatpush1.msra.mxu0 0.0
    %5730 = vmatprep.subr.mxu0 0.0
    %5731 = vmatpush1.msra.mxu0 0.0
    %5732 = vmatprep.subr.mxu0 0.0
    %5733 = vmatpush1.msra.mxu0 0.0
    %5734 = vmatprep.subr.mxu0 0.0
    %5735 = vmatpush1.msra.mxu0 0.0
    %5736 = vmatprep.subr.mxu0 0.0
    %5737 = vmatpush1.msra.mxu0 0.0
    %5738 = vmatprep.mubr.f32.mxu0 0.0
    %5739 = vmatmul.mubr.f32.gmra.mrb[0].mxu0 %v5672
    %v5740 = vpop.f32.mrb[0].mxu0
    %v5741 = vadd.f32 0.0, %v5740
    %v5742 = vpop.f32.mrb[0].mxu0
    %5743 = vdwg.mxu0
    %v5745 = vrot.slane %v5741, 6
    %v5747 = vadd.f32 %v4262, %v5745
    %v5748 = vxor.u32 %v5668, 2147483648
    %v5749 = vmul.f32 %v5748, 1.442695
    %v5750 = vpow.pop %v5749
    %v5751 = vadd.f32 %v5750, 1.0
    %v5752 = vrcp.pop %v5751
    %v5753 = vmul.f32 1.0, %v5752
    %v5754 = vtanh.pop %v5668
    %v5755 = vsel %vm173, %v5754, %v5753
    %v5757 = vrot.slane %v5545, 6
    %v5759 = vmul.f32 %v5755, %v5757
    %5761 = vrot.lane.b32.xlu0 %v5755, 64
    %v5762 = vpop.permute.xlu0 %5761
    %v5764 = vmul.f32 %v5755, %v5762
    %5766 = vrot.lane.b32.xlu0 %v5764, 32
    %v5767 = vpop.permute.xlu0 %5766
    %v5769 = vadd.f32 %v5759, %v5767
    %v5770 = vtanh.pop %v5769
    %5772 = vrot.lane.b32.xlu0 %v5770, 64
    %v5773 = vpop.permute.xlu0 %5772
    %v5775 = vmul.f32 %v5755, %v5773
    %v5776 = vxor.u32 %v5747, 2147483648
    %v5777 = vmul.f32 %v5776, 1.442695
    %v5778 = vpow.pop %v5777
    %v5779 = vadd.f32 %v5778, 1.0
    %v5780 = vrcp.pop %v5779
    %v5781 = vmul.f32 1.0, %v5780
    %v5782 = vtanh.pop %v5747
    %v5783 = vsel %vm173, %v5782, %v5781
    %v5785 = vrot.slane %v5573, 2
    %v5787 = vmul.f32 %v5783, %v5785
    %5789 = vrot.lane.b32.xlu0 %v5783, 64
    %v5790 = vpop.permute.xlu0 %5789
    %v5792 = vmul.f32 %v5783, %v5790
    %5794 = vrot.lane.b32.xlu0 %v5792, 32
    %v5795 = vpop.permute.xlu0 %5794
    %v5797 = vadd.f32 %v5787, %v5795
    %v5798 = vtanh.pop %v5797
    %5800 = vrot.lane.b32.xlu0 %v5798, 64
    %v5801 = vpop.permute.xlu0 %5800
    %v5803 = vmul.f32 %v5783, %v5801
    %5805 = vrot.lane.b32.xlu0 %v5775, 32
    %v5806 = vpop.permute.xlu0 %5805
    %5808 = vst.msk [vmem:[#allocation2 + $0x8] sm:$0x30] %vm1011, %v5806
    %5810 = vrot.lane.b32.xlu0 %v5803, 64
    %v5811 = vpop.permute.xlu0 %5810
    %5813 = vst.msk [vmem:[#allocation2] sm:$0xc] %vm1017, %v5811
    %v5814 = vrot.slane %v5775, 4
    %5815 = vrot.lane.b32.xlu0 %v5814, 32
    %v5816 = vpop.permute.xlu0 %5815
    %v5817 = vsel %vm359, %v5816, 0
    %5819 = vmatprep.subr.mxu0 0.0
    %5820 = vmatpush1.msra.mxu0 %v4270
    %5821 = vmatprep.subr.mxu0 0.0
    %5822 = vmatpush1.msra.mxu0 %v4271
    %5823 = vmatprep.subr.mxu0 0.0
    %5824 = vmatpush1.msra.mxu0 %v4272
    %5825 = vmatprep.subr.mxu0 0.0
    %5826 = vmatpush1.msra.mxu0 %v4273
    %5827 = vmatprep.subr.mxu0 0.0
    %5828 = vmatpush1.msra.mxu0 0.0
    %5829 = vmatprep.subr.mxu0 0.0
    %5830 = vmatpush1.msra.mxu0 0.0
    %5831 = vmatprep.subr.mxu0 0.0
    %5832 = vmatpush1.msra.mxu0 0.0
    %5833 = vmatprep.subr.mxu0 0.0
    %5834 = vmatpush1.msra.mxu0 0.0
    %5835 = vmatprep.subr.mxu0 0.0
    %5836 = vmatpush1.msra.mxu0 0.0
    %5837 = vmatprep.subr.mxu0 0.0
    %5838 = vmatpush1.msra.mxu0 0.0
    %5839 = vmatprep.subr.mxu0 0.0
    %5840 = vmatpush1.msra.mxu0 0.0
    %5841 = vmatprep.subr.mxu0 0.0
    %5842 = vmatpush1.msra.mxu0 0.0
    %5843 = vmatprep.subr.mxu0 0.0
    %5844 = vmatpush1.msra.mxu0 0.0
    %5845 = vmatprep.subr.mxu0 0.0
    %5846 = vmatpush1.msra.mxu0 0.0
    %5847 = vmatprep.subr.mxu0 0.0
    %5848 = vmatpush1.msra.mxu0 0.0
    %5849 = vmatprep.subr.mxu0 0.0
    %5850 = vmatpush1.msra.mxu0 0.0
    %5851 = vmatprep.subr.mxu0 0.0
    %5852 = vmatpush1.msra.mxu0 0.0
    %5853 = vmatprep.subr.mxu0 0.0
    %5854 = vmatpush1.msra.mxu0 0.0
    %5855 = vmatprep.subr.mxu0 0.0
    %5856 = vmatpush1.msra.mxu0 0.0
    %5857 = vmatprep.subr.mxu0 0.0
    %5858 = vmatpush1.msra.mxu0 0.0
    %5859 = vmatprep.subr.mxu0 0.0
    %5860 = vmatpush1.msra.mxu0 0.0
    %5861 = vmatprep.subr.mxu0 0.0
    %5862 = vmatpush1.msra.mxu0 0.0
    %5863 = vmatprep.subr.mxu0 0.0
    %5864 = vmatpush1.msra.mxu0 0.0
    %5865 = vmatprep.subr.mxu0 0.0
    %5866 = vmatpush1.msra.mxu0 0.0
    %5867 = vmatprep.subr.mxu0 0.0
    %5868 = vmatpush1.msra.mxu0 0.0
    %5869 = vmatprep.subr.mxu0 0.0
    %5870 = vmatpush1.msra.mxu0 0.0
    %5871 = vmatprep.subr.mxu0 0.0
    %5872 = vmatpush1.msra.mxu0 0.0
    %5873 = vmatprep.subr.mxu0 0.0
    %5874 = vmatpush1.msra.mxu0 0.0
    %5875 = vmatprep.subr.mxu0 0.0
    %5876 = vmatpush1.msra.mxu0 0.0
    %5877 = vmatprep.subr.mxu0 0.0
    %5878 = vmatpush1.msra.mxu0 0.0
    %5879 = vmatprep.subr.mxu0 0.0
    %5880 = vmatpush1.msra.mxu0 0.0
    %5881 = vmatprep.subr.mxu0 0.0
    %5882 = vmatpush1.msra.mxu0 0.0
    %5883 = vmatprep.mubr.f32.mxu0 0.0
    %5884 = vmatmul.mubr.f32.gmra.mrb[0].mxu0 %v5817
    %v5885 = vpop.f32.mrb[0].mxu0
    %v5886 = vadd.f32 0.0, %v5885
    %v5887 = vpop.f32.mrb[0].mxu0
    %5888 = vdwg.mxu0
    %v5890 = vrot.slane %v5886, 2
    %v5892 = vadd.f32 %v4177, %v5890
    %v5893 = vrot.slane %v5803, 2
    %5894 = vrot.lane.b32.xlu0 %v5893, 32
    %v5895 = vpop.permute.xlu0 %5894
    %v5896 = vsel %vm359, %v5895, 0
    %5898 = vmatprep.subr.mxu0 0.0
    %5899 = vmatpush1.msra.mxu0 %v4274
    %5900 = vmatprep.subr.mxu0 0.0
    %5901 = vmatpush1.msra.mxu0 %v4275
    %5902 = vmatprep.subr.mxu0 0.0
    %5903 = vmatpush1.msra.mxu0 %v4276
    %5904 = vmatprep.subr.mxu0 0.0
    %5905 = vmatpush1.msra.mxu0 %v4277
    %5906 = vmatprep.subr.mxu0 0.0
    %5907 = vmatpush1.msra.mxu0 0.0
    %5908 = vmatprep.subr.mxu0 0.0
    %5909 = vmatpush1.msra.mxu0 0.0
    %5910 = vmatprep.subr.mxu0 0.0
    %5911 = vmatpush1.msra.mxu0 0.0
    %5912 = vmatprep.subr.mxu0 0.0
    %5913 = vmatpush1.msra.mxu0 0.0
    %5914 = vmatprep.subr.mxu0 0.0
    %5915 = vmatpush1.msra.mxu0 0.0
    %5916 = vmatprep.subr.mxu0 0.0
    %5917 = vmatpush1.msra.mxu0 0.0
    %5918 = vmatprep.subr.mxu0 0.0
    %5919 = vmatpush1.msra.mxu0 0.0
    %5920 = vmatprep.subr.mxu0 0.0
    %5921 = vmatpush1.msra.mxu0 0.0
    %5922 = vmatprep.subr.mxu0 0.0
    %5923 = vmatpush1.msra.mxu0 0.0
    %5924 = vmatprep.subr.mxu0 0.0
    %5925 = vmatpush1.msra.mxu0 0.0
    %5926 = vmatprep.subr.mxu0 0.0
    %5927 = vmatpush1.msra.mxu0 0.0
    %5928 = vmatprep.subr.mxu0 0.0
    %5929 = vmatpush1.msra.mxu0 0.0
    %5930 = vmatprep.subr.mxu0 0.0
    %5931 = vmatpush1.msra.mxu0 0.0
    %5932 = vmatprep.subr.mxu0 0.0
    %5933 = vmatpush1.msra.mxu0 0.0
    %5934 = vmatprep.subr.mxu0 0.0
    %5935 = vmatpush1.msra.mxu0 0.0
    %5936 = vmatprep.subr.mxu0 0.0
    %5937 = vmatpush1.msra.mxu0 0.0
    %5938 = vmatprep.subr.mxu0 0.0
    %5939 = vmatpush1.msra.mxu0 0.0
    %5940 = vmatprep.subr.mxu0 0.0
    %5941 = vmatpush1.msra.mxu0 0.0
    %5942 = vmatprep.subr.mxu0 0.0
    %5943 = vmatpush1.msra.mxu0 0.0
    %5944 = vmatprep.subr.mxu0 0.0
    %5945 = vmatpush1.msra.mxu0 0.0
    %5946 = vmatprep.subr.mxu0 0.0
    %5947 = vmatpush1.msra.mxu0 0.0
    %5948 = vmatprep.subr.mxu0 0.0
    %5949 = vmatpush1.msra.mxu0 0.0
    %5950 = vmatprep.subr.mxu0 0.0
    %5951 = vmatpush1.msra.mxu0 0.0
    %5952 = vmatprep.subr.mxu0 0.0
    %5953 = vmatpush1.msra.mxu0 0.0
    %5954 = vmatprep.subr.mxu0 0.0
    %5955 = vmatpush1.msra.mxu0 0.0
    %5956 = vmatprep.subr.mxu0 0.0
    %5957 = vmatpush1.msra.mxu0 0.0
    %5958 = vmatprep.subr.mxu0 0.0
    %5959 = vmatpush1.msra.mxu0 0.0
    %5960 = vmatprep.subr.mxu0 0.0
    %5961 = vmatpush1.msra.mxu0 0.0
    %5962 = vmatprep.mubr.f32.mxu0 0.0
    %5963 = vmatmul.mubr.f32.gmra.mrb[0].mxu0 %v5896
    %v5964 = vpop.f32.mrb[0].mxu0
    %v5965 = vadd.f32 0.0, %v5964
    %v5966 = vpop.f32.mrb[0].mxu0
    %5967 = vdwg.mxu0
    %v5968 = vadd.f32 %v4262, %v5965
    %v5969 = vxor.u32 %v5892, 2147483648
    %v5970 = vmul.f32 %v5969, 1.442695
    %v5971 = vpow.pop %v5970
    %v5972 = vadd.f32 %v5971, 1.0
    %v5973 = vrcp.pop %v5972
    %v5974 = vmul.f32 1.0, %v5973
    %v5975 = vtanh.pop %v5892
    %v5976 = vsel %vm173, %v5975, %v5974
    %v5978 = vrot.slane %v5769, 6
    %v5980 = vmul.f32 %v5976, %v5978
    %5982 = vrot.lane.b32.xlu0 %v5976, 64
    %v5983 = vpop.permute.xlu0 %5982
    %v5985 = vmul.f32 %v5976, %v5983
    %5987 = vrot.lane.b32.xlu0 %v5985, 32
    %v5988 = vpop.permute.xlu0 %5987
    %v5990 = vadd.f32 %v5980, %v5988
    %v5991 = vtanh.pop %v5990
    %5993 = vrot.lane.b32.xlu0 %v5991, 64
    %v5994 = vpop.permute.xlu0 %5993
    %v5996 = vmul.f32 %v5976, %v5994
    %v5997 = vxor.u32 %v5968, 2147483648
    %v5998 = vmul.f32 %v5997, 1.442695
    %v5999 = vpow.pop %v5998
    %v6000 = vadd.f32 %v5999, 1.0
    %v6001 = vrcp.pop %v6000
    %v6002 = vmul.f32 1.0, %v6001
    %v6003 = vtanh.pop %v5968
    %v6004 = vsel %vm173, %v6003, %v6002
    %v6006 = vrot.slane %v5797, 2
    %v6008 = vmul.f32 %v6004, %v6006
    %6010 = vrot.lane.b32.xlu0 %v6004, 64
    %v6011 = vpop.permute.xlu0 %6010
    %v6013 = vmul.f32 %v6004, %v6011
    %6015 = vrot.lane.b32.xlu0 %v6013, 32
    %v6016 = vpop.permute.xlu0 %6015
    %v6018 = vadd.f32 %v6008, %v6016
    %v6019 = vtanh.pop %v6018
    %6021 = vrot.lane.b32.xlu0 %v6019, 64
    %v6022 = vpop.permute.xlu0 %6021
    %v6024 = vmul.f32 %v6004, %v6022
    %6026 = vrot.lane.b32.xlu0 %v5996, 32
    %v6027 = vpop.permute.xlu0 %6026
    %6029 = vst.msk [vmem:[#allocation2 + $0x8] sm:$0xc0] %vm1234, %v6027
    %6031 = vrot.lane.b32.xlu0 %v6024, 64
    %v6032 = vpop.permute.xlu0 %6031
    %6034 = vst.msk [vmem:[#allocation2] sm:$0x3] %vm1240, %v6032
    %v6035 = vld [vmem:[#allocation2] sm:$0xff]
    %v6036 = vld [vmem:[#allocation2 + $0x8] sm:$0xff]
    %v6037 = vld [vmem:[%s19] sm:$0xff]
    %v6038 = vld [vmem:[%s19 + $0x8] sm:$0xff]
    %v6039 = vld [vmem:[%s19 + $0x10] sm:$0xff]
    %v6040 = vld [vmem:[%s19 + $0x18] sm:$0xff]
    %v6041 = vld [vmem:[%s19 + $0x20] sm:$0xff]
    %v6042 = vld [vmem:[%s19 + $0x28] sm:$0xff]
    %v6043 = vld [vmem:[%s19 + $0x30] sm:$0xff]
    %v6044 = vld [vmem:[%s19 + $0x38] sm:$0xff]
    %v6045 = vld [vmem:[%s21] sm:$0x1]
    %v6047 = vlaneseq
    %v6048 = vshrl.u32 %v6047, 7
    %v6049 = vsub.s32 0, %v6048
    %v6050 = vrot.slane %v6045, %v6049
    %v6053 = vsel %vm2145, %v6035, 0
    %v6056 = vsel %vm2145, %v6036, 0
    %6058 = vmatprep.subr.mxu0 0.0
    %6059 = vmatpush1.msra.mxu0 %v6037
    %6060 = vmatprep.subr.mxu0 0.0
    %6061 = vmatpush1.msra.mxu0 %v6038
    %6062 = vmatprep.subr.mxu0 0.0
    %6063 = vmatpush1.msra.mxu0 %v6039
    %6064 = vmatprep.subr.mxu0 0.0
    %6065 = vmatpush1.msra.mxu0 %v6040
    %6066 = vmatprep.subr.mxu0 0.0
    %6067 = vmatpush1.msra.mxu0 %v6041
    %6068 = vmatprep.subr.mxu0 0.0
    %6069 = vmatpush1.msra.mxu0 %v6042
    %6070 = vmatprep.subr.mxu0 0.0
    %6071 = vmatpush1.msra.mxu0 %v6043
    %6072 = vmatprep.subr.mxu0 0.0
    %6073 = vmatpush1.msra.mxu0 %v6044
    %6074 = vmatprep.subr.mxu0 0.0
    %6075 = vmatpush1.msra.mxu0 0.0
    %6076 = vmatprep.subr.mxu0 0.0
    %6077 = vmatpush1.msra.mxu0 0.0
    %6078 = vmatprep.subr.mxu0 0.0
    %6079 = vmatpush1.msra.mxu0 0.0
    %6080 = vmatprep.subr.mxu0 0.0
    %6081 = vmatpush1.msra.mxu0 0.0
    %6082 = vmatprep.subr.mxu0 0.0
    %6083 = vmatpush1.msra.mxu0 0.0
    %6084 = vmatprep.subr.mxu0 0.0
    %6085 = vmatpush1.msra.mxu0 0.0
    %6086 = vmatprep.subr.mxu0 0.0
    %6087 = vmatpush1.msra.mxu0 0.0
    %6088 = vmatprep.subr.mxu0 0.0
    %6089 = vmatpush1.msra.mxu0 0.0
    %6090 = vmatprep.subr.mxu0 0.0
    %6091 = vmatpush1.msra.mxu0 0.0
    %6092 = vmatprep.subr.mxu0 0.0
    %6093 = vmatpush1.msra.mxu0 0.0
    %6094 = vmatprep.subr.mxu0 0.0
    %6095 = vmatpush1.msra.mxu0 0.0
    %6096 = vmatprep.subr.mxu0 0.0
    %6097 = vmatpush1.msra.mxu0 0.0
    %6098 = vmatprep.subr.mxu0 0.0
    %6099 = vmatpush1.msra.mxu0 0.0
    %6100 = vmatprep.subr.mxu0 0.0
    %6101 = vmatpush1.msra.mxu0 0.0
    %6102 = vmatprep.subr.mxu0 0.0
    %6103 = vmatpush1.msra.mxu0 0.0
    %6104 = vmatprep.subr.mxu0 0.0
    %6105 = vmatpush1.msra.mxu0 0.0
    %6106 = vmatprep.subr.mxu0 0.0
    %6107 = vmatpush1.msra.mxu0 0.0
    %6108 = vmatprep.subr.mxu0 0.0
    %6109 = vmatpush1.msra.mxu0 0.0
    %6110 = vmatprep.subr.mxu0 0.0
    %6111 = vmatpush1.msra.mxu0 0.0
    %6112 = vmatprep.subr.mxu0 0.0
    %6113 = vmatpush1.msra.mxu0 0.0
    %6114 = vmatprep.subr.mxu0 0.0
    %6115 = vmatpush1.msra.mxu0 0.0
    %6116 = vmatprep.subr.mxu0 0.0
    %6117 = vmatpush1.msra.mxu0 0.0
    %6118 = vmatprep.subr.mxu0 0.0
    %6119 = vmatpush1.msra.mxu0 0.0
    %6120 = vmatprep.subr.mxu0 0.0
    %6121 = vmatpush1.msra.mxu0 0.0
    %6122 = vmatprep.mubr.f32.mxu0 0.0
    %6123 = vmatmul.mubr.f32.gmra.mrb[0].mxu0 %v6053
    %v6124 = vpop.f32.mrb[0].mxu0
    %v6125 = vadd.f32 %v6050, %v6124
    %v6126 = vpop.f32.mrb[0].mxu0
    %6127 = vmatprep.mubr.f32.mxu0 0.0
    %6128 = vmatmul.mubr.f32.gmra.mrb[0].mxu0 %v6056
    %v6129 = vpop.f32.mrb[0].mxu0
    %v6130 = vadd.f32 %v6050, %v6129
    %v6131 = vpop.f32.mrb[0].mxu0
    %6132 = vdwg.mxu0
    %v6133 = vld [vmem:[%s22] sm:$0xff]
    %v6134 = vld [vmem:[%s22 + $0x8] sm:$0xff]
    %v6135 = vld [vmem:[%s22 + $0x10] sm:$0xff]
    %v6136 = vld [vmem:[%s22 + $0x18] sm:$0xff]
    %v6137 = vld [vmem:[%s22 + $0x20] sm:$0xff]
    %v6138 = vld [vmem:[%s22 + $0x28] sm:$0xff]
    %v6139 = vld [vmem:[%s22 + $0x30] sm:$0xff]
    %v6140 = vld [vmem:[%s22 + $0x38] sm:$0xff]
    %v6141 = vld [vmem:[%s24] sm:$0x1]
    %v6143 = vlaneseq
    %v6144 = vshrl.u32 %v6143, 7
    %v6145 = vsub.s32 0, %v6144
    %v6146 = vrot.slane %v6141, %v6145
    %6148 = vmatprep.subr.mxu0 0.0
    %6149 = vmatpush1.msra.mxu0 %v6133
    %6150 = vmatprep.subr.mxu0 0.0
    %6151 = vmatpush1.msra.mxu0 %v6134
    %6152 = vmatprep.subr.mxu0 0.0
    %6153 = vmatpush1.msra.mxu0 %v6135
    %6154 = vmatprep.subr.mxu0 0.0
    %6155 = vmatpush1.msra.mxu0 %v6136
    %6156 = vmatprep.subr.mxu0 0.0
    %6157 = vmatpush1.msra.mxu0 %v6137
    %6158 = vmatprep.subr.mxu0 0.0
    %6159 = vmatpush1.msra.mxu0 %v6138
    %6160 = vmatprep.subr.mxu0 0.0
    %6161 = vmatpush1.msra.mxu0 %v6139
    %6162 = vmatprep.subr.mxu0 0.0
    %6163 = vmatpush1.msra.mxu0 %v6140
    %6164 = vmatprep.subr.mxu0 0.0
    %6165 = vmatpush1.msra.mxu0 0.0
    %6166 = vmatprep.subr.mxu0 0.0
    %6167 = vmatpush1.msra.mxu0 0.0
    %6168 = vmatprep.subr.mxu0 0.0
    %6169 = vmatpush1.msra.mxu0 0.0
    %6170 = vmatprep.subr.mxu0 0.0
    %6171 = vmatpush1.msra.mxu0 0.0
    %6172 = vmatprep.subr.mxu0 0.0
    %6173 = vmatpush1.msra.mxu0 0.0
    %6174 = vmatprep.subr.mxu0 0.0
    %6175 = vmatpush1.msra.mxu0 0.0
    %6176 = vmatprep.subr.mxu0 0.0
    %6177 = vmatpush1.msra.mxu0 0.0
    %6178 = vmatprep.subr.mxu0 0.0
    %6179 = vmatpush1.msra.mxu0 0.0
    %6180 = vmatprep.subr.mxu0 0.0
    %6181 = vmatpush1.msra.mxu0 0.0
    %6182 = vmatprep.subr.mxu0 0.0
    %6183 = vmatpush1.msra.mxu0 0.0
    %6184 = vmatprep.subr.mxu0 0.0
    %6185 = vmatpush1.msra.mxu0 0.0
    %6186 = vmatprep.subr.mxu0 0.0
    %6187 = vmatpush1.msra.mxu0 0.0
    %6188 = vmatprep.subr.mxu0 0.0
    %6189 = vmatpush1.msra.mxu0 0.0
    %6190 = vmatprep.subr.mxu0 0.0
    %6191 = vmatpush1.msra.mxu0 0.0
    %6192 = vmatprep.subr.mxu0 0.0
    %6193 = vmatpush1.msra.mxu0 0.0
    %6194 = vmatprep.subr.mxu0 0.0
    %6195 = vmatpush1.msra.mxu0 0.0
    %6196 = vmatprep.subr.mxu0 0.0
    %6197 = vmatpush1.msra.mxu0 0.0
    %6198 = vmatprep.subr.mxu0 0.0
    %6199 = vmatpush1.msra.mxu0 0.0
    %6200 = vmatprep.subr.mxu0 0.0
    %6201 = vmatpush1.msra.mxu0 0.0
    %6202 = vmatprep.subr.mxu0 0.0
    %6203 = vmatpush1.msra.mxu0 0.0
    %6204 = vmatprep.subr.mxu0 0.0
    %6205 = vmatpush1.msra.mxu0 0.0
    %6206 = vmatprep.subr.mxu0 0.0
    %6207 = vmatpush1.msra.mxu0 0.0
    %6208 = vmatprep.subr.mxu0 0.0
    %6209 = vmatpush1.msra.mxu0 0.0
    %6210 = vmatprep.subr.mxu0 0.0
    %6211 = vmatpush1.msra.mxu0 0.0
    %6212 = vmatprep.mubr.f32.mxu0 0.0
    %6213 = vmatmul.mubr.f32.gmra.mrb[0].mxu0 %v6053
    %v6214 = vpop.f32.mrb[0].mxu0
    %v6215 = vpop.f32.mrb[0].mxu0
    %6216 = vmatprep.mubr.f32.mxu0 0.0
    %6217 = vmatmul.mubr.f32.gmra.mrb[0].mxu0 %v6056
    %v6218 = vpop.f32.mrb[0].mxu0
    %v6219 = vadd.f32 %v6146, %v6218
    %v6220 = vpop.f32.mrb[0].mxu0
    %6221 = vdwg.mxu0
    %v6222 = vld [vmem:[%s20] sm:$0xff]
    %v6223 = vld [vmem:[%s20 + $0x8] sm:$0xff]
    %v6224 = vld [vmem:[%s20 + $0x10] sm:$0xff]
    %v6225 = vld [vmem:[%s20 + $0x18] sm:$0xff]
    %v6226 = vxor.u32 %v6219, 2147483648
    %v6227 = vmul.f32 %v6226, 1.442695
    %v6228 = vpow.pop %v6227
    %v6229 = vadd.f32 %v6228, 1.0
    %v6230 = vrcp.pop %v6229
    %v6231 = vmul.f32 1.0, %v6230
    %v6232 = vtanh.pop %v6219
    %v6233 = vsel %vm173, %v6232, %v6231
    %v6234 = vmul.f32 %v6233, 0.0
    %6236 = vrot.lane.b32.xlu0 %v6233, 64
    %v6237 = vpop.permute.xlu0 %6236
    %v6239 = vmul.f32 %v6233, %v6237
    %6241 = vrot.lane.b32.xlu0 %v6239, 32
    %v6242 = vpop.permute.xlu0 %6241
    %v6244 = vadd.f32 %v6234, %v6242
    %v6245 = vtanh.pop %v6244
    %6247 = vrot.lane.b32.xlu0 %v6245, 64
    %v6248 = vpop.permute.xlu0 %6247
    %v6250 = vmul.f32 %v6233, %v6248
    %6251 = vmatprep.subr.mxu0 0.0
    %6252 = vmatpush1.msra.mxu0 %v6222
    %6253 = vmatprep.subr.mxu0 0.0
    %6254 = vmatpush1.msra.mxu0 %v6223
    %6255 = vmatprep.subr.mxu0 0.0
    %6256 = vmatpush1.msra.mxu0 %v6224
    %6257 = vmatprep.subr.mxu0 0.0
    %6258 = vmatpush1.msra.mxu0 %v6225
    %6259 = vmatprep.subr.mxu0 0.0
    %6260 = vmatpush1.msra.mxu0 0.0
    %6261 = vmatprep.subr.mxu0 0.0
    %6262 = vmatpush1.msra.mxu0 0.0
    %6263 = vmatprep.subr.mxu0 0.0
    %6264 = vmatpush1.msra.mxu0 0.0
    %6265 = vmatprep.subr.mxu0 0.0
    %6266 = vmatpush1.msra.mxu0 0.0
    %6267 = vmatprep.subr.mxu0 0.0
    %6268 = vmatpush1.msra.mxu0 0.0
    %6269 = vmatprep.subr.mxu0 0.0
    %6270 = vmatpush1.msra.mxu0 0.0
    %6271 = vmatprep.subr.mxu0 0.0
    %6272 = vmatpush1.msra.mxu0 0.0
    %6273 = vmatprep.subr.mxu0 0.0
    %6274 = vmatpush1.msra.mxu0 0.0
    %6275 = vmatprep.subr.mxu0 0.0
    %6276 = vmatpush1.msra.mxu0 0.0
    %6277 = vmatprep.subr.mxu0 0.0
    %6278 = vmatpush1.msra.mxu0 0.0
    %6279 = vmatprep.subr.mxu0 0.0
    %6280 = vmatpush1.msra.mxu0 0.0
    %6281 = vmatprep.subr.mxu0 0.0
    %6282 = vmatpush1.msra.mxu0 0.0
    %6283 = vmatprep.subr.mxu0 0.0
    %6284 = vmatpush1.msra.mxu0 0.0
    %6285 = vmatprep.subr.mxu0 0.0
    %6286 = vmatpush1.msra.mxu0 0.0
    %6287 = vmatprep.subr.mxu0 0.0
    %6288 = vmatpush1.msra.mxu0 0.0
    %6289 = vmatprep.subr.mxu0 0.0
    %6290 = vmatpush1.msra.mxu0 0.0
    %6291 = vmatprep.subr.mxu0 0.0
    %6292 = vmatpush1.msra.mxu0 0.0
    %6293 = vmatprep.subr.mxu0 0.0
    %6294 = vmatpush1.msra.mxu0 0.0
    %6295 = vmatprep.subr.mxu0 0.0
    %6296 = vmatpush1.msra.mxu0 0.0
    %6297 = vmatprep.subr.mxu0 0.0
    %6298 = vmatpush1.msra.mxu0 0.0
    %6299 = vmatprep.subr.mxu0 0.0
    %6300 = vmatpush1.msra.mxu0 0.0
    %6301 = vmatprep.subr.mxu0 0.0
    %6302 = vmatpush1.msra.mxu0 0.0
    %6303 = vmatprep.subr.mxu0 0.0
    %6304 = vmatpush1.msra.mxu0 0.0
    %6305 = vmatprep.subr.mxu0 0.0
    %6306 = vmatpush1.msra.mxu0 0.0
    %6307 = vmatprep.subr.mxu0 0.0
    %6308 = vmatpush1.msra.mxu0 0.0
    %6309 = vmatprep.subr.mxu0 0.0
    %6310 = vmatpush1.msra.mxu0 0.0
    %6311 = vmatprep.subr.mxu0 0.0
    %6312 = vmatpush1.msra.mxu0 0.0
    %6313 = vmatprep.subr.mxu0 0.0
    %6314 = vmatpush1.msra.mxu0 0.0
    %6315 = vmatprep.mubr.f32.mxu0 0.0
    %6316 = vmatmul.mubr.f32.gmra.mrb[0].mxu0 %v361
    %v6317 = vpop.f32.mrb[0].mxu0
    %v6318 = vadd.f32 0.0, %v6317
    %v6319 = vpop.f32.mrb[0].mxu0
    %6320 = vdwg.mxu0
    %v6321 = vadd.f32 %v6125, %v6318
    %v6322 = vxor.u32 %v6321, 2147483648
    %v6323 = vmul.f32 %v6322, 1.442695
    %v6324 = vpow.pop %v6323
    %v6325 = vadd.f32 %v6324, 1.0
    %v6326 = vrcp.pop %v6325
    %v6327 = vmul.f32 1.0, %v6326
    %v6328 = vtanh.pop %v6321
    %v6329 = vsel %vm173, %v6328, %v6327
    %v6330 = vmul.f32 %v6329, 0.0
    %6332 = vrot.lane.b32.xlu0 %v6329, 64
    %v6333 = vpop.permute.xlu0 %6332
    %v6335 = vmul.f32 %v6329, %v6333
    %6337 = vrot.lane.b32.xlu0 %v6335, 32
    %v6338 = vpop.permute.xlu0 %6337
    %v6340 = vadd.f32 %v6330, %v6338
    %v6341 = vtanh.pop %v6340
    %6343 = vrot.lane.b32.xlu0 %v6341, 64
    %v6344 = vpop.permute.xlu0 %6343
    %v6346 = vmul.f32 %v6329, %v6344
    %6348 = vrot.lane.b32.xlu0 %v6346, 32
    %v6349 = vpop.permute.xlu0 %6348
    %v6350 = vsel %vm359, %v6349, 0
    %6352 = vmatprep.subr.mxu0 0.0
    %6353 = vmatpush1.msra.mxu0 %v6222
    %6354 = vmatprep.subr.mxu0 0.0
    %6355 = vmatpush1.msra.mxu0 %v6223
    %6356 = vmatprep.subr.mxu0 0.0
    %6357 = vmatpush1.msra.mxu0 %v6224
    %6358 = vmatprep.subr.mxu0 0.0
    %6359 = vmatpush1.msra.mxu0 %v6225
    %6360 = vmatprep.subr.mxu0 0.0
    %6361 = vmatpush1.msra.mxu0 0.0
    %6362 = vmatprep.subr.mxu0 0.0
    %6363 = vmatpush1.msra.mxu0 0.0
    %6364 = vmatprep.subr.mxu0 0.0
    %6365 = vmatpush1.msra.mxu0 0.0
    %6366 = vmatprep.subr.mxu0 0.0
    %6367 = vmatpush1.msra.mxu0 0.0
    %6368 = vmatprep.subr.mxu0 0.0
    %6369 = vmatpush1.msra.mxu0 0.0
    %6370 = vmatprep.subr.mxu0 0.0
    %6371 = vmatpush1.msra.mxu0 0.0
    %6372 = vmatprep.subr.mxu0 0.0
    %6373 = vmatpush1.msra.mxu0 0.0
    %6374 = vmatprep.subr.mxu0 0.0
    %6375 = vmatpush1.msra.mxu0 0.0
    %6376 = vmatprep.subr.mxu0 0.0
    %6377 = vmatpush1.msra.mxu0 0.0
    %6378 = vmatprep.subr.mxu0 0.0
    %6379 = vmatpush1.msra.mxu0 0.0
    %6380 = vmatprep.subr.mxu0 0.0
    %6381 = vmatpush1.msra.mxu0 0.0
    %6382 = vmatprep.subr.mxu0 0.0
    %6383 = vmatpush1.msra.mxu0 0.0
    %6384 = vmatprep.subr.mxu0 0.0
    %6385 = vmatpush1.msra.mxu0 0.0
    %6386 = vmatprep.subr.mxu0 0.0
    %6387 = vmatpush1.msra.mxu0 0.0
    %6388 = vmatprep.subr.mxu0 0.0
    %6389 = vmatpush1.msra.mxu0 0.0
    %6390 = vmatprep.subr.mxu0 0.0
    %6391 = vmatpush1.msra.mxu0 0.0
    %6392 = vmatprep.subr.mxu0 0.0
    %6393 = vmatpush1.msra.mxu0 0.0
    %6394 = vmatprep.subr.mxu0 0.0
    %6395 = vmatpush1.msra.mxu0 0.0
    %6396 = vmatprep.subr.mxu0 0.0
    %6397 = vmatpush1.msra.mxu0 0.0
    %6398 = vmatprep.subr.mxu0 0.0
    %6399 = vmatpush1.msra.mxu0 0.0
    %6400 = vmatprep.subr.mxu0 0.0
    %6401 = vmatpush1.msra.mxu0 0.0
    %6402 = vmatprep.subr.mxu0 0.0
    %6403 = vmatpush1.msra.mxu0 0.0
    %6404 = vmatprep.subr.mxu0 0.0
    %6405 = vmatpush1.msra.mxu0 0.0
    %6406 = vmatprep.subr.mxu0 0.0
    %6407 = vmatpush1.msra.mxu0 0.0
    %6408 = vmatprep.subr.mxu0 0.0
    %6409 = vmatpush1.msra.mxu0 0.0
    %6410 = vmatprep.subr.mxu0 0.0
    %6411 = vmatpush1.msra.mxu0 0.0
    %6412 = vmatprep.subr.mxu0 0.0
    %6413 = vmatpush1.msra.mxu0 0.0
    %6414 = vmatprep.subr.mxu0 0.0
    %6415 = vmatpush1.msra.mxu0 0.0
    %6416 = vmatprep.mubr.f32.mxu0 0.0
    %6417 = vmatmul.mubr.f32.gmra.mrb[0].mxu0 %v6350
    %v6418 = vpop.f32.mrb[0].mxu0
    %v6419 = vadd.f32 0.0, %v6418
    %v6420 = vpop.f32.mrb[0].mxu0
    %6421 = vdwg.mxu0
    %v6423 = vrot.slane %v6419, 6
    %v6425 = vadd.f32 %v6125, %v6423
    %v6426 = vxor.u32 %v6425, 2147483648
    %v6427 = vmul.f32 %v6426, 1.442695
    %v6428 = vpow.pop %v6427
    %v6429 = vadd.f32 %v6428, 1.0
    %v6430 = vrcp.pop %v6429
    %v6431 = vmul.f32 1.0, %v6430
    %v6432 = vtanh.pop %v6425
    %v6433 = vsel %vm173, %v6432, %v6431
    %v6435 = vrot.slane %v6340, 6
    %v6437 = vmul.f32 %v6433, %v6435
    %6439 = vrot.lane.b32.xlu0 %v6433, 64
    %v6440 = vpop.permute.xlu0 %6439
    %v6442 = vmul.f32 %v6433, %v6440
    %6444 = vrot.lane.b32.xlu0 %v6442, 32
    %v6445 = vpop.permute.xlu0 %6444
    %v6447 = vadd.f32 %v6437, %v6445
    %v6448 = vtanh.pop %v6447
    %6450 = vrot.lane.b32.xlu0 %v6448, 64
    %v6451 = vpop.permute.xlu0 %6450
    %v6453 = vmul.f32 %v6433, %v6451
    %v6455 = vrot.slane %v6453, 2
    %6456 = vrot.lane.b32.xlu0 %v6455, 32
    %v6457 = vpop.permute.xlu0 %6456
    %v6458 = vsel %vm359, %v6457, 0
    %6460 = vmatprep.subr.mxu0 0.0
    %6461 = vmatpush1.msra.mxu0 %v6222
    %6462 = vmatprep.subr.mxu0 0.0
    %6463 = vmatpush1.msra.mxu0 %v6223
    %6464 = vmatprep.subr.mxu0 0.0
    %6465 = vmatpush1.msra.mxu0 %v6224
    %6466 = vmatprep.subr.mxu0 0.0
    %6467 = vmatpush1.msra.mxu0 %v6225
    %6468 = vmatprep.subr.mxu0 0.0
    %6469 = vmatpush1.msra.mxu0 0.0
    %6470 = vmatprep.subr.mxu0 0.0
    %6471 = vmatpush1.msra.mxu0 0.0
    %6472 = vmatprep.subr.mxu0 0.0
    %6473 = vmatpush1.msra.mxu0 0.0
    %6474 = vmatprep.subr.mxu0 0.0
    %6475 = vmatpush1.msra.mxu0 0.0
    %6476 = vmatprep.subr.mxu0 0.0
    %6477 = vmatpush1.msra.mxu0 0.0
    %6478 = vmatprep.subr.mxu0 0.0
    %6479 = vmatpush1.msra.mxu0 0.0
    %6480 = vmatprep.subr.mxu0 0.0
    %6481 = vmatpush1.msra.mxu0 0.0
    %6482 = vmatprep.subr.mxu0 0.0
    %6483 = vmatpush1.msra.mxu0 0.0
    %6484 = vmatprep.subr.mxu0 0.0
    %6485 = vmatpush1.msra.mxu0 0.0
    %6486 = vmatprep.subr.mxu0 0.0
    %6487 = vmatpush1.msra.mxu0 0.0
    %6488 = vmatprep.subr.mxu0 0.0
    %6489 = vmatpush1.msra.mxu0 0.0
    %6490 = vmatprep.subr.mxu0 0.0
    %6491 = vmatpush1.msra.mxu0 0.0
    %6492 = vmatprep.subr.mxu0 0.0
    %6493 = vmatpush1.msra.mxu0 0.0
    %6494 = vmatprep.subr.mxu0 0.0
    %6495 = vmatpush1.msra.mxu0 0.0
    %6496 = vmatprep.subr.mxu0 0.0
    %6497 = vmatpush1.msra.mxu0 0.0
    %6498 = vmatprep.subr.mxu0 0.0
    %6499 = vmatpush1.msra.mxu0 0.0
    %6500 = vmatprep.subr.mxu0 0.0
    %6501 = vmatpush1.msra.mxu0 0.0
    %6502 = vmatprep.subr.mxu0 0.0
    %6503 = vmatpush1.msra.mxu0 0.0
    %6504 = vmatprep.subr.mxu0 0.0
    %6505 = vmatpush1.msra.mxu0 0.0
    %6506 = vmatprep.subr.mxu0 0.0
    %6507 = vmatpush1.msra.mxu0 0.0
    %6508 = vmatprep.subr.mxu0 0.0
    %6509 = vmatpush1.msra.mxu0 0.0
    %6510 = vmatprep.subr.mxu0 0.0
    %6511 = vmatpush1.msra.mxu0 0.0
    %6512 = vmatprep.subr.mxu0 0.0
    %6513 = vmatpush1.msra.mxu0 0.0
    %6514 = vmatprep.subr.mxu0 0.0
    %6515 = vmatpush1.msra.mxu0 0.0
    %6516 = vmatprep.subr.mxu0 0.0
    %6517 = vmatpush1.msra.mxu0 0.0
    %6518 = vmatprep.subr.mxu0 0.0
    %6519 = vmatpush1.msra.mxu0 0.0
    %6520 = vmatprep.subr.mxu0 0.0
    %6521 = vmatpush1.msra.mxu0 0.0
    %6522 = vmatprep.subr.mxu0 0.0
    %6523 = vmatpush1.msra.mxu0 0.0
    %6524 = vmatprep.mubr.f32.mxu0 0.0
    %6525 = vmatmul.mubr.f32.gmra.mrb[0].mxu0 %v6458
    %v6526 = vpop.f32.mrb[0].mxu0
    %v6527 = vadd.f32 0.0, %v6526
    %v6528 = vpop.f32.mrb[0].mxu0
    %6529 = vdwg.mxu0
    %v6531 = vrot.slane %v6527, 4
    %v6533 = vadd.f32 %v6125, %v6531
    %v6534 = vxor.u32 %v6533, 2147483648
    %v6535 = vmul.f32 %v6534, 1.442695
    %v6536 = vpow.pop %v6535
    %v6537 = vadd.f32 %v6536, 1.0
    %v6538 = vrcp.pop %v6537
    %v6539 = vmul.f32 1.0, %v6538
    %v6540 = vtanh.pop %v6533
    %v6541 = vsel %vm173, %v6540, %v6539
    %v6543 = vrot.slane %v6447, 6
    %v6545 = vmul.f32 %v6541, %v6543
    %6547 = vrot.lane.b32.xlu0 %v6541, 64
    %v6548 = vpop.permute.xlu0 %6547
    %v6550 = vmul.f32 %v6541, %v6548
    %6552 = vrot.lane.b32.xlu0 %v6550, 32
    %v6553 = vpop.permute.xlu0 %6552
    %v6555 = vadd.f32 %v6545, %v6553
    %v6556 = vtanh.pop %v6555
    %6558 = vrot.lane.b32.xlu0 %v6556, 64
    %v6559 = vpop.permute.xlu0 %6558
    %v6561 = vmul.f32 %v6541, %v6559
    %v6563 = vrot.slane %v6561, 4
    %6564 = vrot.lane.b32.xlu0 %v6563, 32
    %v6565 = vpop.permute.xlu0 %6564
    %v6566 = vsel %vm359, %v6565, 0
    %6568 = vmatprep.subr.mxu0 0.0
    %6569 = vmatpush1.msra.mxu0 %v6222
    %6570 = vmatprep.subr.mxu0 0.0
    %6571 = vmatpush1.msra.mxu0 %v6223
    %6572 = vmatprep.subr.mxu0 0.0
    %6573 = vmatpush1.msra.mxu0 %v6224
    %6574 = vmatprep.subr.mxu0 0.0
    %6575 = vmatpush1.msra.mxu0 %v6225
    %6576 = vmatprep.subr.mxu0 0.0
    %6577 = vmatpush1.msra.mxu0 0.0
    %6578 = vmatprep.subr.mxu0 0.0
    %6579 = vmatpush1.msra.mxu0 0.0
    %6580 = vmatprep.subr.mxu0 0.0
    %6581 = vmatpush1.msra.mxu0 0.0
    %6582 = vmatprep.subr.mxu0 0.0
    %6583 = vmatpush1.msra.mxu0 0.0
    %6584 = vmatprep.subr.mxu0 0.0
    %6585 = vmatpush1.msra.mxu0 0.0
    %6586 = vmatprep.subr.mxu0 0.0
    %6587 = vmatpush1.msra.mxu0 0.0
    %6588 = vmatprep.subr.mxu0 0.0
    %6589 = vmatpush1.msra.mxu0 0.0
    %6590 = vmatprep.subr.mxu0 0.0
    %6591 = vmatpush1.msra.mxu0 0.0
    %6592 = vmatprep.subr.mxu0 0.0
    %6593 = vmatpush1.msra.mxu0 0.0
    %6594 = vmatprep.subr.mxu0 0.0
    %6595 = vmatpush1.msra.mxu0 0.0
    %6596 = vmatprep.subr.mxu0 0.0
    %6597 = vmatpush1.msra.mxu0 0.0
    %6598 = vmatprep.subr.mxu0 0.0
    %6599 = vmatpush1.msra.mxu0 0.0
    %6600 = vmatprep.subr.mxu0 0.0
    %6601 = vmatpush1.msra.mxu0 0.0
    %6602 = vmatprep.subr.mxu0 0.0
    %6603 = vmatpush1.msra.mxu0 0.0
    %6604 = vmatprep.subr.mxu0 0.0
    %6605 = vmatpush1.msra.mxu0 0.0
    %6606 = vmatprep.subr.mxu0 0.0
    %6607 = vmatpush1.msra.mxu0 0.0
    %6608 = vmatprep.subr.mxu0 0.0
    %6609 = vmatpush1.msra.mxu0 0.0
    %6610 = vmatprep.subr.mxu0 0.0
    %6611 = vmatpush1.msra.mxu0 0.0
    %6612 = vmatprep.subr.mxu0 0.0
    %6613 = vmatpush1.msra.mxu0 0.0
    %6614 = vmatprep.subr.mxu0 0.0
    %6615 = vmatpush1.msra.mxu0 0.0
    %6616 = vmatprep.subr.mxu0 0.0
    %6617 = vmatpush1.msra.mxu0 0.0
    %6618 = vmatprep.subr.mxu0 0.0
    %6619 = vmatpush1.msra.mxu0 0.0
    %6620 = vmatprep.subr.mxu0 0.0
    %6621 = vmatpush1.msra.mxu0 0.0
    %6622 = vmatprep.subr.mxu0 0.0
    %6623 = vmatpush1.msra.mxu0 0.0
    %6624 = vmatprep.subr.mxu0 0.0
    %6625 = vmatpush1.msra.mxu0 0.0
    %6626 = vmatprep.subr.mxu0 0.0
    %6627 = vmatpush1.msra.mxu0 0.0
    %6628 = vmatprep.subr.mxu0 0.0
    %6629 = vmatpush1.msra.mxu0 0.0
    %6630 = vmatprep.subr.mxu0 0.0
    %6631 = vmatpush1.msra.mxu0 0.0
    %6632 = vmatprep.mubr.f32.mxu0 0.0
    %6633 = vmatmul.mubr.f32.gmra.mrb[0].mxu0 %v6566
    %v6634 = vpop.f32.mrb[0].mxu0
    %v6635 = vadd.f32 0.0, %v6634
    %v6636 = vpop.f32.mrb[0].mxu0
    %6637 = vdwg.mxu0
    %v6639 = vrot.slane %v6635, 2
    %v6641 = vadd.f32 %v6125, %v6639
    %v6642 = vxor.u32 %v6641, 2147483648
    %v6643 = vmul.f32 %v6642, 1.442695
    %v6644 = vpow.pop %v6643
    %v6645 = vadd.f32 %v6644, 1.0
    %v6646 = vrcp.pop %v6645
    %v6647 = vmul.f32 1.0, %v6646
    %v6648 = vtanh.pop %v6641
    %v6649 = vsel %vm173, %v6648, %v6647
    %v6651 = vrot.slane %v6555, 6
    %v6653 = vmul.f32 %v6649, %v6651
    %6655 = vrot.lane.b32.xlu0 %v6649, 64
    %v6656 = vpop.permute.xlu0 %6655
    %v6658 = vmul.f32 %v6649, %v6656
    %6660 = vrot.lane.b32.xlu0 %v6658, 32
    %v6661 = vpop.permute.xlu0 %6660
    %v6663 = vadd.f32 %v6653, %v6661
    %v6664 = vtanh.pop %v6663
    %6666 = vrot.lane.b32.xlu0 %v6664, 64
    %v6667 = vpop.permute.xlu0 %6666
    %v6669 = vmul.f32 %v6649, %v6667
    %v6671 = vrot.slane %v6669, 6
    %6672 = vrot.lane.b32.xlu0 %v6671, 32
    %v6673 = vpop.permute.xlu0 %6672
    %v6674 = vsel %vm359, %v6673, 0
    %6676 = vmatprep.subr.mxu0 0.0
    %6677 = vmatpush1.msra.mxu0 %v6222
    %6678 = vmatprep.subr.mxu0 0.0
    %6679 = vmatpush1.msra.mxu0 %v6223
    %6680 = vmatprep.subr.mxu0 0.0
    %6681 = vmatpush1.msra.mxu0 %v6224
    %6682 = vmatprep.subr.mxu0 0.0
    %6683 = vmatpush1.msra.mxu0 %v6225
    %6684 = vmatprep.subr.mxu0 0.0
    %6685 = vmatpush1.msra.mxu0 0.0
    %6686 = vmatprep.subr.mxu0 0.0
    %6687 = vmatpush1.msra.mxu0 0.0
    %6688 = vmatprep.subr.mxu0 0.0
    %6689 = vmatpush1.msra.mxu0 0.0
    %6690 = vmatprep.subr.mxu0 0.0
    %6691 = vmatpush1.msra.mxu0 0.0
    %6692 = vmatprep.subr.mxu0 0.0
    %6693 = vmatpush1.msra.mxu0 0.0
    %6694 = vmatprep.subr.mxu0 0.0
    %6695 = vmatpush1.msra.mxu0 0.0
    %6696 = vmatprep.subr.mxu0 0.0
    %6697 = vmatpush1.msra.mxu0 0.0
    %6698 = vmatprep.subr.mxu0 0.0
    %6699 = vmatpush1.msra.mxu0 0.0
    %6700 = vmatprep.subr.mxu0 0.0
    %6701 = vmatpush1.msra.mxu0 0.0
    %6702 = vmatprep.subr.mxu0 0.0
    %6703 = vmatpush1.msra.mxu0 0.0
    %6704 = vmatprep.subr.mxu0 0.0
    %6705 = vmatpush1.msra.mxu0 0.0
    %6706 = vmatprep.subr.mxu0 0.0
    %6707 = vmatpush1.msra.mxu0 0.0
    %6708 = vmatprep.subr.mxu0 0.0
    %6709 = vmatpush1.msra.mxu0 0.0
    %6710 = vmatprep.subr.mxu0 0.0
    %6711 = vmatpush1.msra.mxu0 0.0
    %6712 = vmatprep.subr.mxu0 0.0
    %6713 = vmatpush1.msra.mxu0 0.0
    %6714 = vmatprep.subr.mxu0 0.0
    %6715 = vmatpush1.msra.mxu0 0.0
    %6716 = vmatprep.subr.mxu0 0.0
    %6717 = vmatpush1.msra.mxu0 0.0
    %6718 = vmatprep.subr.mxu0 0.0
    %6719 = vmatpush1.msra.mxu0 0.0
    %6720 = vmatprep.subr.mxu0 0.0
    %6721 = vmatpush1.msra.mxu0 0.0
    %6722 = vmatprep.subr.mxu0 0.0
    %6723 = vmatpush1.msra.mxu0 0.0
    %6724 = vmatprep.subr.mxu0 0.0
    %6725 = vmatpush1.msra.mxu0 0.0
    %6726 = vmatprep.subr.mxu0 0.0
    %6727 = vmatpush1.msra.mxu0 0.0
    %6728 = vmatprep.subr.mxu0 0.0
    %6729 = vmatpush1.msra.mxu0 0.0
    %6730 = vmatprep.subr.mxu0 0.0
    %6731 = vmatpush1.msra.mxu0 0.0
    %6732 = vmatprep.subr.mxu0 0.0
    %6733 = vmatpush1.msra.mxu0 0.0
    %6734 = vmatprep.subr.mxu0 0.0
    %6735 = vmatpush1.msra.mxu0 0.0
    %6736 = vmatprep.subr.mxu0 0.0
    %6737 = vmatpush1.msra.mxu0 0.0
    %6738 = vmatprep.subr.mxu0 0.0
    %6739 = vmatpush1.msra.mxu0 0.0
    %6740 = vmatprep.mubr.f32.mxu0 0.0
    %6741 = vmatmul.mubr.f32.gmra.mrb[0].mxu0 %v6674
    %v6742 = vpop.f32.mrb[0].mxu0
    %v6743 = vadd.f32 0.0, %v6742
    %v6744 = vpop.f32.mrb[0].mxu0
    %6745 = vdwg.mxu0
    %v6746 = vadd.f32 %v6130, %v6743
    %v6747 = vxor.u32 %v6746, 2147483648
    %v6748 = vmul.f32 %v6747, 1.442695
    %v6749 = vpow.pop %v6748
    %v6750 = vadd.f32 %v6749, 1.0
    %v6751 = vrcp.pop %v6750
    %v6752 = vmul.f32 1.0, %v6751
    %v6753 = vtanh.pop %v6746
    %v6754 = vsel %vm173, %v6753, %v6752
    %v6756 = vrot.slane %v6663, 6
    %v6758 = vmul.f32 %v6754, %v6756
    %6760 = vrot.lane.b32.xlu0 %v6754, 64
    %v6761 = vpop.permute.xlu0 %6760
    %v6763 = vmul.f32 %v6754, %v6761
    %6765 = vrot.lane.b32.xlu0 %v6763, 32
    %v6766 = vpop.permute.xlu0 %6765
    %v6768 = vadd.f32 %v6758, %v6766
    %v6769 = vtanh.pop %v6768
    %6771 = vrot.lane.b32.xlu0 %v6769, 64
    %v6772 = vpop.permute.xlu0 %6771
    %v6774 = vmul.f32 %v6754, %v6772
    %6776 = vrot.lane.b32.xlu0 %v6774, 32
    %v6777 = vpop.permute.xlu0 %6776
    %v6778 = vsel %vm359, %v6777, 0
    %6780 = vmatprep.subr.mxu0 0.0
    %6781 = vmatpush1.msra.mxu0 %v6222
    %6782 = vmatprep.subr.mxu0 0.0
    %6783 = vmatpush1.msra.mxu0 %v6223
    %6784 = vmatprep.subr.mxu0 0.0
    %6785 = vmatpush1.msra.mxu0 %v6224
    %6786 = vmatprep.subr.mxu0 0.0
    %6787 = vmatpush1.msra.mxu0 %v6225
    %6788 = vmatprep.subr.mxu0 0.0
    %6789 = vmatpush1.msra.mxu0 0.0
    %6790 = vmatprep.subr.mxu0 0.0
    %6791 = vmatpush1.msra.mxu0 0.0
    %6792 = vmatprep.subr.mxu0 0.0
    %6793 = vmatpush1.msra.mxu0 0.0
    %6794 = vmatprep.subr.mxu0 0.0
    %6795 = vmatpush1.msra.mxu0 0.0
    %6796 = vmatprep.subr.mxu0 0.0
    %6797 = vmatpush1.msra.mxu0 0.0
    %6798 = vmatprep.subr.mxu0 0.0
    %6799 = vmatpush1.msra.mxu0 0.0
    %6800 = vmatprep.subr.mxu0 0.0
    %6801 = vmatpush1.msra.mxu0 0.0
    %6802 = vmatprep.subr.mxu0 0.0
    %6803 = vmatpush1.msra.mxu0 0.0
    %6804 = vmatprep.subr.mxu0 0.0
    %6805 = vmatpush1.msra.mxu0 0.0
    %6806 = vmatprep.subr.mxu0 0.0
    %6807 = vmatpush1.msra.mxu0 0.0
    %6808 = vmatprep.subr.mxu0 0.0
    %6809 = vmatpush1.msra.mxu0 0.0
    %6810 = vmatprep.subr.mxu0 0.0
    %6811 = vmatpush1.msra.mxu0 0.0
    %6812 = vmatprep.subr.mxu0 0.0
    %6813 = vmatpush1.msra.mxu0 0.0
    %6814 = vmatprep.subr.mxu0 0.0
    %6815 = vmatpush1.msra.mxu0 0.0
    %6816 = vmatprep.subr.mxu0 0.0
    %6817 = vmatpush1.msra.mxu0 0.0
    %6818 = vmatprep.subr.mxu0 0.0
    %6819 = vmatpush1.msra.mxu0 0.0
    %6820 = vmatprep.subr.mxu0 0.0
    %6821 = vmatpush1.msra.mxu0 0.0
    %6822 = vmatprep.subr.mxu0 0.0
    %6823 = vmatpush1.msra.mxu0 0.0
    %6824 = vmatprep.subr.mxu0 0.0
    %6825 = vmatpush1.msra.mxu0 0.0
    %6826 = vmatprep.subr.mxu0 0.0
    %6827 = vmatpush1.msra.mxu0 0.0
    %6828 = vmatprep.subr.mxu0 0.0
    %6829 = vmatpush1.msra.mxu0 0.0
    %6830 = vmatprep.subr.mxu0 0.0
    %6831 = vmatpush1.msra.mxu0 0.0
    %6832 = vmatprep.subr.mxu0 0.0
    %6833 = vmatpush1.msra.mxu0 0.0
    %6834 = vmatprep.subr.mxu0 0.0
    %6835 = vmatpush1.msra.mxu0 0.0
    %6836 = vmatprep.subr.mxu0 0.0
    %6837 = vmatpush1.msra.mxu0 0.0
    %6838 = vmatprep.subr.mxu0 0.0
    %6839 = vmatpush1.msra.mxu0 0.0
    %6840 = vmatprep.subr.mxu0 0.0
    %6841 = vmatpush1.msra.mxu0 0.0
    %6842 = vmatprep.subr.mxu0 0.0
    %6843 = vmatpush1.msra.mxu0 0.0
    %6844 = vmatprep.mubr.f32.mxu0 0.0
    %6845 = vmatmul.mubr.f32.gmra.mrb[0].mxu0 %v6778
    %v6846 = vpop.f32.mrb[0].mxu0
    %v6847 = vadd.f32 0.0, %v6846
    %v6848 = vpop.f32.mrb[0].mxu0
    %6849 = vdwg.mxu0
    %v6851 = vrot.slane %v6847, 6
    %v6853 = vadd.f32 %v6130, %v6851
    %v6854 = vxor.u32 %v6853, 2147483648
    %v6855 = vmul.f32 %v6854, 1.442695
    %v6856 = vpow.pop %v6855
    %v6857 = vadd.f32 %v6856, 1.0
    %v6858 = vrcp.pop %v6857
    %v6859 = vmul.f32 1.0, %v6858
    %v6860 = vtanh.pop %v6853
    %v6861 = vsel %vm173, %v6860, %v6859
    %v6863 = vrot.slane %v6768, 6
    %v6865 = vmul.f32 %v6861, %v6863
    %6867 = vrot.lane.b32.xlu0 %v6861, 64
    %v6868 = vpop.permute.xlu0 %6867
    %v6870 = vmul.f32 %v6861, %v6868
    %6872 = vrot.lane.b32.xlu0 %v6870, 32
    %v6873 = vpop.permute.xlu0 %6872
    %v6875 = vadd.f32 %v6865, %v6873
    %v6876 = vtanh.pop %v6875
    %6878 = vrot.lane.b32.xlu0 %v6876, 64
    %v6879 = vpop.permute.xlu0 %6878
    %v6881 = vmul.f32 %v6861, %v6879
    %v6883 = vrot.slane %v6881, 2
    %6884 = vrot.lane.b32.xlu0 %v6883, 32
    %v6885 = vpop.permute.xlu0 %6884
    %v6886 = vsel %vm359, %v6885, 0
    %6888 = vmatprep.subr.mxu0 0.0
    %6889 = vmatpush1.msra.mxu0 %v6222
    %6890 = vmatprep.subr.mxu0 0.0
    %6891 = vmatpush1.msra.mxu0 %v6223
    %6892 = vmatprep.subr.mxu0 0.0
    %6893 = vmatpush1.msra.mxu0 %v6224
    %6894 = vmatprep.subr.mxu0 0.0
    %6895 = vmatpush1.msra.mxu0 %v6225
    %6896 = vmatprep.subr.mxu0 0.0
    %6897 = vmatpush1.msra.mxu0 0.0
    %6898 = vmatprep.subr.mxu0 0.0
    %6899 = vmatpush1.msra.mxu0 0.0
    %6900 = vmatprep.subr.mxu0 0.0
    %6901 = vmatpush1.msra.mxu0 0.0
    %6902 = vmatprep.subr.mxu0 0.0
    %6903 = vmatpush1.msra.mxu0 0.0
    %6904 = vmatprep.subr.mxu0 0.0
    %6905 = vmatpush1.msra.mxu0 0.0
    %6906 = vmatprep.subr.mxu0 0.0
    %6907 = vmatpush1.msra.mxu0 0.0
    %6908 = vmatprep.subr.mxu0 0.0
    %6909 = vmatpush1.msra.mxu0 0.0
    %6910 = vmatprep.subr.mxu0 0.0
    %6911 = vmatpush1.msra.mxu0 0.0
    %6912 = vmatprep.subr.mxu0 0.0
    %6913 = vmatpush1.msra.mxu0 0.0
    %6914 = vmatprep.subr.mxu0 0.0
    %6915 = vmatpush1.msra.mxu0 0.0
    %6916 = vmatprep.subr.mxu0 0.0
    %6917 = vmatpush1.msra.mxu0 0.0
    %6918 = vmatprep.subr.mxu0 0.0
    %6919 = vmatpush1.msra.mxu0 0.0
    %6920 = vmatprep.subr.mxu0 0.0
    %6921 = vmatpush1.msra.mxu0 0.0
    %6922 = vmatprep.subr.mxu0 0.0
    %6923 = vmatpush1.msra.mxu0 0.0
    %6924 = vmatprep.subr.mxu0 0.0
    %6925 = vmatpush1.msra.mxu0 0.0
    %6926 = vmatprep.subr.mxu0 0.0
    %6927 = vmatpush1.msra.mxu0 0.0
    %6928 = vmatprep.subr.mxu0 0.0
    %6929 = vmatpush1.msra.mxu0 0.0
    %6930 = vmatprep.subr.mxu0 0.0
    %6931 = vmatpush1.msra.mxu0 0.0
    %6932 = vmatprep.subr.mxu0 0.0
    %6933 = vmatpush1.msra.mxu0 0.0
    %6934 = vmatprep.subr.mxu0 0.0
    %6935 = vmatpush1.msra.mxu0 0.0
    %6936 = vmatprep.subr.mxu0 0.0
    %6937 = vmatpush1.msra.mxu0 0.0
    %6938 = vmatprep.subr.mxu0 0.0
    %6939 = vmatpush1.msra.mxu0 0.0
    %6940 = vmatprep.subr.mxu0 0.0
    %6941 = vmatpush1.msra.mxu0 0.0
    %6942 = vmatprep.subr.mxu0 0.0
    %6943 = vmatpush1.msra.mxu0 0.0
    %6944 = vmatprep.subr.mxu0 0.0
    %6945 = vmatpush1.msra.mxu0 0.0
    %6946 = vmatprep.subr.mxu0 0.0
    %6947 = vmatpush1.msra.mxu0 0.0
    %6948 = vmatprep.subr.mxu0 0.0
    %6949 = vmatpush1.msra.mxu0 0.0
    %6950 = vmatprep.subr.mxu0 0.0
    %6951 = vmatpush1.msra.mxu0 0.0
    %6952 = vmatprep.mubr.f32.mxu0 0.0
    %6953 = vmatmul.mubr.f32.gmra.mrb[0].mxu0 %v6886
    %v6954 = vpop.f32.mrb[0].mxu0
    %v6955 = vadd.f32 0.0, %v6954
    %v6956 = vpop.f32.mrb[0].mxu0
    %6957 = vdwg.mxu0
    %v6959 = vrot.slane %v6955, 4
    %v6961 = vadd.f32 %v6130, %v6959
    %v6962 = vxor.u32 %v6961, 2147483648
    %v6963 = vmul.f32 %v6962, 1.442695
    %v6964 = vpow.pop %v6963
    %v6965 = vadd.f32 %v6964, 1.0
    %v6966 = vrcp.pop %v6965
    %v6967 = vmul.f32 1.0, %v6966
    %v6968 = vtanh.pop %v6961
    %v6969 = vsel %vm173, %v6968, %v6967
    %v6971 = vrot.slane %v6875, 6
    %v6973 = vmul.f32 %v6969, %v6971
    %6975 = vrot.lane.b32.xlu0 %v6969, 64
    %v6976 = vpop.permute.xlu0 %6975
    %v6978 = vmul.f32 %v6969, %v6976
    %6980 = vrot.lane.b32.xlu0 %v6978, 32
    %v6981 = vpop.permute.xlu0 %6980
    %v6983 = vadd.f32 %v6973, %v6981
    %v6984 = vtanh.pop %v6983
    %6986 = vrot.lane.b32.xlu0 %v6984, 64
    %v6987 = vpop.permute.xlu0 %6986
    %v6989 = vmul.f32 %v6969, %v6987
    %v6991 = vrot.slane %v6989, 4
    %6992 = vrot.lane.b32.xlu0 %v6991, 32
    %v6993 = vpop.permute.xlu0 %6992
    %v6994 = vsel %vm359, %v6993, 0
    %6996 = vmatprep.subr.mxu0 0.0
    %6997 = vmatpush1.msra.mxu0 %v6222
    %6998 = vmatprep.subr.mxu0 0.0
    %6999 = vmatpush1.msra.mxu0 %v6223
    %7000 = vmatprep.subr.mxu0 0.0
    %7001 = vmatpush1.msra.mxu0 %v6224
    %7002 = vmatprep.subr.mxu0 0.0
    %7003 = vmatpush1.msra.mxu0 %v6225
    %7004 = vmatprep.subr.mxu0 0.0
    %7005 = vmatpush1.msra.mxu0 0.0
    %7006 = vmatprep.subr.mxu0 0.0
    %7007 = vmatpush1.msra.mxu0 0.0
    %7008 = vmatprep.subr.mxu0 0.0
    %7009 = vmatpush1.msra.mxu0 0.0
    %7010 = vmatprep.subr.mxu0 0.0
    %7011 = vmatpush1.msra.mxu0 0.0
    %7012 = vmatprep.subr.mxu0 0.0
    %7013 = vmatpush1.msra.mxu0 0.0
    %7014 = vmatprep.subr.mxu0 0.0
    %7015 = vmatpush1.msra.mxu0 0.0
    %7016 = vmatprep.subr.mxu0 0.0
    %7017 = vmatpush1.msra.mxu0 0.0
    %7018 = vmatprep.subr.mxu0 0.0
    %7019 = vmatpush1.msra.mxu0 0.0
    %7020 = vmatprep.subr.mxu0 0.0
    %7021 = vmatpush1.msra.mxu0 0.0
    %7022 = vmatprep.subr.mxu0 0.0
    %7023 = vmatpush1.msra.mxu0 0.0
    %7024 = vmatprep.subr.mxu0 0.0
    %7025 = vmatpush1.msra.mxu0 0.0
    %7026 = vmatprep.subr.mxu0 0.0
    %7027 = vmatpush1.msra.mxu0 0.0
    %7028 = vmatprep.subr.mxu0 0.0
    %7029 = vmatpush1.msra.mxu0 0.0
    %7030 = vmatprep.subr.mxu0 0.0
    %7031 = vmatpush1.msra.mxu0 0.0
    %7032 = vmatprep.subr.mxu0 0.0
    %7033 = vmatpush1.msra.mxu0 0.0
    %7034 = vmatprep.subr.mxu0 0.0
    %7035 = vmatpush1.msra.mxu0 0.0
    %7036 = vmatprep.subr.mxu0 0.0
    %7037 = vmatpush1.msra.mxu0 0.0
    %7038 = vmatprep.subr.mxu0 0.0
    %7039 = vmatpush1.msra.mxu0 0.0
    %7040 = vmatprep.subr.mxu0 0.0
    %7041 = vmatpush1.msra.mxu0 0.0
    %7042 = vmatprep.subr.mxu0 0.0
    %7043 = vmatpush1.msra.mxu0 0.0
    %7044 = vmatprep.subr.mxu0 0.0
    %7045 = vmatpush1.msra.mxu0 0.0
    %7046 = vmatprep.subr.mxu0 0.0
    %7047 = vmatpush1.msra.mxu0 0.0
    %7048 = vmatprep.subr.mxu0 0.0
    %7049 = vmatpush1.msra.mxu0 0.0
    %7050 = vmatprep.subr.mxu0 0.0
    %7051 = vmatpush1.msra.mxu0 0.0
    %7052 = vmatprep.subr.mxu0 0.0
    %7053 = vmatpush1.msra.mxu0 0.0
    %7054 = vmatprep.subr.mxu0 0.0
    %7055 = vmatpush1.msra.mxu0 0.0
    %7056 = vmatprep.subr.mxu0 0.0
    %7057 = vmatpush1.msra.mxu0 0.0
    %7058 = vmatprep.subr.mxu0 0.0
    %7059 = vmatpush1.msra.mxu0 0.0
    %7060 = vmatprep.mubr.f32.mxu0 0.0
    %7061 = vmatmul.mubr.f32.gmra.mrb[0].mxu0 %v6994
    %v7062 = vpop.f32.mrb[0].mxu0
    %v7063 = vadd.f32 0.0, %v7062
    %v7064 = vpop.f32.mrb[0].mxu0
    %7065 = vdwg.mxu0
    %v7067 = vrot.slane %v7063, 2
    %v7069 = vadd.f32 %v6130, %v7067
    %v7070 = vxor.u32 %v7069, 2147483648
    %v7071 = vmul.f32 %v7070, 1.442695
    %v7072 = vpow.pop %v7071
    %v7073 = vadd.f32 %v7072, 1.0
    %v7074 = vrcp.pop %v7073
    %v7075 = vmul.f32 1.0, %v7074
    %v7076 = vtanh.pop %v7069
    %v7077 = vsel %vm173, %v7076, %v7075
    %v7079 = vrot.slane %v6983, 6
    %v7081 = vmul.f32 %v7077, %v7079
    %7083 = vrot.lane.b32.xlu0 %v7077, 64
    %v7084 = vpop.permute.xlu0 %7083
    %v7086 = vmul.f32 %v7077, %v7084
    %7088 = vrot.lane.b32.xlu0 %v7086, 32
    %v7089 = vpop.permute.xlu0 %7088
    %v7091 = vadd.f32 %v7081, %v7089
    %v7092 = vtanh.pop %v7091
    %7094 = vrot.lane.b32.xlu0 %v7092, 64
    %v7095 = vpop.permute.xlu0 %7094
    %v7097 = vmul.f32 %v7077, %v7095
    %v7098 = vmax.f32 %v7097, 0.0
    %v7099 = vmax.f32 %v6250, 0.0
    %v7100 = vld [vmem:[%s25] sm:$0xff]
    %v7101 = vld [vmem:[%s25 + $0x8] sm:$0xff]
    %v7102 = vld [vmem:[%s25 + $0x10] sm:$0xff]
    %v7103 = vld [vmem:[%s25 + $0x18] sm:$0xff]
    %v7104 = vld [vmem:[%s25 + $0x20] sm:$0xff]
    %v7105 = vld [vmem:[%s25 + $0x28] sm:$0xff]
    %v7106 = vld [vmem:[%s25 + $0x30] sm:$0xff]
    %v7107 = vld [vmem:[%s25 + $0x38] sm:$0xff]
    %v7109 = vrot.slane %v7099, 6
    %7110 = vrot.lane.b32.xlu0 %v7109, 32
    %v7111 = vpop.permute.xlu0 %7110
    %v7112 = vsel %vm359, %v7111, 0
    %7114 = vmatprep.subr.mxu0 0.0
    %7115 = vmatpush1.msra.mxu0 %v7104
    %7116 = vmatprep.subr.mxu0 0.0
    %7117 = vmatpush1.msra.mxu0 %v7105
    %7118 = vmatprep.subr.mxu0 0.0
    %7119 = vmatpush1.msra.mxu0 %v7106
    %7120 = vmatprep.subr.mxu0 0.0
    %7121 = vmatpush1.msra.mxu0 %v7107
    %7122 = vmatprep.subr.mxu0 0.0
    %7123 = vmatpush1.msra.mxu0 0.0
    %7124 = vmatprep.subr.mxu0 0.0
    %7125 = vmatpush1.msra.mxu0 0.0
    %7126 = vmatprep.subr.mxu0 0.0
    %7127 = vmatpush1.msra.mxu0 0.0
    %7128 = vmatprep.subr.mxu0 0.0
    %7129 = vmatpush1.msra.mxu0 0.0
    %7130 = vmatprep.subr.mxu0 0.0
    %7131 = vmatpush1.msra.mxu0 0.0
    %7132 = vmatprep.subr.mxu0 0.0
    %7133 = vmatpush1.msra.mxu0 0.0
    %7134 = vmatprep.subr.mxu0 0.0
    %7135 = vmatpush1.msra.mxu0 0.0
    %7136 = vmatprep.subr.mxu0 0.0
    %7137 = vmatpush1.msra.mxu0 0.0
    %7138 = vmatprep.subr.mxu0 0.0
    %7139 = vmatpush1.msra.mxu0 0.0
    %7140 = vmatprep.subr.mxu0 0.0
    %7141 = vmatpush1.msra.mxu0 0.0
    %7142 = vmatprep.subr.mxu0 0.0
    %7143 = vmatpush1.msra.mxu0 0.0
    %7144 = vmatprep.subr.mxu0 0.0
    %7145 = vmatpush1.msra.mxu0 0.0
    %7146 = vmatprep.subr.mxu0 0.0
    %7147 = vmatpush1.msra.mxu0 0.0
    %7148 = vmatprep.subr.mxu0 0.0
    %7149 = vmatpush1.msra.mxu0 0.0
    %7150 = vmatprep.subr.mxu0 0.0
    %7151 = vmatpush1.msra.mxu0 0.0
    %7152 = vmatprep.subr.mxu0 0.0
    %7153 = vmatpush1.msra.mxu0 0.0
    %7154 = vmatprep.subr.mxu0 0.0
    %7155 = vmatpush1.msra.mxu0 0.0
    %7156 = vmatprep.subr.mxu0 0.0
    %7157 = vmatpush1.msra.mxu0 0.0
    %7158 = vmatprep.subr.mxu0 0.0
    %7159 = vmatpush1.msra.mxu0 0.0
    %7160 = vmatprep.subr.mxu0 0.0
    %7161 = vmatpush1.msra.mxu0 0.0
    %7162 = vmatprep.subr.mxu0 0.0
    %7163 = vmatpush1.msra.mxu0 0.0
    %7164 = vmatprep.subr.mxu0 0.0
    %7165 = vmatpush1.msra.mxu0 0.0
    %7166 = vmatprep.subr.mxu0 0.0
    %7167 = vmatpush1.msra.mxu0 0.0
    %7168 = vmatprep.subr.mxu0 0.0
    %7169 = vmatpush1.msra.mxu0 0.0
    %7170 = vmatprep.subr.mxu0 0.0
    %7171 = vmatpush1.msra.mxu0 0.0
    %7172 = vmatprep.subr.mxu0 0.0
    %7173 = vmatpush1.msra.mxu0 0.0
    %7174 = vmatprep.subr.mxu0 0.0
    %7175 = vmatpush1.msra.mxu0 0.0
    %7176 = vmatprep.subr.mxu0 0.0
    %7177 = vmatpush1.msra.mxu0 0.0
    %7178 = vmatprep.mubr.f32.mxu0 0.0
    %7179 = vmatmul.mubr.f32.gmra.mrb[0].mxu0 %v7112
    %v7180 = vpop.f32.mrb[0].mxu0
    %v7181 = vadd.f32 0.0, %v7180
    %v7182 = vpop.f32.mrb[0].mxu0
    %7183 = vdwg.mxu0
    %v7185 = vrot.slane %v7098, 6
    %7186 = vrot.lane.b32.xlu0 %v7185, 32
    %v7187 = vpop.permute.xlu0 %7186
    %v7188 = vsel %vm359, %v7187, 0
    %7190 = vmatprep.subr.mxu0 0.0
    %7191 = vmatpush1.msra.mxu0 %v7100
    %7192 = vmatprep.subr.mxu0 0.0
    %7193 = vmatpush1.msra.mxu0 %v7101
    %7194 = vmatprep.subr.mxu0 0.0
    %7195 = vmatpush1.msra.mxu0 %v7102
    %7196 = vmatprep.subr.mxu0 0.0
    %7197 = vmatpush1.msra.mxu0 %v7103
    %7198 = vmatprep.subr.mxu0 0.0
    %7199 = vmatpush1.msra.mxu0 0.0
    %7200 = vmatprep.subr.mxu0 0.0
    %7201 = vmatpush1.msra.mxu0 0.0
    %7202 = vmatprep.subr.mxu0 0.0
    %7203 = vmatpush1.msra.mxu0 0.0
    %7204 = vmatprep.subr.mxu0 0.0
    %7205 = vmatpush1.msra.mxu0 0.0
    %7206 = vmatprep.subr.mxu0 0.0
    %7207 = vmatpush1.msra.mxu0 0.0
    %7208 = vmatprep.subr.mxu0 0.0
    %7209 = vmatpush1.msra.mxu0 0.0
    %7210 = vmatprep.subr.mxu0 0.0
    %7211 = vmatpush1.msra.mxu0 0.0
    %7212 = vmatprep.subr.mxu0 0.0
    %7213 = vmatpush1.msra.mxu0 0.0
    %7214 = vmatprep.subr.mxu0 0.0
    %7215 = vmatpush1.msra.mxu0 0.0
    %7216 = vmatprep.subr.mxu0 0.0
    %7217 = vmatpush1.msra.mxu0 0.0
    %7218 = vmatprep.subr.mxu0 0.0
    %7219 = vmatpush1.msra.mxu0 0.0
    %7220 = vmatprep.subr.mxu0 0.0
    %7221 = vmatpush1.msra.mxu0 0.0
    %7222 = vmatprep.subr.mxu0 0.0
    %7223 = vmatpush1.msra.mxu0 0.0
    %7224 = vmatprep.subr.mxu0 0.0
    %7225 = vmatpush1.msra.mxu0 0.0
    %7226 = vmatprep.subr.mxu0 0.0
    %7227 = vmatpush1.msra.mxu0 0.0
    %7228 = vmatprep.subr.mxu0 0.0
    %7229 = vmatpush1.msra.mxu0 0.0
    %7230 = vmatprep.subr.mxu0 0.0
    %7231 = vmatpush1.msra.mxu0 0.0
    %7232 = vmatprep.subr.mxu0 0.0
    %7233 = vmatpush1.msra.mxu0 0.0
    %7234 = vmatprep.subr.mxu0 0.0
    %7235 = vmatpush1.msra.mxu0 0.0
    %7236 = vmatprep.subr.mxu0 0.0
    %7237 = vmatpush1.msra.mxu0 0.0
    %7238 = vmatprep.subr.mxu0 0.0
    %7239 = vmatpush1.msra.mxu0 0.0
    %7240 = vmatprep.subr.mxu0 0.0
    %7241 = vmatpush1.msra.mxu0 0.0
    %7242 = vmatprep.subr.mxu0 0.0
    %7243 = vmatpush1.msra.mxu0 0.0
    %7244 = vmatprep.subr.mxu0 0.0
    %7245 = vmatpush1.msra.mxu0 0.0
    %7246 = vmatprep.subr.mxu0 0.0
    %7247 = vmatpush1.msra.mxu0 0.0
    %7248 = vmatprep.subr.mxu0 0.0
    %7249 = vmatpush1.msra.mxu0 0.0
    %7250 = vmatprep.subr.mxu0 0.0
    %7251 = vmatpush1.msra.mxu0 0.0
    %7252 = vmatprep.subr.mxu0 0.0
    %7253 = vmatpush1.msra.mxu0 0.0
    %7254 = vmatprep.mubr.f32.mxu0 0.0
    %7255 = vmatmul.mubr.f32.gmra.mrb[0].mxu0 %v7188
    %v7256 = vpop.f32.mrb[0].mxu0
    %v7257 = vadd.f32 %v7181, %v7256
    %v7258 = vpop.f32.mrb[0].mxu0
    %7259 = vdwg.mxu0
    %v7260 = vld [vmem:[%s26] sm:$0x1]
    %v7262 = vlaneseq
    %v7263 = vshrl.u32 %v7262, 7
    %v7264 = vsub.s32 0, %v7263
    %v7265 = vrot.slane %v7260, %v7264
    %v7267 = vadd.f32 %v7257, %v7265
    %vm7268 = vcmask 74752
    %v7269 = vsel %vm7268, %v7267, -inf
    %7270 = vmax.xlane.f32.xlu0 %v7269
    %v7271 = vpop.xlane.xlu0 %7270
    %v7272 = vsub.f32 %v7267, %v7271
    %v7273 = vmul.f32 %v7272, 1.442695
    %v7274 = vpow.pop %v7273
    %v7275 = vsel %vm7268, %v7274, 0.0
    %7276 = vadd.xlane.f32.xlu0 %v7275
    %v7277 = vpop.xlane.xlu0 %7276
    %v7278 = vrcp.pop %v7277
    %v7279 = vmul.f32 %v7274, %v7278
    %7280 = vst.msk [vmem:[#allocation15] sm:$0x3] %vm7268, %v7279
    // Predicated region
    $region134: #{sequence_classifier_forward.1} parent=1 // pred_check
      _
    $region135: #{sequence_classifier_forward.1} parent=1 // pred_check_branch
      %7282 = sbr.rel (0) target = $region137
    $region136: #{sequence_classifier_forward.1} parent=1 // pred_region
      %s7284 = ssub.s32 32, 32
      %7285 = vsyncadd [#allocation6], %s7284
      %s7287 = sshll.u32 [#allocation15], 4
      %s7288 = int_to_ptr.vmem [resolvable:$true] %s7287
      %7290 = dma.vmem_to_hbm [thread:$0]  %s7288, 32, %s27, [#allocation6]
    $region137: #{sequence_classifier_forward.1} parent=1 // pred_fallthru
      _
    // Predicated region
    $region138: #{sequence_classifier_forward.1} parent=1 // pred_check
      _
    $region139: #{sequence_classifier_forward.1} parent=1 // pred_check_branch
      %7292 = sbr.rel (0) target = $region141
    $region140: #{sequence_classifier_forward.1} parent=1 // pred_region
      %7293 = dma.done [#allocation6], 32
    $region141: #{sequence_classifier_forward.1} parent=1 // pred_fallthru
      _
    %7294 = vsyncpa [#allocation5], 1
    %7295 = vsyncpa [#allocation8], 1
    %7296 = vsyncpa [#allocation11], 1
    %7297 = vsyncpa [#allocation14], 1
    %7298 = vsyncpa [#allocation6], 1

</llo_original>
